<compile_context>
chip_gen: v5e
topology: v5e:2x2
jax: 0.10.0
libtpu: 0.0.40
codegen_flags: <defaults>
</compile_context>

<pallas_src>
import functools
import math

import numpy as np
import jax
import jax.numpy as jnp
from jax.experimental import pallas as pl
from jax.experimental.pallas import tpu as pltpu

F32 = jnp.float32
BF16 = jnp.bfloat16
NEG = -1e30
VMEM_LIMIT = 32 * 1024 * 1024   # explicit scoped-VMEM cap (v5e default is only 16 MiB)


# ----------------------------------------------------------------------------
# Small helpers shared by the kernels
# ----------------------------------------------------------------------------
def _cparams(parallel):
    sem = ("parallel",) if parallel else ("arbitrary",)
    return pltpu.CompilerParams(dimension_semantics=sem,
                                vmem_limit_bytes=VMEM_LIMIT)


def _full(shape):
    shape = tuple(int(s) for s in shape)
    return pl.BlockSpec(shape, lambda b: (0,) * len(shape))


def _bf16_dot(a, b):
    # bf16 MXU inputs, f32 accumulation.
    return jnp.dot(a.astype(BF16), b.astype(BF16), preferred_element_type=F32)


def _act_fn(y, activation):
    if activation == "gelu":
        c = math.sqrt(2.0 / math.pi)
        return 0.5 * y * (1.0 + jnp.tanh(c * (y + 0.044715 * y * y * y)))
    if activation == "relu":
        return jnp.maximum(y, 0.0)
    return y


def _layernorm(y, g, b, eps):
    mu = jnp.mean(y, axis=-1, keepdims=True)
    yc = y - mu
    var = jnp.mean(yc * yc, axis=-1, keepdims=True)
    return yc * jax.lax.rsqrt(var + eps) * g + b


def _attn_bias(H, L, S, causal):
    """Additive (H*L, H*S) mask: 0 inside the per-head diagonal block (and
    causal region), -1e30 elsewhere.  Static -> built once with numpy."""
    r = np.arange(H * L)[:, None]
    c = np.arange(H * S)[None, :]
    keep = (r // L) == (c // S)
    if causal:
        keep = keep & ((c % S) <= (r % L))
    return jnp.asarray(np.where(keep, 0.0, NEG), dtype=F32)


def _mha_flat(q, k, v, bias, H, scale, mix):
    """Multi-head attention, heads handled fully in-kernel.

    q: (L, d), k/v: (S, d).  Heads are lane-sliced and stacked head-major along
    the row axis so ONE MXU push computes every head's scores; `bias` enforces
    the block-diagonal (per-head) structure plus optional causality.
    """
    L, d = q.shape
    S = k.shape[0]
    dh = d // H
    qf = jnp.concatenate([q[:, h * dh:(h + 1) * dh] for h in range(H)], axis=0)
    kf = jnp.concatenate([k[:, h * dh:(h + 1) * dh] for h in range(H)], axis=0)
    vf = jnp.concatenate([v[:, h * dh:(h + 1) * dh] for h in range(H)], axis=0)
    s = jax.lax.dot_general(qf.astype(BF16), kf.astype(BF16),
                            (((1,), (1,)), ((), ())),
                            preferred_element_type=F32)       # (H*L, H*S)
    s = s * scale + bias
    m = jnp.max(s, axis=-1, keepdims=True)
    p = jnp.exp(s - m)
    p = p * pl.reciprocal(jnp.sum(p, axis=-1, keepdims=True), approx=True)
    of = _bf16_dot(p, vf)                                     # (H*L, dh) head-major
    if mix:
        # torch 'mix=True': view the (H, L, dh) buffer as (L, H*dh);
        # column block h of the result takes rows {l*H + h} of `of`.
        row = jax.lax.broadcasted_iota(jnp.int32, (L, H * L), 0)
        col = jax.lax.broadcasted_iota(jnp.int32, (L, H * L), 1)
        blocks = []
        for h in range(H):
            sel = jnp.where(col == row * H + h, 1.0, 0.0).astype(F32)
            blocks.append(jnp.dot(sel, of, preferred_element_type=F32))
        return jnp.concatenate(blocks, axis=1)
    # no mix: standard concat of heads along channels.
    return jnp.concatenate([of[h * L:(h + 1) * L, :] for h in range(H)], axis=1)


# ----------------------------------------------------------------------------
# Fused kernels
# ----------------------------------------------------------------------------
def _embed_kernel(xp_ref, w_ref, b_ref, extra_ref, o_ref, *, L):
    """Token conv1d (k=3, circular pad done outside as 2 extra rows) + bias +
    positional/temporal embedding, per batch item."""
    xp = xp_ref[0]                      # (L+2, C)
    w = w_ref[...]                      # (3C, d)
    C = xp.shape[-1]
    y = (_bf16_dot(xp[0:L, :], w[0:C, :])
         + _bf16_dot(xp[1:L + 1, :], w[C:2 * C, :])
         + _bf16_dot(xp[2:L + 2, :], w[2 * C:3 * C, :]))
    o_ref[0] = y + b_ref[...] + extra_ref[0]


def _encoder_layer_kernel(*refs, H, scale, activation, eps, final_norm):
    """Whole EncoderLayer: self-attn + out-proj + res + LN1 + FFN + res + LN2
    (optionally followed by the Encoder's final LayerNorm)."""
    (x_ref, bias_ref, wqkv_ref, bqkv_ref, wo_ref, bo_ref, g1_ref, n1_ref,
     w1_ref, b1_ref, w2_ref, b2_ref, g2_ref, n2_ref) = refs[:14]
    if final_norm:
        gf_ref, nf_ref, o_ref = refs[14], refs[15], refs[16]
    else:
        o_ref = refs[14]

    x = x_ref[0]                        # (L, d)
    d = x.shape[-1]
    qkv = _bf16_dot(x, wqkv_ref[...]) + bqkv_ref[...]          # fused QKV matmul
    attn = _mha_flat(qkv[:, :d], qkv[:, d:2 * d], qkv[:, 2 * d:],
                     bias_ref[...], H, scale, mix=False)
    y = _layernorm(x + _bf16_dot(attn, wo_ref[...]) + bo_ref[...],
                   g1_ref[...], n1_ref[...], eps)
    h = _act_fn(_bf16_dot(y, w1_ref[...]) + b1_ref[...], activation)
    z = y + _bf16_dot(h, w2_ref[...]) + b2_ref[...]
    out = _layernorm(z, g2_ref[...], n2_ref[...], eps)
    if final_norm:
        out = _layernorm(out, gf_ref[...], nf_ref[...], eps)
    o_ref[0] = out


def _decoder_layer_kernel(x_ref, cross_ref, sbias_ref, cbias_ref,
                          wqkv_ref, bqkv_ref, wo1_ref, bo1_ref, g1_ref, n1_ref,
                          wq_ref, bq_ref, wkv_ref, bkv_ref, wo2_ref, bo2_ref,
                          g2_ref, n2_ref,
                          w1_ref, b1_ref, w2_ref, b2_ref, g3_ref, n3_ref,
                          o_ref, *, H, scale, activation, mix, eps):
    """Whole DecoderLayer: causal self-attn + LN1 + cross-attn + LN2 + FFN + LN3."""
    x = x_ref[0]
    cr = cross_ref[0]
    d = x.shape[-1]

    qkv = _bf16_dot(x, wqkv_ref[...]) + bqkv_ref[...]
    a1 = _mha_flat(qkv[:, :d], qkv[:, d:2 * d], qkv[:, 2 * d:],
                   sbias_ref[...], H, scale, mix)
    y = _layernorm(x + _bf16_dot(a1, wo1_ref[...]) + bo1_ref[...],
                   g1_ref[...], n1_ref[...], eps)

    q2 = _bf16_dot(y, wq_ref[...]) + bq_ref[...]
    kv = _bf16_dot(cr, wkv_ref[...]) + bkv_ref[...]            # fused K|V matmul
    a2 = _mha_flat(q2, kv[:, :d], kv[:, d:], cbias_ref[...], H, scale, mix=False)
    z = _layernorm(y + _bf16_dot(a2, wo2_ref[...]) + bo2_ref[...],
                   g2_ref[...], n2_ref[...], eps)

    hh = _act_fn(_bf16_dot(z, w1_ref[...]) + b1_ref[...], activation)
    w = z + _bf16_dot(hh, w2_ref[...]) + b2_ref[...]
    o_ref[0] = _layernorm(w, g3_ref[...], n3_ref[...], eps)


def _conv_distill_kernel(xp_ref, w_ref, b_ref, g_ref, beta_ref, sel_ref, o_ref,
                         *, B, L, eps):
    """Distilling ConvLayer: conv1d(k=3 circular) + BatchNorm1d(batch stats) +
    ELU + MaxPool1d(3,2,1), all fused.  grid=(1,) because BN stats span the batch."""
    w = w_ref[...]                      # (3C, N)
    C = xp_ref.shape[-1]
    N = w.shape[-1]
    bb = b_ref[...]

    ys = []
    for b in range(B):
        xp = xp_ref[b]                  # (L+2, C)
        y = (_bf16_dot(xp[0:L, :], w[0:C, :])
             + _bf16_dot(xp[1:L + 1, :], w[C:2 * C, :])
             + _bf16_dot(xp[2:L + 2, :], w[2 * C:3 * C, :]) + bb)
        ys.append(y)

    cnt = float(B * L)
    mean = sum(jnp.sum(y, axis=0, keepdims=True) for y in ys) / cnt
    var = sum(jnp.sum((y - mean) ** 2, axis=0, keepdims=True) for y in ys) / cnt
    inv = jax.lax.rsqrt(var + eps) * g_ref[...]
    beta = beta_ref[...]

    neg_row = jnp.full((1, N), NEG, F32)
    sel = sel_ref[...]                  # (L//2, L) stride-2 row selector
    for b in range(B):
        yn = (ys[b] - mean) * inv + beta
        ye = jnp.where(yn > 0, yn, jnp.exp(jnp.minimum(yn, 0.0)) - 1.0)   # ELU
        ym1 = jnp.concatenate([neg_row, ye[:L - 1, :]], axis=0)           # row l-1
        yp1 = jnp.concatenate([ye[1:, :], neg_row], axis=0)               # row l+1
        m = jnp.maximum(jnp.maximum(ym1, ye), yp1)                        # window max
        o_ref[b] = jnp.dot(sel, m, preferred_element_type=F32)            # stride 2


def _norm_proj_kernel(x_ref, g_ref, b_ref, w_ref, bp_ref, o_ref, *, eps):
    y = _layernorm(x_ref[0], g_ref[...], b_ref[...], eps)
    o_ref[0] = _bf16_dot(y, w_ref[...]) + bp_ref[...]


# ----------------------------------------------------------------------------
# Wrappers (one pallas_call each)
# ----------------------------------------------------------------------------
def data_embedding(p, x, x_mark):
    B, L, C = x.shape
    d = p["token_w"].shape[1]
    xm = x_mark.astype(jnp.int32)
    temp = (p["month_tab"][xm[:, :, 0]] + p["day_tab"][xm[:, :, 1]]
            + p["weekday_tab"][xm[:, :, 2]] + p["hour_tab"][xm[:, :, 3]])
    extra = temp + p["pos_tab"][:L][None]               # positional + temporal
    xp = jnp.concatenate([x[:, -1:, :], x, x[:, :1, :]], axis=1)   # circular pad (+2 rows)
    return pl.pallas_call(
        functools.partial(_embed_kernel, L=L),
        out_shape=jax.ShapeDtypeStruct((B, L, d), F32),
        grid=(B,),
        in_specs=[pl.BlockSpec((1, L + 2, C), lambda b: (b, 0, 0)),
                  _full(p["token_w"].shape),
                  _full((1, d)),
                  pl.BlockSpec((1, L, d), lambda b: (b, 0, 0))],
        out_specs=pl.BlockSpec((1, L, d), lambda b: (b, 0, 0)),
        compiler_params=_cparams(parallel=True),
    )(xp, p["token_w"], p["token_b"].reshape(1, d), extra)


def encoder_layer(p, x, H, activation, final_ln=None, eps=1e-5):
    B, L, d = x.shape
    dff = p["ff1_w"].shape[1]
    scale = 1.0 / math.sqrt(d // H)
    bias = _attn_bias(H, L, L, causal=False)
    a = p["attn"]
    args = [x, bias,
            a["w_qkv"], a["b_qkv"].reshape(1, 3 * d),
            a["wo"], a["bo"].reshape(1, d),
            p["ln1_g"].reshape(1, d), p["ln1_b"].reshape(1, d),
            p["ff1_w"], p["ff1_b"].reshape(1, dff),
            p["ff2_w"], p["ff2_b"].reshape(1, d),
            p["ln2_g"].reshape(1, d), p["ln2_b"].reshape(1, d)]
    if final_ln is not None:
        args += [final_ln[0].reshape(1, d), final_ln[1].reshape(1, d)]
    in_specs = ([pl.BlockSpec((1, L, d), lambda b: (b, 0, 0))]
                + [_full(t.shape) for t in args[1:]])
    return pl.pallas_call(
        functools.partial(_encoder_layer_kernel, H=H, scale=scale,
                          activation=activation, eps=eps,
                          final_norm=final_ln is not None),
        out_shape=jax.ShapeDtypeStruct((B, L, d), F32),
        grid=(B,),
        in_specs=in_specs,
        out_specs=pl.BlockSpec((1, L, d), lambda b: (b, 0, 0)),
        compiler_params=_cparams(parallel=True),
    )(*args)


def decoder_layer(p, x, cross, H, activation, mix, eps=1e-5):
    B, L, d = x.shape
    S = cross.shape[1]
    dff = p["ff1_w"].shape[1]
    scale = 1.0 / math.sqrt(d // H)
    sbias = _attn_bias(H, L, L, causal=True)
    cbias = _attn_bias(H, L, S, causal=False)
    sa, ca = p["self_attn"], p["cross_attn"]
    args = [x, cross, sbias, cbias,
            sa["w_qkv"], sa["b_qkv"].reshape(1, 3 * d),
            sa["wo"], sa["bo"].reshape(1, d),
            p["ln1_g"].reshape(1, d), p["ln1_b"].reshape(1, d),
            ca["wq"], ca["bq"].reshape(1, d),
            ca["w_kv"], ca["b_kv"].reshape(1, 2 * d),
            ca["wo"], ca["bo"].reshape(1, d),
            p["ln2_g"].reshape(1, d), p["ln2_b"].reshape(1, d),
            p["ff1_w"], p["ff1_b"].reshape(1, dff),
            p["ff2_w"], p["ff2_b"].reshape(1, d),
            p["ln3_g"].reshape(1, d), p["ln3_b"].reshape(1, d)]
    in_specs = ([pl.BlockSpec((1, L, d), lambda b: (b, 0, 0)),
                 pl.BlockSpec((1, S, d), lambda b: (b, 0, 0))]
                + [_full(t.shape) for t in args[2:]])
    return pl.pallas_call(
        functools.partial(_decoder_layer_kernel, H=H, scale=scale,
                          activation=activation, mix=mix, eps=eps),
        out_shape=jax.ShapeDtypeStruct((B, L, d), F32),
        grid=(B,),
        in_specs=in_specs,
        out_specs=pl.BlockSpec((1, L, d), lambda b: (b, 0, 0)),
        compiler_params=_cparams(parallel=True),
    )(*args)


def conv_distill(p, x, eps=1e-5):
    B, L, d = x.shape
    Lp = (L - 1) // 2 + 1                       # MaxPool1d(3,2,1) output length
    xp = jnp.concatenate([x[:, -1:, :], x, x[:, :1, :]], axis=1)
    sel = np.zeros((Lp, L), np.float32)
    sel[np.arange(Lp), 2 * np.arange(Lp)] = 1.0
    return pl.pallas_call(
        functools.partial(_conv_distill_kernel, B=B, L=L, eps=eps),
        out_shape=jax.ShapeDtypeStruct((B, Lp, d), F32),
        grid=(1,),
        in_specs=[_full((B, L + 2, d)), _full((3 * d, d)), _full((1, d)),
                  _full((1, d)), _full((1, d)), _full((Lp, L))],
        out_specs=_full((B, Lp, d)),
        compiler_params=_cparams(parallel=False),
    )(xp, p["conv_w"], p["conv_b"].reshape(1, d), p["bn_g"].reshape(1, d),
      p["bn_b"].reshape(1, d), jnp.asarray(sel))


def norm_proj(x, g, b, w, bp, eps=1e-5):
    B, L, d = x.shape
    N = w.shape[1]
    return pl.pallas_call(
        functools.partial(_norm_proj_kernel, eps=eps),
        out_shape=jax.ShapeDtypeStruct((B, L, N), F32),
        grid=(B,),
        in_specs=[pl.BlockSpec((1, L, d), lambda i: (i, 0, 0)),
                  _full((1, d)), _full((1, d)), _full((d, N)), _full((1, N))],
        out_specs=pl.BlockSpec((1, L, N), lambda i: (i, 0, 0)),
        compiler_params=_cparams(parallel=True),
    )(x, g.reshape(1, d), b.reshape(1, d), w, bp.reshape(1, N))


# ----------------------------------------------------------------------------
# Model composition (functional, params are nested dicts)
# ----------------------------------------------------------------------------
def run_encoder(p, x, H, act):
    layers, convs = p["layers"], p["convs"]
    final = (p["norm_g"], p["norm_b"])
    if convs is not None:
        for al, cl in zip(layers, convs):
            x = encoder_layer(al, x, H, act)
            x = conv_distill(cl, x)
        x = encoder_layer(layers[-1], x, H, act, final_ln=final)
    else:
        n = len(layers)
        for i, al in enumerate(layers):
            x = encoder_layer(al, x, H, act,
                              final_ln=final if i == n - 1 else None)
    return x


def informer_stack_forward(params, cfg, x_enc, x_mark_enc, x_dec, x_mark_dec):
    H, act, mix = cfg["n_heads"], cfg["activation"], cfg["mix"]
    enc_out = data_embedding(params["enc_emb"], x_enc, x_mark_enc)

    # EncoderStack: encoder i consumes the last L // 2**i steps.
    xs = []
    L = enc_out.shape[1]
    for i_len, enc_p in enumerate(params["encoder"]["encoders"]):
        inp_len = L // (2 ** i_len)
        xs.append(run_encoder(enc_p, enc_out[:, -inp_len:, :], H, act))
    enc_stack = jnp.concatenate(xs, axis=-2)

    dec_out = data_embedding(params["dec_emb"], x_dec, x_mark_dec)
    for lp in params["decoder"]["layers"]:
        dec_out = decoder_layer(lp, dec_out, enc_stack, H, act, mix)
    dec_out = norm_proj(dec_out, params["decoder"]["norm_g"],
                        params["decoder"]["norm_b"],
                        params["proj_w"], params["proj_b"])
    return dec_out[:, -cfg["out_len"]:, :]


# ----------------------------------------------------------------------------
# Fixed (sinusoidal) embedding tables + deterministic parameter initialization
# ----------------------------------------------------------------------------
def fixed_embedding_table(c_in, d_model):
    pos = jnp.arange(c_in, dtype=jnp.float32)[:, None]
    div = jnp.exp(jnp.arange(0, d_model, 2, dtype=jnp.float32)
                  * -(math.log(10000.0) / d_model))
    tab = jnp.zeros((c_in, d_model), jnp.float32)
    tab = tab.at[:, 0::2].set(jnp.sin(pos * div))
    tab = tab.at[:, 1::2].set(jnp.cos(pos * div))
    return tab


class ParamGen:
    def __init__(self, seed=0):
        self.key = jax.random.PRNGKey(seed)

    def normal(self, shape, scale=0.02):
        self.key, sub = jax.random.split(self.key)
        return (scale * jax.random.normal(sub, shape)).astype(F32)

    def zeros(self, shape):
        return jnp.zeros(shape, F32)

    def ones(self, shape):
        return jnp.ones(shape, F32)


def init_informer_stack(cfg, seed=0):
    pg = ParamGen(seed)
    d, dff = cfg["d_model"], cfg["d_ff"]

    def self_attn_params():
        return dict(w_qkv=pg.normal((d, 3 * d)), b_qkv=pg.zeros((3 * d,)),
                    wo=pg.normal((d, d)), bo=pg.zeros((d,)))

    def cross_attn_params():
        return dict(wq=pg.normal((d, d)), bq=pg.zeros((d,)),
                    w_kv=pg.normal((d, 2 * d)), b_kv=pg.zeros((2 * d,)),
                    wo=pg.normal((d, d)), bo=pg.zeros((d,)))

    def enc_layer_params():
        return dict(attn=self_attn_params(),
                    ff1_w=pg.normal((d, dff)), ff1_b=pg.zeros((dff,)),
                    ff2_w=pg.normal((dff, d)), ff2_b=pg.zeros((d,)),
                    ln1_g=pg.ones((d,)), ln1_b=pg.zeros((d,)),
                    ln2_g=pg.ones((d,)), ln2_b=pg.zeros((d,)))

    def conv_layer_params():
        return dict(conv_w=pg.normal((3 * d, d)), conv_b=pg.zeros((d,)),
                    bn_g=pg.ones((d,)), bn_b=pg.zeros((d,)))

    def dec_layer_params():
        return dict(self_attn=self_attn_params(), cross_attn=cross_attn_params(),
                    ff1_w=pg.normal((d, dff)), ff1_b=pg.zeros((dff,)),
                    ff2_w=pg.normal((dff, d)), ff2_b=pg.zeros((d,)),
                    ln1_g=pg.ones((d,)), ln1_b=pg.zeros((d,)),
                    ln2_g=pg.ones((d,)), ln2_b=pg.zeros((d,)),
                    ln3_g=pg.ones((d,)), ln3_b=pg.zeros((d,)))

    def embedding_params(c_in, max_len):
        return dict(token_w=pg.normal((3 * c_in, d)), token_b=pg.zeros((d,)),
                    pos_tab=fixed_embedding_table(max_len, d),
                    month_tab=fixed_embedding_table(13, d),
                    day_tab=fixed_embedding_table(32, d),
                    weekday_tab=fixed_embedding_table(7, d),
                    hour_tab=fixed_embedding_table(24, d))

    encoders = []
    for el in cfg["e_layers"]:
        encoders.append(dict(
            layers=[enc_layer_params() for _ in range(el)],
            convs=([conv_layer_params() for _ in range(el - 1)]
                   if cfg["distil"] else None),
            norm_g=pg.ones((d,)), norm_b=pg.zeros((d,))))

    return dict(
        enc_emb=embedding_params(cfg["enc_in"], cfg["seq_len"]),
        dec_emb=embedding_params(cfg["dec_in"], cfg["label_len"] + cfg["out_len"]),
        encoder=dict(encoders=encoders),
        decoder=dict(layers=[dec_layer_params() for _ in range(cfg["d_layers"])],
                     norm_g=pg.ones((d,)), norm_b=pg.zeros((d,))),
        proj_w=pg.normal((d, cfg["c_out"])), proj_b=pg.zeros((cfg["c_out"],)))


# ----------------------------------------------------------------------------
# Main
# ----------------------------------------------------------------------------
if __name__ == "__main__":
    CFG = dict(enc_in=4, dec_in=4, c_out=4, seq_len=16, label_len=8, out_len=8,
               d_model=32, n_heads=4, e_layers=[2, 1], d_layers=2, d_ff=64,
               activation="gelu", distil=True, mix=True)

    B = 2
    L_enc = CFG["seq_len"]
    L_dec = CFG["label_len"] + CFG["out_len"]

    key = jax.random.PRNGKey(0)
    k1, k2, k3, k4 = jax.random.split(key, 4)
    x_enc = jax.random.normal(k1, (B, L_enc, CFG["enc_in"]), F32)
    x_dec = jax.random.normal(k2, (B, L_dec, CFG["dec_in"]), F32)

    def make_mark(k, L):
        km, kd, kw, kh = jax.random.split(k, 4)
        month = jax.random.randint(km, (B, L, 1), 0, 13)
        day = jax.random.randint(kd, (B, L, 1), 0, 32)
        weekday = jax.random.randint(kw, (B, L, 1), 0, 7)
        hour = jax.random.randint(kh, (B, L, 1), 0, 24)
        return jnp.concatenate([month, day, weekday, hour], -1).astype(F32)

    x_mark_enc = make_mark(k3, L_enc)
    x_mark_dec = make_mark(k4, L_dec)

    params = init_informer_stack(CFG, seed=0)

    @jax.jit
    def forward(p, xe, me, xd, md):
        return informer_stack_forward(p, CFG, xe, me, xd, md)

    out = forward(params, x_enc, x_mark_enc, x_dec, x_mark_dec)
    out = jax.block_until_ready(out)
    assert out.shape == (B, CFG["out_len"], CFG["c_out"]), out.shape
    assert bool(jnp.all(jnp.isfinite(out)))
    print("KERNEL_OK")
</pallas_src>

<mosaic_0001>
module attributes {stable_mosaic.version = 11 : i64} {
  func.func @_encoder_layer_kernel(%arg0: i32, %arg1: memref<1x8x32xf32, #tpu.memory_space<vmem>>, %arg2: memref<32x32xf32, #tpu.memory_space<vmem>>, %arg3: memref<32x96xf32, #tpu.memory_space<vmem>>, %arg4: memref<1x96xf32, #tpu.memory_space<vmem>>, %arg5: memref<32x32xf32, #tpu.memory_space<vmem>>, %arg6: memref<1x32xf32, #tpu.memory_space<vmem>>, %arg7: memref<1x32xf32, #tpu.memory_space<vmem>>, %arg8: memref<1x32xf32, #tpu.memory_space<vmem>>, %arg9: memref<32x64xf32, #tpu.memory_space<vmem>>, %arg10: memref<1x64xf32, #tpu.memory_space<vmem>>, %arg11: memref<64x32xf32, #tpu.memory_space<vmem>>, %arg12: memref<1x32xf32, #tpu.memory_space<vmem>>, %arg13: memref<1x32xf32, #tpu.memory_space<vmem>>, %arg14: memref<1x32xf32, #tpu.memory_space<vmem>>, %arg15: memref<1x32xf32, #tpu.memory_space<vmem>>, %arg16: memref<1x32xf32, #tpu.memory_space<vmem>>, %arg17: memref<1x8x32xf32, #tpu.memory_space<vmem>>) attributes {dimension_semantics = [#tpu.dimension_semantics<parallel>], iteration_bounds = array<i64: 2>, scalar_prefetch = 0 : i64, scratch_operands = 0 : i64, tpu.core_type = #tpu.core_type<tc>, window_params = [{transform_indices = @transform_0, window_bounds = array<i64: 1, 8, 32>}, {pipeline_mode = #tpu.pipeline_mode<synchronous>, transform_indices = @transform_1, window_bounds = array<i64: 32, 32>}, {pipeline_mode = #tpu.pipeline_mode<synchronous>, transform_indices = @transform_2, window_bounds = array<i64: 32, 96>}, {pipeline_mode = #tpu.pipeline_mode<synchronous>, transform_indices = @transform_3, window_bounds = array<i64: 1, 96>}, {pipeline_mode = #tpu.pipeline_mode<synchronous>, transform_indices = @transform_4, window_bounds = array<i64: 32, 32>}, {pipeline_mode = #tpu.pipeline_mode<synchronous>, transform_indices = @transform_5, window_bounds = array<i64: 1, 32>}, {pipeline_mode = #tpu.pipeline_mode<synchronous>, transform_indices = @transform_6, window_bounds = array<i64: 1, 32>}, {pipeline_mode = #tpu.pipeline_mode<synchronous>, transform_indices = @transform_7, window_bounds = array<i64: 1, 32>}, {pipeline_mode = #tpu.pipeline_mode<synchronous>, transform_indices = @transform_8, window_bounds = array<i64: 32, 64>}, {pipeline_mode = #tpu.pipeline_mode<synchronous>, transform_indices = @transform_9, window_bounds = array<i64: 1, 64>}, {pipeline_mode = #tpu.pipeline_mode<synchronous>, transform_indices = @transform_10, window_bounds = array<i64: 64, 32>}, {pipeline_mode = #tpu.pipeline_mode<synchronous>, transform_indices = @transform_11, window_bounds = array<i64: 1, 32>}, {pipeline_mode = #tpu.pipeline_mode<synchronous>, transform_indices = @transform_12, window_bounds = array<i64: 1, 32>}, {pipeline_mode = #tpu.pipeline_mode<synchronous>, transform_indices = @transform_13, window_bounds = array<i64: 1, 32>}, {pipeline_mode = #tpu.pipeline_mode<synchronous>, transform_indices = @transform_14, window_bounds = array<i64: 1, 32>}, {pipeline_mode = #tpu.pipeline_mode<synchronous>, transform_indices = @transform_15, window_bounds = array<i64: 1, 32>}, {transform_indices = @transform_16, window_bounds = array<i64: 1, 8, 32>}]} {
    %c0 = arith.constant 0 : index
    %c0_0 = arith.constant 0 : index
    %c0_1 = arith.constant 0 : index
    %0 = vector.load %arg1[%c0, %c0_0, %c0_1] : memref<1x8x32xf32, #tpu.memory_space<vmem>>, vector<1x8x32xf32>
    %1 = vector.shape_cast %0 : vector<1x8x32xf32> to vector<8x32xf32>
    %c0_2 = arith.constant 0 : index
    %c0_3 = arith.constant 0 : index
    %2 = vector.load %arg3[%c0_2, %c0_3] : memref<32x96xf32, #tpu.memory_space<vmem>>, vector<32x96xf32>
    %3 = arith.truncf %1 : vector<8x32xf32> to vector<8x32xbf16>
    %4 = arith.truncf %2 : vector<32x96xf32> to vector<32x96xbf16>
    %cst = arith.constant dense<0.000000e+00> : vector<8x96xf32>
    %5 = tpu.matmul %3, %4, %cst {dimension_numbers = #tpu.dot_dimension_numbers<[1], [0], [0], [1], [0, 0, 1, 1], [], []>} : vector<8x32xbf16>, vector<32x96xbf16>, vector<8x96xf32> -> vector<8x96xf32>
    %c0_4 = arith.constant 0 : index
    %c0_5 = arith.constant 0 : index
    %6 = vector.load %arg4[%c0_4, %c0_5] : memref<1x96xf32, #tpu.memory_space<vmem>>, vector<1x96xf32>
    %7 = vector.broadcast %6 : vector<1x96xf32> to vector<8x96xf32>
    %8 = arith.addf %5, %7 : vector<8x96xf32>
    %9 = vector.extract_strided_slice %8 {offsets = [0, 0], sizes = [8, 32], strides = [1, 1]} : vector<8x96xf32> to vector<8x32xf32>
    %10 = vector.extract_strided_slice %8 {offsets = [0, 32], sizes = [8, 32], strides = [1, 1]} : vector<8x96xf32> to vector<8x32xf32>
    %11 = vector.extract_strided_slice %8 {offsets = [0, 64], sizes = [8, 32], strides = [1, 1]} : vector<8x96xf32> to vector<8x32xf32>
    %c0_6 = arith.constant 0 : index
    %c0_7 = arith.constant 0 : index
    %12 = vector.load %arg2[%c0_6, %c0_7] : memref<32x32xf32, #tpu.memory_space<vmem>>, vector<32x32xf32>
    %13 = vector.extract_strided_slice %9 {offsets = [0, 0], sizes = [8, 8], strides = [1, 1]} : vector<8x32xf32> to vector<8x8xf32>
    %14 = vector.extract_strided_slice %9 {offsets = [0, 8], sizes = [8, 8], strides = [1, 1]} : vector<8x32xf32> to vector<8x8xf32>
    %15 = vector.extract_strided_slice %9 {offsets = [0, 16], sizes = [8, 8], strides = [1, 1]} : vector<8x32xf32> to vector<8x8xf32>
    %16 = vector.extract_strided_slice %9 {offsets = [0, 24], sizes = [8, 8], strides = [1, 1]} : vector<8x32xf32> to vector<8x8xf32>
    %17 = tpu.concatenate %13, %14, %15, %16 in 0 : vector<8x8xf32>, vector<8x8xf32>, vector<8x8xf32>, vector<8x8xf32> -> vector<32x8xf32>
    %18 = vector.extract_strided_slice %10 {offsets = [0, 0], sizes = [8, 8], strides = [1, 1]} : vector<8x32xf32> to vector<8x8xf32>
    %19 = vector.extract_strided_slice %10 {offsets = [0, 8], sizes = [8, 8], strides = [1, 1]} : vector<8x32xf32> to vector<8x8xf32>
    %20 = vector.extract_strided_slice %10 {offsets = [0, 16], sizes = [8, 8], strides = [1, 1]} : vector<8x32xf32> to vector<8x8xf32>
    %21 = vector.extract_strided_slice %10 {offsets = [0, 24], sizes = [8, 8], strides = [1, 1]} : vector<8x32xf32> to vector<8x8xf32>
    %22 = tpu.concatenate %18, %19, %20, %21 in 0 : vector<8x8xf32>, vector<8x8xf32>, vector<8x8xf32>, vector<8x8xf32> -> vector<32x8xf32>
    %23 = vector.extract_strided_slice %11 {offsets = [0, 0], sizes = [8, 8], strides = [1, 1]} : vector<8x32xf32> to vector<8x8xf32>
    %24 = vector.extract_strided_slice %11 {offsets = [0, 8], sizes = [8, 8], strides = [1, 1]} : vector<8x32xf32> to vector<8x8xf32>
    %25 = vector.extract_strided_slice %11 {offsets = [0, 16], sizes = [8, 8], strides = [1, 1]} : vector<8x32xf32> to vector<8x8xf32>
    %26 = vector.extract_strided_slice %11 {offsets = [0, 24], sizes = [8, 8], strides = [1, 1]} : vector<8x32xf32> to vector<8x8xf32>
    %27 = tpu.concatenate %23, %24, %25, %26 in 0 : vector<8x8xf32>, vector<8x8xf32>, vector<8x8xf32>, vector<8x8xf32> -> vector<32x8xf32>
    %28 = arith.truncf %17 : vector<32x8xf32> to vector<32x8xbf16>
    %29 = arith.truncf %22 : vector<32x8xf32> to vector<32x8xbf16>
    %cst_8 = arith.constant dense<0.000000e+00> : vector<32x32xf32>
    %30 = tpu.matmul %28, %29, %cst_8 {dimension_numbers = #tpu.dot_dimension_numbers<[1], [1], [0], [0], [0, 0, 1, 0], [], []>} : vector<32x8xbf16>, vector<32x8xbf16>, vector<32x32xf32> -> vector<32x32xf32>
    %cst_9 = arith.constant 0.353553385 : f32
    %31 = vector.broadcast %cst_9 : f32 to vector<32x32xf32>
    %32 = arith.mulf %30, %31 : vector<32x32xf32>
    %33 = arith.addf %32, %12 : vector<32x32xf32>
    %cst_10 = arith.constant dense<0xFF800000> : vector<32xf32>
    %34 = vector.multi_reduction <maximumf>, %33, %cst_10 [1] : vector<32x32xf32> to vector<32xf32>
    %35 = vector.shape_cast %34 : vector<32xf32> to vector<32x1xf32>
    %36 = vector.broadcast %35 : vector<32x1xf32> to vector<32x32xf32>
    %37 = arith.subf %33, %36 : vector<32x32xf32>
    %38 = math.exp %37 : vector<32x32xf32>
    %cst_11 = arith.constant dense<0.000000e+00> : vector<32xf32>
    %39 = vector.multi_reduction <add>, %38, %cst_11 [1] : vector<32x32xf32> to vector<32xf32>
    %40 = vector.shape_cast %39 : vector<32xf32> to vector<32x1xf32>
    %41 = tpu.reciprocal %40 {approx = true} : vector<32x1xf32> -> vector<32x1xf32>
    %42 = vector.broadcast %41 : vector<32x1xf32> to vector<32x32xf32>
    %43 = arith.mulf %38, %42 : vector<32x32xf32>
    %44 = arith.truncf %43 : vector<32x32xf32> to vector<32x32xbf16>
    %45 = arith.truncf %27 : vector<32x8xf32> to vector<32x8xbf16>
    %cst_12 = arith.constant dense<0.000000e+00> : vector<32x8xf32>
    %46 = tpu.matmul %44, %45, %cst_12 {dimension_numbers = #tpu.dot_dimension_numbers<[1], [0], [0], [1], [0, 0, 1, 1], [], []>} : vector<32x32xbf16>, vector<32x8xbf16>, vector<32x8xf32> -> vector<32x8xf32>
    %47 = vector.extract_strided_slice %46 {offsets = [0, 0], sizes = [8, 8], strides = [1, 1]} : vector<32x8xf32> to vector<8x8xf32>
    %48 = vector.extract_strided_slice %46 {offsets = [8, 0], sizes = [8, 8], strides = [1, 1]} : vector<32x8xf32> to vector<8x8xf32>
    %49 = vector.extract_strided_slice %46 {offsets = [16, 0], sizes = [8, 8], strides = [1, 1]} : vector<32x8xf32> to vector<8x8xf32>
    %50 = vector.extract_strided_slice %46 {offsets = [24, 0], sizes = [8, 8], strides = [1, 1]} : vector<32x8xf32> to vector<8x8xf32>
    %51 = tpu.concatenate %47, %48, %49, %50 in 1 : vector<8x8xf32>, vector<8x8xf32>, vector<8x8xf32>, vector<8x8xf32> -> vector<8x32xf32>
    %c0_13 = arith.constant 0 : index
    %c0_14 = arith.constant 0 : index
    %52 = vector.load %arg5[%c0_13, %c0_14] : memref<32x32xf32, #tpu.memory_space<vmem>>, vector<32x32xf32>
    %53 = arith.truncf %51 : vector<8x32xf32> to vector<8x32xbf16>
    %54 = arith.truncf %52 : vector<32x32xf32> to vector<32x32xbf16>
    %cst_15 = arith.constant dense<0.000000e+00> : vector<8x32xf32>
    %55 = tpu.matmul %53, %54, %cst_15 {dimension_numbers = #tpu.dot_dimension_numbers<[1], [0], [0], [1], [0, 0, 1, 1], [], []>} : vector<8x32xbf16>, vector<32x32xbf16>, vector<8x32xf32> -> vector<8x32xf32>
    %56 = arith.addf %1, %55 : vector<8x32xf32>
    %c0_16 = arith.constant 0 : index
    %c0_17 = arith.constant 0 : index
    %57 = vector.load %arg6[%c0_16, %c0_17] : memref<1x32xf32, #tpu.memory_space<vmem>>, vector<1x32xf32>
    %58 = vector.broadcast %57 : vector<1x32xf32> to vector<8x32xf32>
    %59 = arith.addf %56, %58 : vector<8x32xf32>
    %c0_18 = arith.constant 0 : index
    %c0_19 = arith.constant 0 : index
    %60 = vector.load %arg7[%c0_18, %c0_19] : memref<1x32xf32, #tpu.memory_space<vmem>>, vector<1x32xf32>
    %c0_20 = arith.constant 0 : index
    %c0_21 = arith.constant 0 : index
    %61 = vector.load %arg8[%c0_20, %c0_21] : memref<1x32xf32, #tpu.memory_space<vmem>>, vector<1x32xf32>
    %cst_22 = arith.constant dense<0.000000e+00> : vector<8xf32>
    %62 = vector.multi_reduction <add>, %59, %cst_22 [1] : vector<8x32xf32> to vector<8xf32>
    %63 = vector.shape_cast %62 : vector<8xf32> to vector<8x1xf32>
    %cst_23 = arith.constant 3.200000e+01 : f32
    %64 = vector.broadcast %cst_23 : f32 to vector<8x1xf32>
    %65 = arith.divf %63, %64 : vector<8x1xf32>
    %66 = vector.broadcast %65 : vector<8x1xf32> to vector<8x32xf32>
    %67 = arith.subf %59, %66 : vector<8x32xf32>
    %68 = arith.mulf %67, %67 : vector<8x32xf32>
    %cst_24 = arith.constant dense<0.000000e+00> : vector<8xf32>
    %69 = vector.multi_reduction <add>, %68, %cst_24 [1] : vector<8x32xf32> to vector<8xf32>
    %70 = vector.shape_cast %69 : vector<8xf32> to vector<8x1xf32>
    %cst_25 = arith.constant 3.200000e+01 : f32
    %71 = vector.broadcast %cst_25 : f32 to vector<8x1xf32>
    %72 = arith.divf %70, %71 : vector<8x1xf32>
    %cst_26 = arith.constant 9.99999974E-6 : f32
    %73 = vector.broadcast %cst_26 : f32 to vector<8x1xf32>
    %74 = arith.addf %72, %73 : vector<8x1xf32>
    %75 = math.rsqrt %74 : vector<8x1xf32>
    %76 = vector.broadcast %75 : vector<8x1xf32> to vector<8x32xf32>
    %77 = arith.mulf %67, %76 : vector<8x32xf32>
    %78 = vector.broadcast %60 : vector<1x32xf32> to vector<8x32xf32>
    %79 = arith.mulf %77, %78 : vector<8x32xf32>
    %80 = vector.broadcast %61 : vector<1x32xf32> to vector<8x32xf32>
    %81 = arith.addf %79, %80 : vector<8x32xf32>
    %c0_27 = arith.constant 0 : index
    %c0_28 = arith.constant 0 : index
    %82 = vector.load %arg9[%c0_27, %c0_28] : memref<32x64xf32, #tpu.memory_space<vmem>>, vector<32x64xf32>
    %83 = arith.truncf %81 : vector<8x32xf32> to vector<8x32xbf16>
    %84 = arith.truncf %82 : vector<32x64xf32> to vector<32x64xbf16>
    %cst_29 = arith.constant dense<0.000000e+00> : vector<8x64xf32>
    %85 = tpu.matmul %83, %84, %cst_29 {dimension_numbers = #tpu.dot_dimension_numbers<[1], [0], [0], [1], [0, 0, 1, 1], [], []>} : vector<8x32xbf16>, vector<32x64xbf16>, vector<8x64xf32> -> vector<8x64xf32>
    %c0_30 = arith.constant 0 : index
    %c0_31 = arith.constant 0 : index
    %86 = vector.load %arg10[%c0_30, %c0_31] : memref<1x64xf32, #tpu.memory_space<vmem>>, vector<1x64xf32>
    %87 = vector.broadcast %86 : vector<1x64xf32> to vector<8x64xf32>
    %88 = arith.addf %85, %87 : vector<8x64xf32>
    %cst_32 = arith.constant 5.000000e-01 : f32
    %89 = vector.broadcast %cst_32 : f32 to vector<8x64xf32>
    %90 = arith.mulf %89, %88 : vector<8x64xf32>
    %cst_33 = arith.constant 4.471500e-02 : f32
    %91 = vector.broadcast %cst_33 : f32 to vector<8x64xf32>
    %92 = arith.mulf %91, %88 : vector<8x64xf32>
    %93 = arith.mulf %92, %88 : vector<8x64xf32>
    %94 = arith.mulf %93, %88 : vector<8x64xf32>
    %95 = arith.addf %88, %94 : vector<8x64xf32>
    %cst_34 = arith.constant 0.797884583 : f32
    %96 = vector.broadcast %cst_34 : f32 to vector<8x64xf32>
    %97 = arith.mulf %96, %95 : vector<8x64xf32>
    %98 = math.tanh %97 : vector<8x64xf32>
    %cst_35 = arith.constant 1.000000e+00 : f32
    %99 = vector.broadcast %cst_35 : f32 to vector<8x64xf32>
    %100 = arith.addf %99, %98 : vector<8x64xf32>
    %101 = arith.mulf %90, %100 : vector<8x64xf32>
    %c0_36 = arith.constant 0 : index
    %c0_37 = arith.constant 0 : index
    %102 = vector.load %arg11[%c0_36, %c0_37] : memref<64x32xf32, #tpu.memory_space<vmem>>, vector<64x32xf32>
    %103 = arith.truncf %101 : vector<8x64xf32> to vector<8x64xbf16>
    %104 = arith.truncf %102 : vector<64x32xf32> to vector<64x32xbf16>
    %cst_38 = arith.constant dense<0.000000e+00> : vector<8x32xf32>
    %105 = tpu.matmul %103, %104, %cst_38 {dimension_numbers = #tpu.dot_dimension_numbers<[1], [0], [0], [1], [0, 0, 1, 1], [], []>} : vector<8x64xbf16>, vector<64x32xbf16>, vector<8x32xf32> -> vector<8x32xf32>
    %106 = arith.addf %81, %105 : vector<8x32xf32>
    %c0_39 = arith.constant 0 : index
    %c0_40 = arith.constant 0 : index
    %107 = vector.load %arg12[%c0_39, %c0_40] : memref<1x32xf32, #tpu.memory_space<vmem>>, vector<1x32xf32>
    %108 = vector.broadcast %107 : vector<1x32xf32> to vector<8x32xf32>
    %109 = arith.addf %106, %108 : vector<8x32xf32>
    %c0_41 = arith.constant 0 : index
    %c0_42 = arith.constant 0 : index
    %110 = vector.load %arg13[%c0_41, %c0_42] : memref<1x32xf32, #tpu.memory_space<vmem>>, vector<1x32xf32>
    %c0_43 = arith.constant 0 : index
    %c0_44 = arith.constant 0 : index
    %111 = vector.load %arg14[%c0_43, %c0_44] : memref<1x32xf32, #tpu.memory_space<vmem>>, vector<1x32xf32>
    %cst_45 = arith.constant dense<0.000000e+00> : vector<8xf32>
    %112 = vector.multi_reduction <add>, %109, %cst_45 [1] : vector<8x32xf32> to vector<8xf32>
    %113 = vector.shape_cast %112 : vector<8xf32> to vector<8x1xf32>
    %cst_46 = arith.constant 3.200000e+01 : f32
    %114 = vector.broadcast %cst_46 : f32 to vector<8x1xf32>
    %115 = arith.divf %113, %114 : vector<8x1xf32>
    %116 = vector.broadcast %115 : vector<8x1xf32> to vector<8x32xf32>
    %117 = arith.subf %109, %116 : vector<8x32xf32>
    %118 = arith.mulf %117, %117 : vector<8x32xf32>
    %cst_47 = arith.constant dense<0.000000e+00> : vector<8xf32>
    %119 = vector.multi_reduction <add>, %118, %cst_47 [1] : vector<8x32xf32> to vector<8xf32>
    %120 = vector.shape_cast %119 : vector<8xf32> to vector<8x1xf32>
    %cst_48 = arith.constant 3.200000e+01 : f32
    %121 = vector.broadcast %cst_48 : f32 to vector<8x1xf32>
    %122 = arith.divf %120, %121 : vector<8x1xf32>
    %cst_49 = arith.constant 9.99999974E-6 : f32
    %123 = vector.broadcast %cst_49 : f32 to vector<8x1xf32>
    %124 = arith.addf %122, %123 : vector<8x1xf32>
    %125 = math.rsqrt %124 : vector<8x1xf32>
    %126 = vector.broadcast %125 : vector<8x1xf32> to vector<8x32xf32>
    %127 = arith.mulf %117, %126 : vector<8x32xf32>
    %128 = vector.broadcast %110 : vector<1x32xf32> to vector<8x32xf32>
    %129 = arith.mulf %127, %128 : vector<8x32xf32>
    %130 = vector.broadcast %111 : vector<1x32xf32> to vector<8x32xf32>
    %131 = arith.addf %129, %130 : vector<8x32xf32>
    %c0_50 = arith.constant 0 : index
    %c0_51 = arith.constant 0 : index
    %132 = vector.load %arg15[%c0_50, %c0_51] : memref<1x32xf32, #tpu.memory_space<vmem>>, vector<1x32xf32>
    %c0_52 = arith.constant 0 : index
    %c0_53 = arith.constant 0 : index
    %133 = vector.load %arg16[%c0_52, %c0_53] : memref<1x32xf32, #tpu.memory_space<vmem>>, vector<1x32xf32>
    %cst_54 = arith.constant dense<0.000000e+00> : vector<8xf32>
    %134 = vector.multi_reduction <add>, %131, %cst_54 [1] : vector<8x32xf32> to vector<8xf32>
    %135 = vector.shape_cast %134 : vector<8xf32> to vector<8x1xf32>
    %cst_55 = arith.constant 3.200000e+01 : f32
    %136 = vector.broadcast %cst_55 : f32 to vector<8x1xf32>
    %137 = arith.divf %135, %136 : vector<8x1xf32>
    %138 = vector.broadcast %137 : vector<8x1xf32> to vector<8x32xf32>
    %139 = arith.subf %131, %138 : vector<8x32xf32>
    %140 = arith.mulf %139, %139 : vector<8x32xf32>
    %cst_56 = arith.constant dense<0.000000e+00> : vector<8xf32>
    %141 = vector.multi_reduction <add>, %140, %cst_56 [1] : vector<8x32xf32> to vector<8xf32>
    %142 = vector.shape_cast %141 : vector<8xf32> to vector<8x1xf32>
    %cst_57 = arith.constant 3.200000e+01 : f32
    %143 = vector.broadcast %cst_57 : f32 to vector<8x1xf32>
    %144 = arith.divf %142, %143 : vector<8x1xf32>
    %cst_58 = arith.constant 9.99999974E-6 : f32
    %145 = vector.broadcast %cst_58 : f32 to vector<8x1xf32>
    %146 = arith.addf %144, %145 : vector<8x1xf32>
    %147 = math.rsqrt %146 : vector<8x1xf32>
    %148 = vector.broadcast %147 : vector<8x1xf32> to vector<8x32xf32>
    %149 = arith.mulf %139, %148 : vector<8x32xf32>
    %150 = vector.broadcast %132 : vector<1x32xf32> to vector<8x32xf32>
    %151 = arith.mulf %149, %150 : vector<8x32xf32>
    %152 = vector.broadcast %133 : vector<1x32xf32> to vector<8x32xf32>
    %153 = arith.addf %151, %152 : vector<8x32xf32>
    %c0_59 = arith.constant 0 : index
    %c0_60 = arith.constant 0 : index
    %c0_61 = arith.constant 0 : index
    %154 = vector.load %arg17[%c0_59, %c0_60, %c0_61] : memref<1x8x32xf32, #tpu.memory_space<vmem>>, vector<1x8x32xf32>
    %155 = vector.shape_cast %154 : vector<1x8x32xf32> to vector<8x32xf32>
    %156 = vector.shape_cast %153 : vector<8x32xf32> to vector<1x8x32xf32>
    tpu.vector_store %arg17[%c0_59, %c0_60, %c0_61], %156 {strides = array<i32>} : memref<1x8x32xf32, #tpu.memory_space<vmem>>, vector<1x8x32xf32>,
    return
  }
  func.func @transform_0(%arg0: i32) -> (i32, i32, i32) {
    %c0_i32 = arith.constant 0 : i32
    %c0_i32_0 = arith.constant 0 : i32
    %c0_i32_1 = arith.constant 0 : i32
    return %arg0, %c0_i32, %c0_i32_0 : i32, i32, i32
  }
  func.func @transform_1(%arg0: i32) -> (i32, i32) {
    %c0_i32 = arith.constant 0 : i32
    %c0_i32_0 = arith.constant 0 : i32
    %c0_i32_1 = arith.constant 0 : i32
    return %c0_i32, %c0_i32_0 : i32, i32
  }
  func.func @transform_2(%arg0: i32) -> (i32, i32) {
    %c0_i32 = arith.constant 0 : i32
    %c0_i32_0 = arith.constant 0 : i32
    %c0_i32_1 = arith.constant 0 : i32
    return %c0_i32, %c0_i32_0 : i32, i32
  }
  func.func @transform_3(%arg0: i32) -> (i32, i32) {
    %c0_i32 = arith.constant 0 : i32
    %c0_i32_0 = arith.constant 0 : i32
    %c0_i32_1 = arith.constant 0 : i32
    return %c0_i32, %c0_i32_0 : i32, i32
  }
  func.func @transform_4(%arg0: i32) -> (i32, i32) {
    %c0_i32 = arith.constant 0 : i32
    %c0_i32_0 = arith.constant 0 : i32
    %c0_i32_1 = arith.constant 0 : i32
    return %c0_i32, %c0_i32_0 : i32, i32
  }
  func.func @transform_5(%arg0: i32) -> (i32, i32) {
    %c0_i32 = arith.constant 0 : i32
    %c0_i32_0 = arith.constant 0 : i32
    %c0_i32_1 = arith.constant 0 : i32
    return %c0_i32, %c0_i32_0 : i32, i32
  }
  func.func @transform_6(%arg0: i32) -> (i32, i32) {
    %c0_i32 = arith.constant 0 : i32
    %c0_i32_0 = arith.constant 0 : i32
    %c0_i32_1 = arith.constant 0 : i32
    return %c0_i32, %c0_i32_0 : i32, i32
  }
  func.func @transform_7(%arg0: i32) -> (i32, i32) {
    %c0_i32 = arith.constant 0 : i32
    %c0_i32_0 = arith.constant 0 : i32
    %c0_i32_1 = arith.constant 0 : i32
    return %c0_i32, %c0_i32_0 : i32, i32
  }
  func.func @transform_8(%arg0: i32) -> (i32, i32) {
    %c0_i32 = arith.constant 0 : i32
    %c0_i32_0 = arith.constant 0 : i32
    %c0_i32_1 = arith.constant 0 : i32
    return %c0_i32, %c0_i32_0 : i32, i32
  }
  func.func @transform_9(%arg0: i32) -> (i32, i32) {
    %c0_i32 = arith.constant 0 : i32
    %c0_i32_0 = arith.constant 0 : i32
    %c0_i32_1 = arith.constant 0 : i32
    return %c0_i32, %c0_i32_0 : i32, i32
  }
  func.func @transform_10(%arg0: i32) -> (i32, i32) {
    %c0_i32 = arith.constant 0 : i32
    %c0_i32_0 = arith.constant 0 : i32
    %c0_i32_1 = arith.constant 0 : i32
    return %c0_i32, %c0_i32_0 : i32, i32
  }
  func.func @transform_11(%arg0: i32) -> (i32, i32) {
    %c0_i32 = arith.constant 0 : i32
    %c0_i32_0 = arith.constant 0 : i32
    %c0_i32_1 = arith.constant 0 : i32
    return %c0_i32, %c0_i32_0 : i32, i32
  }
  func.func @transform_12(%arg0: i32) -> (i32, i32) {
    %c0_i32 = arith.constant 0 : i32
    %c0_i32_0 = arith.constant 0 : i32
    %c0_i32_1 = arith.constant 0 : i32
    return %c0_i32, %c0_i32_0 : i32, i32
  }
  func.func @transform_13(%arg0: i32) -> (i32, i32) {
    %c0_i32 = arith.constant 0 : i32
    %c0_i32_0 = arith.constant 0 : i32
    %c0_i32_1 = arith.constant 0 : i32
    return %c0_i32, %c0_i32_0 : i32, i32
  }
  func.func @transform_14(%arg0: i32) -> (i32, i32) {
    %c0_i32 = arith.constant 0 : i32
    %c0_i32_0 = arith.constant 0 : i32
    %c0_i32_1 = arith.constant 0 : i32
    return %c0_i32, %c0_i32_0 : i32, i32
  }
  func.func @transform_15(%arg0: i32) -> (i32, i32) {
    %c0_i32 = arith.constant 0 : i32
    %c0_i32_0 = arith.constant 0 : i32
    %c0_i32_1 = arith.constant 0 : i32
    return %c0_i32, %c0_i32_0 : i32, i32
  }
  func.func @transform_16(%arg0: i32) -> (i32, i32, i32) {
    %c0_i32 = arith.constant 0 : i32
    %c0_i32_0 = arith.constant 0 : i32
    %c0_i32_1 = arith.constant 0 : i32
    return %arg0, %c0_i32, %c0_i32_0 : i32, i32, i32
  }
}

module attributes {stable_mosaic.version = 11 : i64} {
  func.func @_embed_kernel(%arg0: i32, %arg1: memref<1x18x4xf32, #tpu.memory_space<vmem>>, %arg2: memref<12x32xf32, #tpu.memory_space<vmem>>, %arg3: memref<1x32xf32, #tpu.memory_space<vmem>>, %arg4: memref<1x16x32xf32, #tpu.memory_space<vmem>>, %arg5: memref<1x16x32xf32, #tpu.memory_space<vmem>>) attributes {dimension_semantics = [#tpu.dimension_semantics<parallel>], iteration_bounds = array<i64: 2>, scalar_prefetch = 0 : i64, scratch_operands = 0 : i64, tpu.core_type = #tpu.core_type<tc>, window_params = [{transform_indices = @transform_0, window_bounds = array<i64: 1, 18, 4>}, {pipeline_mode = #tpu.pipeline_mode<synchronous>, transform_indices = @transform_1, window_bounds = array<i64: 12, 32>}, {pipeline_mode = #tpu.pipeline_mode<synchronous>, transform_indices = @transform_2, window_bounds = array<i64: 1, 32>}, {transform_indices = @transform_3, window_bounds = array<i64: 1, 16, 32>}, {transform_indices = @transform_4, window_bounds = array<i64: 1, 16, 32>}]} {
    %c0 = arith.constant 0 : index
    %c0_0 = arith.constant 0 : index
    %c0_1 = arith.constant 0 : index
    %0 = vector.load %arg1[%c0, %c0_0, %c0_1] : memref<1x18x4xf32, #tpu.memory_space<vmem>>, vector<1x18x4xf32>
    %1 = vector.shape_cast %0 : vector<1x18x4xf32> to vector<18x4xf32>
    %c0_2 = arith.constant 0 : index
    %c0_3 = arith.constant 0 : index
    %2 = vector.load %arg2[%c0_2, %c0_3] : memref<12x32xf32, #tpu.memory_space<vmem>>, vector<12x32xf32>
    %3 = vector.extract_strided_slice %1 {offsets = [0, 0], sizes = [16, 4], strides = [1, 1]} : vector<18x4xf32> to vector<16x4xf32>
    %4 = vector.extract_strided_slice %2 {offsets = [0, 0], sizes = [4, 32], strides = [1, 1]} : vector<12x32xf32> to vector<4x32xf32>
    %5 = arith.truncf %3 : vector<16x4xf32> to vector<16x4xbf16>
    %6 = arith.truncf %4 : vector<4x32xf32> to vector<4x32xbf16>
    %cst = arith.constant dense<0.000000e+00> : vector<16x32xf32>
    %7 = tpu.matmul %5, %6, %cst {dimension_numbers = #tpu.dot_dimension_numbers<[1], [0], [0], [1], [0, 0, 1, 1], [], []>} : vector<16x4xbf16>, vector<4x32xbf16>, vector<16x32xf32> -> vector<16x32xf32>
    %8 = vector.extract_strided_slice %1 {offsets = [1, 0], sizes = [16, 4], strides = [1, 1]} : vector<18x4xf32> to vector<16x4xf32>
    %9 = vector.extract_strided_slice %2 {offsets = [4, 0], sizes = [4, 32], strides = [1, 1]} : vector<12x32xf32> to vector<4x32xf32>
    %10 = arith.truncf %8 : vector<16x4xf32> to vector<16x4xbf16>
    %11 = arith.truncf %9 : vector<4x32xf32> to vector<4x32xbf16>
    %cst_4 = arith.constant dense<0.000000e+00> : vector<16x32xf32>
    %12 = tpu.matmul %10, %11, %cst_4 {dimension_numbers = #tpu.dot_dimension_numbers<[1], [0], [0], [1], [0, 0, 1, 1], [], []>} : vector<16x4xbf16>, vector<4x32xbf16>, vector<16x32xf32> -> vector<16x32xf32>
    %13 = arith.addf %7, %12 : vector<16x32xf32>
    %14 = vector.extract_strided_slice %1 {offsets = [2, 0], sizes = [16, 4], strides = [1, 1]} : vector<18x4xf32> to vector<16x4xf32>
    %15 = vector.extract_strided_slice %2 {offsets = [8, 0], sizes = [4, 32], strides = [1, 1]} : vector<12x32xf32> to vector<4x32xf32>
    %16 = arith.truncf %14 : vector<16x4xf32> to vector<16x4xbf16>
    %17 = arith.truncf %15 : vector<4x32xf32> to vector<4x32xbf16>
    %cst_5 = arith.constant dense<0.000000e+00> : vector<16x32xf32>
    %18 = tpu.matmul %16, %17, %cst_5 {dimension_numbers = #tpu.dot_dimension_numbers<[1], [0], [0], [1], [0, 0, 1, 1], [], []>} : vector<16x4xbf16>, vector<4x32xbf16>, vector<16x32xf32> -> vector<16x32xf32>
    %19 = arith.addf %13, %18 : vector<16x32xf32>
    %c0_6 = arith.constant 0 : index
    %c0_7 = arith.constant 0 : index
    %20 = vector.load %arg3[%c0_6, %c0_7] : memref<1x32xf32, #tpu.memory_space<vmem>>, vector<1x32xf32>
    %21 = vector.broadcast %20 : vector<1x32xf32> to vector<16x32xf32>
    %22 = arith.addf %19, %21 : vector<16x32xf32>
    %c0_8 = arith.constant 0 : index
    %c0_9 = arith.constant 0 : index
    %c0_10 = arith.constant 0 : index
    %23 = vector.load %arg4[%c0_8, %c0_9, %c0_10] : memref<1x16x32xf32, #tpu.memory_space<vmem>>, vector<1x16x32xf32>
    %24 = vector.shape_cast %23 : vector<1x16x32xf32> to vector<16x32xf32>
    %25 = arith.addf %22, %24 : vector<16x32xf32>
    %c0_11 = arith.constant 0 : index
    %c0_12 = arith.constant 0 : index
    %c0_13 = arith.constant 0 : index
    %26 = vector.load %arg5[%c0_11, %c0_12, %c0_13] : memref<1x16x32xf32, #tpu.memory_space<vmem>>, vector<1x16x32xf32>
    %27 = vector.shape_cast %26 : vector<1x16x32xf32> to vector<16x32xf32>
    %28 = vector.shape_cast %25 : vector<16x32xf32> to vector<1x16x32xf32>
    tpu.vector_store %arg5[%c0_11, %c0_12, %c0_13], %28 {strides = array<i32>} : memref<1x16x32xf32, #tpu.memory_space<vmem>>, vector<1x16x32xf32>,
    return
  }
  func.func @transform_0(%arg0: i32) -> (i32, i32, i32) {
    %c0_i32 = arith.constant 0 : i32
    %c0_i32_0 = arith.constant 0 : i32
    %c0_i32_1 = arith.constant 0 : i32
    return %arg0, %c0_i32, %c0_i32_0 : i32, i32, i32
  }
  func.func @transform_1(%arg0: i32) -> (i32, i32) {
    %c0_i32 = arith.constant 0 : i32
    %c0_i32_0 = arith.constant 0 : i32
    %c0_i32_1 = arith.constant 0 : i32
    return %c0_i32, %c0_i32_0 : i32, i32
  }
  func.func @transform_2(%arg0: i32) -> (i32, i32) {
    %c0_i32 = arith.constant 0 : i32
    %c0_i32_0 = arith.constant 0 : i32
    %c0_i32_1 = arith.constant 0 : i32
    return %c0_i32, %c0_i32_0 : i32, i32
  }
  func.func @transform_3(%arg0: i32) -> (i32, i32, i32) {
    %c0_i32 = arith.constant 0 : i32
    %c0_i32_0 = arith.constant 0 : i32
    %c0_i32_1 = arith.constant 0 : i32
    return %arg0, %c0_i32, %c0_i32_0 : i32, i32, i32
  }
  func.func @transform_4(%arg0: i32) -> (i32, i32, i32) {
    %c0_i32 = arith.constant 0 : i32
    %c0_i32_0 = arith.constant 0 : i32
    %c0_i32_1 = arith.constant 0 : i32
    return %arg0, %c0_i32, %c0_i32_0 : i32, i32, i32
  }
}

module attributes {stable_mosaic.version = 11 : i64} {
  func.func @_encoder_layer_kernel(%arg0: i32, %arg1: memref<1x16x32xf32, #tpu.memory_space<vmem>>, %arg2: memref<64x64xf32, #tpu.memory_space<vmem>>, %arg3: memref<32x96xf32, #tpu.memory_space<vmem>>, %arg4: memref<1x96xf32, #tpu.memory_space<vmem>>, %arg5: memref<32x32xf32, #tpu.memory_space<vmem>>, %arg6: memref<1x32xf32, #tpu.memory_space<vmem>>, %arg7: memref<1x32xf32, #tpu.memory_space<vmem>>, %arg8: memref<1x32xf32, #tpu.memory_space<vmem>>, %arg9: memref<32x64xf32, #tpu.memory_space<vmem>>, %arg10: memref<1x64xf32, #tpu.memory_space<vmem>>, %arg11: memref<64x32xf32, #tpu.memory_space<vmem>>, %arg12: memref<1x32xf32, #tpu.memory_space<vmem>>, %arg13: memref<1x32xf32, #tpu.memory_space<vmem>>, %arg14: memref<1x32xf32, #tpu.memory_space<vmem>>, %arg15: memref<1x16x32xf32, #tpu.memory_space<vmem>>) attributes {dimension_semantics = [#tpu.dimension_semantics<parallel>], iteration_bounds = array<i64: 2>, scalar_prefetch = 0 : i64, scratch_operands = 0 : i64, tpu.core_type = #tpu.core_type<tc>, window_params = [{transform_indices = @transform_0, window_bounds = array<i64: 1, 16, 32>}, {pipeline_mode = #tpu.pipeline_mode<synchronous>, transform_indices = @transform_1, window_bounds = array<i64: 64, 64>}, {pipeline_mode = #tpu.pipeline_mode<synchronous>, transform_indices = @transform_2, window_bounds = array<i64: 32, 96>}, {pipeline_mode = #tpu.pipeline_mode<synchronous>, transform_indices = @transform_3, window_bounds = array<i64: 1, 96>}, {pipeline_mode = #tpu.pipeline_mode<synchronous>, transform_indices = @transform_4, window_bounds = array<i64: 32, 32>}, {pipeline_mode = #tpu.pipeline_mode<synchronous>, transform_indices = @transform_5, window_bounds = array<i64: 1, 32>}, {pipeline_mode = #tpu.pipeline_mode<synchronous>, transform_indices = @transform_6, window_bounds = array<i64: 1, 32>}, {pipeline_mode = #tpu.pipeline_mode<synchronous>, transform_indices = @transform_7, window_bounds = array<i64: 1, 32>}, {pipeline_mode = #tpu.pipeline_mode<synchronous>, transform_indices = @transform_8, window_bounds = array<i64: 32, 64>}, {pipeline_mode = #tpu.pipeline_mode<synchronous>, transform_indices = @transform_9, window_bounds = array<i64: 1, 64>}, {pipeline_mode = #tpu.pipeline_mode<synchronous>, transform_indices = @transform_10, window_bounds = array<i64: 64, 32>}, {pipeline_mode = #tpu.pipeline_mode<synchronous>, transform_indices = @transform_11, window_bounds = array<i64: 1, 32>}, {pipeline_mode = #tpu.pipeline_mode<synchronous>, transform_indices = @transform_12, window_bounds = array<i64: 1, 32>}, {pipeline_mode = #tpu.pipeline_mode<synchronous>, transform_indices = @transform_13, window_bounds = array<i64: 1, 32>}, {transform_indices = @transform_14, window_bounds = array<i64: 1, 16, 32>}]} {
    %c0 = arith.constant 0 : index
    %c0_0 = arith.constant 0 : index
    %c0_1 = arith.constant 0 : index
    %0 = vector.load %arg1[%c0, %c0_0, %c0_1] : memref<1x16x32xf32, #tpu.memory_space<vmem>>, vector<1x16x32xf32>
    %1 = vector.shape_cast %0 : vector<1x16x32xf32> to vector<16x32xf32>
    %c0_2 = arith.constant 0 : index
    %c0_3 = arith.constant 0 : index
    %2 = vector.load %arg3[%c0_2, %c0_3] : memref<32x96xf32, #tpu.memory_space<vmem>>, vector<32x96xf32>
    %3 = arith.truncf %1 : vector<16x32xf32> to vector<16x32xbf16>
    %4 = arith.truncf %2 : vector<32x96xf32> to vector<32x96xbf16>
    %cst = arith.constant dense<0.000000e+00> : vector<16x96xf32>
    %5 = tpu.matmul %3, %4, %cst {dimension_numbers = #tpu.dot_dimension_numbers<[1], [0], [0], [1], [0, 0, 1, 1], [], []>} : vector<16x32xbf16>, vector<32x96xbf16>, vector<16x96xf32> -> vector<16x96xf32>
    %c0_4 = arith.constant 0 : index
    %c0_5 = arith.constant 0 : index
    %6 = vector.load %arg4[%c0_4, %c0_5] : memref<1x96xf32, #tpu.memory_space<vmem>>, vector<1x96xf32>
    %7 = vector.broadcast %6 : vector<1x96xf32> to vector<16x96xf32>
    %8 = arith.addf %5, %7 : vector<16x96xf32>
    %9 = vector.extract_strided_slice %8 {offsets = [0, 0], sizes = [16, 32], strides = [1, 1]} : vector<16x96xf32> to vector<16x32xf32>
    %10 = vector.extract_strided_slice %8 {offsets = [0, 32], sizes = [16, 32], strides = [1, 1]} : vector<16x96xf32> to vector<16x32xf32>
    %11 = vector.extract_strided_slice %8 {offsets = [0, 64], sizes = [16, 32], strides = [1, 1]} : vector<16x96xf32> to vector<16x32xf32>
    %c0_6 = arith.constant 0 : index
    %c0_7 = arith.constant 0 : index
    %12 = vector.load %arg2[%c0_6, %c0_7] : memref<64x64xf32, #tpu.memory_space<vmem>>, vector<64x64xf32>
    %13 = vector.extract_strided_slice %9 {offsets = [0, 0], sizes = [16, 8], strides = [1, 1]} : vector<16x32xf32> to vector<16x8xf32>
    %14 = vector.extract_strided_slice %9 {offsets = [0, 8], sizes = [16, 8], strides = [1, 1]} : vector<16x32xf32> to vector<16x8xf32>
    %15 = vector.extract_strided_slice %9 {offsets = [0, 16], sizes = [16, 8], strides = [1, 1]} : vector<16x32xf32> to vector<16x8xf32>
    %16 = vector.extract_strided_slice %9 {offsets = [0, 24], sizes = [16, 8], strides = [1, 1]} : vector<16x32xf32> to vector<16x8xf32>
    %17 = tpu.concatenate %13, %14, %15, %16 in 0 : vector<16x8xf32>, vector<16x8xf32>, vector<16x8xf32>, vector<16x8xf32> -> vector<64x8xf32>
    %18 = vector.extract_strided_slice %10 {offsets = [0, 0], sizes = [16, 8], strides = [1, 1]} : vector<16x32xf32> to vector<16x8xf32>
    %19 = vector.extract_strided_slice %10 {offsets = [0, 8], sizes = [16, 8], strides = [1, 1]} : vector<16x32xf32> to vector<16x8xf32>
    %20 = vector.extract_strided_slice %10 {offsets = [0, 16], sizes = [16, 8], strides = [1, 1]} : vector<16x32xf32> to vector<16x8xf32>
    %21 = vector.extract_strided_slice %10 {offsets = [0, 24], sizes = [16, 8], strides = [1, 1]} : vector<16x32xf32> to vector<16x8xf32>
    %22 = tpu.concatenate %18, %19, %20, %21 in 0 : vector<16x8xf32>, vector<16x8xf32>, vector<16x8xf32>, vector<16x8xf32> -> vector<64x8xf32>
    %23 = vector.extract_strided_slice %11 {offsets = [0, 0], sizes = [16, 8], strides = [1, 1]} : vector<16x32xf32> to vector<16x8xf32>
    %24 = vector.extract_strided_slice %11 {offsets = [0, 8], sizes = [16, 8], strides = [1, 1]} : vector<16x32xf32> to vector<16x8xf32>
    %25 = vector.extract_strided_slice %11 {offsets = [0, 16], sizes = [16, 8], strides = [1, 1]} : vector<16x32xf32> to vector<16x8xf32>
    %26 = vector.extract_strided_slice %11 {offsets = [0, 24], sizes = [16, 8], strides = [1, 1]} : vector<16x32xf32> to vector<16x8xf32>
    %27 = tpu.concatenate %23, %24, %25, %26 in 0 : vector<16x8xf32>, vector<16x8xf32>, vector<16x8xf32>, vector<16x8xf32> -> vector<64x8xf32>
    %28 = arith.truncf %17 : vector<64x8xf32> to vector<64x8xbf16>
    %29 = arith.truncf %22 : vector<64x8xf32> to vector<64x8xbf16>
    %cst_8 = arith.constant dense<0.000000e+00> : vector<64x64xf32>
    %30 = tpu.matmul %28, %29, %cst_8 {dimension_numbers = #tpu.dot_dimension_numbers<[1], [1], [0], [0], [0, 0, 1, 0], [], []>} : vector<64x8xbf16>, vector<64x8xbf16>, vector<64x64xf32> -> vector<64x64xf32>
    %cst_9 = arith.constant 0.353553385 : f32
    %31 = vector.broadcast %cst_9 : f32 to vector<64x64xf32>
    %32 = arith.mulf %30, %31 : vector<64x64xf32>
    %33 = arith.addf %32, %12 : vector<64x64xf32>
    %cst_10 = arith.constant dense<0xFF800000> : vector<64xf32>
    %34 = vector.multi_reduction <maximumf>, %33, %cst_10 [1] : vector<64x64xf32> to vector<64xf32>
    %35 = vector.shape_cast %34 : vector<64xf32> to vector<64x1xf32>
    %36 = vector.broadcast %35 : vector<64x1xf32> to vector<64x64xf32>
    %37 = arith.subf %33, %36 : vector<64x64xf32>
    %38 = math.exp %37 : vector<64x64xf32>
    %cst_11 = arith.constant dense<0.000000e+00> : vector<64xf32>
    %39 = vector.multi_reduction <add>, %38, %cst_11 [1] : vector<64x64xf32> to vector<64xf32>
    %40 = vector.shape_cast %39 : vector<64xf32> to vector<64x1xf32>
    %41 = tpu.reciprocal %40 {approx = true} : vector<64x1xf32> -> vector<64x1xf32>
    %42 = vector.broadcast %41 : vector<64x1xf32> to vector<64x64xf32>
    %43 = arith.mulf %38, %42 : vector<64x64xf32>
    %44 = arith.truncf %43 : vector<64x64xf32> to vector<64x64xbf16>
    %45 = arith.truncf %27 : vector<64x8xf32> to vector<64x8xbf16>
    %cst_12 = arith.constant dense<0.000000e+00> : vector<64x8xf32>
    %46 = tpu.matmul %44, %45, %cst_12 {dimension_numbers = #tpu.dot_dimension_numbers<[1], [0], [0], [1], [0, 0, 1, 1], [], []>} : vector<64x64xbf16>, vector<64x8xbf16>, vector<64x8xf32> -> vector<64x8xf32>
    %47 = vector.extract_strided_slice %46 {offsets = [0, 0], sizes = [16, 8], strides = [1, 1]} : vector<64x8xf32> to vector<16x8xf32>
    %48 = vector.extract_strided_slice %46 {offsets = [16, 0], sizes = [16, 8], strides = [1, 1]} : vector<64x8xf32> to vector<16x8xf32>
    %49 = vector.extract_strided_slice %46 {offsets = [32, 0], sizes = [16, 8], strides = [1, 1]} : vector<64x8xf32> to vector<16x8xf32>
    %50 = vector.extract_strided_slice %46 {offsets = [48, 0], sizes = [16, 8], strides = [1, 1]} : vector<64x8xf32> to vector<16x8xf32>
    %51 = tpu.concatenate %47, %48, %49, %50 in 1 : vector<16x8xf32>, vector<16x8xf32>, vector<16x8xf32>, vector<16x8xf32> -> vector<16x32xf32>
    %c0_13 = arith.constant 0 : index
    %c0_14 = arith.constant 0 : index
    %52 = vector.load %arg5[%c0_13, %c0_14] : memref<32x32xf32, #tpu.memory_space<vmem>>, vector<32x32xf32>
    %53 = arith.truncf %51 : vector<16x32xf32> to vector<16x32xbf16>
    %54 = arith.truncf %52 : vector<32x32xf32> to vector<32x32xbf16>
    %cst_15 = arith.constant dense<0.000000e+00> : vector<16x32xf32>
    %55 = tpu.matmul %53, %54, %cst_15 {dimension_numbers = #tpu.dot_dimension_numbers<[1], [0], [0], [1], [0, 0, 1, 1], [], []>} : vector<16x32xbf16>, vector<32x32xbf16>, vector<16x32xf32> -> vector<16x32xf32>
    %56 = arith.addf %1, %55 : vector<16x32xf32>
    %c0_16 = arith.constant 0 : index
    %c0_17 = arith.constant 0 : index
    %57 = vector.load %arg6[%c0_16, %c0_17] : memref<1x32xf32, #tpu.memory_space<vmem>>, vector<1x32xf32>
    %58 = vector.broadcast %57 : vector<1x32xf32> to vector<16x32xf32>
    %59 = arith.addf %56, %58 : vector<16x32xf32>
    %c0_18 = arith.constant 0 : index
    %c0_19 = arith.constant 0 : index
    %60 = vector.load %arg7[%c0_18, %c0_19] : memref<1x32xf32, #tpu.memory_space<vmem>>, vector<1x32xf32>
    %c0_20 = arith.constant 0 : index
    %c0_21 = arith.constant 0 : index
    %61 = vector.load %arg8[%c0_20, %c0_21] : memref<1x32xf32, #tpu.memory_space<vmem>>, vector<1x32xf32>
    %cst_22 = arith.constant dense<0.000000e+00> : vector<16xf32>
    %62 = vector.multi_reduction <add>, %59, %cst_22 [1] : vector<16x32xf32> to vector<16xf32>
    %63 = vector.shape_cast %62 : vector<16xf32> to vector<16x1xf32>
    %cst_23 = arith.constant 3.200000e+01 : f32
    %64 = vector.broadcast %cst_23 : f32 to vector<16x1xf32>
    %65 = arith.divf %63, %64 : vector<16x1xf32>
    %66 = vector.broadcast %65 : vector<16x1xf32> to vector<16x32xf32>
    %67 = arith.subf %59, %66 : vector<16x32xf32>
    %68 = arith.mulf %67, %67 : vector<16x32xf32>
    %cst_24 = arith.constant dense<0.000000e+00> : vector<16xf32>
    %69 = vector.multi_reduction <add>, %68, %cst_24 [1] : vector<16x32xf32> to vector<16xf32>
    %70 = vector.shape_cast %69 : vector<16xf32> to vector<16x1xf32>
    %cst_25 = arith.constant 3.200000e+01 : f32
    %71 = vector.broadcast %cst_25 : f32 to vector<16x1xf32>
    %72 = arith.divf %70, %71 : vector<16x1xf32>
    %cst_26 = arith.constant 9.99999974E-6 : f32
    %73 = vector.broadcast %cst_26 : f32 to vector<16x1xf32>
    %74 = arith.addf %72, %73 : vector<16x1xf32>
    %75 = math.rsqrt %74 : vector<16x1xf32>
    %76 = vector.broadcast %75 : vector<16x1xf32> to vector<16x32xf32>
    %77 = arith.mulf %67, %76 : vector<16x32xf32>
    %78 = vector.broadcast %60 : vector<1x32xf32> to vector<16x32xf32>
    %79 = arith.mulf %77, %78 : vector<16x32xf32>
    %80 = vector.broadcast %61 : vector<1x32xf32> to vector<16x32xf32>
    %81 = arith.addf %79, %80 : vector<16x32xf32>
    %c0_27 = arith.constant 0 : index
    %c0_28 = arith.constant 0 : index
    %82 = vector.load %arg9[%c0_27, %c0_28] : memref<32x64xf32, #tpu.memory_space<vmem>>, vector<32x64xf32>
    %83 = arith.truncf %81 : vector<16x32xf32> to vector<16x32xbf16>
    %84 = arith.truncf %82 : vector<32x64xf32> to vector<32x64xbf16>
    %cst_29 = arith.constant dense<0.000000e+00> : vector<16x64xf32>
    %85 = tpu.matmul %83, %84, %cst_29 {dimension_numbers = #tpu.dot_dimension_numbers<[1], [0], [0], [1], [0, 0, 1, 1], [], []>} : vector<16x32xbf16>, vector<32x64xbf16>, vector<16x64xf32> -> vector<16x64xf32>
    %c0_30 = arith.constant 0 : index
    %c0_31 = arith.constant 0 : index
    %86 = vector.load %arg10[%c0_30, %c0_31] : memref<1x64xf32, #tpu.memory_space<vmem>>, vector<1x64xf32>
    %87 = vector.broadcast %86 : vector<1x64xf32> to vector<16x64xf32>
    %88 = arith.addf %85, %87 : vector<16x64xf32>
    %cst_32 = arith.constant 5.000000e-01 : f32
    %89 = vector.broadcast %cst_32 : f32 to vector<16x64xf32>
    %90 = arith.mulf %89, %88 : vector<16x64xf32>
    %cst_33 = arith.constant 4.471500e-02 : f32
    %91 = vector.broadcast %cst_33 : f32 to vector<16x64xf32>
    %92 = arith.mulf %91, %88 : vector<16x64xf32>
    %93 = arith.mulf %92, %88 : vector<16x64xf32>
    %94 = arith.mulf %93, %88 : vector<16x64xf32>
    %95 = arith.addf %88, %94 : vector<16x64xf32>
    %cst_34 = arith.constant 0.797884583 : f32
    %96 = vector.broadcast %cst_34 : f32 to vector<16x64xf32>
    %97 = arith.mulf %96, %95 : vector<16x64xf32>
    %98 = math.tanh %97 : vector<16x64xf32>
    %cst_35 = arith.constant 1.000000e+00 : f32
    %99 = vector.broadcast %cst_35 : f32 to vector<16x64xf32>
    %100 = arith.addf %99, %98 : vector<16x64xf32>
    %101 = arith.mulf %90, %100 : vector<16x64xf32>
    %c0_36 = arith.constant 0 : index
    %c0_37 = arith.constant 0 : index
    %102 = vector.load %arg11[%c0_36, %c0_37] : memref<64x32xf32, #tpu.memory_space<vmem>>, vector<64x32xf32>
    %103 = arith.truncf %101 : vector<16x64xf32> to vector<16x64xbf16>
    %104 = arith.truncf %102 : vector<64x32xf32> to vector<64x32xbf16>
    %cst_38 = arith.constant dense<0.000000e+00> : vector<16x32xf32>
    %105 = tpu.matmul %103, %104, %cst_38 {dimension_numbers = #tpu.dot_dimension_numbers<[1], [0], [0], [1], [0, 0, 1, 1], [], []>} : vector<16x64xbf16>, vector<64x32xbf16>, vector<16x32xf32> -> vector<16x32xf32>
    %106 = arith.addf %81, %105 : vector<16x32xf32>
    %c0_39 = arith.constant 0 : index
    %c0_40 = arith.constant 0 : index
    %107 = vector.load %arg12[%c0_39, %c0_40] : memref<1x32xf32, #tpu.memory_space<vmem>>, vector<1x32xf32>
    %108 = vector.broadcast %107 : vector<1x32xf32> to vector<16x32xf32>
    %109 = arith.addf %106, %108 : vector<16x32xf32>
    %c0_41 = arith.constant 0 : index
    %c0_42 = arith.constant 0 : index
    %110 = vector.load %arg13[%c0_41, %c0_42] : memref<1x32xf32, #tpu.memory_space<vmem>>, vector<1x32xf32>
    %c0_43 = arith.constant 0 : index
    %c0_44 = arith.constant 0 : index
    %111 = vector.load %arg14[%c0_43, %c0_44] : memref<1x32xf32, #tpu.memory_space<vmem>>, vector<1x32xf32>
    %cst_45 = arith.constant dense<0.000000e+00> : vector<16xf32>
    %112 = vector.multi_reduction <add>, %109, %cst_45 [1] : vector<16x32xf32> to vector<16xf32>
    %113 = vector.shape_cast %112 : vector<16xf32> to vector<16x1xf32>
    %cst_46 = arith.constant 3.200000e+01 : f32
    %114 = vector.broadcast %cst_46 : f32 to vector<16x1xf32>
    %115 = arith.divf %113, %114 : vector<16x1xf32>
    %116 = vector.broadcast %115 : vector<16x1xf32> to vector<16x32xf32>
    %117 = arith.subf %109, %116 : vector<16x32xf32>
    %118 = arith.mulf %117, %117 : vector<16x32xf32>
    %cst_47 = arith.constant dense<0.000000e+00> : vector<16xf32>
    %119 = vector.multi_reduction <add>, %118, %cst_47 [1] : vector<16x32xf32> to vector<16xf32>
    %120 = vector.shape_cast %119 : vector<16xf32> to vector<16x1xf32>
    %cst_48 = arith.constant 3.200000e+01 : f32
    %121 = vector.broadcast %cst_48 : f32 to vector<16x1xf32>
    %122 = arith.divf %120, %121 : vector<16x1xf32>
    %cst_49 = arith.constant 9.99999974E-6 : f32
    %123 = vector.broadcast %cst_49 : f32 to vector<16x1xf32>
    %124 = arith.addf %122, %123 : vector<16x1xf32>
    %125 = math.rsqrt %124 : vector<16x1xf32>
    %126 = vector.broadcast %125 : vector<16x1xf32> to vector<16x32xf32>
    %127 = arith.mulf %117, %126 : vector<16x32xf32>
    %128 = vector.broadcast %110 : vector<1x32xf32> to vector<16x32xf32>
    %129 = arith.mulf %127, %128 : vector<16x32xf32>
    %130 = vector.broadcast %111 : vector<1x32xf32> to vector<16x32xf32>
    %131 = arith.addf %129, %130 : vector<16x32xf32>
    %c0_50 = arith.constant 0 : index
    %c0_51 = arith.constant 0 : index
    %c0_52 = arith.constant 0 : index
    %132 = vector.load %arg15[%c0_50, %c0_51, %c0_52] : memref<1x16x32xf32, #tpu.memory_space<vmem>>, vector<1x16x32xf32>
    %133 = vector.shape_cast %132 : vector<1x16x32xf32> to vector<16x32xf32>
    %134 = vector.shape_cast %131 : vector<16x32xf32> to vector<1x16x32xf32>
    tpu.vector_store %arg15[%c0_50, %c0_51, %c0_52], %134 {strides = array<i32>} : memref<1x16x32xf32, #tpu.memory_space<vmem>>, vector<1x16x32xf32>,
    return
  }
  func.func @transform_0(%arg0: i32) -> (i32, i32, i32) {
    %c0_i32 = arith.constant 0 : i32
    %c0_i32_0 = arith.constant 0 : i32
    %c0_i32_1 = arith.constant 0 : i32
    return %arg0, %c0_i32, %c0_i32_0 : i32, i32, i32
  }
  func.func @transform_1(%arg0: i32) -> (i32, i32) {
    %c0_i32 = arith.constant 0 : i32
    %c0_i32_0 = arith.constant 0 : i32
    %c0_i32_1 = arith.constant 0 : i32
    return %c0_i32, %c0_i32_0 : i32, i32
  }
  func.func @transform_2(%arg0: i32) -> (i32, i32) {
    %c0_i32 = arith.constant 0 : i32
    %c0_i32_0 = arith.constant 0 : i32
    %c0_i32_1 = arith.constant 0 : i32
    return %c0_i32, %c0_i32_0 : i32, i32
  }
  func.func @transform_3(%arg0: i32) -> (i32, i32) {
    %c0_i32 = arith.constant 0 : i32
    %c0_i32_0 = arith.constant 0 : i32
    %c0_i32_1 = arith.constant 0 : i32
    return %c0_i32, %c0_i32_0 : i32, i32
  }
  func.func @transform_4(%arg0: i32) -> (i32, i32) {
    %c0_i32 = arith.constant 0 : i32
    %c0_i32_0 = arith.constant 0 : i32
    %c0_i32_1 = arith.constant 0 : i32
    return %c0_i32, %c0_i32_0 : i32, i32
  }
  func.func @transform_5(%arg0: i32) -> (i32, i32) {
    %c0_i32 = arith.constant 0 : i32
    %c0_i32_0 = arith.constant 0 : i32
    %c0_i32_1 = arith.constant 0 : i32
    return %c0_i32, %c0_i32_0 : i32, i32
  }
  func.func @transform_6(%arg0: i32) -> (i32, i32) {
    %c0_i32 = arith.constant 0 : i32
    %c0_i32_0 = arith.constant 0 : i32
    %c0_i32_1 = arith.constant 0 : i32
    return %c0_i32, %c0_i32_0 : i32, i32
  }
  func.func @transform_7(%arg0: i32) -> (i32, i32) {
    %c0_i32 = arith.constant 0 : i32
    %c0_i32_0 = arith.constant 0 : i32
    %c0_i32_1 = arith.constant 0 : i32
    return %c0_i32, %c0_i32_0 : i32, i32
  }
  func.func @transform_8(%arg0: i32) -> (i32, i32) {
    %c0_i32 = arith.constant 0 : i32
    %c0_i32_0 = arith.constant 0 : i32
    %c0_i32_1 = arith.constant 0 : i32
    return %c0_i32, %c0_i32_0 : i32, i32
  }
  func.func @transform_9(%arg0: i32) -> (i32, i32) {
    %c0_i32 = arith.constant 0 : i32
    %c0_i32_0 = arith.constant 0 : i32
    %c0_i32_1 = arith.constant 0 : i32
    return %c0_i32, %c0_i32_0 : i32, i32
  }
  func.func @transform_10(%arg0: i32) -> (i32, i32) {
    %c0_i32 = arith.constant 0 : i32
    %c0_i32_0 = arith.constant 0 : i32
    %c0_i32_1 = arith.constant 0 : i32
    return %c0_i32, %c0_i32_0 : i32, i32
  }
  func.func @transform_11(%arg0: i32) -> (i32, i32) {
    %c0_i32 = arith.constant 0 : i32
    %c0_i32_0 = arith.constant 0 : i32
    %c0_i32_1 = arith.constant 0 : i32
    return %c0_i32, %c0_i32_0 : i32, i32
  }
  func.func @transform_12(%arg0: i32) -> (i32, i32) {
    %c0_i32 = arith.constant 0 : i32
    %c0_i32_0 = arith.constant 0 : i32
    %c0_i32_1 = arith.constant 0 : i32
    return %c0_i32, %c0_i32_0 : i32, i32
  }
  func.func @transform_13(%arg0: i32) -> (i32, i32) {
    %c0_i32 = arith.constant 0 : i32
    %c0_i32_0 = arith.constant 0 : i32
    %c0_i32_1 = arith.constant 0 : i32
    return %c0_i32, %c0_i32_0 : i32, i32
  }
  func.func @transform_14(%arg0: i32) -> (i32, i32, i32) {
    %c0_i32 = arith.constant 0 : i32
    %c0_i32_0 = arith.constant 0 : i32
    %c0_i32_1 = arith.constant 0 : i32
    return %arg0, %c0_i32, %c0_i32_0 : i32, i32, i32
  }
}

module attributes {stable_mosaic.version = 11 : i64} {
  func.func @_conv_distill_kernel(%arg0: i32, %arg1: memref<2x18x32xf32, #tpu.memory_space<vmem>>, %arg2: memref<96x32xf32, #tpu.memory_space<vmem>>, %arg3: memref<1x32xf32, #tpu.memory_space<vmem>>, %arg4: memref<1x32xf32, #tpu.memory_space<vmem>>, %arg5: memref<1x32xf32, #tpu.memory_space<vmem>>, %arg6: memref<8x16xf32, #tpu.memory_space<vmem>>, %arg7: memref<2x8x32xf32, #tpu.memory_space<vmem>>) attributes {dimension_semantics = [#tpu.dimension_semantics<arbitrary>], iteration_bounds = array<i64: 1>, scalar_prefetch = 0 : i64, scratch_operands = 0 : i64, tpu.core_type = #tpu.core_type<tc>, window_params = [{pipeline_mode = #tpu.pipeline_mode<synchronous>, transform_indices = @transform_0, window_bounds = array<i64: 2, 18, 32>}, {pipeline_mode = #tpu.pipeline_mode<synchronous>, transform_indices = @transform_1, window_bounds = array<i64: 96, 32>}, {pipeline_mode = #tpu.pipeline_mode<synchronous>, transform_indices = @transform_2, window_bounds = array<i64: 1, 32>}, {pipeline_mode = #tpu.pipeline_mode<synchronous>, transform_indices = @transform_3, window_bounds = array<i64: 1, 32>}, {pipeline_mode = #tpu.pipeline_mode<synchronous>, transform_indices = @transform_4, window_bounds = array<i64: 1, 32>}, {pipeline_mode = #tpu.pipeline_mode<synchronous>, transform_indices = @transform_5, window_bounds = array<i64: 8, 16>}, {pipeline_mode = #tpu.pipeline_mode<synchronous>, transform_indices = @transform_6, window_bounds = array<i64: 2, 8, 32>}]} {
    %c0 = arith.constant 0 : index
    %c0_0 = arith.constant 0 : index
    %0 = vector.load %arg2[%c0, %c0_0] : memref<96x32xf32, #tpu.memory_space<vmem>>, vector<96x32xf32>
    %c0_1 = arith.constant 0 : index
    %c0_2 = arith.constant 0 : index
    %1 = vector.load %arg3[%c0_1, %c0_2] : memref<1x32xf32, #tpu.memory_space<vmem>>, vector<1x32xf32>
    %c0_3 = arith.constant 0 : index
    %c0_4 = arith.constant 0 : index
    %c0_5 = arith.constant 0 : index
    %2 = vector.load %arg1[%c0_3, %c0_4, %c0_5] : memref<2x18x32xf32, #tpu.memory_space<vmem>>, vector<1x18x32xf32>
    %3 = vector.shape_cast %2 : vector<1x18x32xf32> to vector<18x32xf32>
    %4 = vector.extract_strided_slice %3 {offsets = [0, 0], sizes = [16, 32], strides = [1, 1]} : vector<18x32xf32> to vector<16x32xf32>
    %5 = vector.extract_strided_slice %0 {offsets = [0, 0], sizes = [32, 32], strides = [1, 1]} : vector<96x32xf32> to vector<32x32xf32>
    %6 = arith.truncf %4 : vector<16x32xf32> to vector<16x32xbf16>
    %7 = arith.truncf %5 : vector<32x32xf32> to vector<32x32xbf16>
    %cst = arith.constant dense<0.000000e+00> : vector<16x32xf32>
    %8 = tpu.matmul %6, %7, %cst {dimension_numbers = #tpu.dot_dimension_numbers<[1], [0], [0], [1], [0, 0, 1, 1], [], []>} : vector<16x32xbf16>, vector<32x32xbf16>, vector<16x32xf32> -> vector<16x32xf32>
    %9 = vector.extract_strided_slice %3 {offsets = [1, 0], sizes = [16, 32], strides = [1, 1]} : vector<18x32xf32> to vector<16x32xf32>
    %10 = vector.extract_strided_slice %0 {offsets = [32, 0], sizes = [32, 32], strides = [1, 1]} : vector<96x32xf32> to vector<32x32xf32>
    %11 = arith.truncf %9 : vector<16x32xf32> to vector<16x32xbf16>
    %12 = arith.truncf %10 : vector<32x32xf32> to vector<32x32xbf16>
    %cst_6 = arith.constant dense<0.000000e+00> : vector<16x32xf32>
    %13 = tpu.matmul %11, %12, %cst_6 {dimension_numbers = #tpu.dot_dimension_numbers<[1], [0], [0], [1], [0, 0, 1, 1], [], []>} : vector<16x32xbf16>, vector<32x32xbf16>, vector<16x32xf32> -> vector<16x32xf32>
    %14 = arith.addf %8, %13 : vector<16x32xf32>
    %15 = vector.extract_strided_slice %3 {offsets = [2, 0], sizes = [16, 32], strides = [1, 1]} : vector<18x32xf32> to vector<16x32xf32>
    %16 = vector.extract_strided_slice %0 {offsets = [64, 0], sizes = [32, 32], strides = [1, 1]} : vector<96x32xf32> to vector<32x32xf32>
    %17 = arith.truncf %15 : vector<16x32xf32> to vector<16x32xbf16>
    %18 = arith.truncf %16 : vector<32x32xf32> to vector<32x32xbf16>
    %cst_7 = arith.constant dense<0.000000e+00> : vector<16x32xf32>
    %19 = tpu.matmul %17, %18, %cst_7 {dimension_numbers = #tpu.dot_dimension_numbers<[1], [0], [0], [1], [0, 0, 1, 1], [], []>} : vector<16x32xbf16>, vector<32x32xbf16>, vector<16x32xf32> -> vector<16x32xf32>
    %20 = arith.addf %14, %19 : vector<16x32xf32>
    %21 = vector.broadcast %1 : vector<1x32xf32> to vector<16x32xf32>
    %22 = arith.addf %20, %21 : vector<16x32xf32>
    %c1 = arith.constant 1 : index
    %c0_8 = arith.constant 0 : index
    %c0_9 = arith.constant 0 : index
    %23 = vector.load %arg1[%c1, %c0_8, %c0_9] : memref<2x18x32xf32, #tpu.memory_space<vmem>>, vector<1x18x32xf32>
    %24 = vector.shape_cast %23 : vector<1x18x32xf32> to vector<18x32xf32>
    %25 = vector.extract_strided_slice %24 {offsets = [0, 0], sizes = [16, 32], strides = [1, 1]} : vector<18x32xf32> to vector<16x32xf32>
    %26 = vector.extract_strided_slice %0 {offsets = [0, 0], sizes = [32, 32], strides = [1, 1]} : vector<96x32xf32> to vector<32x32xf32>
    %27 = arith.truncf %25 : vector<16x32xf32> to vector<16x32xbf16>
    %28 = arith.truncf %26 : vector<32x32xf32> to vector<32x32xbf16>
    %cst_10 = arith.constant dense<0.000000e+00> : vector<16x32xf32>
    %29 = tpu.matmul %27, %28, %cst_10 {dimension_numbers = #tpu.dot_dimension_numbers<[1], [0], [0], [1], [0, 0, 1, 1], [], []>} : vector<16x32xbf16>, vector<32x32xbf16>, vector<16x32xf32> -> vector<16x32xf32>
    %30 = vector.extract_strided_slice %24 {offsets = [1, 0], sizes = [16, 32], strides = [1, 1]} : vector<18x32xf32> to vector<16x32xf32>
    %31 = vector.extract_strided_slice %0 {offsets = [32, 0], sizes = [32, 32], strides = [1, 1]} : vector<96x32xf32> to vector<32x32xf32>
    %32 = arith.truncf %30 : vector<16x32xf32> to vector<16x32xbf16>
    %33 = arith.truncf %31 : vector<32x32xf32> to vector<32x32xbf16>
    %cst_11 = arith.constant dense<0.000000e+00> : vector<16x32xf32>
    %34 = tpu.matmul %32, %33, %cst_11 {dimension_numbers = #tpu.dot_dimension_numbers<[1], [0], [0], [1], [0, 0, 1, 1], [], []>} : vector<16x32xbf16>, vector<32x32xbf16>, vector<16x32xf32> -> vector<16x32xf32>
    %35 = arith.addf %29, %34 : vector<16x32xf32>
    %36 = vector.extract_strided_slice %24 {offsets = [2, 0], sizes = [16, 32], strides = [1, 1]} : vector<18x32xf32> to vector<16x32xf32>
    %37 = vector.extract_strided_slice %0 {offsets = [64, 0], sizes = [32, 32], strides = [1, 1]} : vector<96x32xf32> to vector<32x32xf32>
    %38 = arith.truncf %36 : vector<16x32xf32> to vector<16x32xbf16>
    %39 = arith.truncf %37 : vector<32x32xf32> to vector<32x32xbf16>
    %cst_12 = arith.constant dense<0.000000e+00> : vector<16x32xf32>
    %40 = tpu.matmul %38, %39, %cst_12 {dimension_numbers = #tpu.dot_dimension_numbers<[1], [0], [0], [1], [0, 0, 1, 1], [], []>} : vector<16x32xbf16>, vector<32x32xbf16>, vector<16x32xf32> -> vector<16x32xf32>
    %41 = arith.addf %35, %40 : vector<16x32xf32>
    %42 = vector.broadcast %1 : vector<1x32xf32> to vector<16x32xf32>
    %43 = arith.addf %41, %42 : vector<16x32xf32>
    %cst_13 = arith.constant dense<0.000000e+00> : vector<32xf32>
    %44 = vector.multi_reduction <add>, %22, %cst_13 [0] : vector<16x32xf32> to vector<32xf32>
    %45 = vector.shape_cast %44 : vector<32xf32> to vector<1x32xf32>
    %cst_14 = arith.constant 0.000000e+00 : f32
    %46 = vector.broadcast %cst_14 : f32 to vector<1x32xf32>
    %47 = arith.addf %46, %45 : vector<1x32xf32>
    %cst_15 = arith.constant dense<0.000000e+00> : vector<32xf32>
    %48 = vector.multi_reduction <add>, %43, %cst_15 [0] : vector<16x32xf32> to vector<32xf32>
    %49 = vector.shape_cast %48 : vector<32xf32> to vector<1x32xf32>
    %50 = arith.addf %47, %49 : vector<1x32xf32>
    %cst_16 = arith.constant 3.200000e+01 : f32
    %51 = vector.broadcast %cst_16 : f32 to vector<1x32xf32>
    %52 = arith.divf %50, %51 : vector<1x32xf32>
    %53 = vector.broadcast %52 : vector<1x32xf32> to vector<16x32xf32>
    %54 = arith.subf %22, %53 : vector<16x32xf32>
    %55 = arith.mulf %54, %54 : vector<16x32xf32>
    %cst_17 = arith.constant dense<0.000000e+00> : vector<32xf32>
    %56 = vector.multi_reduction <add>, %55, %cst_17 [0] : vector<16x32xf32> to vector<32xf32>
    %57 = vector.shape_cast %56 : vector<32xf32> to vector<1x32xf32>
    %cst_18 = arith.constant 0.000000e+00 : f32
    %58 = vector.broadcast %cst_18 : f32 to vector<1x32xf32>
    %59 = arith.addf %58, %57 : vector<1x32xf32>
    %60 = vector.broadcast %52 : vector<1x32xf32> to vector<16x32xf32>
    %61 = arith.subf %43, %60 : vector<16x32xf32>
    %62 = arith.mulf %61, %61 : vector<16x32xf32>
    %cst_19 = arith.constant dense<0.000000e+00> : vector<32xf32>
    %63 = vector.multi_reduction <add>, %62, %cst_19 [0] : vector<16x32xf32> to vector<32xf32>
    %64 = vector.shape_cast %63 : vector<32xf32> to vector<1x32xf32>
    %65 = arith.addf %59, %64 : vector<1x32xf32>
    %cst_20 = arith.constant 3.200000e+01 : f32
    %66 = vector.broadcast %cst_20 : f32 to vector<1x32xf32>
    %67 = arith.divf %65, %66 : vector<1x32xf32>
    %cst_21 = arith.constant 9.99999974E-6 : f32
    %68 = vector.broadcast %cst_21 : f32 to vector<1x32xf32>
    %69 = arith.addf %67, %68 : vector<1x32xf32>
    %70 = math.rsqrt %69 : vector<1x32xf32>
    %c0_22 = arith.constant 0 : index
    %c0_23 = arith.constant 0 : index
    %71 = vector.load %arg4[%c0_22, %c0_23] : memref<1x32xf32, #tpu.memory_space<vmem>>, vector<1x32xf32>
    %72 = arith.mulf %70, %71 : vector<1x32xf32>
    %c0_24 = arith.constant 0 : index
    %c0_25 = arith.constant 0 : index
    %73 = vector.load %arg5[%c0_24, %c0_25] : memref<1x32xf32, #tpu.memory_space<vmem>>, vector<1x32xf32>
    %cst_26 = arith.constant -1.000000e+30 : f32
    %74 = vector.broadcast %cst_26 : f32 to vector<1x32xf32>
    %c0_27 = arith.constant 0 : index
    %c0_28 = arith.constant 0 : index
    %75 = vector.load %arg6[%c0_27, %c0_28] : memref<8x16xf32, #tpu.memory_space<vmem>>, vector<8x16xf32>
    %76 = vector.broadcast %52 : vector<1x32xf32> to vector<16x32xf32>
    %77 = arith.subf %22, %76 : vector<16x32xf32>
    %78 = vector.broadcast %72 : vector<1x32xf32> to vector<16x32xf32>
    %79 = arith.mulf %77, %78 : vector<16x32xf32>
    %80 = vector.broadcast %73 : vector<1x32xf32> to vector<16x32xf32>
    %81 = arith.addf %79, %80 : vector<16x32xf32>
    %cst_29 = arith.constant 0.000000e+00 : f32
    %82 = vector.broadcast %cst_29 : f32 to vector<16x32xf32>
    %83 = arith.cmpf ogt, %81, %82 : vector<16x32xf32>
    %cst_30 = arith.constant 0.000000e+00 : f32
    %84 = vector.broadcast %cst_30 : f32 to vector<16x32xf32>
    %85 = arith.minimumf %81, %84 : vector<16x32xf32>
    %86 = math.exp %85 : vector<16x32xf32>
    %cst_31 = arith.constant 1.000000e+00 : f32
    %87 = vector.broadcast %cst_31 : f32 to vector<16x32xf32>
    %88 = arith.subf %86, %87 : vector<16x32xf32>
    %89 = arith.select %83, %81, %88 : vector<16x32xi1>, vector<16x32xf32>
    %90 = vector.extract_strided_slice %89 {offsets = [0, 0], sizes = [15, 32], strides = [1, 1]} : vector<16x32xf32> to vector<15x32xf32>
    %91 = tpu.concatenate %74, %90 in 0 : vector<1x32xf32>, vector<15x32xf32> -> vector<16x32xf32>
    %92 = vector.extract_strided_slice %89 {offsets = [1, 0], sizes = [15, 32], strides = [1, 1]} : vector<16x32xf32> to vector<15x32xf32>
    %93 = tpu.concatenate %92, %74 in 0 : vector<15x32xf32>, vector<1x32xf32> -> vector<16x32xf32>
    %94 = arith.maximumf %91, %89 : vector<16x32xf32>
    %95 = arith.maximumf %94, %93 : vector<16x32xf32>
    %cst_32 = arith.constant dense<0.000000e+00> : vector<8x32xf32>
    %96 = tpu.matmul %75, %95, %cst_32 {dimension_numbers = #tpu.dot_dimension_numbers<[1], [0], [0], [1], [0, 0, 1, 1], [], []>} : vector<8x16xf32>, vector<16x32xf32>, vector<8x32xf32> -> vector<8x32xf32>
    %c0_33 = arith.constant 0 : index
    %c0_34 = arith.constant 0 : index
    %c0_35 = arith.constant 0 : index
    %97 = vector.load %arg7[%c0_33, %c0_34, %c0_35] : memref<2x8x32xf32, #tpu.memory_space<vmem>>, vector<1x8x32xf32>
    %98 = vector.shape_cast %97 : vector<1x8x32xf32> to vector<8x32xf32>
    %99 = vector.shape_cast %96 : vector<8x32xf32> to vector<1x8x32xf32>
    tpu.vector_store %arg7[%c0_33, %c0_34, %c0_35], %99 {strides = array<i32>} : memref<2x8x32xf32, #tpu.memory_space<vmem>>, vector<1x8x32xf32>,
    %100 = vector.broadcast %52 : vector<1x32xf32> to vector<16x32xf32>
    %101 = arith.subf %43, %100 : vector<16x32xf32>
    %102 = vector.broadcast %72 : vector<1x32xf32> to vector<16x32xf32>
    %103 = arith.mulf %101, %102 : vector<16x32xf32>
    %104 = vector.broadcast %73 : vector<1x32xf32> to vector<16x32xf32>
    %105 = arith.addf %103, %104 : vector<16x32xf32>
    %cst_36 = arith.constant 0.000000e+00 : f32
    %106 = vector.broadcast %cst_36 : f32 to vector<16x32xf32>
    %107 = arith.cmpf ogt, %105, %106 : vector<16x32xf32>
    %cst_37 = arith.constant 0.000000e+00 : f32
    %108 = vector.broadcast %cst_37 : f32 to vector<16x32xf32>
    %109 = arith.minimumf %105, %108 : vector<16x32xf32>
    %110 = math.exp %109 : vector<16x32xf32>
    %cst_38 = arith.constant 1.000000e+00 : f32
    %111 = vector.broadcast %cst_38 : f32 to vector<16x32xf32>
    %112 = arith.subf %110, %111 : vector<16x32xf32>
    %113 = arith.select %107, %105, %112 : vector<16x32xi1>, vector<16x32xf32>
    %114 = vector.extract_strided_slice %113 {offsets = [0, 0], sizes = [15, 32], strides = [1, 1]} : vector<16x32xf32> to vector<15x32xf32>
    %115 = tpu.concatenate %74, %114 in 0 : vector<1x32xf32>, vector<15x32xf32> -> vector<16x32xf32>
    %116 = vector.extract_strided_slice %113 {offsets = [1, 0], sizes = [15, 32], strides = [1, 1]} : vector<16x32xf32> to vector<15x32xf32>
    %117 = tpu.concatenate %116, %74 in 0 : vector<15x32xf32>, vector<1x32xf32> -> vector<16x32xf32>
    %118 = arith.maximumf %115, %113 : vector<16x32xf32>
    %119 = arith.maximumf %118, %117 : vector<16x32xf32>
    %cst_39 = arith.constant dense<0.000000e+00> : vector<8x32xf32>
    %120 = tpu.matmul %75, %119, %cst_39 {dimension_numbers = #tpu.dot_dimension_numbers<[1], [0], [0], [1], [0, 0, 1, 1], [], []>} : vector<8x16xf32>, vector<16x32xf32>, vector<8x32xf32> -> vector<8x32xf32>
    %c1_40 = arith.constant 1 : index
    %c0_41 = arith.constant 0 : index
    %c0_42 = arith.constant 0 : index
    %121 = vector.load %arg7[%c1_40, %c0_41, %c0_42] : memref<2x8x32xf32, #tpu.memory_space<vmem>>, vector<1x8x32xf32>
    %122 = vector.shape_cast %121 : vector<1x8x32xf32> to vector<8x32xf32>
    %123 = vector.shape_cast %120 : vector<8x32xf32> to vector<1x8x32xf32>
    tpu.vector_store %arg7[%c1_40, %c0_41, %c0_42], %123 {strides = array<i32>} : memref<2x8x32xf32, #tpu.memory_space<vmem>>, vector<1x8x32xf32>,
    return
  }
  func.func @transform_0(%arg0: i32) -> (i32, i32, i32) {
    %c0_i32 = arith.constant 0 : i32
    %c0_i32_0 = arith.constant 0 : i32
    %c0_i32_1 = arith.constant 0 : i32
    %c0_i32_2 = arith.constant 0 : i32
    return %c0_i32, %c0_i32_0, %c0_i32_1 : i32, i32, i32
  }
  func.func @transform_1(%arg0: i32) -> (i32, i32) {
    %c0_i32 = arith.constant 0 : i32
    %c0_i32_0 = arith.constant 0 : i32
    %c0_i32_1 = arith.constant 0 : i32
    return %c0_i32, %c0_i32_0 : i32, i32
  }
  func.func @transform_2(%arg0: i32) -> (i32, i32) {
    %c0_i32 = arith.constant 0 : i32
    %c0_i32_0 = arith.constant 0 : i32
    %c0_i32_1 = arith.constant 0 : i32
    return %c0_i32, %c0_i32_0 : i32, i32
  }
  func.func @transform_3(%arg0: i32) -> (i32, i32) {
    %c0_i32 = arith.constant 0 : i32
    %c0_i32_0 = arith.constant 0 : i32
    %c0_i32_1 = arith.constant 0 : i32
    return %c0_i32, %c0_i32_0 : i32, i32
  }
  func.func @transform_4(%arg0: i32) -> (i32, i32) {
    %c0_i32 = arith.constant 0 : i32
    %c0_i32_0 = arith.constant 0 : i32
    %c0_i32_1 = arith.constant 0 : i32
    return %c0_i32, %c0_i32_0 : i32, i32
  }
  func.func @transform_5(%arg0: i32) -> (i32, i32) {
    %c0_i32 = arith.constant 0 : i32
    %c0_i32_0 = arith.constant 0 : i32
    %c0_i32_1 = arith.constant 0 : i32
    return %c0_i32, %c0_i32_0 : i32, i32
  }
  func.func @transform_6(%arg0: i32) -> (i32, i32, i32) {
    %c0_i32 = arith.constant 0 : i32
    %c0_i32_0 = arith.constant 0 : i32
    %c0_i32_1 = arith.constant 0 : i32
    %c0_i32_2 = arith.constant 0 : i32
    return %c0_i32, %c0_i32_0, %c0_i32_1 : i32, i32, i32
  }
}

module attributes {stable_mosaic.version = 11 : i64} {
  func.func @_decoder_layer_kernel(%arg0: i32, %arg1: memref<1x16x32xf32, #tpu.memory_space<vmem>>, %arg2: memref<1x16x32xf32, #tpu.memory_space<vmem>>, %arg3: memref<64x64xf32, #tpu.memory_space<vmem>>, %arg4: memref<64x64xf32, #tpu.memory_space<vmem>>, %arg5: memref<32x96xf32, #tpu.memory_space<vmem>>, %arg6: memref<1x96xf32, #tpu.memory_space<vmem>>, %arg7: memref<32x32xf32, #tpu.memory_space<vmem>>, %arg8: memref<1x32xf32, #tpu.memory_space<vmem>>, %arg9: memref<1x32xf32, #tpu.memory_space<vmem>>, %arg10: memref<1x32xf32, #tpu.memory_space<vmem>>, %arg11: memref<32x32xf32, #tpu.memory_space<vmem>>, %arg12: memref<1x32xf32, #tpu.memory_space<vmem>>, %arg13: memref<32x64xf32, #tpu.memory_space<vmem>>, %arg14: memref<1x64xf32, #tpu.memory_space<vmem>>, %arg15: memref<32x32xf32, #tpu.memory_space<vmem>>, %arg16: memref<1x32xf32, #tpu.memory_space<vmem>>, %arg17: memref<1x32xf32, #tpu.memory_space<vmem>>, %arg18: memref<1x32xf32, #tpu.memory_space<vmem>>, %arg19: memref<32x64xf32, #tpu.memory_space<vmem>>, %arg20: memref<1x64xf32, #tpu.memory_space<vmem>>, %arg21: memref<64x32xf32, #tpu.memory_space<vmem>>, %arg22: memref<1x32xf32, #tpu.memory_space<vmem>>, %arg23: memref<1x32xf32, #tpu.memory_space<vmem>>, %arg24: memref<1x32xf32, #tpu.memory_space<vmem>>, %arg25: memref<1x16x32xf32, #tpu.memory_space<vmem>>) attributes {dimension_semantics = [#tpu.dimension_semantics<parallel>], iteration_bounds = array<i64: 2>, scalar_prefetch = 0 : i64, scratch_operands = 0 : i64, tpu.core_type = #tpu.core_type<tc>, window_params = [{transform_indices = @transform_0, window_bounds = array<i64: 1, 16, 32>}, {transform_indices = @transform_1, window_bounds = array<i64: 1, 16, 32>}, {pipeline_mode = #tpu.pipeline_mode<synchronous>, transform_indices = @transform_2, window_bounds = array<i64: 64, 64>}, {pipeline_mode = #tpu.pipeline_mode<synchronous>, transform_indices = @transform_3, window_bounds = array<i64: 64, 64>}, {pipeline_mode = #tpu.pipeline_mode<synchronous>, transform_indices = @transform_4, window_bounds = array<i64: 32, 96>}, {pipeline_mode = #tpu.pipeline_mode<synchronous>, transform_indices = @transform_5, window_bounds = array<i64: 1, 96>}, {pipeline_mode = #tpu.pipeline_mode<synchronous>, transform_indices = @transform_6, window_bounds = array<i64: 32, 32>}, {pipeline_mode = #tpu.pipeline_mode<synchronous>, transform_indices = @transform_7, window_bounds = array<i64: 1, 32>}, {pipeline_mode = #tpu.pipeline_mode<synchronous>, transform_indices = @transform_8, window_bounds = array<i64: 1, 32>}, {pipeline_mode = #tpu.pipeline_mode<synchronous>, transform_indices = @transform_9, window_bounds = array<i64: 1, 32>}, {pipeline_mode = #tpu.pipeline_mode<synchronous>, transform_indices = @transform_10, window_bounds = array<i64: 32, 32>}, {pipeline_mode = #tpu.pipeline_mode<synchronous>, transform_indices = @transform_11, window_bounds = array<i64: 1, 32>}, {pipeline_mode = #tpu.pipeline_mode<synchronous>, transform_indices = @transform_12, window_bounds = array<i64: 32, 64>}, {pipeline_mode = #tpu.pipeline_mode<synchronous>, transform_indices = @transform_13, window_bounds = array<i64: 1, 64>}, {pipeline_mode = #tpu.pipeline_mode<synchronous>, transform_indices = @transform_14, window_bounds = array<i64: 32, 32>}, {pipeline_mode = #tpu.pipeline_mode<synchronous>, transform_indices = @transform_15, window_bounds = array<i64: 1, 32>}, {pipeline_mode = #tpu.pipeline_mode<synchronous>, transform_indices = @transform_16, window_bounds = array<i64: 1, 32>}, {pipeline_mode = #tpu.pipeline_mode<synchronous>, transform_indices = @transform_17, window_bounds = array<i64: 1, 32>}, {pipeline_mode = #tpu.pipeline_mode<synchronous>, transform_indices = @transform_18, window_bounds = array<i64: 32, 64>}, {pipeline_mode = #tpu.pipeline_mode<synchronous>, transform_indices = @transform_19, window_bounds = array<i64: 1, 64>}, {pipeline_mode = #tpu.pipeline_mode<synchronous>, transform_indices = @transform_20, window_bounds = array<i64: 64, 32>}, {pipeline_mode = #tpu.pipeline_mode<synchronous>, transform_indices = @transform_21, window_bounds = array<i64: 1, 32>}, {pipeline_mode = #tpu.pipeline_mode<synchronous>, transform_indices = @transform_22, window_bounds = array<i64: 1, 32>}, {pipeline_mode = #tpu.pipeline_mode<synchronous>, transform_indices = @transform_23, window_bounds = array<i64: 1, 32>}, {transform_indices = @transform_24, window_bounds = array<i64: 1, 16, 32>}]} {
    %c0 = arith.constant 0 : index
    %c0_0 = arith.constant 0 : index
    %c0_1 = arith.constant 0 : index
    %0 = vector.load %arg1[%c0, %c0_0, %c0_1] : memref<1x16x32xf32, #tpu.memory_space<vmem>>, vector<1x16x32xf32>
    %1 = vector.shape_cast %0 : vector<1x16x32xf32> to vector<16x32xf32>
    %c0_2 = arith.constant 0 : index
    %c0_3 = arith.constant 0 : index
    %c0_4 = arith.constant 0 : index
    %2 = vector.load %arg2[%c0_2, %c0_3, %c0_4] : memref<1x16x32xf32, #tpu.memory_space<vmem>>, vector<1x16x32xf32>
    %3 = vector.shape_cast %2 : vector<1x16x32xf32> to vector<16x32xf32>
    %c0_5 = arith.constant 0 : index
    %c0_6 = arith.constant 0 : index
    %4 = vector.load %arg5[%c0_5, %c0_6] : memref<32x96xf32, #tpu.memory_space<vmem>>, vector<32x96xf32>
    %5 = arith.truncf %1 : vector<16x32xf32> to vector<16x32xbf16>
    %6 = arith.truncf %4 : vector<32x96xf32> to vector<32x96xbf16>
    %cst = arith.constant dense<0.000000e+00> : vector<16x96xf32>
    %7 = tpu.matmul %5, %6, %cst {dimension_numbers = #tpu.dot_dimension_numbers<[1], [0], [0], [1], [0, 0, 1, 1], [], []>} : vector<16x32xbf16>, vector<32x96xbf16>, vector<16x96xf32> -> vector<16x96xf32>
    %c0_7 = arith.constant 0 : index
    %c0_8 = arith.constant 0 : index
    %8 = vector.load %arg6[%c0_7, %c0_8] : memref<1x96xf32, #tpu.memory_space<vmem>>, vector<1x96xf32>
    %9 = vector.broadcast %8 : vector<1x96xf32> to vector<16x96xf32>
    %10 = arith.addf %7, %9 : vector<16x96xf32>
    %11 = vector.extract_strided_slice %10 {offsets = [0, 0], sizes = [16, 32], strides = [1, 1]} : vector<16x96xf32> to vector<16x32xf32>
    %12 = vector.extract_strided_slice %10 {offsets = [0, 32], sizes = [16, 32], strides = [1, 1]} : vector<16x96xf32> to vector<16x32xf32>
    %13 = vector.extract_strided_slice %10 {offsets = [0, 64], sizes = [16, 32], strides = [1, 1]} : vector<16x96xf32> to vector<16x32xf32>
    %c0_9 = arith.constant 0 : index
    %c0_10 = arith.constant 0 : index
    %14 = vector.load %arg3[%c0_9, %c0_10] : memref<64x64xf32, #tpu.memory_space<vmem>>, vector<64x64xf32>
    %15 = vector.extract_strided_slice %11 {offsets = [0, 0], sizes = [16, 8], strides = [1, 1]} : vector<16x32xf32> to vector<16x8xf32>
    %16 = vector.extract_strided_slice %11 {offsets = [0, 8], sizes = [16, 8], strides = [1, 1]} : vector<16x32xf32> to vector<16x8xf32>
    %17 = vector.extract_strided_slice %11 {offsets = [0, 16], sizes = [16, 8], strides = [1, 1]} : vector<16x32xf32> to vector<16x8xf32>
    %18 = vector.extract_strided_slice %11 {offsets = [0, 24], sizes = [16, 8], strides = [1, 1]} : vector<16x32xf32> to vector<16x8xf32>
    %19 = tpu.concatenate %15, %16, %17, %18 in 0 : vector<16x8xf32>, vector<16x8xf32>, vector<16x8xf32>, vector<16x8xf32> -> vector<64x8xf32>
    %20 = vector.extract_strided_slice %12 {offsets = [0, 0], sizes = [16, 8], strides = [1, 1]} : vector<16x32xf32> to vector<16x8xf32>
    %21 = vector.extract_strided_slice %12 {offsets = [0, 8], sizes = [16, 8], strides = [1, 1]} : vector<16x32xf32> to vector<16x8xf32>
    %22 = vector.extract_strided_slice %12 {offsets = [0, 16], sizes = [16, 8], strides = [1, 1]} : vector<16x32xf32> to vector<16x8xf32>
    %23 = vector.extract_strided_slice %12 {offsets = [0, 24], sizes = [16, 8], strides = [1, 1]} : vector<16x32xf32> to vector<16x8xf32>
    %24 = tpu.concatenate %20, %21, %22, %23 in 0 : vector<16x8xf32>, vector<16x8xf32>, vector<16x8xf32>, vector<16x8xf32> -> vector<64x8xf32>
    %25 = vector.extract_strided_slice %13 {offsets = [0, 0], sizes = [16, 8], strides = [1, 1]} : vector<16x32xf32> to vector<16x8xf32>
    %26 = vector.extract_strided_slice %13 {offsets = [0, 8], sizes = [16, 8], strides = [1, 1]} : vector<16x32xf32> to vector<16x8xf32>
    %27 = vector.extract_strided_slice %13 {offsets = [0, 16], sizes = [16, 8], strides = [1, 1]} : vector<16x32xf32> to vector<16x8xf32>
    %28 = vector.extract_strided_slice %13 {offsets = [0, 24], sizes = [16, 8], strides = [1, 1]} : vector<16x32xf32> to vector<16x8xf32>
    %29 = tpu.concatenate %25, %26, %27, %28 in 0 : vector<16x8xf32>, vector<16x8xf32>, vector<16x8xf32>, vector<16x8xf32> -> vector<64x8xf32>
    %30 = arith.truncf %19 : vector<64x8xf32> to vector<64x8xbf16>
    %31 = arith.truncf %24 : vector<64x8xf32> to vector<64x8xbf16>
    %cst_11 = arith.constant dense<0.000000e+00> : vector<64x64xf32>
    %32 = tpu.matmul %30, %31, %cst_11 {dimension_numbers = #tpu.dot_dimension_numbers<[1], [1], [0], [0], [0, 0, 1, 0], [], []>} : vector<64x8xbf16>, vector<64x8xbf16>, vector<64x64xf32> -> vector<64x64xf32>
    %cst_12 = arith.constant 0.353553385 : f32
    %33 = vector.broadcast %cst_12 : f32 to vector<64x64xf32>
    %34 = arith.mulf %32, %33 : vector<64x64xf32>
    %35 = arith.addf %34, %14 : vector<64x64xf32>
    %cst_13 = arith.constant dense<0xFF800000> : vector<64xf32>
    %36 = vector.multi_reduction <maximumf>, %35, %cst_13 [1] : vector<64x64xf32> to vector<64xf32>
    %37 = vector.shape_cast %36 : vector<64xf32> to vector<64x1xf32>
    %38 = vector.broadcast %37 : vector<64x1xf32> to vector<64x64xf32>
    %39 = arith.subf %35, %38 : vector<64x64xf32>
    %40 = math.exp %39 : vector<64x64xf32>
    %cst_14 = arith.constant dense<0.000000e+00> : vector<64xf32>
    %41 = vector.multi_reduction <add>, %40, %cst_14 [1] : vector<64x64xf32> to vector<64xf32>
    %42 = vector.shape_cast %41 : vector<64xf32> to vector<64x1xf32>
    %43 = tpu.reciprocal %42 {approx = true} : vector<64x1xf32> -> vector<64x1xf32>
    %44 = vector.broadcast %43 : vector<64x1xf32> to vector<64x64xf32>
    %45 = arith.mulf %40, %44 : vector<64x64xf32>
    %46 = arith.truncf %45 : vector<64x64xf32> to vector<64x64xbf16>
    %47 = arith.truncf %29 : vector<64x8xf32> to vector<64x8xbf16>
    %cst_15 = arith.constant dense<0.000000e+00> : vector<64x8xf32>
    %48 = tpu.matmul %46, %47, %cst_15 {dimension_numbers = #tpu.dot_dimension_numbers<[1], [0], [0], [1], [0, 0, 1, 1], [], []>} : vector<64x64xbf16>, vector<64x8xbf16>, vector<64x8xf32> -> vector<64x8xf32>
    %49 = tpu.iota {dimensions = array<i32: 0>} : vector<16x64xi32>
    %50 = tpu.iota {dimensions = array<i32: 1>} : vector<16x64xi32>
    %c4_i32 = arith.constant 4 : i32
    %51 = vector.broadcast %c4_i32 : i32 to vector<16x64xi32>
    %52 = arith.muli %49, %51 : vector<16x64xi32>
    %c0_i32 = arith.constant 0 : i32
    %53 = vector.broadcast %c0_i32 : i32 to vector<16x64xi32>
    %54 = arith.addi %52, %53 : vector<16x64xi32>
    %55 = arith.cmpi eq, %50, %54 : vector<16x64xi32>
    %cst_16 = arith.constant 1.000000e+00 : f32
    %cst_17 = arith.constant 0.000000e+00 : f32
    %56 = vector.broadcast %cst_16 : f32 to vector<16x64xf32>
    %57 = vector.broadcast %cst_17 : f32 to vector<16x64xf32>
    %58 = arith.select %55, %56, %57 : vector<16x64xi1>, vector<16x64xf32>
    %cst_18 = arith.constant dense<0.000000e+00> : vector<16x8xf32>
    %59 = tpu.matmul %58, %48, %cst_18 {dimension_numbers = #tpu.dot_dimension_numbers<[1], [0], [0], [1], [0, 0, 1, 1], [], []>} : vector<16x64xf32>, vector<64x8xf32>, vector<16x8xf32> -> vector<16x8xf32>
    %c4_i32_19 = arith.constant 4 : i32
    %60 = vector.broadcast %c4_i32_19 : i32 to vector<16x64xi32>
    %61 = arith.muli %49, %60 : vector<16x64xi32>
    %c1_i32 = arith.constant 1 : i32
    %62 = vector.broadcast %c1_i32 : i32 to vector<16x64xi32>
    %63 = arith.addi %61, %62 : vector<16x64xi32>
    %64 = arith.cmpi eq, %50, %63 : vector<16x64xi32>
    %cst_20 = arith.constant 1.000000e+00 : f32
    %cst_21 = arith.constant 0.000000e+00 : f32
    %65 = vector.broadcast %cst_20 : f32 to vector<16x64xf32>
    %66 = vector.broadcast %cst_21 : f32 to vector<16x64xf32>
    %67 = arith.select %64, %65, %66 : vector<16x64xi1>, vector<16x64xf32>
    %cst_22 = arith.constant dense<0.000000e+00> : vector<16x8xf32>
    %68 = tpu.matmul %67, %48, %cst_22 {dimension_numbers = #tpu.dot_dimension_numbers<[1], [0], [0], [1], [0, 0, 1, 1], [], []>} : vector<16x64xf32>, vector<64x8xf32>, vector<16x8xf32> -> vector<16x8xf32>
    %c4_i32_23 = arith.constant 4 : i32
    %69 = vector.broadcast %c4_i32_23 : i32 to vector<16x64xi32>
    %70 = arith.muli %49, %69 : vector<16x64xi32>
    %c2_i32 = arith.constant 2 : i32
    %71 = vector.broadcast %c2_i32 : i32 to vector<16x64xi32>
    %72 = arith.addi %70, %71 : vector<16x64xi32>
    %73 = arith.cmpi eq, %50, %72 : vector<16x64xi32>
    %cst_24 = arith.constant 1.000000e+00 : f32
    %cst_25 = arith.constant 0.000000e+00 : f32
    %74 = vector.broadcast %cst_24 : f32 to vector<16x64xf32>
    %75 = vector.broadcast %cst_25 : f32 to vector<16x64xf32>
    %76 = arith.select %73, %74, %75 : vector<16x64xi1>, vector<16x64xf32>
    %cst_26 = arith.constant dense<0.000000e+00> : vector<16x8xf32>
    %77 = tpu.matmul %76, %48, %cst_26 {dimension_numbers = #tpu.dot_dimension_numbers<[1], [0], [0], [1], [0, 0, 1, 1], [], []>} : vector<16x64xf32>, vector<64x8xf32>, vector<16x8xf32> -> vector<16x8xf32>
    %c4_i32_27 = arith.constant 4 : i32
    %78 = vector.broadcast %c4_i32_27 : i32 to vector<16x64xi32>
    %79 = arith.muli %49, %78 : vector<16x64xi32>
    %c3_i32 = arith.constant 3 : i32
    %80 = vector.broadcast %c3_i32 : i32 to vector<16x64xi32>
    %81 = arith.addi %79, %80 : vector<16x64xi32>
    %82 = arith.cmpi eq, %50, %81 : vector<16x64xi32>
    %cst_28 = arith.constant 1.000000e+00 : f32
    %cst_29 = arith.constant 0.000000e+00 : f32
    %83 = vector.broadcast %cst_28 : f32 to vector<16x64xf32>
    %84 = vector.broadcast %cst_29 : f32 to vector<16x64xf32>
    %85 = arith.select %82, %83, %84 : vector<16x64xi1>, vector<16x64xf32>
    %cst_30 = arith.constant dense<0.000000e+00> : vector<16x8xf32>
    %86 = tpu.matmul %85, %48, %cst_30 {dimension_numbers = #tpu.dot_dimension_numbers<[1], [0], [0], [1], [0, 0, 1, 1], [], []>} : vector<16x64xf32>, vector<64x8xf32>, vector<16x8xf32> -> vector<16x8xf32>
    %87 = tpu.concatenate %59, %68, %77, %86 in 1 : vector<16x8xf32>, vector<16x8xf32>, vector<16x8xf32>, vector<16x8xf32> -> vector<16x32xf32>
    %c0_31 = arith.constant 0 : index
    %c0_32 = arith.constant 0 : index
    %88 = vector.load %arg7[%c0_31, %c0_32] : memref<32x32xf32, #tpu.memory_space<vmem>>, vector<32x32xf32>
    %89 = arith.truncf %87 : vector<16x32xf32> to vector<16x32xbf16>
    %90 = arith.truncf %88 : vector<32x32xf32> to vector<32x32xbf16>
    %cst_33 = arith.constant dense<0.000000e+00> : vector<16x32xf32>
    %91 = tpu.matmul %89, %90, %cst_33 {dimension_numbers = #tpu.dot_dimension_numbers<[1], [0], [0], [1], [0, 0, 1, 1], [], []>} : vector<16x32xbf16>, vector<32x32xbf16>, vector<16x32xf32> -> vector<16x32xf32>
    %92 = arith.addf %1, %91 : vector<16x32xf32>
    %c0_34 = arith.constant 0 : index
    %c0_35 = arith.constant 0 : index
    %93 = vector.load %arg8[%c0_34, %c0_35] : memref<1x32xf32, #tpu.memory_space<vmem>>, vector<1x32xf32>
    %94 = vector.broadcast %93 : vector<1x32xf32> to vector<16x32xf32>
    %95 = arith.addf %92, %94 : vector<16x32xf32>
    %c0_36 = arith.constant 0 : index
    %c0_37 = arith.constant 0 : index
    %96 = vector.load %arg9[%c0_36, %c0_37] : memref<1x32xf32, #tpu.memory_space<vmem>>, vector<1x32xf32>
    %c0_38 = arith.constant 0 : index
    %c0_39 = arith.constant 0 : index
    %97 = vector.load %arg10[%c0_38, %c0_39] : memref<1x32xf32, #tpu.memory_space<vmem>>, vector<1x32xf32>
    %cst_40 = arith.constant dense<0.000000e+00> : vector<16xf32>
    %98 = vector.multi_reduction <add>, %95, %cst_40 [1] : vector<16x32xf32> to vector<16xf32>
    %99 = vector.shape_cast %98 : vector<16xf32> to vector<16x1xf32>
    %cst_41 = arith.constant 3.200000e+01 : f32
    %100 = vector.broadcast %cst_41 : f32 to vector<16x1xf32>
    %101 = arith.divf %99, %100 : vector<16x1xf32>
    %102 = vector.broadcast %101 : vector<16x1xf32> to vector<16x32xf32>
    %103 = arith.subf %95, %102 : vector<16x32xf32>
    %104 = arith.mulf %103, %103 : vector<16x32xf32>
    %cst_42 = arith.constant dense<0.000000e+00> : vector<16xf32>
    %105 = vector.multi_reduction <add>, %104, %cst_42 [1] : vector<16x32xf32> to vector<16xf32>
    %106 = vector.shape_cast %105 : vector<16xf32> to vector<16x1xf32>
    %cst_43 = arith.constant 3.200000e+01 : f32
    %107 = vector.broadcast %cst_43 : f32 to vector<16x1xf32>
    %108 = arith.divf %106, %107 : vector<16x1xf32>
    %cst_44 = arith.constant 9.99999974E-6 : f32
    %109 = vector.broadcast %cst_44 : f32 to vector<16x1xf32>
    %110 = arith.addf %108, %109 : vector<16x1xf32>
    %111 = math.rsqrt %110 : vector<16x1xf32>
    %112 = vector.broadcast %111 : vector<16x1xf32> to vector<16x32xf32>
    %113 = arith.mulf %103, %112 : vector<16x32xf32>
    %114 = vector.broadcast %96 : vector<1x32xf32> to vector<16x32xf32>
    %115 = arith.mulf %113, %114 : vector<16x32xf32>
    %116 = vector.broadcast %97 : vector<1x32xf32> to vector<16x32xf32>
    %117 = arith.addf %115, %116 : vector<16x32xf32>
    %c0_45 = arith.constant 0 : index
    %c0_46 = arith.constant 0 : index
    %118 = vector.load %arg11[%c0_45, %c0_46] : memref<32x32xf32, #tpu.memory_space<vmem>>, vector<32x32xf32>
    %119 = arith.truncf %117 : vector<16x32xf32> to vector<16x32xbf16>
    %120 = arith.truncf %118 : vector<32x32xf32> to vector<32x32xbf16>
    %cst_47 = arith.constant dense<0.000000e+00> : vector<16x32xf32>
    %121 = tpu.matmul %119, %120, %cst_47 {dimension_numbers = #tpu.dot_dimension_numbers<[1], [0], [0], [1], [0, 0, 1, 1], [], []>} : vector<16x32xbf16>, vector<32x32xbf16>, vector<16x32xf32> -> vector<16x32xf32>
    %c0_48 = arith.constant 0 : index
    %c0_49 = arith.constant 0 : index
    %122 = vector.load %arg12[%c0_48, %c0_49] : memref<1x32xf32, #tpu.memory_space<vmem>>, vector<1x32xf32>
    %123 = vector.broadcast %122 : vector<1x32xf32> to vector<16x32xf32>
    %124 = arith.addf %121, %123 : vector<16x32xf32>
    %c0_50 = arith.constant 0 : index
    %c0_51 = arith.constant 0 : index
    %125 = vector.load %arg13[%c0_50, %c0_51] : memref<32x64xf32, #tpu.memory_space<vmem>>, vector<32x64xf32>
    %126 = arith.truncf %3 : vector<16x32xf32> to vector<16x32xbf16>
    %127 = arith.truncf %125 : vector<32x64xf32> to vector<32x64xbf16>
    %cst_52 = arith.constant dense<0.000000e+00> : vector<16x64xf32>
    %128 = tpu.matmul %126, %127, %cst_52 {dimension_numbers = #tpu.dot_dimension_numbers<[1], [0], [0], [1], [0, 0, 1, 1], [], []>} : vector<16x32xbf16>, vector<32x64xbf16>, vector<16x64xf32> -> vector<16x64xf32>
    %c0_53 = arith.constant 0 : index
    %c0_54 = arith.constant 0 : index
    %129 = vector.load %arg14[%c0_53, %c0_54] : memref<1x64xf32, #tpu.memory_space<vmem>>, vector<1x64xf32>
    %130 = vector.broadcast %129 : vector<1x64xf32> to vector<16x64xf32>
    %131 = arith.addf %128, %130 : vector<16x64xf32>
    %132 = vector.extract_strided_slice %131 {offsets = [0, 0], sizes = [16, 32], strides = [1, 1]} : vector<16x64xf32> to vector<16x32xf32>
    %133 = vector.extract_strided_slice %131 {offsets = [0, 32], sizes = [16, 32], strides = [1, 1]} : vector<16x64xf32> to vector<16x32xf32>
    %c0_55 = arith.constant 0 : index
    %c0_56 = arith.constant 0 : index
    %134 = vector.load %arg4[%c0_55, %c0_56] : memref<64x64xf32, #tpu.memory_space<vmem>>, vector<64x64xf32>
    %135 = vector.extract_strided_slice %124 {offsets = [0, 0], sizes = [16, 8], strides = [1, 1]} : vector<16x32xf32> to vector<16x8xf32>
    %136 = vector.extract_strided_slice %124 {offsets = [0, 8], sizes = [16, 8], strides = [1, 1]} : vector<16x32xf32> to vector<16x8xf32>
    %137 = vector.extract_strided_slice %124 {offsets = [0, 16], sizes = [16, 8], strides = [1, 1]} : vector<16x32xf32> to vector<16x8xf32>
    %138 = vector.extract_strided_slice %124 {offsets = [0, 24], sizes = [16, 8], strides = [1, 1]} : vector<16x32xf32> to vector<16x8xf32>
    %139 = tpu.concatenate %135, %136, %137, %138 in 0 : vector<16x8xf32>, vector<16x8xf32>, vector<16x8xf32>, vector<16x8xf32> -> vector<64x8xf32>
    %140 = vector.extract_strided_slice %132 {offsets = [0, 0], sizes = [16, 8], strides = [1, 1]} : vector<16x32xf32> to vector<16x8xf32>
    %141 = vector.extract_strided_slice %132 {offsets = [0, 8], sizes = [16, 8], strides = [1, 1]} : vector<16x32xf32> to vector<16x8xf32>
    %142 = vector.extract_strided_slice %132 {offsets = [0, 16], sizes = [16, 8], strides = [1, 1]} : vector<16x32xf32> to vector<16x8xf32>
    %143 = vector.extract_strided_slice %132 {offsets = [0, 24], sizes = [16, 8], strides = [1, 1]} : vector<16x32xf32> to vector<16x8xf32>
    %144 = tpu.concatenate %140, %141, %142, %143 in 0 : vector<16x8xf32>, vector<16x8xf32>, vector<16x8xf32>, vector<16x8xf32> -> vector<64x8xf32>
    %145 = vector.extract_strided_slice %133 {offsets = [0, 0], sizes = [16, 8], strides = [1, 1]} : vector<16x32xf32> to vector<16x8xf32>
    %146 = vector.extract_strided_slice %133 {offsets = [0, 8], sizes = [16, 8], strides = [1, 1]} : vector<16x32xf32> to vector<16x8xf32>
    %147 = vector.extract_strided_slice %133 {offsets = [0, 16], sizes = [16, 8], strides = [1, 1]} : vector<16x32xf32> to vector<16x8xf32>
    %148 = vector.extract_strided_slice %133 {offsets = [0, 24], sizes = [16, 8], strides = [1, 1]} : vector<16x32xf32> to vector<16x8xf32>
    %149 = tpu.concatenate %145, %146, %147, %148 in 0 : vector<16x8xf32>, vector<16x8xf32>, vector<16x8xf32>, vector<16x8xf32> -> vector<64x8xf32>
    %150 = arith.truncf %139 : vector<64x8xf32> to vector<64x8xbf16>
    %151 = arith.truncf %144 : vector<64x8xf32> to vector<64x8xbf16>
    %cst_57 = arith.constant dense<0.000000e+00> : vector<64x64xf32>
    %152 = tpu.matmul %150, %151, %cst_57 {dimension_numbers = #tpu.dot_dimension_numbers<[1], [1], [0], [0], [0, 0, 1, 0], [], []>} : vector<64x8xbf16>, vector<64x8xbf16>, vector<64x64xf32> -> vector<64x64xf32>
    %cst_58 = arith.constant 0.353553385 : f32
    %153 = vector.broadcast %cst_58 : f32 to vector<64x64xf32>
    %154 = arith.mulf %152, %153 : vector<64x64xf32>
    %155 = arith.addf %154, %134 : vector<64x64xf32>
    %cst_59 = arith.constant dense<0xFF800000> : vector<64xf32>
    %156 = vector.multi_reduction <maximumf>, %155, %cst_59 [1] : vector<64x64xf32> to vector<64xf32>
    %157 = vector.shape_cast %156 : vector<64xf32> to vector<64x1xf32>
    %158 = vector.broadcast %157 : vector<64x1xf32> to vector<64x64xf32>
    %159 = arith.subf %155, %158 : vector<64x64xf32>
    %160 = math.exp %159 : vector<64x64xf32>
    %cst_60 = arith.constant dense<0.000000e+00> : vector<64xf32>
    %161 = vector.multi_reduction <add>, %160, %cst_60 [1] : vector<64x64xf32> to vector<64xf32>
    %162 = vector.shape_cast %161 : vector<64xf32> to vector<64x1xf32>
    %163 = tpu.reciprocal %162 {approx = true} : vector<64x1xf32> -> vector<64x1xf32>
    %164 = vector.broadcast %163 : vector<64x1xf32> to vector<64x64xf32>
    %165 = arith.mulf %160, %164 : vector<64x64xf32>
    %166 = arith.truncf %165 : vector<64x64xf32> to vector<64x64xbf16>
    %167 = arith.truncf %149 : vector<64x8xf32> to vector<64x8xbf16>
    %cst_61 = arith.constant dense<0.000000e+00> : vector<64x8xf32>
    %168 = tpu.matmul %166, %167, %cst_61 {dimension_numbers = #tpu.dot_dimension_numbers<[1], [0], [0], [1], [0, 0, 1, 1], [], []>} : vector<64x64xbf16>, vector<64x8xbf16>, vector<64x8xf32> -> vector<64x8xf32>
    %169 = vector.extract_strided_slice %168 {offsets = [0, 0], sizes = [16, 8], strides = [1, 1]} : vector<64x8xf32> to vector<16x8xf32>
    %170 = vector.extract_strided_slice %168 {offsets = [16, 0], sizes = [16, 8], strides = [1, 1]} : vector<64x8xf32> to vector<16x8xf32>
    %171 = vector.extract_strided_slice %168 {offsets = [32, 0], sizes = [16, 8], strides = [1, 1]} : vector<64x8xf32> to vector<16x8xf32>
    %172 = vector.extract_strided_slice %168 {offsets = [48, 0], sizes = [16, 8], strides = [1, 1]} : vector<64x8xf32> to vector<16x8xf32>
    %173 = tpu.concatenate %169, %170, %171, %172 in 1 : vector<16x8xf32>, vector<16x8xf32>, vector<16x8xf32>, vector<16x8xf32> -> vector<16x32xf32>
    %c0_62 = arith.constant 0 : index
    %c0_63 = arith.constant 0 : index
    %174 = vector.load %arg15[%c0_62, %c0_63] : memref<32x32xf32, #tpu.memory_space<vmem>>, vector<32x32xf32>
    %175 = arith.truncf %173 : vector<16x32xf32> to vector<16x32xbf16>
    %176 = arith.truncf %174 : vector<32x32xf32> to vector<32x32xbf16>
    %cst_64 = arith.constant dense<0.000000e+00> : vector<16x32xf32>
    %177 = tpu.matmul %175, %176, %cst_64 {dimension_numbers = #tpu.dot_dimension_numbers<[1], [0], [0], [1], [0, 0, 1, 1], [], []>} : vector<16x32xbf16>, vector<32x32xbf16>, vector<16x32xf32> -> vector<16x32xf32>
    %178 = arith.addf %117, %177 : vector<16x32xf32>
    %c0_65 = arith.constant 0 : index
    %c0_66 = arith.constant 0 : index
    %179 = vector.load %arg16[%c0_65, %c0_66] : memref<1x32xf32, #tpu.memory_space<vmem>>, vector<1x32xf32>
    %180 = vector.broadcast %179 : vector<1x32xf32> to vector<16x32xf32>
    %181 = arith.addf %178, %180 : vector<16x32xf32>
    %c0_67 = arith.constant 0 : index
    %c0_68 = arith.constant 0 : index
    %182 = vector.load %arg17[%c0_67, %c0_68] : memref<1x32xf32, #tpu.memory_space<vmem>>, vector<1x32xf32>
    %c0_69 = arith.constant 0 : index
    %c0_70 = arith.constant 0 : index
    %183 = vector.load %arg18[%c0_69, %c0_70] : memref<1x32xf32, #tpu.memory_space<vmem>>, vector<1x32xf32>
    %cst_71 = arith.constant dense<0.000000e+00> : vector<16xf32>
    %184 = vector.multi_reduction <add>, %181, %cst_71 [1] : vector<16x32xf32> to vector<16xf32>
    %185 = vector.shape_cast %184 : vector<16xf32> to vector<16x1xf32>
    %cst_72 = arith.constant 3.200000e+01 : f32
    %186 = vector.broadcast %cst_72 : f32 to vector<16x1xf32>
    %187 = arith.divf %185, %186 : vector<16x1xf32>
    %188 = vector.broadcast %187 : vector<16x1xf32> to vector<16x32xf32>
    %189 = arith.subf %181, %188 : vector<16x32xf32>
    %190 = arith.mulf %189, %189 : vector<16x32xf32>
    %cst_73 = arith.constant dense<0.000000e+00> : vector<16xf32>
    %191 = vector.multi_reduction <add>, %190, %cst_73 [1] : vector<16x32xf32> to vector<16xf32>
    %192 = vector.shape_cast %191 : vector<16xf32> to vector<16x1xf32>
    %cst_74 = arith.constant 3.200000e+01 : f32
    %193 = vector.broadcast %cst_74 : f32 to vector<16x1xf32>
    %194 = arith.divf %192, %193 : vector<16x1xf32>
    %cst_75 = arith.constant 9.99999974E-6 : f32
    %195 = vector.broadcast %cst_75 : f32 to vector<16x1xf32>
    %196 = arith.addf %194, %195 : vector<16x1xf32>
    %197 = math.rsqrt %196 : vector<16x1xf32>
    %198 = vector.broadcast %197 : vector<16x1xf32> to vector<16x32xf32>
    %199 = arith.mulf %189, %198 : vector<16x32xf32>
    %200 = vector.broadcast %182 : vector<1x32xf32> to vector<16x32xf32>
    %201 = arith.mulf %199, %200 : vector<16x32xf32>
    %202 = vector.broadcast %183 : vector<1x32xf32> to vector<16x32xf32>
    %203 = arith.addf %201, %202 : vector<16x32xf32>
    %c0_76 = arith.constant 0 : index
    %c0_77 = arith.constant 0 : index
    %204 = vector.load %arg19[%c0_76, %c0_77] : memref<32x64xf32, #tpu.memory_space<vmem>>, vector<32x64xf32>
    %205 = arith.truncf %203 : vector<16x32xf32> to vector<16x32xbf16>
    %206 = arith.truncf %204 : vector<32x64xf32> to vector<32x64xbf16>
    %cst_78 = arith.constant dense<0.000000e+00> : vector<16x64xf32>
    %207 = tpu.matmul %205, %206, %cst_78 {dimension_numbers = #tpu.dot_dimension_numbers<[1], [0], [0], [1], [0, 0, 1, 1], [], []>} : vector<16x32xbf16>, vector<32x64xbf16>, vector<16x64xf32> -> vector<16x64xf32>
    %c0_79 = arith.constant 0 : index
    %c0_80 = arith.constant 0 : index
    %208 = vector.load %arg20[%c0_79, %c0_80] : memref<1x64xf32, #tpu.memory_space<vmem>>, vector<1x64xf32>
    %209 = vector.broadcast %208 : vector<1x64xf32> to vector<16x64xf32>
    %210 = arith.addf %207, %209 : vector<16x64xf32>
    %cst_81 = arith.constant 5.000000e-01 : f32
    %211 = vector.broadcast %cst_81 : f32 to vector<16x64xf32>
    %212 = arith.mulf %211, %210 : vector<16x64xf32>
    %cst_82 = arith.constant 4.471500e-02 : f32
    %213 = vector.broadcast %cst_82 : f32 to vector<16x64xf32>
    %214 = arith.mulf %213, %210 : vector<16x64xf32>
    %215 = arith.mulf %214, %210 : vector<16x64xf32>
    %216 = arith.mulf %215, %210 : vector<16x64xf32>
    %217 = arith.addf %210, %216 : vector<16x64xf32>
    %cst_83 = arith.constant 0.797884583 : f32
    %218 = vector.broadcast %cst_83 : f32 to vector<16x64xf32>
    %219 = arith.mulf %218, %217 : vector<16x64xf32>
    %220 = math.tanh %219 : vector<16x64xf32>
    %cst_84 = arith.constant 1.000000e+00 : f32
    %221 = vector.broadcast %cst_84 : f32 to vector<16x64xf32>
    %222 = arith.addf %221, %220 : vector<16x64xf32>
    %223 = arith.mulf %212, %222 : vector<16x64xf32>
    %c0_85 = arith.constant 0 : index
    %c0_86 = arith.constant 0 : index
    %224 = vector.load %arg21[%c0_85, %c0_86] : memref<64x32xf32, #tpu.memory_space<vmem>>, vector<64x32xf32>
    %225 = arith.truncf %223 : vector<16x64xf32> to vector<16x64xbf16>
    %226 = arith.truncf %224 : vector<64x32xf32> to vector<64x32xbf16>
    %cst_87 = arith.constant dense<0.000000e+00> : vector<16x32xf32>
    %227 = tpu.matmul %225, %226, %cst_87 {dimension_numbers = #tpu.dot_dimension_numbers<[1], [0], [0], [1], [0, 0, 1, 1], [], []>} : vector<16x64xbf16>, vector<64x32xbf16>, vector<16x32xf32> -> vector<16x32xf32>
    %228 = arith.addf %203, %227 : vector<16x32xf32>
    %c0_88 = arith.constant 0 : index
    %c0_89 = arith.constant 0 : index
    %229 = vector.load %arg22[%c0_88, %c0_89] : memref<1x32xf32, #tpu.memory_space<vmem>>, vector<1x32xf32>
    %230 = vector.broadcast %229 : vector<1x32xf32> to vector<16x32xf32>
    %231 = arith.addf %228, %230 : vector<16x32xf32>
    %c0_90 = arith.constant 0 : index
    %c0_91 = arith.constant 0 : index
    %232 = vector.load %arg23[%c0_90, %c0_91] : memref<1x32xf32, #tpu.memory_space<vmem>>, vector<1x32xf32>
    %c0_92 = arith.constant 0 : index
    %c0_93 = arith.constant 0 : index
    %233 = vector.load %arg24[%c0_92, %c0_93] : memref<1x32xf32, #tpu.memory_space<vmem>>, vector<1x32xf32>
    %cst_94 = arith.constant dense<0.000000e+00> : vector<16xf32>
    %234 = vector.multi_reduction <add>, %231, %cst_94 [1] : vector<16x32xf32> to vector<16xf32>
    %235 = vector.shape_cast %234 : vector<16xf32> to vector<16x1xf32>
    %cst_95 = arith.constant 3.200000e+01 : f32
    %236 = vector.broadcast %cst_95 : f32 to vector<16x1xf32>
    %237 = arith.divf %235, %236 : vector<16x1xf32>
    %238 = vector.broadcast %237 : vector<16x1xf32> to vector<16x32xf32>
    %239 = arith.subf %231, %238 : vector<16x32xf32>
    %240 = arith.mulf %239, %239 : vector<16x32xf32>
    %cst_96 = arith.constant dense<0.000000e+00> : vector<16xf32>
    %241 = vector.multi_reduction <add>, %240, %cst_96 [1] : vector<16x32xf32> to vector<16xf32>
    %242 = vector.shape_cast %241 : vector<16xf32> to vector<16x1xf32>
    %cst_97 = arith.constant 3.200000e+01 : f32
    %243 = vector.broadcast %cst_97 : f32 to vector<16x1xf32>
    %244 = arith.divf %242, %243 : vector<16x1xf32>
    %cst_98 = arith.constant 9.99999974E-6 : f32
    %245 = vector.broadcast %cst_98 : f32 to vector<16x1xf32>
    %246 = arith.addf %244, %245 : vector<16x1xf32>
    %247 = math.rsqrt %246 : vector<16x1xf32>
    %248 = vector.broadcast %247 : vector<16x1xf32> to vector<16x32xf32>
    %249 = arith.mulf %239, %248 : vector<16x32xf32>
    %250 = vector.broadcast %232 : vector<1x32xf32> to vector<16x32xf32>
    %251 = arith.mulf %249, %250 : vector<16x32xf32>
    %252 = vector.broadcast %233 : vector<1x32xf32> to vector<16x32xf32>
    %253 = arith.addf %251, %252 : vector<16x32xf32>
    %c0_99 = arith.constant 0 : index
    %c0_100 = arith.constant 0 : index
    %c0_101 = arith.constant 0 : index
    %254 = vector.load %arg25[%c0_99, %c0_100, %c0_101] : memref<1x16x32xf32, #tpu.memory_space<vmem>>, vector<1x16x32xf32>
    %255 = vector.shape_cast %254 : vector<1x16x32xf32> to vector<16x32xf32>
    %256 = vector.shape_cast %253 : vector<16x32xf32> to vector<1x16x32xf32>
    tpu.vector_store %arg25[%c0_99, %c0_100, %c0_101], %256 {strides = array<i32>} : memref<1x16x32xf32, #tpu.memory_space<vmem>>, vector<1x16x32xf32>,
    return
  }
  func.func @transform_0(%arg0: i32) -> (i32, i32, i32) {
    %c0_i32 = arith.constant 0 : i32
    %c0_i32_0 = arith.constant 0 : i32
    %c0_i32_1 = arith.constant 0 : i32
    return %arg0, %c0_i32, %c0_i32_0 : i32, i32, i32
  }
  func.func @transform_1(%arg0: i32) -> (i32, i32, i32) {
    %c0_i32 = arith.constant 0 : i32
    %c0_i32_0 = arith.constant 0 : i32
    %c0_i32_1 = arith.constant 0 : i32
    return %arg0, %c0_i32, %c0_i32_0 : i32, i32, i32
  }
  func.func @transform_2(%arg0: i32) -> (i32, i32) {
    %c0_i32 = arith.constant 0 : i32
    %c0_i32_0 = arith.constant 0 : i32
    %c0_i32_1 = arith.constant 0 : i32
    return %c0_i32, %c0_i32_0 : i32, i32
  }
  func.func @transform_3(%arg0: i32) -> (i32, i32) {
    %c0_i32 = arith.constant 0 : i32
    %c0_i32_0 = arith.constant 0 : i32
    %c0_i32_1 = arith.constant 0 : i32
    return %c0_i32, %c0_i32_0 : i32, i32
  }
  func.func @transform_4(%arg0: i32) -> (i32, i32) {
    %c0_i32 = arith.constant 0 : i32
    %c0_i32_0 = arith.constant 0 : i32
    %c0_i32_1 = arith.constant 0 : i32
    return %c0_i32, %c0_i32_0 : i32, i32
  }
  func.func @transform_5(%arg0: i32) -> (i32, i32) {
    %c0_i32 = arith.constant 0 : i32
    %c0_i32_0 = arith.constant 0 : i32
    %c0_i32_1 = arith.constant 0 : i32
    return %c0_i32, %c0_i32_0 : i32, i32
  }
  func.func @transform_6(%arg0: i32) -> (i32, i32) {
    %c0_i32 = arith.constant 0 : i32
    %c0_i32_0 = arith.constant 0 : i32
    %c0_i32_1 = arith.constant 0 : i32
    return %c0_i32, %c0_i32_0 : i32, i32
  }
  func.func @transform_7(%arg0: i32) -> (i32, i32) {
    %c0_i32 = arith.constant 0 : i32
    %c0_i32_0 = arith.constant 0 : i32
    %c0_i32_1 = arith.constant 0 : i32
    return %c0_i32, %c0_i32_0 : i32, i32
  }
  func.func @transform_8(%arg0: i32) -> (i32, i32) {
    %c0_i32 = arith.constant 0 : i32
    %c0_i32_0 = arith.constant 0 : i32
    %c0_i32_1 = arith.constant 0 : i32
    return %c0_i32, %c0_i32_0 : i32, i32
  }
  func.func @transform_9(%arg0: i32) -> (i32, i32) {
    %c0_i32 = arith.constant 0 : i32
    %c0_i32_0 = arith.constant 0 : i32
    %c0_i32_1 = arith.constant 0 : i32
    return %c0_i32, %c0_i32_0 : i32, i32
  }
  func.func @transform_10(%arg0: i32) -> (i32, i32) {
    %c0_i32 = arith.constant 0 : i32
    %c0_i32_0 = arith.constant 0 : i32
    %c0_i32_1 = arith.constant 0 : i32
    return %c0_i32, %c0_i32_0 : i32, i32
  }
  func.func @transform_11(%arg0: i32) -> (i32, i32) {
    %c0_i32 = arith.constant 0 : i32
    %c0_i32_0 = arith.constant 0 : i32
    %c0_i32_1 = arith.constant 0 : i32
    return %c0_i32, %c0_i32_0 : i32, i32
  }
  func.func @transform_12(%arg0: i32) -> (i32, i32) {
    %c0_i32 = arith.constant 0 : i32
    %c0_i32_0 = arith.constant 0 : i32
    %c0_i32_1 = arith.constant 0 : i32
    return %c0_i32, %c0_i32_0 : i32, i32
  }
  func.func @transform_13(%arg0: i32) -> (i32, i32) {
    %c0_i32 = arith.constant 0 : i32
    %c0_i32_0 = arith.constant 0 : i32
    %c0_i32_1 = arith.constant 0 : i32
    return %c0_i32, %c0_i32_0 : i32, i32
  }
  func.func @transform_14(%arg0: i32) -> (i32, i32) {
    %c0_i32 = arith.constant 0 : i32
    %c0_i32_0 = arith.constant 0 : i32
    %c0_i32_1 = arith.constant 0 : i32
    return %c0_i32, %c0_i32_0 : i32, i32
  }
  func.func @transform_15(%arg0: i32) -> (i32, i32) {
    %c0_i32 = arith.constant 0 : i32
    %c0_i32_0 = arith.constant 0 : i32
    %c0_i32_1 = arith.constant 0 : i32
    return %c0_i32, %c0_i32_0 : i32, i32
  }
  func.func @transform_16(%arg0: i32) -> (i32, i32) {
    %c0_i32 = arith.constant 0 : i32
    %c0_i32_0 = arith.constant 0 : i32
    %c0_i32_1 = arith.constant 0 : i32
    return %c0_i32, %c0_i32_0 : i32, i32
  }
  func.func @transform_17(%arg0: i32) -> (i32, i32) {
    %c0_i32 = arith.constant 0 : i32
    %c0_i32_0 = arith.constant 0 : i32
    %c0_i32_1 = arith.constant 0 : i32
    return %c0_i32, %c0_i32_0 : i32, i32
  }
  func.func @transform_18(%arg0: i32) -> (i32, i32) {
    %c0_i32 = arith.constant 0 : i32
    %c0_i32_0 = arith.constant 0 : i32
    %c0_i32_1 = arith.constant 0 : i32
    return %c0_i32, %c0_i32_0 : i32, i32
  }
  func.func @transform_19(%arg0: i32) -> (i32, i32) {
    %c0_i32 = arith.constant 0 : i32
    %c0_i32_0 = arith.constant 0 : i32
    %c0_i32_1 = arith.constant 0 : i32
    return %c0_i32, %c0_i32_0 : i32, i32
  }
  func.func @transform_20(%arg0: i32) -> (i32, i32) {
    %c0_i32 = arith.constant 0 : i32
    %c0_i32_0 = arith.constant 0 : i32
    %c0_i32_1 = arith.constant 0 : i32
    return %c0_i32, %c0_i32_0 : i32, i32
  }
  func.func @transform_21(%arg0: i32) -> (i32, i32) {
    %c0_i32 = arith.constant 0 : i32
    %c0_i32_0 = arith.constant 0 : i32
    %c0_i32_1 = arith.constant 0 : i32
    return %c0_i32, %c0_i32_0 : i32, i32
  }
  func.func @transform_22(%arg0: i32) -> (i32, i32) {
    %c0_i32 = arith.constant 0 : i32
    %c0_i32_0 = arith.constant 0 : i32
    %c0_i32_1 = arith.constant 0 : i32
    return %c0_i32, %c0_i32_0 : i32, i32
  }
  func.func @transform_23(%arg0: i32) -> (i32, i32) {
    %c0_i32 = arith.constant 0 : i32
    %c0_i32_0 = arith.constant 0 : i32
    %c0_i32_1 = arith.constant 0 : i32
    return %c0_i32, %c0_i32_0 : i32, i32
  }
  func.func @transform_24(%arg0: i32) -> (i32, i32, i32) {
    %c0_i32 = arith.constant 0 : i32
    %c0_i32_0 = arith.constant 0 : i32
    %c0_i32_1 = arith.constant 0 : i32
    return %arg0, %c0_i32, %c0_i32_0 : i32, i32, i32
  }
}

module attributes {stable_mosaic.version = 11 : i64} {
  func.func @_norm_proj_kernel(%arg0: i32, %arg1: memref<1x16x32xf32, #tpu.memory_space<vmem>>, %arg2: memref<1x32xf32, #tpu.memory_space<vmem>>, %arg3: memref<1x32xf32, #tpu.memory_space<vmem>>, %arg4: memref<32x4xf32, #tpu.memory_space<vmem>>, %arg5: memref<1x4xf32, #tpu.memory_space<vmem>>, %arg6: memref<1x16x4xf32, #tpu.memory_space<vmem>>) attributes {dimension_semantics = [#tpu.dimension_semantics<parallel>], iteration_bounds = array<i64: 2>, scalar_prefetch = 0 : i64, scratch_operands = 0 : i64, tpu.core_type = #tpu.core_type<tc>, window_params = [{transform_indices = @transform_0, window_bounds = array<i64: 1, 16, 32>}, {pipeline_mode = #tpu.pipeline_mode<synchronous>, transform_indices = @transform_1, window_bounds = array<i64: 1, 32>}, {pipeline_mode = #tpu.pipeline_mode<synchronous>, transform_indices = @transform_2, window_bounds = array<i64: 1, 32>}, {pipeline_mode = #tpu.pipeline_mode<synchronous>, transform_indices = @transform_3, window_bounds = array<i64: 32, 4>}, {pipeline_mode = #tpu.pipeline_mode<synchronous>, transform_indices = @transform_4, window_bounds = array<i64: 1, 4>}, {transform_indices = @transform_5, window_bounds = array<i64: 1, 16, 4>}]} {
    %c0 = arith.constant 0 : index
    %c0_0 = arith.constant 0 : index
    %c0_1 = arith.constant 0 : index
    %0 = vector.load %arg1[%c0, %c0_0, %c0_1] : memref<1x16x32xf32, #tpu.memory_space<vmem>>, vector<1x16x32xf32>
    %1 = vector.shape_cast %0 : vector<1x16x32xf32> to vector<16x32xf32>
    %c0_2 = arith.constant 0 : index
    %c0_3 = arith.constant 0 : index
    %2 = vector.load %arg2[%c0_2, %c0_3] : memref<1x32xf32, #tpu.memory_space<vmem>>, vector<1x32xf32>
    %c0_4 = arith.constant 0 : index
    %c0_5 = arith.constant 0 : index
    %3 = vector.load %arg3[%c0_4, %c0_5] : memref<1x32xf32, #tpu.memory_space<vmem>>, vector<1x32xf32>
    %cst = arith.constant dense<0.000000e+00> : vector<16xf32>
    %4 = vector.multi_reduction <add>, %1, %cst [1] : vector<16x32xf32> to vector<16xf32>
    %5 = vector.shape_cast %4 : vector<16xf32> to vector<16x1xf32>
    %cst_6 = arith.constant 3.200000e+01 : f32
    %6 = vector.broadcast %cst_6 : f32 to vector<16x1xf32>
    %7 = arith.divf %5, %6 : vector<16x1xf32>
    %8 = vector.broadcast %7 : vector<16x1xf32> to vector<16x32xf32>
    %9 = arith.subf %1, %8 : vector<16x32xf32>
    %10 = arith.mulf %9, %9 : vector<16x32xf32>
    %cst_7 = arith.constant dense<0.000000e+00> : vector<16xf32>
    %11 = vector.multi_reduction <add>, %10, %cst_7 [1] : vector<16x32xf32> to vector<16xf32>
    %12 = vector.shape_cast %11 : vector<16xf32> to vector<16x1xf32>
    %cst_8 = arith.constant 3.200000e+01 : f32
    %13 = vector.broadcast %cst_8 : f32 to vector<16x1xf32>
    %14 = arith.divf %12, %13 : vector<16x1xf32>
    %cst_9 = arith.constant 9.99999974E-6 : f32
    %15 = vector.broadcast %cst_9 : f32 to vector<16x1xf32>
    %16 = arith.addf %14, %15 : vector<16x1xf32>
    %17 = math.rsqrt %16 : vector<16x1xf32>
    %18 = vector.broadcast %17 : vector<16x1xf32> to vector<16x32xf32>
    %19 = arith.mulf %9, %18 : vector<16x32xf32>
    %20 = vector.broadcast %2 : vector<1x32xf32> to vector<16x32xf32>
    %21 = arith.mulf %19, %20 : vector<16x32xf32>
    %22 = vector.broadcast %3 : vector<1x32xf32> to vector<16x32xf32>
    %23 = arith.addf %21, %22 : vector<16x32xf32>
    %c0_10 = arith.constant 0 : index
    %c0_11 = arith.constant 0 : index
    %24 = vector.load %arg4[%c0_10, %c0_11] : memref<32x4xf32, #tpu.memory_space<vmem>>, vector<32x4xf32>
    %25 = arith.truncf %23 : vector<16x32xf32> to vector<16x32xbf16>
    %26 = arith.truncf %24 : vector<32x4xf32> to vector<32x4xbf16>
    %cst_12 = arith.constant dense<0.000000e+00> : vector<16x4xf32>
    %27 = tpu.matmul %25, %26, %cst_12 {dimension_numbers = #tpu.dot_dimension_numbers<[1], [0], [0], [1], [0, 0, 1, 1], [], []>} : vector<16x32xbf16>, vector<32x4xbf16>, vector<16x4xf32> -> vector<16x4xf32>
    %c0_13 = arith.constant 0 : index
    %c0_14 = arith.constant 0 : index
    %28 = vector.load %arg5[%c0_13, %c0_14] : memref<1x4xf32, #tpu.memory_space<vmem>>, vector<1x4xf32>
    %29 = vector.broadcast %28 : vector<1x4xf32> to vector<16x4xf32>
    %30 = arith.addf %27, %29 : vector<16x4xf32>
    %c0_15 = arith.constant 0 : index
    %c0_16 = arith.constant 0 : index
    %c0_17 = arith.constant 0 : index
    %31 = vector.load %arg6[%c0_15, %c0_16, %c0_17] : memref<1x16x4xf32, #tpu.memory_space<vmem>>, vector<1x16x4xf32>
    %32 = vector.shape_cast %31 : vector<1x16x4xf32> to vector<16x4xf32>
    %33 = vector.shape_cast %30 : vector<16x4xf32> to vector<1x16x4xf32>
    tpu.vector_store %arg6[%c0_15, %c0_16, %c0_17], %33 {strides = array<i32>} : memref<1x16x4xf32, #tpu.memory_space<vmem>>, vector<1x16x4xf32>,
    return
  }
  func.func @transform_0(%arg0: i32) -> (i32, i32, i32) {
    %c0_i32 = arith.constant 0 : i32
    %c0_i32_0 = arith.constant 0 : i32
    %c0_i32_1 = arith.constant 0 : i32
    return %arg0, %c0_i32, %c0_i32_0 : i32, i32, i32
  }
  func.func @transform_1(%arg0: i32) -> (i32, i32) {
    %c0_i32 = arith.constant 0 : i32
    %c0_i32_0 = arith.constant 0 : i32
    %c0_i32_1 = arith.constant 0 : i32
    return %c0_i32, %c0_i32_0 : i32, i32
  }
  func.func @transform_2(%arg0: i32) -> (i32, i32) {
    %c0_i32 = arith.constant 0 : i32
    %c0_i32_0 = arith.constant 0 : i32
    %c0_i32_1 = arith.constant 0 : i32
    return %c0_i32, %c0_i32_0 : i32, i32
  }
  func.func @transform_3(%arg0: i32) -> (i32, i32) {
    %c0_i32 = arith.constant 0 : i32
    %c0_i32_0 = arith.constant 0 : i32
    %c0_i32_1 = arith.constant 0 : i32
    return %c0_i32, %c0_i32_0 : i32, i32
  }
  func.func @transform_4(%arg0: i32) -> (i32, i32) {
    %c0_i32 = arith.constant 0 : i32
    %c0_i32_0 = arith.constant 0 : i32
    %c0_i32_1 = arith.constant 0 : i32
    return %c0_i32, %c0_i32_0 : i32, i32
  }
  func.func @transform_5(%arg0: i32) -> (i32, i32, i32) {
    %c0_i32 = arith.constant 0 : i32
    %c0_i32_0 = arith.constant 0 : i32
    %c0_i32_1 = arith.constant 0 : i32
    return %arg0, %c0_i32, %c0_i32_0 : i32, i32, i32
  }
}

module attributes {stable_mosaic.version = 11 : i64} {
  func.func @_decoder_layer_kernel(%arg0: i32, %arg1: memref<1x16x32xf32, #tpu.memory_space<vmem>>, %arg2: memref<1x16x32xf32, #tpu.memory_space<vmem>>, %arg3: memref<64x64xf32, #tpu.memory_space<vmem>>, %arg4: memref<64x64xf32, #tpu.memory_space<vmem>>, %arg5: memref<32x96xf32, #tpu.memory_space<vmem>>, %arg6: memref<1x96xf32, #tpu.memory_space<vmem>>, %arg7: memref<32x32xf32, #tpu.memory_space<vmem>>, %arg8: memref<1x32xf32, #tpu.memory_space<vmem>>, %arg9: memref<1x32xf32, #tpu.memory_space<vmem>>, %arg10: memref<1x32xf32, #tpu.memory_space<vmem>>, %arg11: memref<32x32xf32, #tpu.memory_space<vmem>>, %arg12: memref<1x32xf32, #tpu.memory_space<vmem>>, %arg13: memref<32x64xf32, #tpu.memory_space<vmem>>, %arg14: memref<1x64xf32, #tpu.memory_space<vmem>>, %arg15: memref<32x32xf32, #tpu.memory_space<vmem>>, %arg16: memref<1x32xf32, #tpu.memory_space<vmem>>, %arg17: memref<1x32xf32, #tpu.memory_space<vmem>>, %arg18: memref<1x32xf32, #tpu.memory_space<vmem>>, %arg19: memref<32x64xf32, #tpu.memory_space<vmem>>, %arg20: memref<1x64xf32, #tpu.memory_space<vmem>>, %arg21: memref<64x32xf32, #tpu.memory_space<vmem>>, %arg22: memref<1x32xf32, #tpu.memory_space<vmem>>, %arg23: memref<1x32xf32, #tpu.memory_space<vmem>>, %arg24: memref<1x32xf32, #tpu.memory_space<vmem>>, %arg25: memref<1x16x32xf32, #tpu.memory_space<vmem>>) attributes {dimension_semantics = [#tpu.dimension_semantics<parallel>], iteration_bounds = array<i64: 2>, scalar_prefetch = 0 : i64, scratch_operands = 0 : i64, tpu.core_type = #tpu.core_type<tc>, window_params = [{transform_indices = @transform_0, window_bounds = array<i64: 1, 16, 32>}, {transform_indices = @transform_1, window_bounds = array<i64: 1, 16, 32>}, {pipeline_mode = #tpu.pipeline_mode<synchronous>, transform_indices = @transform_2, window_bounds = array<i64: 64, 64>}, {pipeline_mode = #tpu.pipeline_mode<synchronous>, transform_indices = @transform_3, window_bounds = array<i64: 64, 64>}, {pipeline_mode = #tpu.pipeline_mode<synchronous>, transform_indices = @transform_4, window_bounds = array<i64: 32, 96>}, {pipeline_mode = #tpu.pipeline_mode<synchronous>, transform_indices = @transform_5, window_bounds = array<i64: 1, 96>}, {pipeline_mode = #tpu.pipeline_mode<synchronous>, transform_indices = @transform_6, window_bounds = array<i64: 32, 32>}, {pipeline_mode = #tpu.pipeline_mode<synchronous>, transform_indices = @transform_7, window_bounds = array<i64: 1, 32>}, {pipeline_mode = #tpu.pipeline_mode<synchronous>, transform_indices = @transform_8, window_bounds = array<i64: 1, 32>}, {pipeline_mode = #tpu.pipeline_mode<synchronous>, transform_indices = @transform_9, window_bounds = array<i64: 1, 32>}, {pipeline_mode = #tpu.pipeline_mode<synchronous>, transform_indices = @transform_10, window_bounds = array<i64: 32, 32>}, {pipeline_mode = #tpu.pipeline_mode<synchronous>, transform_indices = @transform_11, window_bounds = array<i64: 1, 32>}, {pipeline_mode = #tpu.pipeline_mode<synchronous>, transform_indices = @transform_12, window_bounds = array<i64: 32, 64>}, {pipeline_mode = #tpu.pipeline_mode<synchronous>, transform_indices = @transform_13, window_bounds = array<i64: 1, 64>}, {pipeline_mode = #tpu.pipeline_mode<synchronous>, transform_indices = @transform_14, window_bounds = array<i64: 32, 32>}, {pipeline_mode = #tpu.pipeline_mode<synchronous>, transform_indices = @transform_15, window_bounds = array<i64: 1, 32>}, {pipeline_mode = #tpu.pipeline_mode<synchronous>, transform_indices = @transform_16, window_bounds = array<i64: 1, 32>}, {pipeline_mode = #tpu.pipeline_mode<synchronous>, transform_indices = @transform_17, window_bounds = array<i64: 1, 32>}, {pipeline_mode = #tpu.pipeline_mode<synchronous>, transform_indices = @transform_18, window_bounds = array<i64: 32, 64>}, {pipeline_mode = #tpu.pipeline_mode<synchronous>, transform_indices = @transform_19, window_bounds = array<i64: 1, 64>}, {pipeline_mode = #tpu.pipeline_mode<synchronous>, transform_indices = @transform_20, window_bounds = array<i64: 64, 32>}, {pipeline_mode = #tpu.pipeline_mode<synchronous>, transform_indices = @transform_21, window_bounds = array<i64: 1, 32>}, {pipeline_mode = #tpu.pipeline_mode<synchronous>, transform_indices = @transform_22, window_bounds = array<i64: 1, 32>}, {pipeline_mode = #tpu.pipeline_mode<synchronous>, transform_indices = @transform_23, window_bounds = array<i64: 1, 32>}, {transform_indices = @transform_24, window_bounds = array<i64: 1, 16, 32>}]} {
    %c0 = arith.constant 0 : index
    %c0_0 = arith.constant 0 : index
    %c0_1 = arith.constant 0 : index
    %0 = vector.load %arg1[%c0, %c0_0, %c0_1] : memref<1x16x32xf32, #tpu.memory_space<vmem>>, vector<1x16x32xf32>
    %1 = vector.shape_cast %0 : vector<1x16x32xf32> to vector<16x32xf32>
    %c0_2 = arith.constant 0 : index
    %c0_3 = arith.constant 0 : index
    %c0_4 = arith.constant 0 : index
    %2 = vector.load %arg2[%c0_2, %c0_3, %c0_4] : memref<1x16x32xf32, #tpu.memory_space<vmem>>, vector<1x16x32xf32>
    %3 = vector.shape_cast %2 : vector<1x16x32xf32> to vector<16x32xf32>
    %c0_5 = arith.constant 0 : index
    %c0_6 = arith.constant 0 : index
    %4 = vector.load %arg5[%c0_5, %c0_6] : memref<32x96xf32, #tpu.memory_space<vmem>>, vector<32x96xf32>
    %5 = arith.truncf %1 : vector<16x32xf32> to vector<16x32xbf16>
    %6 = arith.truncf %4 : vector<32x96xf32> to vector<32x96xbf16>
    %cst = arith.constant dense<0.000000e+00> : vector<16x96xf32>
    %7 = tpu.matmul %5, %6, %cst {dimension_numbers = #tpu.dot_dimension_numbers<[1], [0], [0], [1], [0, 0, 1, 1], [], []>} : vector<16x32xbf16>, vector<32x96xbf16>, vector<16x96xf32> -> vector<16x96xf32>
    %c0_7 = arith.constant 0 : index
    %c0_8 = arith.constant 0 : index
    %8 = vector.load %arg6[%c0_7, %c0_8] : memref<1x96xf32, #tpu.memory_space<vmem>>, vector<1x96xf32>
    %9 = vector.broadcast %8 : vector<1x96xf32> to vector<16x96xf32>
    %10 = arith.addf %7, %9 : vector<16x96xf32>
    %11 = vector.extract_strided_slice %10 {offsets = [0, 0], sizes = [16, 32], strides = [1, 1]} : vector<16x96xf32> to vector<16x32xf32>
    %12 = vector.extract_strided_slice %10 {offsets = [0, 32], sizes = [16, 32], strides = [1, 1]} : vector<16x96xf32> to vector<16x32xf32>
    %13 = vector.extract_strided_slice %10 {offsets = [0, 64], sizes = [16, 32], strides = [1, 1]} : vector<16x96xf32> to vector<16x32xf32>
    %c0_9 = arith.constant 0 : index
    %c0_10 = arith.constant 0 : index
    %14 = vector.load %arg3[%c0_9, %c0_10] : memref<64x64xf32, #tpu.memory_space<vmem>>, vector<64x64xf32>
    %15 = vector.extract_strided_slice %11 {offsets = [0, 0], sizes = [16, 8], strides = [1, 1]} : vector<16x32xf32> to vector<16x8xf32>
    %16 = vector.extract_strided_slice %11 {offsets = [0, 8], sizes = [16, 8], strides = [1, 1]} : vector<16x32xf32> to vector<16x8xf32>
    %17 = vector.extract_strided_slice %11 {offsets = [0, 16], sizes = [16, 8], strides = [1, 1]} : vector<16x32xf32> to vector<16x8xf32>
    %18 = vector.extract_strided_slice %11 {offsets = [0, 24], sizes = [16, 8], strides = [1, 1]} : vector<16x32xf32> to vector<16x8xf32>
    %19 = tpu.concatenate %15, %16, %17, %18 in 0 : vector<16x8xf32>, vector<16x8xf32>, vector<16x8xf32>, vector<16x8xf32> -> vector<64x8xf32>
    %20 = vector.extract_strided_slice %12 {offsets = [0, 0], sizes = [16, 8], strides = [1, 1]} : vector<16x32xf32> to vector<16x8xf32>
    %21 = vector.extract_strided_slice %12 {offsets = [0, 8], sizes = [16, 8], strides = [1, 1]} : vector<16x32xf32> to vector<16x8xf32>
    %22 = vector.extract_strided_slice %12 {offsets = [0, 16], sizes = [16, 8], strides = [1, 1]} : vector<16x32xf32> to vector<16x8xf32>
    %23 = vector.extract_strided_slice %12 {offsets = [0, 24], sizes = [16, 8], strides = [1, 1]} : vector<16x32xf32> to vector<16x8xf32>
    %24 = tpu.concatenate %20, %21, %22, %23 in 0 : vector<16x8xf32>, vector<16x8xf32>, vector<16x8xf32>, vector<16x8xf32> -> vector<64x8xf32>
    %25 = vector.extract_strided_slice %13 {offsets = [0, 0], sizes = [16, 8], strides = [1, 1]} : vector<16x32xf32> to vector<16x8xf32>
    %26 = vector.extract_strided_slice %13 {offsets = [0, 8], sizes = [16, 8], strides = [1, 1]} : vector<16x32xf32> to vector<16x8xf32>
    %27 = vector.extract_strided_slice %13 {offsets = [0, 16], sizes = [16, 8], strides = [1, 1]} : vector<16x32xf32> to vector<16x8xf32>
    %28 = vector.extract_strided_slice %13 {offsets = [0, 24], sizes = [16, 8], strides = [1, 1]} : vector<16x32xf32> to vector<16x8xf32>
    %29 = tpu.concatenate %25, %26, %27, %28 in 0 : vector<16x8xf32>, vector<16x8xf32>, vector<16x8xf32>, vector<16x8xf32> -> vector<64x8xf32>
    %30 = arith.truncf %19 : vector<64x8xf32> to vector<64x8xbf16>
    %31 = arith.truncf %24 : vector<64x8xf32> to vector<64x8xbf16>
    %cst_11 = arith.constant dense<0.000000e+00> : vector<64x64xf32>
    %32 = tpu.matmul %30, %31, %cst_11 {dimension_numbers = #tpu.dot_dimension_numbers<[1], [1], [0], [0], [0, 0, 1, 0], [], []>} : vector<64x8xbf16>, vector<64x8xbf16>, vector<64x64xf32> -> vector<64x64xf32>
    %cst_12 = arith.constant 0.353553385 : f32
    %33 = vector.broadcast %cst_12 : f32 to vector<64x64xf32>
    %34 = arith.mulf %32, %33 : vector<64x64xf32>
    %35 = arith.addf %34, %14 : vector<64x64xf32>
    %cst_13 = arith.constant dense<0xFF800000> : vector<64xf32>
    %36 = vector.multi_reduction <maximumf>, %35, %cst_13 [1] : vector<64x64xf32> to vector<64xf32>
    %37 = vector.shape_cast %36 : vector<64xf32> to vector<64x1xf32>
    %38 = vector.broadcast %37 : vector<64x1xf32> to vector<64x64xf32>
    %39 = arith.subf %35, %38 : vector<64x64xf32>
    %40 = math.exp %39 : vector<64x64xf32>
    %cst_14 = arith.constant dense<0.000000e+00> : vector<64xf32>
    %41 = vector.multi_reduction <add>, %40, %cst_14 [1] : vector<64x64xf32> to vector<64xf32>
    %42 = vector.shape_cast %41 : vector<64xf32> to vector<64x1xf32>
    %43 = tpu.reciprocal %42 {approx = true} : vector<64x1xf32> -> vector<64x1xf32>
    %44 = vector.broadcast %43 : vector<64x1xf32> to vector<64x64xf32>
    %45 = arith.mulf %40, %44 : vector<64x64xf32>
    %46 = arith.truncf %45 : vector<64x64xf32> to vector<64x64xbf16>
    %47 = arith.truncf %29 : vector<64x8xf32> to vector<64x8xbf16>
    %cst_15 = arith.constant dense<0.000000e+00> : vector<64x8xf32>
    %48 = tpu.matmul %46, %47, %cst_15 {dimension_numbers = #tpu.dot_dimension_numbers<[1], [0], [0], [1], [0, 0, 1, 1], [], []>} : vector<64x64xbf16>, vector<64x8xbf16>, vector<64x8xf32> -> vector<64x8xf32>
    %49 = tpu.iota {dimensions = array<i32: 0>} : vector<16x64xi32>
    %50 = tpu.iota {dimensions = array<i32: 1>} : vector<16x64xi32>
    %c4_i32 = arith.constant 4 : i32
    %51 = vector.broadcast %c4_i32 : i32 to vector<16x64xi32>
    %52 = arith.muli %49, %51 : vector<16x64xi32>
    %c0_i32 = arith.constant 0 : i32
    %53 = vector.broadcast %c0_i32 : i32 to vector<16x64xi32>
    %54 = arith.addi %52, %53 : vector<16x64xi32>
    %55 = arith.cmpi eq, %50, %54 : vector<16x64xi32>
    %cst_16 = arith.constant 1.000000e+00 : f32
    %cst_17 = arith.constant 0.000000e+00 : f32
    %56 = vector.broadcast %cst_16 : f32 to vector<16x64xf32>
    %57 = vector.broadcast %cst_17 : f32 to vector<16x64xf32>
    %58 = arith.select %55, %56, %57 : vector<16x64xi1>, vector<16x64xf32>
    %cst_18 = arith.constant dense<0.000000e+00> : vector<16x8xf32>
    %59 = tpu.matmul %58, %48, %cst_18 {dimension_numbers = #tpu.dot_dimension_numbers<[1], [0], [0], [1], [0, 0, 1, 1], [], []>} : vector<16x64xf32>, vector<64x8xf32>, vector<16x8xf32> -> vector<16x8xf32>
    %c4_i32_19 = arith.constant 4 : i32
    %60 = vector.broadcast %c4_i32_19 : i32 to vector<16x64xi32>
    %61 = arith.muli %49, %60 : vector<16x64xi32>
    %c1_i32 = arith.constant 1 : i32
    %62 = vector.broadcast %c1_i32 : i32 to vector<16x64xi32>
    %63 = arith.addi %61, %62 : vector<16x64xi32>
    %64 = arith.cmpi eq, %50, %63 : vector<16x64xi32>
    %cst_20 = arith.constant 1.000000e+00 : f32
    %cst_21 = arith.constant 0.000000e+00 : f32
    %65 = vector.broadcast %cst_20 : f32 to vector<16x64xf32>
    %66 = vector.broadcast %cst_21 : f32 to vector<16x64xf32>
    %67 = arith.select %64, %65, %66 : vector<16x64xi1>, vector<16x64xf32>
    %cst_22 = arith.constant dense<0.000000e+00> : vector<16x8xf32>
    %68 = tpu.matmul %67, %48, %cst_22 {dimension_numbers = #tpu.dot_dimension_numbers<[1], [0], [0], [1], [0, 0, 1, 1], [], []>} : vector<16x64xf32>, vector<64x8xf32>, vector<16x8xf32> -> vector<16x8xf32>
    %c4_i32_23 = arith.constant 4 : i32
    %69 = vector.broadcast %c4_i32_23 : i32 to vector<16x64xi32>
    %70 = arith.muli %49, %69 : vector<16x64xi32>
    %c2_i32 = arith.constant 2 : i32
    %71 = vector.broadcast %c2_i32 : i32 to vector<16x64xi32>
    %72 = arith.addi %70, %71 : vector<16x64xi32>
    %73 = arith.cmpi eq, %50, %72 : vector<16x64xi32>
    %cst_24 = arith.constant 1.000000e+00 : f32
    %cst_25 = arith.constant 0.000000e+00 : f32
    %74 = vector.broadcast %cst_24 : f32 to vector<16x64xf32>
    %75 = vector.broadcast %cst_25 : f32 to vector<16x64xf32>
    %76 = arith.select %73, %74, %75 : vector<16x64xi1>, vector<16x64xf32>
    %cst_26 = arith.constant dense<0.000000e+00> : vector<16x8xf32>
    %77 = tpu.matmul %76, %48, %cst_26 {dimension_numbers = #tpu.dot_dimension_numbers<[1], [0], [0], [1], [0, 0, 1, 1], [], []>} : vector<16x64xf32>, vector<64x8xf32>, vector<16x8xf32> -> vector<16x8xf32>
    %c4_i32_27 = arith.constant 4 : i32
    %78 = vector.broadcast %c4_i32_27 : i32 to vector<16x64xi32>
    %79 = arith.muli %49, %78 : vector<16x64xi32>
    %c3_i32 = arith.constant 3 : i32
    %80 = vector.broadcast %c3_i32 : i32 to vector<16x64xi32>
    %81 = arith.addi %79, %80 : vector<16x64xi32>
    %82 = arith.cmpi eq, %50, %81 : vector<16x64xi32>
    %cst_28 = arith.constant 1.000000e+00 : f32
    %cst_29 = arith.constant 0.000000e+00 : f32
    %83 = vector.broadcast %cst_28 : f32 to vector<16x64xf32>
    %84 = vector.broadcast %cst_29 : f32 to vector<16x64xf32>
    %85 = arith.select %82, %83, %84 : vector<16x64xi1>, vector<16x64xf32>
    %cst_30 = arith.constant dense<0.000000e+00> : vector<16x8xf32>
    %86 = tpu.matmul %85, %48, %cst_30 {dimension_numbers = #tpu.dot_dimension_numbers<[1], [0], [0], [1], [0, 0, 1, 1], [], []>} : vector<16x64xf32>, vector<64x8xf32>, vector<16x8xf32> -> vector<16x8xf32>
    %87 = tpu.concatenate %59, %68, %77, %86 in 1 : vector<16x8xf32>, vector<16x8xf32>, vector<16x8xf32>, vector<16x8xf32> -> vector<16x32xf32>
    %c0_31 = arith.constant 0 : index
    %c0_32 = arith.constant 0 : index
    %88 = vector.load %arg7[%c0_31, %c0_32] : memref<32x32xf32, #tpu.memory_space<vmem>>, vector<32x32xf32>
    %89 = arith.truncf %87 : vector<16x32xf32> to vector<16x32xbf16>
    %90 = arith.truncf %88 : vector<32x32xf32> to vector<32x32xbf16>
    %cst_33 = arith.constant dense<0.000000e+00> : vector<16x32xf32>
    %91 = tpu.matmul %89, %90, %cst_33 {dimension_numbers = #tpu.dot_dimension_numbers<[1], [0], [0], [1], [0, 0, 1, 1], [], []>} : vector<16x32xbf16>, vector<32x32xbf16>, vector<16x32xf32> -> vector<16x32xf32>
    %92 = arith.addf %1, %91 : vector<16x32xf32>
    %c0_34 = arith.constant 0 : index
    %c0_35 = arith.constant 0 : index
    %93 = vector.load %arg8[%c0_34, %c0_35] : memref<1x32xf32, #tpu.memory_space<vmem>>, vector<1x32xf32>
    %94 = vector.broadcast %93 : vector<1x32xf32> to vector<16x32xf32>
    %95 = arith.addf %92, %94 : vector<16x32xf32>
    %c0_36 = arith.constant 0 : index
    %c0_37 = arith.constant 0 : index
    %96 = vector.load %arg9[%c0_36, %c0_37] : memref<1x32xf32, #tpu.memory_space<vmem>>, vector<1x32xf32>
    %c0_38 = arith.constant 0 : index
    %c0_39 = arith.constant 0 : index
    %97 = vector.load %arg10[%c0_38, %c0_39] : memref<1x32xf32, #tpu.memory_space<vmem>>, vector<1x32xf32>
    %cst_40 = arith.constant dense<0.000000e+00> : vector<16xf32>
    %98 = vector.multi_reduction <add>, %95, %cst_40 [1] : vector<16x32xf32> to vector<16xf32>
    %99 = vector.shape_cast %98 : vector<16xf32> to vector<16x1xf32>
    %cst_41 = arith.constant 3.200000e+01 : f32
    %100 = vector.broadcast %cst_41 : f32 to vector<16x1xf32>
    %101 = arith.divf %99, %100 : vector<16x1xf32>
    %102 = vector.broadcast %101 : vector<16x1xf32> to vector<16x32xf32>
    %103 = arith.subf %95, %102 : vector<16x32xf32>
    %104 = arith.mulf %103, %103 : vector<16x32xf32>
    %cst_42 = arith.constant dense<0.000000e+00> : vector<16xf32>
    %105 = vector.multi_reduction <add>, %104, %cst_42 [1] : vector<16x32xf32> to vector<16xf32>
    %106 = vector.shape_cast %105 : vector<16xf32> to vector<16x1xf32>
    %cst_43 = arith.constant 3.200000e+01 : f32
    %107 = vector.broadcast %cst_43 : f32 to vector<16x1xf32>
    %108 = arith.divf %106, %107 : vector<16x1xf32>
    %cst_44 = arith.constant 9.99999974E-6 : f32
    %109 = vector.broadcast %cst_44 : f32 to vector<16x1xf32>
    %110 = arith.addf %108, %109 : vector<16x1xf32>
    %111 = math.rsqrt %110 : vector<16x1xf32>
    %112 = vector.broadcast %111 : vector<16x1xf32> to vector<16x32xf32>
    %113 = arith.mulf %103, %112 : vector<16x32xf32>
    %114 = vector.broadcast %96 : vector<1x32xf32> to vector<16x32xf32>
    %115 = arith.mulf %113, %114 : vector<16x32xf32>
    %116 = vector.broadcast %97 : vector<1x32xf32> to vector<16x32xf32>
    %117 = arith.addf %115, %116 : vector<16x32xf32>
    %c0_45 = arith.constant 0 : index
    %c0_46 = arith.constant 0 : index
    %118 = vector.load %arg11[%c0_45, %c0_46] : memref<32x32xf32, #tpu.memory_space<vmem>>, vector<32x32xf32>
    %119 = arith.truncf %117 : vector<16x32xf32> to vector<16x32xbf16>
    %120 = arith.truncf %118 : vector<32x32xf32> to vector<32x32xbf16>
    %cst_47 = arith.constant dense<0.000000e+00> : vector<16x32xf32>
    %121 = tpu.matmul %119, %120, %cst_47 {dimension_numbers = #tpu.dot_dimension_numbers<[1], [0], [0], [1], [0, 0, 1, 1], [], []>} : vector<16x32xbf16>, vector<32x32xbf16>, vector<16x32xf32> -> vector<16x32xf32>
    %c0_48 = arith.constant 0 : index
    %c0_49 = arith.constant 0 : index
    %122 = vector.load %arg12[%c0_48, %c0_49] : memref<1x32xf32, #tpu.memory_space<vmem>>, vector<1x32xf32>
    %123 = vector.broadcast %122 : vector<1x32xf32> to vector<16x32xf32>
    %124 = arith.addf %121, %123 : vector<16x32xf32>
    %c0_50 = arith.constant 0 : index
    %c0_51 = arith.constant 0 : index
    %125 = vector.load %arg13[%c0_50, %c0_51] : memref<32x64xf32, #tpu.memory_space<vmem>>, vector<32x64xf32>
    %126 = arith.truncf %3 : vector<16x32xf32> to vector<16x32xbf16>
    %127 = arith.truncf %125 : vector<32x64xf32> to vector<32x64xbf16>
    %cst_52 = arith.constant dense<0.000000e+00> : vector<16x64xf32>
    %128 = tpu.matmul %126, %127, %cst_52 {dimension_numbers = #tpu.dot_dimension_numbers<[1], [0], [0], [1], [0, 0, 1, 1], [], []>} : vector<16x32xbf16>, vector<32x64xbf16>, vector<16x64xf32> -> vector<16x64xf32>
    %c0_53 = arith.constant 0 : index
    %c0_54 = arith.constant 0 : index
    %129 = vector.load %arg14[%c0_53, %c0_54] : memref<1x64xf32, #tpu.memory_space<vmem>>, vector<1x64xf32>
    %130 = vector.broadcast %129 : vector<1x64xf32> to vector<16x64xf32>
    %131 = arith.addf %128, %130 : vector<16x64xf32>
    %132 = vector.extract_strided_slice %131 {offsets = [0, 0], sizes = [16, 32], strides = [1, 1]} : vector<16x64xf32> to vector<16x32xf32>
    %133 = vector.extract_strided_slice %131 {offsets = [0, 32], sizes = [16, 32], strides = [1, 1]} : vector<16x64xf32> to vector<16x32xf32>
    %c0_55 = arith.constant 0 : index
    %c0_56 = arith.constant 0 : index
    %134 = vector.load %arg4[%c0_55, %c0_56] : memref<64x64xf32, #tpu.memory_space<vmem>>, vector<64x64xf32>
    %135 = vector.extract_strided_slice %124 {offsets = [0, 0], sizes = [16, 8], strides = [1, 1]} : vector<16x32xf32> to vector<16x8xf32>
    %136 = vector.extract_strided_slice %124 {offsets = [0, 8], sizes = [16, 8], strides = [1, 1]} : vector<16x32xf32> to vector<16x8xf32>
    %137 = vector.extract_strided_slice %124 {offsets = [0, 16], sizes = [16, 8], strides = [1, 1]} : vector<16x32xf32> to vector<16x8xf32>
    %138 = vector.extract_strided_slice %124 {offsets = [0, 24], sizes = [16, 8], strides = [1, 1]} : vector<16x32xf32> to vector<16x8xf32>
    %139 = tpu.concatenate %135, %136, %137, %138 in 0 : vector<16x8xf32>, vector<16x8xf32>, vector<16x8xf32>, vector<16x8xf32> -> vector<64x8xf32>
    %140 = vector.extract_strided_slice %132 {offsets = [0, 0], sizes = [16, 8], strides = [1, 1]} : vector<16x32xf32> to vector<16x8xf32>
    %141 = vector.extract_strided_slice %132 {offsets = [0, 8], sizes = [16, 8], strides = [1, 1]} : vector<16x32xf32> to vector<16x8xf32>
    %142 = vector.extract_strided_slice %132 {offsets = [0, 16], sizes = [16, 8], strides = [1, 1]} : vector<16x32xf32> to vector<16x8xf32>
    %143 = vector.extract_strided_slice %132 {offsets = [0, 24], sizes = [16, 8], strides = [1, 1]} : vector<16x32xf32> to vector<16x8xf32>
    %144 = tpu.concatenate %140, %141, %142, %143 in 0 : vector<16x8xf32>, vector<16x8xf32>, vector<16x8xf32>, vector<16x8xf32> -> vector<64x8xf32>
    %145 = vector.extract_strided_slice %133 {offsets = [0, 0], sizes = [16, 8], strides = [1, 1]} : vector<16x32xf32> to vector<16x8xf32>
    %146 = vector.extract_strided_slice %133 {offsets = [0, 8], sizes = [16, 8], strides = [1, 1]} : vector<16x32xf32> to vector<16x8xf32>
    %147 = vector.extract_strided_slice %133 {offsets = [0, 16], sizes = [16, 8], strides = [1, 1]} : vector<16x32xf32> to vector<16x8xf32>
    %148 = vector.extract_strided_slice %133 {offsets = [0, 24], sizes = [16, 8], strides = [1, 1]} : vector<16x32xf32> to vector<16x8xf32>
    %149 = tpu.concatenate %145, %146, %147, %148 in 0 : vector<16x8xf32>, vector<16x8xf32>, vector<16x8xf32>, vector<16x8xf32> -> vector<64x8xf32>
    %150 = arith.truncf %139 : vector<64x8xf32> to vector<64x8xbf16>
    %151 = arith.truncf %144 : vector<64x8xf32> to vector<64x8xbf16>
    %cst_57 = arith.constant dense<0.000000e+00> : vector<64x64xf32>
    %152 = tpu.matmul %150, %151, %cst_57 {dimension_numbers = #tpu.dot_dimension_numbers<[1], [1], [0], [0], [0, 0, 1, 0], [], []>} : vector<64x8xbf16>, vector<64x8xbf16>, vector<64x64xf32> -> vector<64x64xf32>
    %cst_58 = arith.constant 0.353553385 : f32
    %153 = vector.broadcast %cst_58 : f32 to vector<64x64xf32>
    %154 = arith.mulf %152, %153 : vector<64x64xf32>
    %155 = arith.addf %154, %134 : vector<64x64xf32>
    %cst_59 = arith.constant dense<0xFF800000> : vector<64xf32>
    %156 = vector.multi_reduction <maximumf>, %155, %cst_59 [1] : vector<64x64xf32> to vector<64xf32>
    %157 = vector.shape_cast %156 : vector<64xf32> to vector<64x1xf32>
    %158 = vector.broadcast %157 : vector<64x1xf32> to vector<64x64xf32>
    %159 = arith.subf %155, %158 : vector<64x64xf32>
    %160 = math.exp %159 : vector<64x64xf32>
    %cst_60 = arith.constant dense<0.000000e+00> : vector<64xf32>
    %161 = vector.multi_reduction <add>, %160, %cst_60 [1] : vector<64x64xf32> to vector<64xf32>
    %162 = vector.shape_cast %161 : vector<64xf32> to vector<64x1xf32>
    %163 = tpu.reciprocal %162 {approx = true} : vector<64x1xf32> -> vector<64x1xf32>
    %164 = vector.broadcast %163 : vector<64x1xf32> to vector<64x64xf32>
    %165 = arith.mulf %160, %164 : vector<64x64xf32>
    %166 = arith.truncf %165 : vector<64x64xf32> to vector<64x64xbf16>
    %167 = arith.truncf %149 : vector<64x8xf32> to vector<64x8xbf16>
    %cst_61 = arith.constant dense<0.000000e+00> : vector<64x8xf32>
    %168 = tpu.matmul %166, %167, %cst_61 {dimension_numbers = #tpu.dot_dimension_numbers<[1], [0], [0], [1], [0, 0, 1, 1], [], []>} : vector<64x64xbf16>, vector<64x8xbf16>, vector<64x8xf32> -> vector<64x8xf32>
    %169 = vector.extract_strided_slice %168 {offsets = [0, 0], sizes = [16, 8], strides = [1, 1]} : vector<64x8xf32> to vector<16x8xf32>
    %170 = vector.extract_strided_slice %168 {offsets = [16, 0], sizes = [16, 8], strides = [1, 1]} : vector<64x8xf32> to vector<16x8xf32>
    %171 = vector.extract_strided_slice %168 {offsets = [32, 0], sizes = [16, 8], strides = [1, 1]} : vector<64x8xf32> to vector<16x8xf32>
    %172 = vector.extract_strided_slice %168 {offsets = [48, 0], sizes = [16, 8], strides = [1, 1]} : vector<64x8xf32> to vector<16x8xf32>
    %173 = tpu.concatenate %169, %170, %171, %172 in 1 : vector<16x8xf32>, vector<16x8xf32>, vector<16x8xf32>, vector<16x8xf32> -> vector<16x32xf32>
    %c0_62 = arith.constant 0 : index
    %c0_63 = arith.constant 0 : index
    %174 = vector.load %arg15[%c0_62, %c0_63] : memref<32x32xf32, #tpu.memory_space<vmem>>, vector<32x32xf32>
    %175 = arith.truncf %173 : vector<16x32xf32> to vector<16x32xbf16>
    %176 = arith.truncf %174 : vector<32x32xf32> to vector<32x32xbf16>
    %cst_64 = arith.constant dense<0.000000e+00> : vector<16x32xf32>
    %177 = tpu.matmul %175, %176, %cst_64 {dimension_numbers = #tpu.dot_dimension_numbers<[1], [0], [0], [1], [0, 0, 1, 1], [], []>} : vector<16x32xbf16>, vector<32x32xbf16>, vector<16x32xf32> -> vector<16x32xf32>
    %178 = arith.addf %117, %177 : vector<16x32xf32>
    %c0_65 = arith.constant 0 : index
    %c0_66 = arith.constant 0 : index
    %179 = vector.load %arg16[%c0_65, %c0_66] : memref<1x32xf32, #tpu.memory_space<vmem>>, vector<1x32xf32>
    %180 = vector.broadcast %179 : vector<1x32xf32> to vector<16x32xf32>
    %181 = arith.addf %178, %180 : vector<16x32xf32>
    %c0_67 = arith.constant 0 : index
    %c0_68 = arith.constant 0 : index
    %182 = vector.load %arg17[%c0_67, %c0_68] : memref<1x32xf32, #tpu.memory_space<vmem>>, vector<1x32xf32>
    %c0_69 = arith.constant 0 : index
    %c0_70 = arith.constant 0 : index
    %183 = vector.load %arg18[%c0_69, %c0_70] : memref<1x32xf32, #tpu.memory_space<vmem>>, vector<1x32xf32>
    %cst_71 = arith.constant dense<0.000000e+00> : vector<16xf32>
    %184 = vector.multi_reduction <add>, %181, %cst_71 [1] : vector<16x32xf32> to vector<16xf32>
    %185 = vector.shape_cast %184 : vector<16xf32> to vector<16x1xf32>
    %cst_72 = arith.constant 3.200000e+01 : f32
    %186 = vector.broadcast %cst_72 : f32 to vector<16x1xf32>
    %187 = arith.divf %185, %186 : vector<16x1xf32>
    %188 = vector.broadcast %187 : vector<16x1xf32> to vector<16x32xf32>
    %189 = arith.subf %181, %188 : vector<16x32xf32>
    %190 = arith.mulf %189, %189 : vector<16x32xf32>
    %cst_73 = arith.constant dense<0.000000e+00> : vector<16xf32>
    %191 = vector.multi_reduction <add>, %190, %cst_73 [1] : vector<16x32xf32> to vector<16xf32>
    %192 = vector.shape_cast %191 : vector<16xf32> to vector<16x1xf32>
    %cst_74 = arith.constant 3.200000e+01 : f32
    %193 = vector.broadcast %cst_74 : f32 to vector<16x1xf32>
    %194 = arith.divf %192, %193 : vector<16x1xf32>
    %cst_75 = arith.constant 9.99999974E-6 : f32
    %195 = vector.broadcast %cst_75 : f32 to vector<16x1xf32>
    %196 = arith.addf %194, %195 : vector<16x1xf32>
    %197 = math.rsqrt %196 : vector<16x1xf32>
    %198 = vector.broadcast %197 : vector<16x1xf32> to vector<16x32xf32>
    %199 = arith.mulf %189, %198 : vector<16x32xf32>
    %200 = vector.broadcast %182 : vector<1x32xf32> to vector<16x32xf32>
    %201 = arith.mulf %199, %200 : vector<16x32xf32>
    %202 = vector.broadcast %183 : vector<1x32xf32> to vector<16x32xf32>
    %203 = arith.addf %201, %202 : vector<16x32xf32>
    %c0_76 = arith.constant 0 : index
    %c0_77 = arith.constant 0 : index
    %204 = vector.load %arg19[%c0_76, %c0_77] : memref<32x64xf32, #tpu.memory_space<vmem>>, vector<32x64xf32>
    %205 = arith.truncf %203 : vector<16x32xf32> to vector<16x32xbf16>
    %206 = arith.truncf %204 : vector<32x64xf32> to vector<32x64xbf16>
    %cst_78 = arith.constant dense<0.000000e+00> : vector<16x64xf32>
    %207 = tpu.matmul %205, %206, %cst_78 {dimension_numbers = #tpu.dot_dimension_numbers<[1], [0], [0], [1], [0, 0, 1, 1], [], []>} : vector<16x32xbf16>, vector<32x64xbf16>, vector<16x64xf32> -> vector<16x64xf32>
    %c0_79 = arith.constant 0 : index
    %c0_80 = arith.constant 0 : index
    %208 = vector.load %arg20[%c0_79, %c0_80] : memref<1x64xf32, #tpu.memory_space<vmem>>, vector<1x64xf32>
    %209 = vector.broadcast %208 : vector<1x64xf32> to vector<16x64xf32>
    %210 = arith.addf %207, %209 : vector<16x64xf32>
    %cst_81 = arith.constant 5.000000e-01 : f32
    %211 = vector.broadcast %cst_81 : f32 to vector<16x64xf32>
    %212 = arith.mulf %211, %210 : vector<16x64xf32>
    %cst_82 = arith.constant 4.471500e-02 : f32
    %213 = vector.broadcast %cst_82 : f32 to vector<16x64xf32>
    %214 = arith.mulf %213, %210 : vector<16x64xf32>
    %215 = arith.mulf %214, %210 : vector<16x64xf32>
    %216 = arith.mulf %215, %210 : vector<16x64xf32>
    %217 = arith.addf %210, %216 : vector<16x64xf32>
    %cst_83 = arith.constant 0.797884583 : f32
    %218 = vector.broadcast %cst_83 : f32 to vector<16x64xf32>
    %219 = arith.mulf %218, %217 : vector<16x64xf32>
    %220 = math.tanh %219 : vector<16x64xf32>
    %cst_84 = arith.constant 1.000000e+00 : f32
    %221 = vector.broadcast %cst_84 : f32 to vector<16x64xf32>
    %222 = arith.addf %221, %220 : vector<16x64xf32>
    %223 = arith.mulf %212, %222 : vector<16x64xf32>
    %c0_85 = arith.constant 0 : index
    %c0_86 = arith.constant 0 : index
    %224 = vector.load %arg21[%c0_85, %c0_86] : memref<64x32xf32, #tpu.memory_space<vmem>>, vector<64x32xf32>
    %225 = arith.truncf %223 : vector<16x64xf32> to vector<16x64xbf16>
    %226 = arith.truncf %224 : vector<64x32xf32> to vector<64x32xbf16>
    %cst_87 = arith.constant dense<0.000000e+00> : vector<16x32xf32>
    %227 = tpu.matmul %225, %226, %cst_87 {dimension_numbers = #tpu.dot_dimension_numbers<[1], [0], [0], [1], [0, 0, 1, 1], [], []>} : vector<16x64xbf16>, vector<64x32xbf16>, vector<16x32xf32> -> vector<16x32xf32>
    %228 = arith.addf %203, %227 : vector<16x32xf32>
    %c0_88 = arith.constant 0 : index
    %c0_89 = arith.constant 0 : index
    %229 = vector.load %arg22[%c0_88, %c0_89] : memref<1x32xf32, #tpu.memory_space<vmem>>, vector<1x32xf32>
    %230 = vector.broadcast %229 : vector<1x32xf32> to vector<16x32xf32>
    %231 = arith.addf %228, %230 : vector<16x32xf32>
    %c0_90 = arith.constant 0 : index
    %c0_91 = arith.constant 0 : index
    %232 = vector.load %arg23[%c0_90, %c0_91] : memref<1x32xf32, #tpu.memory_space<vmem>>, vector<1x32xf32>
    %c0_92 = arith.constant 0 : index
    %c0_93 = arith.constant 0 : index
    %233 = vector.load %arg24[%c0_92, %c0_93] : memref<1x32xf32, #tpu.memory_space<vmem>>, vector<1x32xf32>
    %cst_94 = arith.constant dense<0.000000e+00> : vector<16xf32>
    %234 = vector.multi_reduction <add>, %231, %cst_94 [1] : vector<16x32xf32> to vector<16xf32>
    %235 = vector.shape_cast %234 : vector<16xf32> to vector<16x1xf32>
    %cst_95 = arith.constant 3.200000e+01 : f32
    %236 = vector.broadcast %cst_95 : f32 to vector<16x1xf32>
    %237 = arith.divf %235, %236 : vector<16x1xf32>
    %238 = vector.broadcast %237 : vector<16x1xf32> to vector<16x32xf32>
    %239 = arith.subf %231, %238 : vector<16x32xf32>
    %240 = arith.mulf %239, %239 : vector<16x32xf32>
    %cst_96 = arith.constant dense<0.000000e+00> : vector<16xf32>
    %241 = vector.multi_reduction <add>, %240, %cst_96 [1] : vector<16x32xf32> to vector<16xf32>
    %242 = vector.shape_cast %241 : vector<16xf32> to vector<16x1xf32>
    %cst_97 = arith.constant 3.200000e+01 : f32
    %243 = vector.broadcast %cst_97 : f32 to vector<16x1xf32>
    %244 = arith.divf %242, %243 : vector<16x1xf32>
    %cst_98 = arith.constant 9.99999974E-6 : f32
    %245 = vector.broadcast %cst_98 : f32 to vector<16x1xf32>
    %246 = arith.addf %244, %245 : vector<16x1xf32>
    %247 = math.rsqrt %246 : vector<16x1xf32>
    %248 = vector.broadcast %247 : vector<16x1xf32> to vector<16x32xf32>
    %249 = arith.mulf %239, %248 : vector<16x32xf32>
    %250 = vector.broadcast %232 : vector<1x32xf32> to vector<16x32xf32>
    %251 = arith.mulf %249, %250 : vector<16x32xf32>
    %252 = vector.broadcast %233 : vector<1x32xf32> to vector<16x32xf32>
    %253 = arith.addf %251, %252 : vector<16x32xf32>
    %c0_99 = arith.constant 0 : index
    %c0_100 = arith.constant 0 : index
    %c0_101 = arith.constant 0 : index
    %254 = vector.load %arg25[%c0_99, %c0_100, %c0_101] : memref<1x16x32xf32, #tpu.memory_space<vmem>>, vector<1x16x32xf32>
    %255 = vector.shape_cast %254 : vector<1x16x32xf32> to vector<16x32xf32>
    %256 = vector.shape_cast %253 : vector<16x32xf32> to vector<1x16x32xf32>
    tpu.vector_store %arg25[%c0_99, %c0_100, %c0_101], %256 {strides = array<i32>} : memref<1x16x32xf32, #tpu.memory_space<vmem>>, vector<1x16x32xf32>,
    return
  }
  func.func @transform_0(%arg0: i32) -> (i32, i32, i32) {
    %c0_i32 = arith.constant 0 : i32
    %c0_i32_0 = arith.constant 0 : i32
    %c0_i32_1 = arith.constant 0 : i32
    return %arg0, %c0_i32, %c0_i32_0 : i32, i32, i32
  }
  func.func @transform_1(%arg0: i32) -> (i32, i32, i32) {
    %c0_i32 = arith.constant 0 : i32
    %c0_i32_0 = arith.constant 0 : i32
    %c0_i32_1 = arith.constant 0 : i32
    return %arg0, %c0_i32, %c0_i32_0 : i32, i32, i32
  }
  func.func @transform_2(%arg0: i32) -> (i32, i32) {
    %c0_i32 = arith.constant 0 : i32
    %c0_i32_0 = arith.constant 0 : i32
    %c0_i32_1 = arith.constant 0 : i32
    return %c0_i32, %c0_i32_0 : i32, i32
  }
  func.func @transform_3(%arg0: i32) -> (i32, i32) {
    %c0_i32 = arith.constant 0 : i32
    %c0_i32_0 = arith.constant 0 : i32
    %c0_i32_1 = arith.constant 0 : i32
    return %c0_i32, %c0_i32_0 : i32, i32
  }
  func.func @transform_4(%arg0: i32) -> (i32, i32) {
    %c0_i32 = arith.constant 0 : i32
    %c0_i32_0 = arith.constant 0 : i32
    %c0_i32_1 = arith.constant 0 : i32
    return %c0_i32, %c0_i32_0 : i32, i32
  }
  func.func @transform_5(%arg0: i32) -> (i32, i32) {
    %c0_i32 = arith.constant 0 : i32
    %c0_i32_0 = arith.constant 0 : i32
    %c0_i32_1 = arith.constant 0 : i32
    return %c0_i32, %c0_i32_0 : i32, i32
  }
  func.func @transform_6(%arg0: i32) -> (i32, i32) {
    %c0_i32 = arith.constant 0 : i32
    %c0_i32_0 = arith.constant 0 : i32
    %c0_i32_1 = arith.constant 0 : i32
    return %c0_i32, %c0_i32_0 : i32, i32
  }
  func.func @transform_7(%arg0: i32) -> (i32, i32) {
    %c0_i32 = arith.constant 0 : i32
    %c0_i32_0 = arith.constant 0 : i32
    %c0_i32_1 = arith.constant 0 : i32
    return %c0_i32, %c0_i32_0 : i32, i32
  }
  func.func @transform_8(%arg0: i32) -> (i32, i32) {
    %c0_i32 = arith.constant 0 : i32
    %c0_i32_0 = arith.constant 0 : i32
    %c0_i32_1 = arith.constant 0 : i32
    return %c0_i32, %c0_i32_0 : i32, i32
  }
  func.func @transform_9(%arg0: i32) -> (i32, i32) {
    %c0_i32 = arith.constant 0 : i32
    %c0_i32_0 = arith.constant 0 : i32
    %c0_i32_1 = arith.constant 0 : i32
    return %c0_i32, %c0_i32_0 : i32, i32
  }
  func.func @transform_10(%arg0: i32) -> (i32, i32) {
    %c0_i32 = arith.constant 0 : i32
    %c0_i32_0 = arith.constant 0 : i32
    %c0_i32_1 = arith.constant 0 : i32
    return %c0_i32, %c0_i32_0 : i32, i32
  }
  func.func @transform_11(%arg0: i32) -> (i32, i32) {
    %c0_i32 = arith.constant 0 : i32
    %c0_i32_0 = arith.constant 0 : i32
    %c0_i32_1 = arith.constant 0 : i32
    return %c0_i32, %c0_i32_0 : i32, i32
  }
  func.func @transform_12(%arg0: i32) -> (i32, i32) {
    %c0_i32 = arith.constant 0 : i32
    %c0_i32_0 = arith.constant 0 : i32
    %c0_i32_1 = arith.constant 0 : i32
    return %c0_i32, %c0_i32_0 : i32, i32
  }
  func.func @transform_13(%arg0: i32) -> (i32, i32) {
    %c0_i32 = arith.constant 0 : i32
    %c0_i32_0 = arith.constant 0 : i32
    %c0_i32_1 = arith.constant 0 : i32
    return %c0_i32, %c0_i32_0 : i32, i32
  }
  func.func @transform_14(%arg0: i32) -> (i32, i32) {
    %c0_i32 = arith.constant 0 : i32
    %c0_i32_0 = arith.constant 0 : i32
    %c0_i32_1 = arith.constant 0 : i32
    return %c0_i32, %c0_i32_0 : i32, i32
  }
  func.func @transform_15(%arg0: i32) -> (i32, i32) {
    %c0_i32 = arith.constant 0 : i32
    %c0_i32_0 = arith.constant 0 : i32
    %c0_i32_1 = arith.constant 0 : i32
    return %c0_i32, %c0_i32_0 : i32, i32
  }
  func.func @transform_16(%arg0: i32) -> (i32, i32) {
    %c0_i32 = arith.constant 0 : i32
    %c0_i32_0 = arith.constant 0 : i32
    %c0_i32_1 = arith.constant 0 : i32
    return %c0_i32, %c0_i32_0 : i32, i32
  }
  func.func @transform_17(%arg0: i32) -> (i32, i32) {
    %c0_i32 = arith.constant 0 : i32
    %c0_i32_0 = arith.constant 0 : i32
    %c0_i32_1 = arith.constant 0 : i32
    return %c0_i32, %c0_i32_0 : i32, i32
  }
  func.func @transform_18(%arg0: i32) -> (i32, i32) {
    %c0_i32 = arith.constant 0 : i32
    %c0_i32_0 = arith.constant 0 : i32
    %c0_i32_1 = arith.constant 0 : i32
    return %c0_i32, %c0_i32_0 : i32, i32
  }
  func.func @transform_19(%arg0: i32) -> (i32, i32) {
    %c0_i32 = arith.constant 0 : i32
    %c0_i32_0 = arith.constant 0 : i32
    %c0_i32_1 = arith.constant 0 : i32
    return %c0_i32, %c0_i32_0 : i32, i32
  }
  func.func @transform_20(%arg0: i32) -> (i32, i32) {
    %c0_i32 = arith.constant 0 : i32
    %c0_i32_0 = arith.constant 0 : i32
    %c0_i32_1 = arith.constant 0 : i32
    return %c0_i32, %c0_i32_0 : i32, i32
  }
  func.func @transform_21(%arg0: i32) -> (i32, i32) {
    %c0_i32 = arith.constant 0 : i32
    %c0_i32_0 = arith.constant 0 : i32
    %c0_i32_1 = arith.constant 0 : i32
    return %c0_i32, %c0_i32_0 : i32, i32
  }
  func.func @transform_22(%arg0: i32) -> (i32, i32) {
    %c0_i32 = arith.constant 0 : i32
    %c0_i32_0 = arith.constant 0 : i32
    %c0_i32_1 = arith.constant 0 : i32
    return %c0_i32, %c0_i32_0 : i32, i32
  }
  func.func @transform_23(%arg0: i32) -> (i32, i32) {
    %c0_i32 = arith.constant 0 : i32
    %c0_i32_0 = arith.constant 0 : i32
    %c0_i32_1 = arith.constant 0 : i32
    return %c0_i32, %c0_i32_0 : i32, i32
  }
  func.func @transform_24(%arg0: i32) -> (i32, i32, i32) {
    %c0_i32 = arith.constant 0 : i32
    %c0_i32_0 = arith.constant 0 : i32
    %c0_i32_1 = arith.constant 0 : i32
    return %arg0, %c0_i32, %c0_i32_0 : i32, i32, i32
  }
}

</mosaic_0001>

<llo_original>
// kernel: forward.9
$region0: #{forward.9}
  #allocation0 [shape = 'u32[]', space=smem, size = 0x4, offset = 0x4, fixed_abs, tag = 'smem constant byte address 0x4 - core index']
  #allocation1 [shape = 'u32[72,128]{1,0:T(1,128)}', space=vmem, size = 0x9000, scoped, tag = 'internal scratch']
  %s0 = inlined_call_operand.vmem [shape: f32[2,18,4], index: 0, kind: input, shape index: {}]
  %s1 = inlined_call_operand.vmem [shape: f32[12,32], index: 1, kind: input, shape index: {}]
  %s2 = inlined_call_operand.vmem [shape: f32[1,32], index: 2, kind: input, shape index: {}]
  %s3 = inlined_call_operand.vmem [shape: f32[2,16,32], index: 3, kind: input, shape index: {}]
  %s4 = inlined_call_operand.vmem [shape: f32[2,16,32], index: 4, kind: output, shape index: {}]
  %s5 = sld [smem:[#allocation0]]
  $region49: #{forward.9} parent=0
    _
  %s7 = ssub.s32 1, %s5
  %s8 = scalar_select 0, %s7, %s5
  loop: start=0, step=1, limit=4
  $region2: #{forward.9} parent=0 // loop_pre_header
    _
  $region3: #{forward.9} parent=0 // loop_header
    %s10 = sphi 0, %s14
    %p11 = scmp.ge.s32.totalorder %s10, 4
    %s20 = sphi 0, %s22
    %s23 = sphi 0, %s20
    %s24 = sphi 0, %s23
    %s40 = sphi 0, %s24
    %s44 = sphi 0, %s44
    %s46 = sphi 0, %s44
    %s47 = sphi 0, %s46
    %s61 = sphi 0, %s47
    %s65 = sphi 0, %s65
    %s67 = sphi 0, %s65
    %s68 = sphi 0, %s67
    %s82 = sphi 0, %s68
    %s88 = sphi 0, %s90
    %s91 = sphi 0, %s88
    %s92 = sphi 0, %s91
    %s108 = sphi 0, %s92
    %s114 = sphi 0, %s116
    %s117 = sphi 0, %s114
    %s118 = sphi 0, %s117
    %s134 = sphi 0, %s118
  $region4: #{forward.9} parent=0 // loop_header_branch
    %13 = sbr.rel (%p11) target = $region8
  $region5: #{forward.9} parent=0 // loop_body
    %s15 = ssub.s32 %s10, 1
    %s16 = ssub.s32 %s10, 2
    %s17 = sadd.s32 %s10, 1
    %s18 = ssub.s32 %s10, %s17
    %p19 = scmp.eq.s32.totalorder %s18, 0
    %s21 = sadd.s32 %s20, 1
    %s22 = scalar_select %p19, %s20, %s21
    %p25 = pneg %p19
    %p26 = scmp.eq.s32.totalorder %s10, 1
    %p27 = por %p25, %p26
    %p28 = scmp.ne.s32.totalorder %s20, %s23
    %p29 = scmp.eq.s32.totalorder %s10, 0
    %p30 = por %p28, %p29
    %p31 = scmp.ne.s32.totalorder %s20, %s23
    %p32 = scmp.eq.s32.totalorder %s15, 1
    %p33 = por %p31, %p32
    %p34 = scmp.ne.s32.totalorder %s23, %s24
    %p35 = scmp.eq.s32.totalorder %s15, 0
    %p36 = por %p34, %p35
    %p37 = scmp.ne.s32.totalorder %s23, %s24
    %p38 = scmp.eq.s32.totalorder %s16, 1
    %p39 = por %p37, %p38
    %p41 = scmp.ne.s32.totalorder %s24, %s40
    %p42 = scmp.eq.s32.totalorder %s16, 0
    %p43 = por %p41, %p42
    %s45 = sadd.s32 %s44, 1
    %p48 = scmp.eq.s32.totalorder %s10, 1
    %p49 = scmp.ne.s32.totalorder %s44, %s46
    %p50 = scmp.eq.s32.totalorder %s10, 0
    %p51 = por %p49, %p50
    %p52 = scmp.ne.s32.totalorder %s44, %s46
    %p53 = scmp.eq.s32.totalorder %s15, 1
    %p54 = por %p52, %p53
    %p55 = scmp.ne.s32.totalorder %s46, %s47
    %p56 = scmp.eq.s32.totalorder %s15, 0
    %p57 = por %p55, %p56
    %p58 = scmp.ne.s32.totalorder %s46, %s47
    %p59 = scmp.eq.s32.totalorder %s16, 1
    %p60 = por %p58, %p59
    %p62 = scmp.ne.s32.totalorder %s47, %s61
    %p63 = scmp.eq.s32.totalorder %s16, 0
    %p64 = por %p62, %p63
    %s66 = sadd.s32 %s65, 1
    %p69 = scmp.eq.s32.totalorder %s10, 1
    %p70 = scmp.ne.s32.totalorder %s65, %s67
    %p71 = scmp.eq.s32.totalorder %s10, 0
    %p72 = por %p70, %p71
    %p73 = scmp.ne.s32.totalorder %s65, %s67
    %p74 = scmp.eq.s32.totalorder %s15, 1
    %p75 = por %p73, %p74
    %p76 = scmp.ne.s32.totalorder %s67, %s68
    %p77 = scmp.eq.s32.totalorder %s15, 0
    %p78 = por %p76, %p77
    %p79 = scmp.ne.s32.totalorder %s67, %s68
    %p80 = scmp.eq.s32.totalorder %s16, 1
    %p81 = por %p79, %p80
    %p83 = scmp.ne.s32.totalorder %s68, %s82
    %p84 = scmp.eq.s32.totalorder %s16, 0
    %p85 = por %p83, %p84
    %s86 = ssub.s32 %s10, %s17
    %p87 = scmp.eq.s32.totalorder %s86, 0
    %s89 = sadd.s32 %s88, 1
    %s90 = scalar_select %p87, %s88, %s89
    %p93 = pneg %p87
    %p94 = scmp.eq.s32.totalorder %s10, 1
    %p95 = por %p93, %p94
    %p96 = scmp.ne.s32.totalorder %s88, %s91
    %p97 = scmp.eq.s32.totalorder %s10, 0
    %p98 = por %p96, %p97
    %p99 = scmp.ne.s32.totalorder %s88, %s91
    %p100 = scmp.eq.s32.totalorder %s15, 1
    %p101 = por %p99, %p100
    %p102 = scmp.ne.s32.totalorder %s91, %s92
    %p103 = scmp.eq.s32.totalorder %s15, 0
    %p104 = por %p102, %p103
    %p105 = scmp.ne.s32.totalorder %s91, %s92
    %p106 = scmp.eq.s32.totalorder %s16, 1
    %p107 = por %p105, %p106
    %p109 = scmp.ne.s32.totalorder %s92, %s108
    %p110 = scmp.eq.s32.totalorder %s16, 0
    %p111 = por %p109, %p110
    %s112 = ssub.s32 %s10, %s17
    %p113 = scmp.eq.s32.totalorder %s112, 0
    %s115 = sadd.s32 %s114, 1
    %s116 = scalar_select %p113, %s114, %s115
    %p119 = pneg %p113
    %p120 = scmp.eq.s32.totalorder %s10, 1
    %p121 = por %p119, %p120
    %p122 = scmp.ne.s32.totalorder %s114, %s117
    %p123 = scmp.eq.s32.totalorder %s10, 0
    %p124 = por %p122, %p123
    %p125 = scmp.ne.s32.totalorder %s114, %s117
    %p126 = scmp.eq.s32.totalorder %s15, 1
    %p127 = por %p125, %p126
    %p128 = scmp.ne.s32.totalorder %s117, %s118
    %p129 = scmp.eq.s32.totalorder %s15, 0
    %p130 = por %p128, %p129
    %p131 = scmp.ne.s32.totalorder %s117, %s118
    %p132 = scmp.eq.s32.totalorder %s16, 1
    %p133 = por %p131, %p132
    %p135 = scmp.ne.s32.totalorder %s118, %s134
    %p136 = scmp.eq.s32.totalorder %s16, 0
    %p137 = por %p135, %p136
    %p138 = scmp.le.s32.totalorder 1, %s10
    %p139 = scmp.lt.s32.totalorder %s10, 3
    %p140 = pnand %p138, %p139
    %p141 = pneg %p140
    // Predicated region
    $region9: #{forward.9} parent=5 // pred_check
      _
    $region10: #{forward.9} parent=5 // pred_check_branch
      %143 = sbr.rel (%p140) target = $region12
    $region11: #{forward.9} parent=5 // pred_region
      %s144 = ssub.s32 %s10, 1
      // Predicated region
      $region13: #{forward.9} parent=11 // pred_check
        %p145 = pneg %p57
      $region14: #{forward.9} parent=11 // pred_check_branch
        %147 = sbr.rel (%p145) target = $region16
      $region15: #{forward.9} parent=11 // pred_region
        _
      $region16: #{forward.9} parent=11 // pred_fallthru
        _
      // Predicated region
      $region17: #{forward.9} parent=11 // pred_check
        %p148 = pneg %p78
      $region18: #{forward.9} parent=11 // pred_check_branch
        %150 = sbr.rel (%p148) target = $region20
      $region19: #{forward.9} parent=11 // pred_region
        _
      $region20: #{forward.9} parent=11 // pred_fallthru
        _
    $region12: #{forward.9} parent=5 // pred_fallthru
      _
    %p151 = scmp.lt.s32.totalorder %s10, 2
    // Predicated region
    $region21: #{forward.9} parent=5 // pred_check
      %p152 = pneg %p151
    $region22: #{forward.9} parent=5 // pred_check_branch
      %154 = sbr.rel (%p152) target = $region24
    $region23: #{forward.9} parent=5 // pred_region
      // Predicated region
      $region25: #{forward.9} parent=23 // pred_check
        %p155 = pneg %p30
      $region26: #{forward.9} parent=23 // pred_check_branch
        %157 = sbr.rel (%p155) target = $region28
      $region27: #{forward.9} parent=23 // pred_region
        %p158 = scmp.lt.s32.totalorder %s10, 1
        %s159 = scalar_select %p158, %s10, 1
        %s160 = smul.addr %s159, 3
        %s161 = smul.addr %s160, 8
        %s162 = scalar_lea.vmem %s0, %s161
      $region28: #{forward.9} parent=23 // pred_fallthru
        _
      // Predicated region
      $region29: #{forward.9} parent=23 // pred_check
        %p163 = pneg %p98
      $region30: #{forward.9} parent=23 // pred_check_branch
        %165 = sbr.rel (%p163) target = $region32
      $region31: #{forward.9} parent=23 // pred_region
        %p166 = scmp.lt.s32.totalorder %s10, 1
        %s167 = scalar_select %p166, %s10, 1
        %s168 = smul.addr %s167, 2
        %s169 = smul.addr %s168, 8
        %s170 = scalar_lea.vmem %s3, %s169
      $region32: #{forward.9} parent=23 // pred_fallthru
        _
    $region24: #{forward.9} parent=5 // pred_fallthru
      _
    %p171 = scmp.le.s32.totalorder 1, %s10
    %p172 = scmp.lt.s32.totalorder %s10, 3
    %p173 = pnand %p171, %p172
    %p174 = pneg %p173
    // Predicated region
    $region33: #{forward.9} parent=5 // pred_check
      _
    $region34: #{forward.9} parent=5 // pred_check_branch
      %176 = sbr.rel (%p173) target = $region36
    $region35: #{forward.9} parent=5 // pred_region
      %s177 = ssub.s32 %s10, 1
      %p178 = scmp.lt.s32.totalorder %s15, 1
      %s179 = scalar_select %p178, %s15, 1
      %s180 = smul.addr %s179, 3
      %s181 = smul.addr %s180, 8
      %s182 = scalar_lea.vmem %s0, %s181
      %p183 = pneg %p36
      %p184 = pneg %p33
      %p185 = pneg %p57
      %p186 = pneg %p54
      %p187 = pneg %p78
      %p188 = pneg %p75
      %p189 = scmp.lt.s32.totalorder %s15, 1
      %s190 = scalar_select %p189, %s15, 1
      %s191 = smul.addr %s190, 2
      %s192 = smul.addr %s191, 8
      %s193 = scalar_lea.vmem %s3, %s192
      %p194 = pneg %p104
      %p195 = pneg %p101
      %p196 = pneg %p130
      %p197 = pneg %p127
      %p198 = scmp.lt.s32.totalorder %s15, 1
      %s199 = scalar_select %p198, %s15, 1
      %s200 = smul.addr %s199, 2
      %s201 = smul.addr %s200, 8
      %s202 = scalar_lea.vmem %s4, %s201
      %p203 = scmp.lt.s32.totalorder %s15, 1
      %s204 = scalar_select %p203, %s15, 1
      %s205 = smul.addr %s204, 3
      %s206 = smul.addr %s205, 8
      %s207 = scalar_lea.vmem %s0, %s206
      %p208 = scmp.lt.s32.totalorder %s15, 1
      %s209 = scalar_select %p208, %s15, 1
      %s210 = smul.addr %s209, 2
      %s211 = smul.addr %s210, 8
      %s212 = scalar_lea.vmem %s3, %s211
      %p213 = scmp.lt.s32.totalorder %s15, 1
      %s214 = scalar_select %p213, %s15, 1
      %s215 = smul.addr %s214, 2
      %s216 = smul.addr %s215, 8
      %s217 = scalar_lea.vmem %s4, %s216
      %v219 = vld [vmem:[%s207] sm:$0xff]
      %v220 = vld [vmem:[%s207 + $0x8] sm:$0xff]
      %v221 = vld [vmem:[%s207 + $0x10] sm:$0x3]
      %v222 = vld [vmem:[%s1] sm:$0xff]
      %v223 = vld [vmem:[%s1 + $0x8] sm:$0xf]
      %v224 = vpack.c.bf16 %v220, %v219
      %v225 = vpack.c.bf16 %v222, %v222
      %v226 = vpack.c.bf16 %v221, %v221
      %vm227 = vsmask.f32 7424
      %v229 = vshrl.u32 %v224, 16
      %v231 = vshll.u32 %v224, 16
      %v233 = vrot.slane %v231, 1
      %v234 = vor.u32 %v229, %v233
      %v236 = vshll.u32 %v226, 16
      %v238 = vrot.slane %v236, 1
      %v239 = vsel %vm227, %v234, %v238
      %v241 = vrot.slane %v225, 2
      %vm242 = vcmask 31744
      %v244 = vsel %vm242, %v239, 0
      %vm246 = vcmask 1041408
      %v248 = vsel %vm246, %v241, 0
      %250 = vmatpush.bf16.msra.mxu0 0
      %251 = vmatpush.bf16.msra.mxu0 0
      %252 = vmatpush.bf16.msra.mxu0 0
      %253 = vmatpush.bf16.msra.mxu0 0
      %254 = vmatpush.bf16.msra.mxu0 0
      %255 = vmatpush.bf16.msra.mxu0 0
      %256 = vmatpush.bf16.msra.mxu0 0
      %257 = vmatpush.bf16.msra.mxu0 %v248
      %258 = vmatmul.bf16.gmra.mxu0 %v244
      %v259 = vpop.f32.mrf.mxu0
      %v260 = vadd.f32 0.0, %v259
      %v261 = vpop.f32.mrf.mxu0
      %v262 = vadd.f32 0.0, %v261
      %263 = vdwg.mxu0
      %v264 = vsel %vm242, %v224, 0
      %v267 = vsel %vm246, %v225, 0
      %269 = vmatpush.bf16.msra.mxu0 0
      %270 = vmatpush.bf16.msra.mxu0 0
      %271 = vmatpush.bf16.msra.mxu0 0
      %272 = vmatpush.bf16.msra.mxu0 0
      %273 = vmatpush.bf16.msra.mxu0 0
      %274 = vmatpush.bf16.msra.mxu0 0
      %275 = vmatpush.bf16.msra.mxu0 0
      %276 = vmatpush.bf16.msra.mxu0 %v267
      %277 = vmatmul.bf16.gmra.mxu0 %v264
      %v278 = vpop.f32.mrf.mxu0
      %v279 = vadd.f32 %v260, %v278
      %v280 = vpop.f32.mrf.mxu0
      %v281 = vadd.f32 %v262, %v280
      %282 = vdwg.mxu0
      %v283 = vpack.c.bf16 %v223, %v223
      %vm286 = vcmask 1046528
      %v287 = vrot.slane %v224, 1
      %v288 = vrot.slane %v226, 1
      %v289 = vsel %vm286, %v287, %v288
      %v291 = vsel %vm242, %v289, 0
      %v294 = vsel %vm246, %v283, 0
      %296 = vmatpush.bf16.msra.mxu0 0
      %297 = vmatpush.bf16.msra.mxu0 0
      %298 = vmatpush.bf16.msra.mxu0 0
      %299 = vmatpush.bf16.msra.mxu0 0
      %300 = vmatpush.bf16.msra.mxu0 0
      %301 = vmatpush.bf16.msra.mxu0 0
      %302 = vmatpush.bf16.msra.mxu0 0
      %303 = vmatpush.bf16.msra.mxu0 %v294
      %304 = vmatmul.bf16.gmra.mxu0 %v291
      %v305 = vpop.f32.mrf.mxu0
      %v306 = vadd.f32 0.0, %v305
      %v307 = vpop.f32.mrf.mxu0
      %v308 = vadd.f32 0.0, %v307
      %309 = vdwg.mxu0
      %v310 = vadd.f32 %v279, %v306
      %v311 = vadd.f32 %v281, %v308
      %v312 = vld [vmem:[%s2] sm:$0x1]
      %v314 = vperm.slane %v312, 0
      %v316 = vadd.f32 %v310, %v314
      %v317 = vadd.f32 %v311, %v314
      %v318 = vld [vmem:[%s212] sm:$0xff]
      %v319 = vld [vmem:[%s212 + $0x8] sm:$0xff]
      %v320 = vadd.f32 %v316, %v318
      %v321 = vadd.f32 %v317, %v319
      %vm322 = vcmask 261120
      %323 = vst.msk [vmem:[%s217] sm:$0xff] %vm322, %v320
      %324 = vst.msk [vmem:[%s217 + $0x8] sm:$0xff] %vm322, %v321
      %p325 = scmp.lt.s32.totalorder %s15, 1
      %s326 = scalar_select %p325, %s15, 1
      %s327 = smul.addr %s326, 2
      %s328 = smul.addr %s327, 8
      %s329 = scalar_lea.vmem %s4, %s328
      // Predicated region
      $region37: #{forward.9} parent=35 // pred_check
        %p330 = pneg %p127
      $region38: #{forward.9} parent=35 // pred_check_branch
        %332 = sbr.rel (%p330) target = $region40
      $region39: #{forward.9} parent=35 // pred_region
        _
      $region40: #{forward.9} parent=35 // pred_fallthru
        _
    $region36: #{forward.9} parent=5 // pred_fallthru
      _
    %p333 = scmp.le.s32.totalorder 2, %s10
    // Predicated region
    $region41: #{forward.9} parent=5 // pred_check
      %p334 = pneg %p333
    $region42: #{forward.9} parent=5 // pred_check_branch
      %336 = sbr.rel (%p334) target = $region44
    $region43: #{forward.9} parent=5 // pred_region
      %s337 = ssub.s32 %s10, 2
      // Predicated region
      $region45: #{forward.9} parent=43 // pred_check
        %p338 = pneg %p133
      $region46: #{forward.9} parent=43 // pred_check_branch
        %340 = sbr.rel (%p338) target = $region48
      $region47: #{forward.9} parent=43 // pred_region
        %p341 = scmp.lt.s32.totalorder %s16, 1
        %s342 = scalar_select %p341, %s16, 1
        %s343 = smul.addr %s342, 2
        %s344 = smul.addr %s343, 8
        %s345 = scalar_lea.vmem %s4, %s344
      $region48: #{forward.9} parent=43 // pred_fallthru
        _
    $region44: #{forward.9} parent=5 // pred_fallthru
      _
  $region6: #{forward.9} parent=0 // loop_footer
    %s14 = sadd.s32 1, %s10
  $region7: #{forward.9} parent=0 // loop_footer_branch
    %9 = sbr.rel target = $region3
  $region8: #{forward.9} parent=0 // loop_exit
    _

// kernel: forward.12
$region0: #{forward.12}
  #allocation0 [shape = 'u32[]', space=smem, size = 0x4, offset = 0x4, fixed_abs, tag = 'smem constant byte address 0x4 - core index']
  #allocation1 [shape = 'u32[72,128]{1,0:T(1,128)}', space=vmem, size = 0x9000, scoped, tag = 'internal scratch']
  %s0 = inlined_call_operand.vmem [shape: f32[2,8,32], index: 0, kind: input, shape index: {}]
  %s1 = inlined_call_operand.vmem [shape: f32[32,32], index: 1, kind: input, shape index: {}]
  %s2 = inlined_call_operand.vmem [shape: f32[32,96], index: 2, kind: input, shape index: {}]
  %s3 = inlined_call_operand.vmem [shape: f32[1,96], index: 3, kind: input, shape index: {}]
  %s4 = inlined_call_operand.vmem [shape: f32[32,32], index: 4, kind: input, shape index: {}]
  %s5 = inlined_call_operand.vmem [shape: f32[1,32], index: 5, kind: input, shape index: {}]
  %s6 = inlined_call_operand.vmem [shape: f32[1,32], index: 6, kind: input, shape index: {}]
  %s7 = inlined_call_operand.vmem [shape: f32[1,32], index: 7, kind: input, shape index: {}]
  %s8 = inlined_call_operand.vmem [shape: f32[32,64], index: 8, kind: input, shape index: {}]
  %s9 = inlined_call_operand.vmem [shape: f32[1,64], index: 9, kind: input, shape index: {}]
  %s10 = inlined_call_operand.vmem [shape: f32[64,32], index: 10, kind: input, shape index: {}]
  %s11 = inlined_call_operand.vmem [shape: f32[1,32], index: 11, kind: input, shape index: {}]
  %s12 = inlined_call_operand.vmem [shape: f32[1,32], index: 12, kind: input, shape index: {}]
  %s13 = inlined_call_operand.vmem [shape: f32[1,32], index: 13, kind: input, shape index: {}]
  %s14 = inlined_call_operand.vmem [shape: f32[1,32], index: 14, kind: input, shape index: {}]
  %s15 = inlined_call_operand.vmem [shape: f32[1,32], index: 15, kind: input, shape index: {}]
  %s16 = inlined_call_operand.vmem [shape: f32[2,8,32], index: 16, kind: output, shape index: {}]
  %s17 = sld [smem:[#allocation0]]
  $region97: #{forward.12} parent=0
    _
  %s19 = ssub.s32 1, %s17
  %s20 = scalar_select 0, %s19, %s17
  loop: start=0, step=1, limit=4
  $region2: #{forward.12} parent=0 // loop_pre_header
    _
  $region3: #{forward.12} parent=0 // loop_header
    %s22 = sphi 0, %s26
    %p23 = scmp.ge.s32.totalorder %s22, 4
    %s32 = sphi 0, %s34
    %s35 = sphi 0, %s32
    %s36 = sphi 0, %s35
    %s52 = sphi 0, %s36
    %s56 = sphi 0, %s56
    %s58 = sphi 0, %s56
    %s59 = sphi 0, %s58
    %s73 = sphi 0, %s59
    %s77 = sphi 0, %s77
    %s79 = sphi 0, %s77
    %s80 = sphi 0, %s79
    %s94 = sphi 0, %s80
    %s98 = sphi 0, %s98
    %s100 = sphi 0, %s98
    %s101 = sphi 0, %s100
    %s115 = sphi 0, %s101
    %s119 = sphi 0, %s119
    %s121 = sphi 0, %s119
    %s122 = sphi 0, %s121
    %s136 = sphi 0, %s122
    %s140 = sphi 0, %s140
    %s142 = sphi 0, %s140
    %s143 = sphi 0, %s142
    %s157 = sphi 0, %s143
    %s161 = sphi 0, %s161
    %s163 = sphi 0, %s161
    %s164 = sphi 0, %s163
    %s178 = sphi 0, %s164
    %s182 = sphi 0, %s182
    %s184 = sphi 0, %s182
    %s185 = sphi 0, %s184
    %s199 = sphi 0, %s185
    %s203 = sphi 0, %s203
    %s205 = sphi 0, %s203
    %s206 = sphi 0, %s205
    %s220 = sphi 0, %s206
    %s224 = sphi 0, %s224
    %s226 = sphi 0, %s224
    %s227 = sphi 0, %s226
    %s241 = sphi 0, %s227
    %s245 = sphi 0, %s245
    %s247 = sphi 0, %s245
    %s248 = sphi 0, %s247
    %s262 = sphi 0, %s248
    %s266 = sphi 0, %s266
    %s268 = sphi 0, %s266
    %s269 = sphi 0, %s268
    %s283 = sphi 0, %s269
    %s287 = sphi 0, %s287
    %s289 = sphi 0, %s287
    %s290 = sphi 0, %s289
    %s304 = sphi 0, %s290
    %s308 = sphi 0, %s308
    %s310 = sphi 0, %s308
    %s311 = sphi 0, %s310
    %s325 = sphi 0, %s311
    %s329 = sphi 0, %s329
    %s331 = sphi 0, %s329
    %s332 = sphi 0, %s331
    %s346 = sphi 0, %s332
    %s350 = sphi 0, %s350
    %s352 = sphi 0, %s350
    %s353 = sphi 0, %s352
    %s367 = sphi 0, %s353
    %s373 = sphi 0, %s375
    %s376 = sphi 0, %s373
    %s377 = sphi 0, %s376
    %s393 = sphi 0, %s377
  $region4: #{forward.12} parent=0 // loop_header_branch
    %25 = sbr.rel (%p23) target = $region8
  $region5: #{forward.12} parent=0 // loop_body
    %s27 = ssub.s32 %s22, 1
    %s28 = ssub.s32 %s22, 2
    %s29 = sadd.s32 %s22, 1
    %s30 = ssub.s32 %s22, %s29
    %p31 = scmp.eq.s32.totalorder %s30, 0
    %s33 = sadd.s32 %s32, 1
    %s34 = scalar_select %p31, %s32, %s33
    %p37 = pneg %p31
    %p38 = scmp.eq.s32.totalorder %s22, 1
    %p39 = por %p37, %p38
    %p40 = scmp.ne.s32.totalorder %s32, %s35
    %p41 = scmp.eq.s32.totalorder %s22, 0
    %p42 = por %p40, %p41
    %p43 = scmp.ne.s32.totalorder %s32, %s35
    %p44 = scmp.eq.s32.totalorder %s27, 1
    %p45 = por %p43, %p44
    %p46 = scmp.ne.s32.totalorder %s35, %s36
    %p47 = scmp.eq.s32.totalorder %s27, 0
    %p48 = por %p46, %p47
    %p49 = scmp.ne.s32.totalorder %s35, %s36
    %p50 = scmp.eq.s32.totalorder %s28, 1
    %p51 = por %p49, %p50
    %p53 = scmp.ne.s32.totalorder %s36, %s52
    %p54 = scmp.eq.s32.totalorder %s28, 0
    %p55 = por %p53, %p54
    %s57 = sadd.s32 %s56, 1
    %p60 = scmp.eq.s32.totalorder %s22, 1
    %p61 = scmp.ne.s32.totalorder %s56, %s58
    %p62 = scmp.eq.s32.totalorder %s22, 0
    %p63 = por %p61, %p62
    %p64 = scmp.ne.s32.totalorder %s56, %s58
    %p65 = scmp.eq.s32.totalorder %s27, 1
    %p66 = por %p64, %p65
    %p67 = scmp.ne.s32.totalorder %s58, %s59
    %p68 = scmp.eq.s32.totalorder %s27, 0
    %p69 = por %p67, %p68
    %p70 = scmp.ne.s32.totalorder %s58, %s59
    %p71 = scmp.eq.s32.totalorder %s28, 1
    %p72 = por %p70, %p71
    %p74 = scmp.ne.s32.totalorder %s59, %s73
    %p75 = scmp.eq.s32.totalorder %s28, 0
    %p76 = por %p74, %p75
    %s78 = sadd.s32 %s77, 1
    %p81 = scmp.eq.s32.totalorder %s22, 1
    %p82 = scmp.ne.s32.totalorder %s77, %s79
    %p83 = scmp.eq.s32.totalorder %s22, 0
    %p84 = por %p82, %p83
    %p85 = scmp.ne.s32.totalorder %s77, %s79
    %p86 = scmp.eq.s32.totalorder %s27, 1
    %p87 = por %p85, %p86
    %p88 = scmp.ne.s32.totalorder %s79, %s80
    %p89 = scmp.eq.s32.totalorder %s27, 0
    %p90 = por %p88, %p89
    %p91 = scmp.ne.s32.totalorder %s79, %s80
    %p92 = scmp.eq.s32.totalorder %s28, 1
    %p93 = por %p91, %p92
    %p95 = scmp.ne.s32.totalorder %s80, %s94
    %p96 = scmp.eq.s32.totalorder %s28, 0
    %p97 = por %p95, %p96
    %s99 = sadd.s32 %s98, 1
    %p102 = scmp.eq.s32.totalorder %s22, 1
    %p103 = scmp.ne.s32.totalorder %s98, %s100
    %p104 = scmp.eq.s32.totalorder %s22, 0
    %p105 = por %p103, %p104
    %p106 = scmp.ne.s32.totalorder %s98, %s100
    %p107 = scmp.eq.s32.totalorder %s27, 1
    %p108 = por %p106, %p107
    %p109 = scmp.ne.s32.totalorder %s100, %s101
    %p110 = scmp.eq.s32.totalorder %s27, 0
    %p111 = por %p109, %p110
    %p112 = scmp.ne.s32.totalorder %s100, %s101
    %p113 = scmp.eq.s32.totalorder %s28, 1
    %p114 = por %p112, %p113
    %p116 = scmp.ne.s32.totalorder %s101, %s115
    %p117 = scmp.eq.s32.totalorder %s28, 0
    %p118 = por %p116, %p117
    %s120 = sadd.s32 %s119, 1
    %p123 = scmp.eq.s32.totalorder %s22, 1
    %p124 = scmp.ne.s32.totalorder %s119, %s121
    %p125 = scmp.eq.s32.totalorder %s22, 0
    %p126 = por %p124, %p125
    %p127 = scmp.ne.s32.totalorder %s119, %s121
    %p128 = scmp.eq.s32.totalorder %s27, 1
    %p129 = por %p127, %p128
    %p130 = scmp.ne.s32.totalorder %s121, %s122
    %p131 = scmp.eq.s32.totalorder %s27, 0
    %p132 = por %p130, %p131
    %p133 = scmp.ne.s32.totalorder %s121, %s122
    %p134 = scmp.eq.s32.totalorder %s28, 1
    %p135 = por %p133, %p134
    %p137 = scmp.ne.s32.totalorder %s122, %s136
    %p138 = scmp.eq.s32.totalorder %s28, 0
    %p139 = por %p137, %p138
    %s141 = sadd.s32 %s140, 1
    %p144 = scmp.eq.s32.totalorder %s22, 1
    %p145 = scmp.ne.s32.totalorder %s140, %s142
    %p146 = scmp.eq.s32.totalorder %s22, 0
    %p147 = por %p145, %p146
    %p148 = scmp.ne.s32.totalorder %s140, %s142
    %p149 = scmp.eq.s32.totalorder %s27, 1
    %p150 = por %p148, %p149
    %p151 = scmp.ne.s32.totalorder %s142, %s143
    %p152 = scmp.eq.s32.totalorder %s27, 0
    %p153 = por %p151, %p152
    %p154 = scmp.ne.s32.totalorder %s142, %s143
    %p155 = scmp.eq.s32.totalorder %s28, 1
    %p156 = por %p154, %p155
    %p158 = scmp.ne.s32.totalorder %s143, %s157
    %p159 = scmp.eq.s32.totalorder %s28, 0
    %p160 = por %p158, %p159
    %s162 = sadd.s32 %s161, 1
    %p165 = scmp.eq.s32.totalorder %s22, 1
    %p166 = scmp.ne.s32.totalorder %s161, %s163
    %p167 = scmp.eq.s32.totalorder %s22, 0
    %p168 = por %p166, %p167
    %p169 = scmp.ne.s32.totalorder %s161, %s163
    %p170 = scmp.eq.s32.totalorder %s27, 1
    %p171 = por %p169, %p170
    %p172 = scmp.ne.s32.totalorder %s163, %s164
    %p173 = scmp.eq.s32.totalorder %s27, 0
    %p174 = por %p172, %p173
    %p175 = scmp.ne.s32.totalorder %s163, %s164
    %p176 = scmp.eq.s32.totalorder %s28, 1
    %p177 = por %p175, %p176
    %p179 = scmp.ne.s32.totalorder %s164, %s178
    %p180 = scmp.eq.s32.totalorder %s28, 0
    %p181 = por %p179, %p180
    %s183 = sadd.s32 %s182, 1
    %p186 = scmp.eq.s32.totalorder %s22, 1
    %p187 = scmp.ne.s32.totalorder %s182, %s184
    %p188 = scmp.eq.s32.totalorder %s22, 0
    %p189 = por %p187, %p188
    %p190 = scmp.ne.s32.totalorder %s182, %s184
    %p191 = scmp.eq.s32.totalorder %s27, 1
    %p192 = por %p190, %p191
    %p193 = scmp.ne.s32.totalorder %s184, %s185
    %p194 = scmp.eq.s32.totalorder %s27, 0
    %p195 = por %p193, %p194
    %p196 = scmp.ne.s32.totalorder %s184, %s185
    %p197 = scmp.eq.s32.totalorder %s28, 1
    %p198 = por %p196, %p197
    %p200 = scmp.ne.s32.totalorder %s185, %s199
    %p201 = scmp.eq.s32.totalorder %s28, 0
    %p202 = por %p200, %p201
    %s204 = sadd.s32 %s203, 1
    %p207 = scmp.eq.s32.totalorder %s22, 1
    %p208 = scmp.ne.s32.totalorder %s203, %s205
    %p209 = scmp.eq.s32.totalorder %s22, 0
    %p210 = por %p208, %p209
    %p211 = scmp.ne.s32.totalorder %s203, %s205
    %p212 = scmp.eq.s32.totalorder %s27, 1
    %p213 = por %p211, %p212
    %p214 = scmp.ne.s32.totalorder %s205, %s206
    %p215 = scmp.eq.s32.totalorder %s27, 0
    %p216 = por %p214, %p215
    %p217 = scmp.ne.s32.totalorder %s205, %s206
    %p218 = scmp.eq.s32.totalorder %s28, 1
    %p219 = por %p217, %p218
    %p221 = scmp.ne.s32.totalorder %s206, %s220
    %p222 = scmp.eq.s32.totalorder %s28, 0
    %p223 = por %p221, %p222
    %s225 = sadd.s32 %s224, 1
    %p228 = scmp.eq.s32.totalorder %s22, 1
    %p229 = scmp.ne.s32.totalorder %s224, %s226
    %p230 = scmp.eq.s32.totalorder %s22, 0
    %p231 = por %p229, %p230
    %p232 = scmp.ne.s32.totalorder %s224, %s226
    %p233 = scmp.eq.s32.totalorder %s27, 1
    %p234 = por %p232, %p233
    %p235 = scmp.ne.s32.totalorder %s226, %s227
    %p236 = scmp.eq.s32.totalorder %s27, 0
    %p237 = por %p235, %p236
    %p238 = scmp.ne.s32.totalorder %s226, %s227
    %p239 = scmp.eq.s32.totalorder %s28, 1
    %p240 = por %p238, %p239
    %p242 = scmp.ne.s32.totalorder %s227, %s241
    %p243 = scmp.eq.s32.totalorder %s28, 0
    %p244 = por %p242, %p243
    %s246 = sadd.s32 %s245, 1
    %p249 = scmp.eq.s32.totalorder %s22, 1
    %p250 = scmp.ne.s32.totalorder %s245, %s247
    %p251 = scmp.eq.s32.totalorder %s22, 0
    %p252 = por %p250, %p251
    %p253 = scmp.ne.s32.totalorder %s245, %s247
    %p254 = scmp.eq.s32.totalorder %s27, 1
    %p255 = por %p253, %p254
    %p256 = scmp.ne.s32.totalorder %s247, %s248
    %p257 = scmp.eq.s32.totalorder %s27, 0
    %p258 = por %p256, %p257
    %p259 = scmp.ne.s32.totalorder %s247, %s248
    %p260 = scmp.eq.s32.totalorder %s28, 1
    %p261 = por %p259, %p260
    %p263 = scmp.ne.s32.totalorder %s248, %s262
    %p264 = scmp.eq.s32.totalorder %s28, 0
    %p265 = por %p263, %p264
    %s267 = sadd.s32 %s266, 1
    %p270 = scmp.eq.s32.totalorder %s22, 1
    %p271 = scmp.ne.s32.totalorder %s266, %s268
    %p272 = scmp.eq.s32.totalorder %s22, 0
    %p273 = por %p271, %p272
    %p274 = scmp.ne.s32.totalorder %s266, %s268
    %p275 = scmp.eq.s32.totalorder %s27, 1
    %p276 = por %p274, %p275
    %p277 = scmp.ne.s32.totalorder %s268, %s269
    %p278 = scmp.eq.s32.totalorder %s27, 0
    %p279 = por %p277, %p278
    %p280 = scmp.ne.s32.totalorder %s268, %s269
    %p281 = scmp.eq.s32.totalorder %s28, 1
    %p282 = por %p280, %p281
    %p284 = scmp.ne.s32.totalorder %s269, %s283
    %p285 = scmp.eq.s32.totalorder %s28, 0
    %p286 = por %p284, %p285
    %s288 = sadd.s32 %s287, 1
    %p291 = scmp.eq.s32.totalorder %s22, 1
    %p292 = scmp.ne.s32.totalorder %s287, %s289
    %p293 = scmp.eq.s32.totalorder %s22, 0
    %p294 = por %p292, %p293
    %p295 = scmp.ne.s32.totalorder %s287, %s289
    %p296 = scmp.eq.s32.totalorder %s27, 1
    %p297 = por %p295, %p296
    %p298 = scmp.ne.s32.totalorder %s289, %s290
    %p299 = scmp.eq.s32.totalorder %s27, 0
    %p300 = por %p298, %p299
    %p301 = scmp.ne.s32.totalorder %s289, %s290
    %p302 = scmp.eq.s32.totalorder %s28, 1
    %p303 = por %p301, %p302
    %p305 = scmp.ne.s32.totalorder %s290, %s304
    %p306 = scmp.eq.s32.totalorder %s28, 0
    %p307 = por %p305, %p306
    %s309 = sadd.s32 %s308, 1
    %p312 = scmp.eq.s32.totalorder %s22, 1
    %p313 = scmp.ne.s32.totalorder %s308, %s310
    %p314 = scmp.eq.s32.totalorder %s22, 0
    %p315 = por %p313, %p314
    %p316 = scmp.ne.s32.totalorder %s308, %s310
    %p317 = scmp.eq.s32.totalorder %s27, 1
    %p318 = por %p316, %p317
    %p319 = scmp.ne.s32.totalorder %s310, %s311
    %p320 = scmp.eq.s32.totalorder %s27, 0
    %p321 = por %p319, %p320
    %p322 = scmp.ne.s32.totalorder %s310, %s311
    %p323 = scmp.eq.s32.totalorder %s28, 1
    %p324 = por %p322, %p323
    %p326 = scmp.ne.s32.totalorder %s311, %s325
    %p327 = scmp.eq.s32.totalorder %s28, 0
    %p328 = por %p326, %p327
    %s330 = sadd.s32 %s329, 1
    %p333 = scmp.eq.s32.totalorder %s22, 1
    %p334 = scmp.ne.s32.totalorder %s329, %s331
    %p335 = scmp.eq.s32.totalorder %s22, 0
    %p336 = por %p334, %p335
    %p337 = scmp.ne.s32.totalorder %s329, %s331
    %p338 = scmp.eq.s32.totalorder %s27, 1
    %p339 = por %p337, %p338
    %p340 = scmp.ne.s32.totalorder %s331, %s332
    %p341 = scmp.eq.s32.totalorder %s27, 0
    %p342 = por %p340, %p341
    %p343 = scmp.ne.s32.totalorder %s331, %s332
    %p344 = scmp.eq.s32.totalorder %s28, 1
    %p345 = por %p343, %p344
    %p347 = scmp.ne.s32.totalorder %s332, %s346
    %p348 = scmp.eq.s32.totalorder %s28, 0
    %p349 = por %p347, %p348
    %s351 = sadd.s32 %s350, 1
    %p354 = scmp.eq.s32.totalorder %s22, 1
    %p355 = scmp.ne.s32.totalorder %s350, %s352
    %p356 = scmp.eq.s32.totalorder %s22, 0
    %p357 = por %p355, %p356
    %p358 = scmp.ne.s32.totalorder %s350, %s352
    %p359 = scmp.eq.s32.totalorder %s27, 1
    %p360 = por %p358, %p359
    %p361 = scmp.ne.s32.totalorder %s352, %s353
    %p362 = scmp.eq.s32.totalorder %s27, 0
    %p363 = por %p361, %p362
    %p364 = scmp.ne.s32.totalorder %s352, %s353
    %p365 = scmp.eq.s32.totalorder %s28, 1
    %p366 = por %p364, %p365
    %p368 = scmp.ne.s32.totalorder %s353, %s367
    %p369 = scmp.eq.s32.totalorder %s28, 0
    %p370 = por %p368, %p369
    %s371 = ssub.s32 %s22, %s29
    %p372 = scmp.eq.s32.totalorder %s371, 0
    %s374 = sadd.s32 %s373, 1
    %s375 = scalar_select %p372, %s373, %s374
    %p378 = pneg %p372
    %p379 = scmp.eq.s32.totalorder %s22, 1
    %p380 = por %p378, %p379
    %p381 = scmp.ne.s32.totalorder %s373, %s376
    %p382 = scmp.eq.s32.totalorder %s22, 0
    %p383 = por %p381, %p382
    %p384 = scmp.ne.s32.totalorder %s373, %s376
    %p385 = scmp.eq.s32.totalorder %s27, 1
    %p386 = por %p384, %p385
    %p387 = scmp.ne.s32.totalorder %s376, %s377
    %p388 = scmp.eq.s32.totalorder %s27, 0
    %p389 = por %p387, %p388
    %p390 = scmp.ne.s32.totalorder %s376, %s377
    %p391 = scmp.eq.s32.totalorder %s28, 1
    %p392 = por %p390, %p391
    %p394 = scmp.ne.s32.totalorder %s377, %s393
    %p395 = scmp.eq.s32.totalorder %s28, 0
    %p396 = por %p394, %p395
    %p397 = scmp.le.s32.totalorder 1, %s22
    %p398 = scmp.lt.s32.totalorder %s22, 3
    %p399 = pnand %p397, %p398
    %p400 = pneg %p399
    // Predicated region
    $region9: #{forward.12} parent=5 // pred_check
      _
    $region10: #{forward.12} parent=5 // pred_check_branch
      %402 = sbr.rel (%p399) target = $region12
    $region11: #{forward.12} parent=5 // pred_region
      %s403 = ssub.s32 %s22, 1
      // Predicated region
      $region13: #{forward.12} parent=11 // pred_check
        %p404 = pneg %p69
      $region14: #{forward.12} parent=11 // pred_check_branch
        %406 = sbr.rel (%p404) target = $region16
      $region15: #{forward.12} parent=11 // pred_region
        _
      $region16: #{forward.12} parent=11 // pred_fallthru
        _
      // Predicated region
      $region17: #{forward.12} parent=11 // pred_check
        %p407 = pneg %p90
      $region18: #{forward.12} parent=11 // pred_check_branch
        %409 = sbr.rel (%p407) target = $region20
      $region19: #{forward.12} parent=11 // pred_region
        _
      $region20: #{forward.12} parent=11 // pred_fallthru
        _
      // Predicated region
      $region21: #{forward.12} parent=11 // pred_check
        %p410 = pneg %p111
      $region22: #{forward.12} parent=11 // pred_check_branch
        %412 = sbr.rel (%p410) target = $region24
      $region23: #{forward.12} parent=11 // pred_region
        _
      $region24: #{forward.12} parent=11 // pred_fallthru
        _
      // Predicated region
      $region25: #{forward.12} parent=11 // pred_check
        %p413 = pneg %p132
      $region26: #{forward.12} parent=11 // pred_check_branch
        %415 = sbr.rel (%p413) target = $region28
      $region27: #{forward.12} parent=11 // pred_region
        _
      $region28: #{forward.12} parent=11 // pred_fallthru
        _
      // Predicated region
      $region29: #{forward.12} parent=11 // pred_check
        %p416 = pneg %p153
      $region30: #{forward.12} parent=11 // pred_check_branch
        %418 = sbr.rel (%p416) target = $region32
      $region31: #{forward.12} parent=11 // pred_region
        _
      $region32: #{forward.12} parent=11 // pred_fallthru
        _
      // Predicated region
      $region33: #{forward.12} parent=11 // pred_check
        %p419 = pneg %p174
      $region34: #{forward.12} parent=11 // pred_check_branch
        %421 = sbr.rel (%p419) target = $region36
      $region35: #{forward.12} parent=11 // pred_region
        _
      $region36: #{forward.12} parent=11 // pred_fallthru
        _
      // Predicated region
      $region37: #{forward.12} parent=11 // pred_check
        %p422 = pneg %p195
      $region38: #{forward.12} parent=11 // pred_check_branch
        %424 = sbr.rel (%p422) target = $region40
      $region39: #{forward.12} parent=11 // pred_region
        _
      $region40: #{forward.12} parent=11 // pred_fallthru
        _
      // Predicated region
      $region41: #{forward.12} parent=11 // pred_check
        %p425 = pneg %p216
      $region42: #{forward.12} parent=11 // pred_check_branch
        %427 = sbr.rel (%p425) target = $region44
      $region43: #{forward.12} parent=11 // pred_region
        _
      $region44: #{forward.12} parent=11 // pred_fallthru
        _
      // Predicated region
      $region45: #{forward.12} parent=11 // pred_check
        %p428 = pneg %p237
      $region46: #{forward.12} parent=11 // pred_check_branch
        %430 = sbr.rel (%p428) target = $region48
      $region47: #{forward.12} parent=11 // pred_region
        _
      $region48: #{forward.12} parent=11 // pred_fallthru
        _
      // Predicated region
      $region49: #{forward.12} parent=11 // pred_check
        %p431 = pneg %p258
      $region50: #{forward.12} parent=11 // pred_check_branch
        %433 = sbr.rel (%p431) target = $region52
      $region51: #{forward.12} parent=11 // pred_region
        _
      $region52: #{forward.12} parent=11 // pred_fallthru
        _
      // Predicated region
      $region53: #{forward.12} parent=11 // pred_check
        %p434 = pneg %p279
      $region54: #{forward.12} parent=11 // pred_check_branch
        %436 = sbr.rel (%p434) target = $region56
      $region55: #{forward.12} parent=11 // pred_region
        _
      $region56: #{forward.12} parent=11 // pred_fallthru
        _
      // Predicated region
      $region57: #{forward.12} parent=11 // pred_check
        %p437 = pneg %p300
      $region58: #{forward.12} parent=11 // pred_check_branch
        %439 = sbr.rel (%p437) target = $region60
      $region59: #{forward.12} parent=11 // pred_region
        _
      $region60: #{forward.12} parent=11 // pred_fallthru
        _
      // Predicated region
      $region61: #{forward.12} parent=11 // pred_check
        %p440 = pneg %p321
      $region62: #{forward.12} parent=11 // pred_check_branch
        %442 = sbr.rel (%p440) target = $region64
      $region63: #{forward.12} parent=11 // pred_region
        _
      $region64: #{forward.12} parent=11 // pred_fallthru
        _
      // Predicated region
      $region65: #{forward.12} parent=11 // pred_check
        %p443 = pneg %p342
      $region66: #{forward.12} parent=11 // pred_check_branch
        %445 = sbr.rel (%p443) target = $region68
      $region67: #{forward.12} parent=11 // pred_region
        _
      $region68: #{forward.12} parent=11 // pred_fallthru
        _
      // Predicated region
      $region69: #{forward.12} parent=11 // pred_check
        %p446 = pneg %p363
      $region70: #{forward.12} parent=11 // pred_check_branch
        %448 = sbr.rel (%p446) target = $region72
      $region71: #{forward.12} parent=11 // pred_region
        _
      $region72: #{forward.12} parent=11 // pred_fallthru
        _
    $region12: #{forward.12} parent=5 // pred_fallthru
      _
    %p449 = scmp.lt.s32.totalorder %s22, 2
    // Predicated region
    $region73: #{forward.12} parent=5 // pred_check
      %p450 = pneg %p449
    $region74: #{forward.12} parent=5 // pred_check_branch
      %452 = sbr.rel (%p450) target = $region76
    $region75: #{forward.12} parent=5 // pred_region
      // Predicated region
      $region77: #{forward.12} parent=75 // pred_check
        %p453 = pneg %p42
      $region78: #{forward.12} parent=75 // pred_check_branch
        %455 = sbr.rel (%p453) target = $region80
      $region79: #{forward.12} parent=75 // pred_region
        %p456 = scmp.lt.s32.totalorder %s22, 1
        %s457 = scalar_select %p456, %s22, 1
        %s458 = smul.addr %s457, 8
        %s459 = scalar_lea.vmem %s0, %s458
      $region80: #{forward.12} parent=75 // pred_fallthru
        _
    $region76: #{forward.12} parent=5 // pred_fallthru
      _
    %p460 = scmp.le.s32.totalorder 1, %s22
    %p461 = scmp.lt.s32.totalorder %s22, 3
    %p462 = pnand %p460, %p461
    %p463 = pneg %p462
    // Predicated region
    $region81: #{forward.12} parent=5 // pred_check
      _
    $region82: #{forward.12} parent=5 // pred_check_branch
      %465 = sbr.rel (%p462) target = $region84
    $region83: #{forward.12} parent=5 // pred_region
      %s466 = ssub.s32 %s22, 1
      %p467 = scmp.lt.s32.totalorder %s27, 1
      %s468 = scalar_select %p467, %s27, 1
      %s469 = smul.addr %s468, 8
      %s470 = scalar_lea.vmem %s0, %s469
      %p471 = pneg %p48
      %p472 = pneg %p45
      %p473 = pneg %p69
      %p474 = pneg %p66
      %p475 = pneg %p90
      %p476 = pneg %p87
      %p477 = pneg %p111
      %p478 = pneg %p108
      %p479 = pneg %p132
      %p480 = pneg %p129
      %p481 = pneg %p153
      %p482 = pneg %p150
      %p483 = pneg %p174
      %p484 = pneg %p171
      %p485 = pneg %p195
      %p486 = pneg %p192
      %p487 = pneg %p216
      %p488 = pneg %p213
      %p489 = pneg %p237
      %p490 = pneg %p234
      %p491 = pneg %p258
      %p492 = pneg %p255
      %p493 = pneg %p279
      %p494 = pneg %p276
      %p495 = pneg %p300
      %p496 = pneg %p297
      %p497 = pneg %p321
      %p498 = pneg %p318
      %p499 = pneg %p342
      %p500 = pneg %p339
      %p501 = pneg %p363
      %p502 = pneg %p360
      %p503 = pneg %p389
      %p504 = pneg %p386
      %p505 = scmp.lt.s32.totalorder %s27, 1
      %s506 = scalar_select %p505, %s27, 1
      %s507 = smul.addr %s506, 8
      %s508 = scalar_lea.vmem %s16, %s507
      %p509 = scmp.lt.s32.totalorder %s27, 1
      %s510 = scalar_select %p509, %s27, 1
      %s511 = smul.addr %s510, 8
      %s512 = scalar_lea.vmem %s0, %s511
      %p513 = scmp.lt.s32.totalorder %s27, 1
      %s514 = scalar_select %p513, %s27, 1
      %s515 = smul.addr %s514, 8
      %s516 = scalar_lea.vmem %s16, %s515
      %v518 = vld [vmem:[%s512] sm:$0xff]
      %v519 = vld [vmem:[%s2] sm:$0xff]
      %v520 = vld [vmem:[%s2 + $0x8] sm:$0xff]
      %v521 = vld [vmem:[%s2 + $0x10] sm:$0xff]
      %v522 = vld [vmem:[%s2 + $0x18] sm:$0xff]
      %v523 = vpack.c.bf16 %v518, %v518
      %v524 = vpack.c.bf16 %v520, %v519
      %v525 = vpack.c.bf16 %v522, %v521
      %v526 = vld [vmem:[%s3] sm:$0x1]
      %v528 = vperm.slane %v526, 0
      %vm530 = vcmask 261120
      %v532 = vsel %vm530, %v523, 0
      %534 = vmatpush.bf16.msra.mxu0 0
      %535 = vmatpush.bf16.msra.mxu0 0
      %536 = vmatpush.bf16.msra.mxu0 0
      %537 = vmatpush.bf16.msra.mxu0 0
      %538 = vmatpush.bf16.msra.mxu0 0
      %539 = vmatpush.bf16.msra.mxu0 0
      %540 = vmatpush.bf16.msra.mxu0 %v525
      %541 = vmatpush.bf16.msra.mxu0 %v524
      %542 = vmatmul.bf16.gmra.mxu0 %v532
      %v543 = vpop.f32.mrf.mxu0
      %v544 = vadd.f32 %v528, %v543
      %v545 = vpop.f32.mrf.mxu0
      %546 = vdwg.mxu0
      %v547 = vld [vmem:[%s1] sm:$0xff]
      %v548 = vld [vmem:[%s1 + $0x8] sm:$0xff]
      %v549 = vld [vmem:[%s1 + $0x10] sm:$0xff]
      %v550 = vld [vmem:[%s1 + $0x18] sm:$0xff]
      %552 = vrot.lane.b32.xlu0 %v544, 120
      %v553 = vpop.permute.xlu0 %552
      %555 = vrot.lane.b32.xlu0 %v544, 112
      %v556 = vpop.permute.xlu0 %555
      %558 = vrot.lane.b32.xlu0 %v544, 104
      %v559 = vpop.permute.xlu0 %558
      %v561 = vpack.c.bf16 %v553, %v544
      %v562 = vpack.c.bf16 %v559, %v556
      %565 = vrot.lane.b32.xlu0 %v561, 96
      %v566 = vpop.permute.xlu0 %565
      %567 = vrot.lane.b32.xlu0 %v562, 96
      %v568 = vpop.permute.xlu0 %567
      %vm569 = vcmask 64512
      %v571 = vsel %vm569, %v561, 0
      %v574 = vsel %vm569, %v562, 0
      %v577 = vsel %vm569, %v566, 0
      %v580 = vsel %vm569, %v568, 0
      %582 = vmatpush.bf16.xpose.msra.mxu0 0
      %583 = vmatpush.bf16.xpose.msra.mxu0 0
      %584 = vmatpush.bf16.xpose.msra.mxu0 0
      %585 = vmatpush.bf16.xpose.msra.mxu0 0
      %586 = vmatpush.bf16.xpose.msra.mxu0 0
      %587 = vmatpush.bf16.xpose.msra.mxu0 0
      %588 = vmatpush.bf16.xpose.msra.mxu0 %v580
      %589 = vmatpush.bf16.xpose.msra.mxu0 %v577
      %590 = vmatmul.bf16.gmra.mxu0 %v571
      %v591 = vpop.f32.mrf.mxu0
      %v592 = vadd.f32 0.0, %v591
      %v593 = vpop.f32.mrf.mxu0
      %v594 = vadd.f32 0.0, %v593
      %595 = vmatmul.bf16.gmra.mxu0 %v574
      %v596 = vpop.f32.mrf.mxu0
      %v597 = vadd.f32 0.0, %v596
      %v598 = vpop.f32.mrf.mxu0
      %v599 = vadd.f32 0.0, %v598
      %600 = vdwg.mxu0
      %v601 = vmul.f32 %v592, 0.35355338
      %v602 = vmul.f32 %v594, 0.35355338
      %v603 = vmul.f32 %v597, 0.35355338
      %v604 = vmul.f32 %v599, 0.35355338
      %v605 = vadd.f32 %v601, %v547
      %v606 = vadd.f32 %v602, %v548
      %v607 = vadd.f32 %v603, %v549
      %v608 = vadd.f32 %v604, %v550
      %v609 = vsel %vm530, %v605, -inf
      %610 = vmax.xlane.f32.xlu0 %v609
      %v611 = vpop.xlane.xlu0 %610
      %v612 = vsel %vm530, %v606, -inf
      %613 = vmax.xlane.f32.xlu0 %v612
      %v614 = vpop.xlane.xlu0 %613
      %v615 = vsel %vm530, %v607, -inf
      %616 = vmax.xlane.f32.xlu0 %v615
      %v617 = vpop.xlane.xlu0 %616
      %v618 = vsel %vm530, %v608, -inf
      %619 = vmax.xlane.f32.xlu0 %v618
      %v620 = vpop.xlane.xlu0 %619
      %v621 = vsub.f32 %v605, %v611
      %v622 = vsub.f32 %v606, %v614
      %v623 = vsub.f32 %v607, %v617
      %v624 = vsub.f32 %v608, %v620
      %v625 = vmul.f32 %v621, 1.442695
      %v626 = vpow.pop %v625
      %v627 = vmul.f32 %v622, 1.442695
      %v628 = vpow.pop %v627
      %v629 = vmul.f32 %v623, 1.442695
      %v630 = vpow.pop %v629
      %v631 = vmul.f32 %v624, 1.442695
      %v632 = vpow.pop %v631
      %v633 = vsel %vm530, %v626, 0.0
      %634 = vadd.xlane.f32.xlu0 %v633
      %v635 = vpop.xlane.xlu0 %634
      %v636 = vsel %vm530, %v628, 0.0
      %637 = vadd.xlane.f32.xlu0 %v636
      %v638 = vpop.xlane.xlu0 %637
      %v639 = vsel %vm530, %v630, 0.0
      %640 = vadd.xlane.f32.xlu0 %v639
      %v641 = vpop.xlane.xlu0 %640
      %v642 = vsel %vm530, %v632, 0.0
      %643 = vadd.xlane.f32.xlu0 %v642
      %v644 = vpop.xlane.xlu0 %643
      %v645 = vrcp.pop %v635
      %v646 = vrcp.pop %v638
      %v647 = vrcp.pop %v641
      %v648 = vrcp.pop %v644
      %v649 = vmul.f32 %v626, %v645
      %v650 = vmul.f32 %v628, %v646
      %v651 = vmul.f32 %v630, %v647
      %v652 = vmul.f32 %v632, %v648
      %v653 = vpack.c.bf16 %v650, %v649
      %v654 = vpack.c.bf16 %v652, %v651
      %655 = vrot.lane.b32.xlu0 %v561, 64
      %v656 = vpop.permute.xlu0 %655
      %657 = vrot.lane.b32.xlu0 %v562, 64
      %v658 = vpop.permute.xlu0 %657
      %v662 = vsel %vm530, %v653, 0
      %v665 = vsel %vm530, %v654, 0
      %667 = vmatpush.bf16.msra.mxu0 0
      %668 = vmatpush.bf16.msra.mxu0 0
      %669 = vmatpush.bf16.msra.mxu0 0
      %670 = vmatpush.bf16.msra.mxu0 0
      %671 = vmatpush.bf16.msra.mxu0 0
      %672 = vmatpush.bf16.msra.mxu0 0
      %673 = vmatpush.bf16.msra.mxu0 %v658
      %674 = vmatpush.bf16.msra.mxu0 %v656
      %675 = vmatmul.bf16.gmra.mxu0 %v662
      %v676 = vpop.f32.mrf.mxu0
      %v677 = vadd.f32 0.0, %v676
      %v678 = vpop.f32.mrf.mxu0
      %v679 = vadd.f32 0.0, %v678
      %680 = vmatmul.bf16.gmra.mxu0 %v665
      %v681 = vpop.f32.mrf.mxu0
      %v682 = vadd.f32 0.0, %v681
      %v683 = vpop.f32.mrf.mxu0
      %v684 = vadd.f32 0.0, %v683
      %685 = vdwg.mxu0
      %687 = vrot.lane.b32.xlu0 %v679, 8
      %v688 = vpop.permute.xlu0 %687
      %691 = vrot.lane.b32.xlu0 %v682, 16
      %v692 = vpop.permute.xlu0 %691
      %695 = vrot.lane.b32.xlu0 %v684, 24
      %v696 = vpop.permute.xlu0 %695
      %v698 = vsel %vm569, %v677, %v688
      %vm699 = vcmask 130048
      %v700 = vsel %vm699, %v698, %v692
      %vm701 = vcmask 195584
      %v702 = vsel %vm701, %v700, %v696
      %v703 = vld [vmem:[%s4] sm:$0xff]
      %v704 = vld [vmem:[%s4 + $0x8] sm:$0xff]
      %v705 = vld [vmem:[%s4 + $0x10] sm:$0xff]
      %v706 = vld [vmem:[%s4 + $0x18] sm:$0xff]
      %v707 = vpack.c.bf16 %v702, %v702
      %v708 = vpack.c.bf16 %v704, %v703
      %v709 = vpack.c.bf16 %v706, %v705
      %v711 = vsel %vm530, %v707, 0
      %713 = vmatpush.bf16.msra.mxu0 0
      %714 = vmatpush.bf16.msra.mxu0 0
      %715 = vmatpush.bf16.msra.mxu0 0
      %716 = vmatpush.bf16.msra.mxu0 0
      %717 = vmatpush.bf16.msra.mxu0 0
      %718 = vmatpush.bf16.msra.mxu0 0
      %719 = vmatpush.bf16.msra.mxu0 %v709
      %720 = vmatpush.bf16.msra.mxu0 %v708
      %721 = vmatmul.bf16.gmra.mxu0 %v711
      %v722 = vpop.f32.mrf.mxu0
      %v723 = vadd.f32 0.0, %v722
      %v724 = vpop.f32.mrf.mxu0
      %725 = vdwg.mxu0
      %v726 = vadd.f32 %v518, %v723
      %v727 = vld [vmem:[%s5] sm:$0x1]
      %v729 = vperm.slane %v727, 0
      %v731 = vadd.f32 %v726, %v729
      %v732 = vld [vmem:[%s6] sm:$0x1]
      %v733 = vld [vmem:[%s7] sm:$0x1]
      %v734 = vsel %vm530, %v731, 0.0
      %735 = vadd.xlane.f32.xlu0 %v734
      %v736 = vpop.xlane.xlu0 %735
      %v737 = vrcp.pop 32.0
      %v738 = vmul.f32 32.0, %v737
      %v739 = vsub.f32 1.0, %v738
      %v740 = vmul.f32 %v737, %v739
      %v741 = vadd.f32 %v737, %v740
      %vm742 = vweird.f32 %v737
      %v743 = vsel %vm742, %v737, %v741
      %v744 = vmul.f32 %v736, %v743
      %v745 = vsub.f32 %v731, %v744
      %v746 = vmul.f32 %v745, %v745
      %v747 = vsel %vm530, %v746, 0.0
      %748 = vadd.xlane.f32.xlu0 %v747
      %v749 = vpop.xlane.xlu0 %748
      %v750 = vmul.f32 %v749, %v743
      %v751 = vadd.f32 %v750, 1e-05
      %v752 = vrsqrt.pop %v751
      %v753 = vmul.f32 %v752, %v751
      %v754 = vmul.f32 %v753, %v752
      %v755 = vmul.f32 0.5, %v754
      %v756 = vsub.f32 1.5, %v755
      %v757 = vmul.f32 %v752, %v756
      %vm758 = vweird.f32 %v751
      %vm759 = vweird.f32 %v752
      %vm760 = vmor %vm758, %vm759
      %v761 = vsel %vm760, %v752, %v757
      %v762 = vmul.f32 %v745, %v761
      %v764 = vperm.slane %v732, 0
      %v766 = vmul.f32 %v762, %v764
      %v768 = vperm.slane %v733, 0
      %v770 = vadd.f32 %v766, %v768
      %v771 = vld [vmem:[%s8] sm:$0xff]
      %v772 = vld [vmem:[%s8 + $0x8] sm:$0xff]
      %v773 = vld [vmem:[%s8 + $0x10] sm:$0xff]
      %v774 = vld [vmem:[%s8 + $0x18] sm:$0xff]
      %v775 = vpack.c.bf16 %v770, %v770
      %v776 = vpack.c.bf16 %v772, %v771
      %v777 = vpack.c.bf16 %v774, %v773
      %v778 = vld [vmem:[%s9] sm:$0x1]
      %v780 = vperm.slane %v778, 0
      %v783 = vsel %vm530, %v775, 0
      %785 = vmatpush.bf16.msra.mxu0 0
      %786 = vmatpush.bf16.msra.mxu0 0
      %787 = vmatpush.bf16.msra.mxu0 0
      %788 = vmatpush.bf16.msra.mxu0 0
      %789 = vmatpush.bf16.msra.mxu0 0
      %790 = vmatpush.bf16.msra.mxu0 0
      %791 = vmatpush.bf16.msra.mxu0 %v777
      %792 = vmatpush.bf16.msra.mxu0 %v776
      %793 = vmatmul.bf16.gmra.mxu0 %v783
      %v794 = vpop.f32.mrf.mxu0
      %v795 = vadd.f32 %v780, %v794
      %v796 = vpop.f32.mrf.mxu0
      %797 = vdwg.mxu0
      %v798 = vmul.f32 %v795, 0.5
      %v799 = vmul.f32 %v795, 0.044715
      %v800 = vmul.f32 %v799, %v795
      %v801 = vmul.f32 %v800, %v795
      %v802 = vadd.f32 %v795, %v801
      %v803 = vmul.f32 %v802, 0.7978846
      %v804 = vtanh.pop %v803
      %v805 = vadd.f32 %v804, 1.0
      %v806 = vmul.f32 %v798, %v805
      %v807 = vld [vmem:[%s10] sm:$0xff]
      %v808 = vld [vmem:[%s10 + $0x8] sm:$0xff]
      %v809 = vld [vmem:[%s10 + $0x10] sm:$0xff]
      %v810 = vld [vmem:[%s10 + $0x18] sm:$0xff]
      %v811 = vld [vmem:[%s10 + $0x20] sm:$0xff]
      %v812 = vld [vmem:[%s10 + $0x28] sm:$0xff]
      %v813 = vld [vmem:[%s10 + $0x30] sm:$0xff]
      %v814 = vld [vmem:[%s10 + $0x38] sm:$0xff]
      %v815 = vpack.c.bf16 %v806, %v806
      %v816 = vpack.c.bf16 %v808, %v807
      %v817 = vpack.c.bf16 %v810, %v809
      %v818 = vpack.c.bf16 %v812, %v811
      %v819 = vpack.c.bf16 %v814, %v813
      %vm820 = vcmask 523264
      %v822 = vsel %vm820, %v815, 0
      %824 = vmatpush.bf16.msra.mxu0 0
      %825 = vmatpush.bf16.msra.mxu0 0
      %826 = vmatpush.bf16.msra.mxu0 0
      %827 = vmatpush.bf16.msra.mxu0 0
      %828 = vmatpush.bf16.msra.mxu0 %v819
      %829 = vmatpush.bf16.msra.mxu0 %v818
      %830 = vmatpush.bf16.msra.mxu0 %v817
      %831 = vmatpush.bf16.msra.mxu0 %v816
      %832 = vmatmul.bf16.gmra.mxu0 %v822
      %v833 = vpop.f32.mrf.mxu0
      %v834 = vadd.f32 0.0, %v833
      %v835 = vpop.f32.mrf.mxu0
      %836 = vdwg.mxu0
      %v837 = vadd.f32 %v770, %v834
      %v838 = vld [vmem:[%s11] sm:$0x1]
      %v840 = vperm.slane %v838, 0
      %v842 = vadd.f32 %v837, %v840
      %v843 = vld [vmem:[%s12] sm:$0x1]
      %v844 = vld [vmem:[%s13] sm:$0x1]
      %v845 = vsel %vm530, %v842, 0.0
      %846 = vadd.xlane.f32.xlu0 %v845
      %v847 = vpop.xlane.xlu0 %846
      %v848 = vmul.f32 %v847, %v743
      %v849 = vsub.f32 %v842, %v848
      %v850 = vmul.f32 %v849, %v849
      %v851 = vsel %vm530, %v850, 0.0
      %852 = vadd.xlane.f32.xlu0 %v851
      %v853 = vpop.xlane.xlu0 %852
      %v854 = vmul.f32 %v853, %v743
      %v855 = vadd.f32 %v854, 1e-05
      %v856 = vrsqrt.pop %v855
      %v857 = vmul.f32 %v856, %v855
      %v858 = vmul.f32 %v857, %v856
      %v859 = vmul.f32 0.5, %v858
      %v860 = vsub.f32 1.5, %v859
      %v861 = vmul.f32 %v856, %v860
      %vm862 = vweird.f32 %v855
      %vm863 = vweird.f32 %v856
      %vm864 = vmor %vm862, %vm863
      %v865 = vsel %vm864, %v856, %v861
      %v866 = vmul.f32 %v849, %v865
      %v868 = vperm.slane %v843, 0
      %v870 = vmul.f32 %v866, %v868
      %v872 = vperm.slane %v844, 0
      %v874 = vadd.f32 %v870, %v872
      %v875 = vld [vmem:[%s14] sm:$0x1]
      %v876 = vld [vmem:[%s15] sm:$0x1]
      %v877 = vsel %vm530, %v874, 0.0
      %878 = vadd.xlane.f32.xlu0 %v877
      %v879 = vpop.xlane.xlu0 %878
      %v880 = vmul.f32 %v879, %v743
      %v881 = vsub.f32 %v874, %v880
      %v882 = vmul.f32 %v881, %v881
      %v883 = vsel %vm530, %v882, 0.0
      %884 = vadd.xlane.f32.xlu0 %v883
      %v885 = vpop.xlane.xlu0 %884
      %v886 = vmul.f32 %v885, %v743
      %v887 = vadd.f32 %v886, 1e-05
      %v888 = vrsqrt.pop %v887
      %v889 = vmul.f32 %v888, %v887
      %v890 = vmul.f32 %v889, %v888
      %v891 = vmul.f32 0.5, %v890
      %v892 = vsub.f32 1.5, %v891
      %v893 = vmul.f32 %v888, %v892
      %vm894 = vweird.f32 %v887
      %vm895 = vweird.f32 %v888
      %vm896 = vmor %vm894, %vm895
      %v897 = vsel %vm896, %v888, %v893
      %v898 = vmul.f32 %v881, %v897
      %v900 = vperm.slane %v875, 0
      %v902 = vmul.f32 %v898, %v900
      %v904 = vperm.slane %v876, 0
      %v906 = vadd.f32 %v902, %v904
      %907 = vst.msk [vmem:[%s516] sm:$0xff] %vm530, %v906
      %p908 = scmp.lt.s32.totalorder %s27, 1
      %s909 = scalar_select %p908, %s27, 1
      %s910 = smul.addr %s909, 8
      %s911 = scalar_lea.vmem %s16, %s910
      // Predicated region
      $region85: #{forward.12} parent=83 // pred_check
        %p912 = pneg %p386
      $region86: #{forward.12} parent=83 // pred_check_branch
        %914 = sbr.rel (%p912) target = $region88
      $region87: #{forward.12} parent=83 // pred_region
        _
      $region88: #{forward.12} parent=83 // pred_fallthru
        _
    $region84: #{forward.12} parent=5 // pred_fallthru
      _
    %p915 = scmp.le.s32.totalorder 2, %s22
    // Predicated region
    $region89: #{forward.12} parent=5 // pred_check
      %p916 = pneg %p915
    $region90: #{forward.12} parent=5 // pred_check_branch
      %918 = sbr.rel (%p916) target = $region92
    $region91: #{forward.12} parent=5 // pred_region
      %s919 = ssub.s32 %s22, 2
      // Predicated region
      $region93: #{forward.12} parent=91 // pred_check
        %p920 = pneg %p392
      $region94: #{forward.12} parent=91 // pred_check_branch
        %922 = sbr.rel (%p920) target = $region96
      $region95: #{forward.12} parent=91 // pred_region
        %p923 = scmp.lt.s32.totalorder %s28, 1
        %s924 = scalar_select %p923, %s28, 1
        %s925 = smul.addr %s924, 8
        %s926 = scalar_lea.vmem %s16, %s925
      $region96: #{forward.12} parent=91 // pred_fallthru
        _
    $region92: #{forward.12} parent=5 // pred_fallthru
      _
  $region6: #{forward.12} parent=0 // loop_footer
    %s26 = sadd.s32 1, %s22
  $region7: #{forward.12} parent=0 // loop_footer_branch
    %21 = sbr.rel target = $region3
  $region8: #{forward.12} parent=0 // loop_exit
    _

// kernel: forward.11
$region0: #{forward.11}
  #allocation0 [shape = 'u32[]', space=smem, size = 0x4, offset = 0x4, fixed_abs, tag = 'smem constant byte address 0x4 - core index']
  #allocation1 [shape = 'u32[72,128]{1,0:T(1,128)}', space=vmem, size = 0x9000, scoped, tag = 'internal scratch']
  %s0 = inlined_call_operand.vmem [shape: f32[2,18,32], index: 0, kind: input, shape index: {}]
  %s1 = inlined_call_operand.vmem [shape: f32[96,32], index: 1, kind: input, shape index: {}]
  %s2 = inlined_call_operand.vmem [shape: f32[1,32], index: 2, kind: input, shape index: {}]
  %s3 = inlined_call_operand.vmem [shape: f32[1,32], index: 3, kind: input, shape index: {}]
  %s4 = inlined_call_operand.vmem [shape: f32[1,32], index: 4, kind: input, shape index: {}]
  %s5 = inlined_call_operand.vmem [shape: f32[8,16], index: 5, kind: input, shape index: {}]
  %s6 = inlined_call_operand.vmem [shape: f32[2,8,32], index: 6, kind: output, shape index: {}]
  %s7 = sld [smem:[#allocation0]]
  $region34: #{forward.11} parent=0
    _
  %s9 = ssub.s32 1, %s7
  %s10 = scalar_select 0, %s9, %s7
  // Predicated region
  $region2: #{forward.11} parent=0 // pred_check
    _
  $region3: #{forward.11} parent=0 // pred_check_branch
    %12 = sbr.rel (0) target = $region5
  $region4: #{forward.11} parent=0 // pred_region
    _
  $region5: #{forward.11} parent=0 // pred_fallthru
    _
  // Predicated region
  $region6: #{forward.11} parent=0 // pred_check
    _
  $region7: #{forward.11} parent=0 // pred_check_branch
    %14 = sbr.rel (0) target = $region9
  $region8: #{forward.11} parent=0 // pred_region
    _
  $region9: #{forward.11} parent=0 // pred_fallthru
    _
  // Predicated region
  $region10: #{forward.11} parent=0 // pred_check
    _
  $region11: #{forward.11} parent=0 // pred_check_branch
    %16 = sbr.rel (0) target = $region13
  $region12: #{forward.11} parent=0 // pred_region
    _
  $region13: #{forward.11} parent=0 // pred_fallthru
    _
  // Predicated region
  $region14: #{forward.11} parent=0 // pred_check
    _
  $region15: #{forward.11} parent=0 // pred_check_branch
    %18 = sbr.rel (0) target = $region17
  $region16: #{forward.11} parent=0 // pred_region
    _
  $region17: #{forward.11} parent=0 // pred_fallthru
    _
  // Predicated region
  $region18: #{forward.11} parent=0 // pred_check
    _
  $region19: #{forward.11} parent=0 // pred_check_branch
    %20 = sbr.rel (0) target = $region21
  $region20: #{forward.11} parent=0 // pred_region
    _
  $region21: #{forward.11} parent=0 // pred_fallthru
    _
  // Predicated region
  $region22: #{forward.11} parent=0 // pred_check
    _
  $region23: #{forward.11} parent=0 // pred_check_branch
    %22 = sbr.rel (0) target = $region25
  $region24: #{forward.11} parent=0 // pred_region
    _
  $region25: #{forward.11} parent=0 // pred_fallthru
    _
  %v24 = vld [vmem:[%s1] sm:$0xff]
  %v25 = vld [vmem:[%s1 + $0x8] sm:$0xff]
  %v26 = vld [vmem:[%s1 + $0x10] sm:$0xff]
  %v27 = vld [vmem:[%s1 + $0x18] sm:$0xff]
  %v28 = vld [vmem:[%s1 + $0x20] sm:$0xff]
  %v29 = vld [vmem:[%s1 + $0x28] sm:$0xff]
  %v30 = vld [vmem:[%s1 + $0x30] sm:$0xff]
  %v31 = vld [vmem:[%s1 + $0x38] sm:$0xff]
  %v32 = vld [vmem:[%s1 + $0x40] sm:$0xff]
  %v33 = vld [vmem:[%s1 + $0x48] sm:$0xff]
  %v34 = vld [vmem:[%s1 + $0x50] sm:$0xff]
  %v35 = vld [vmem:[%s1 + $0x58] sm:$0xff]
  %v36 = vld [vmem:[%s2] sm:$0x1]
  %v37 = vld [vmem:[%s0] sm:$0xff]
  %v38 = vld [vmem:[%s0 + $0x8] sm:$0xff]
  %v39 = vld [vmem:[%s0 + $0x10] sm:$0x3]
  %v40 = vpack.c.bf16 %v38, %v37
  %v41 = vpack.c.bf16 %v25, %v24
  %v42 = vpack.c.bf16 %v27, %v26
  %v43 = vpack.c.bf16 %v39, %v39
  %v44 = vpack.c.bf16 %v29, %v28
  %v45 = vpack.c.bf16 %v31, %v30
  %vm46 = vsmask.f32 7424
  %v48 = vshrl.u32 %v40, 16
  %v50 = vshll.u32 %v40, 16
  %v52 = vrot.slane %v50, 1
  %v53 = vor.u32 %v48, %v52
  %v55 = vshll.u32 %v43, 16
  %v57 = vrot.slane %v55, 1
  %v58 = vsel %vm46, %v53, %v57
  %vm59 = vcmask 261120
  %v61 = vsel %vm59, %v58, 0
  %63 = vmatpush.bf16.msra.mxu0 0
  %64 = vmatpush.bf16.msra.mxu0 0
  %65 = vmatpush.bf16.msra.mxu0 0
  %66 = vmatpush.bf16.msra.mxu0 0
  %67 = vmatpush.bf16.msra.mxu0 0
  %68 = vmatpush.bf16.msra.mxu0 0
  %69 = vmatpush.bf16.msra.mxu0 %v45
  %70 = vmatpush.bf16.msra.mxu0 %v44
  %71 = vmatmul.bf16.gmra.mxu0 %v61
  %v72 = vpop.f32.mrf.mxu0
  %v73 = vadd.f32 0.0, %v72
  %v74 = vpop.f32.mrf.mxu0
  %v75 = vadd.f32 0.0, %v74
  %76 = vdwg.mxu0
  %v77 = vsel %vm59, %v40, 0
  %79 = vmatpush.bf16.msra.mxu0 0
  %80 = vmatpush.bf16.msra.mxu0 0
  %81 = vmatpush.bf16.msra.mxu0 0
  %82 = vmatpush.bf16.msra.mxu0 0
  %83 = vmatpush.bf16.msra.mxu0 0
  %84 = vmatpush.bf16.msra.mxu0 0
  %85 = vmatpush.bf16.msra.mxu0 %v42
  %86 = vmatpush.bf16.msra.mxu0 %v41
  %87 = vmatmul.bf16.gmra.mxu0 %v77
  %v88 = vpop.f32.mrf.mxu0
  %v89 = vadd.f32 %v73, %v88
  %v90 = vpop.f32.mrf.mxu0
  %v91 = vadd.f32 %v75, %v90
  %92 = vdwg.mxu0
  %v93 = vpack.c.bf16 %v33, %v32
  %v94 = vpack.c.bf16 %v35, %v34
  %vm97 = vcmask 1046528
  %v98 = vrot.slane %v40, 1
  %v99 = vrot.slane %v43, 1
  %v100 = vsel %vm97, %v98, %v99
  %v102 = vsel %vm59, %v100, 0
  %104 = vmatpush.bf16.msra.mxu0 0
  %105 = vmatpush.bf16.msra.mxu0 0
  %106 = vmatpush.bf16.msra.mxu0 0
  %107 = vmatpush.bf16.msra.mxu0 0
  %108 = vmatpush.bf16.msra.mxu0 0
  %109 = vmatpush.bf16.msra.mxu0 0
  %110 = vmatpush.bf16.msra.mxu0 %v94
  %111 = vmatpush.bf16.msra.mxu0 %v93
  %112 = vmatmul.bf16.gmra.mxu0 %v102
  %v113 = vpop.f32.mrf.mxu0
  %v114 = vadd.f32 0.0, %v113
  %v115 = vpop.f32.mrf.mxu0
  %v116 = vadd.f32 0.0, %v115
  %117 = vdwg.mxu0
  %v118 = vadd.f32 %v89, %v114
  %v119 = vadd.f32 %v91, %v116
  %v121 = vperm.slane %v36, 0
  %v123 = vadd.f32 %v118, %v121
  %v124 = vadd.f32 %v119, %v121
  %s125 = scalar_lea.vmem %s0, 24
  %v126 = vld [vmem:[%s125] sm:$0xff]
  %v127 = vld [vmem:[%s125 + $0x8] sm:$0xff]
  %v128 = vld [vmem:[%s125 + $0x10] sm:$0x3]
  %v129 = vpack.c.bf16 %v127, %v126
  %v130 = vpack.c.bf16 %v128, %v128
  %v132 = vshrl.u32 %v129, 16
  %v134 = vshll.u32 %v129, 16
  %v136 = vrot.slane %v134, 1
  %v137 = vor.u32 %v132, %v136
  %v139 = vshll.u32 %v130, 16
  %v141 = vrot.slane %v139, 1
  %v142 = vsel %vm46, %v137, %v141
  %v144 = vsel %vm59, %v142, 0
  %146 = vmatpush.bf16.msra.mxu0 0
  %147 = vmatpush.bf16.msra.mxu0 0
  %148 = vmatpush.bf16.msra.mxu0 0
  %149 = vmatpush.bf16.msra.mxu0 0
  %150 = vmatpush.bf16.msra.mxu0 0
  %151 = vmatpush.bf16.msra.mxu0 0
  %152 = vmatpush.bf16.msra.mxu0 %v45
  %153 = vmatpush.bf16.msra.mxu0 %v44
  %154 = vmatmul.bf16.gmra.mxu0 %v144
  %v155 = vpop.f32.mrf.mxu0
  %v156 = vadd.f32 0.0, %v155
  %v157 = vpop.f32.mrf.mxu0
  %v158 = vadd.f32 0.0, %v157
  %159 = vdwg.mxu0
  %v160 = vsel %vm59, %v129, 0
  %162 = vmatpush.bf16.msra.mxu0 0
  %163 = vmatpush.bf16.msra.mxu0 0
  %164 = vmatpush.bf16.msra.mxu0 0
  %165 = vmatpush.bf16.msra.mxu0 0
  %166 = vmatpush.bf16.msra.mxu0 0
  %167 = vmatpush.bf16.msra.mxu0 0
  %168 = vmatpush.bf16.msra.mxu0 %v42
  %169 = vmatpush.bf16.msra.mxu0 %v41
  %170 = vmatmul.bf16.gmra.mxu0 %v160
  %v171 = vpop.f32.mrf.mxu0
  %v172 = vadd.f32 %v156, %v171
  %v173 = vpop.f32.mrf.mxu0
  %v174 = vadd.f32 %v158, %v173
  %175 = vdwg.mxu0
  %v178 = vrot.slane %v129, 1
  %v179 = vrot.slane %v130, 1
  %v180 = vsel %vm97, %v178, %v179
  %v182 = vsel %vm59, %v180, 0
  %184 = vmatpush.bf16.msra.mxu0 0
  %185 = vmatpush.bf16.msra.mxu0 0
  %186 = vmatpush.bf16.msra.mxu0 0
  %187 = vmatpush.bf16.msra.mxu0 0
  %188 = vmatpush.bf16.msra.mxu0 0
  %189 = vmatpush.bf16.msra.mxu0 0
  %190 = vmatpush.bf16.msra.mxu0 %v94
  %191 = vmatpush.bf16.msra.mxu0 %v93
  %192 = vmatmul.bf16.gmra.mxu0 %v182
  %v193 = vpop.f32.mrf.mxu0
  %v194 = vadd.f32 0.0, %v193
  %v195 = vpop.f32.mrf.mxu0
  %v196 = vadd.f32 0.0, %v195
  %197 = vdwg.mxu0
  %v198 = vadd.f32 %v172, %v194
  %v199 = vadd.f32 %v174, %v196
  %v200 = vadd.f32 %v198, %v121
  %v201 = vadd.f32 %v199, %v121
  %v202 = vsel %vm59, %v123, 0.0
  %v203 = vsel %vm59, %v124, 0.0
  %v204 = vadd.f32 %v202, %v203
  %v205 = vrot.slane %v204, 4
  %v206 = vadd.f32 %v204, %v205
  %v207 = vrot.slane %v206, 2
  %v208 = vadd.f32 %v206, %v207
  %v209 = vrot.slane %v208, 1
  %v210 = vadd.f32 %v208, %v209
  %v211 = vadd.f32 %v210, 0.0
  %v212 = vsel %vm59, %v200, 0.0
  %v213 = vsel %vm59, %v201, 0.0
  %v214 = vadd.f32 %v212, %v213
  %v215 = vrot.slane %v214, 4
  %v216 = vadd.f32 %v214, %v215
  %v217 = vrot.slane %v216, 2
  %v218 = vadd.f32 %v216, %v217
  %v219 = vrot.slane %v218, 1
  %v220 = vadd.f32 %v218, %v219
  %v221 = vadd.f32 %v211, %v220
  %v222 = vrcp.pop 32.0
  %v223 = vmul.f32 32.0, %v222
  %v224 = vsub.f32 1.0, %v223
  %v225 = vmul.f32 %v222, %v224
  %v226 = vadd.f32 %v222, %v225
  %vm227 = vweird.f32 %v222
  %v228 = vsel %vm227, %v222, %v226
  %v229 = vmul.f32 %v221, %v228
  %v230 = vsub.f32 %v123, %v229
  %v231 = vsub.f32 %v124, %v229
  %v232 = vmul.f32 %v230, %v230
  %v233 = vmul.f32 %v231, %v231
  %v234 = vsel %vm59, %v232, 0.0
  %v235 = vsel %vm59, %v233, 0.0
  %v236 = vadd.f32 %v234, %v235
  %v237 = vrot.slane %v236, 4
  %v238 = vadd.f32 %v236, %v237
  %v239 = vrot.slane %v238, 2
  %v240 = vadd.f32 %v238, %v239
  %v241 = vrot.slane %v240, 1
  %v242 = vadd.f32 %v240, %v241
  %v243 = vadd.f32 %v242, 0.0
  %v244 = vsub.f32 %v200, %v229
  %v245 = vsub.f32 %v201, %v229
  %v246 = vmul.f32 %v244, %v244
  %v247 = vmul.f32 %v245, %v245
  %v248 = vsel %vm59, %v246, 0.0
  %v249 = vsel %vm59, %v247, 0.0
  %v250 = vadd.f32 %v248, %v249
  %v251 = vrot.slane %v250, 4
  %v252 = vadd.f32 %v250, %v251
  %v253 = vrot.slane %v252, 2
  %v254 = vadd.f32 %v252, %v253
  %v255 = vrot.slane %v254, 1
  %v256 = vadd.f32 %v254, %v255
  %v257 = vadd.f32 %v243, %v256
  %v258 = vmul.f32 %v257, %v228
  %v259 = vadd.f32 %v258, 1e-05
  %v260 = vrsqrt.pop %v259
  %v261 = vmul.f32 %v260, %v259
  %v262 = vmul.f32 %v261, %v260
  %v263 = vmul.f32 0.5, %v262
  %v264 = vsub.f32 1.5, %v263
  %v265 = vmul.f32 %v260, %v264
  %vm266 = vweird.f32 %v259
  %vm267 = vweird.f32 %v260
  %vm268 = vmor %vm266, %vm267
  %v269 = vsel %vm268, %v260, %v265
  %v270 = vld [vmem:[%s3] sm:$0x1]
  %v271 = vmul.f32 %v269, %v270
  %v272 = vld [vmem:[%s4] sm:$0x1]
  %v273 = vld [vmem:[%s5] sm:$0xff]
  %v274 = vperm.slane %v271, 0
  %v275 = vmul.f32 %v230, %v274
  %v276 = vmul.f32 %v231, %v274
  %v278 = vperm.slane %v272, 0
  %v280 = vadd.f32 %v275, %v278
  %v281 = vadd.f32 %v276, %v278
  %vm282 = vcmp.gt.f32.partialorder %v280, 0.0
  %vm283 = vcmp.gt.f32.partialorder %v281, 0.0
  %v284 = vmin.f32 %v280, 0.0
  %v285 = vmin.f32 %v281, 0.0
  %v286 = vmul.f32 %v284, 1.442695
  %v287 = vpow.pop %v286
  %v288 = vmul.f32 %v285, 1.442695
  %v289 = vpow.pop %v288
  %v290 = vsub.f32 %v287, 1.0
  %v291 = vsub.f32 %v289, 1.0
  %v292 = vsel %vm282, %v280, %v290
  %v293 = vsel %vm283, %v281, %v291
  %vm296 = vcmask 1040384
  %v297 = vrot.slane %v292, 7
  %v298 = vrot.slane %v293, 7
  %v299 = vsel %vm296, %v297, %v298
  %v302 = vsel %vm296, -1e+30, %v297
  %vm303 = vcmask 1046528
  %v304 = vrot.slane %v292, 1
  %v305 = vrot.slane %v293, 1
  %v306 = vsel %vm303, %v304, %v305
  %v309 = vsel %vm303, %v305, -1e+30
  %v310 = vmax.f32 %v302, %v292
  %v311 = vmax.f32 %v299, %v293
  %v312 = vmax.f32 %v310, %v306
  %v313 = vmax.f32 %v311, %v309
  %vm314 = vcmask 130048
  %v316 = vsel %vm314, %v273, 0
  %318 = vmatpush.msra.mxu0 0.0
  %319 = vmatpush.msra.mxu0 0.0
  %320 = vmatpush.msra.mxu0 0.0
  %321 = vmatpush.msra.mxu0 0.0
  %322 = vmatpush.msra.mxu0 0.0
  %323 = vmatpush.msra.mxu0 0.0
  %324 = vmatpush.msra.mxu0 0.0
  %325 = vmatpush.msra.mxu0 0.0
  %326 = vmatpush.msra.mxu0 0.0
  %327 = vmatpush.msra.mxu0 0.0
  %328 = vmatpush.msra.mxu0 0.0
  %329 = vmatpush.msra.mxu0 0.0
  %330 = vmatpush.msra.mxu0 0.0
  %331 = vmatpush.msra.mxu0 0.0
  %332 = vmatpush.msra.mxu0 %v313
  %333 = vmatpush.msra.mxu0 %v312
  %334 = vmatmul.f32.gmra.mxu0 %v316
  %v335 = vpop.f32.mrf.mxu0
  %v336 = vadd.f32 0.0, %v335
  %337 = vdwg.mxu0
  %338 = vst.msk [vmem:[%s6] sm:$0xff] %vm59, %v336
  %v339 = vmul.f32 %v244, %v274
  %v340 = vmul.f32 %v245, %v274
  %v341 = vadd.f32 %v339, %v278
  %v342 = vadd.f32 %v340, %v278
  %vm343 = vcmp.gt.f32.partialorder %v341, 0.0
  %vm344 = vcmp.gt.f32.partialorder %v342, 0.0
  %v345 = vmin.f32 %v341, 0.0
  %v346 = vmin.f32 %v342, 0.0
  %v347 = vmul.f32 %v345, 1.442695
  %v348 = vpow.pop %v347
  %v349 = vmul.f32 %v346, 1.442695
  %v350 = vpow.pop %v349
  %v351 = vsub.f32 %v348, 1.0
  %v352 = vsub.f32 %v350, 1.0
  %v353 = vsel %vm343, %v341, %v351
  %v354 = vsel %vm344, %v342, %v352
  %v357 = vrot.slane %v353, 7
  %v358 = vrot.slane %v354, 7
  %v359 = vsel %vm296, %v357, %v358
  %v362 = vsel %vm296, -1e+30, %v357
  %v363 = vrot.slane %v353, 1
  %v364 = vrot.slane %v354, 1
  %v365 = vsel %vm303, %v363, %v364
  %v368 = vsel %vm303, %v364, -1e+30
  %v369 = vmax.f32 %v362, %v353
  %v370 = vmax.f32 %v359, %v354
  %v371 = vmax.f32 %v369, %v365
  %v372 = vmax.f32 %v370, %v368
  %373 = vmatpush.msra.mxu0 0.0
  %374 = vmatpush.msra.mxu0 0.0
  %375 = vmatpush.msra.mxu0 0.0
  %376 = vmatpush.msra.mxu0 0.0
  %377 = vmatpush.msra.mxu0 0.0
  %378 = vmatpush.msra.mxu0 0.0
  %379 = vmatpush.msra.mxu0 0.0
  %380 = vmatpush.msra.mxu0 0.0
  %381 = vmatpush.msra.mxu0 0.0
  %382 = vmatpush.msra.mxu0 0.0
  %383 = vmatpush.msra.mxu0 0.0
  %384 = vmatpush.msra.mxu0 0.0
  %385 = vmatpush.msra.mxu0 0.0
  %386 = vmatpush.msra.mxu0 0.0
  %387 = vmatpush.msra.mxu0 %v372
  %388 = vmatpush.msra.mxu0 %v371
  %389 = vmatmul.f32.gmra.mxu0 %v316
  %v390 = vpop.f32.mrf.mxu0
  %v391 = vadd.f32 0.0, %v390
  %392 = vdwg.mxu0
  %s393 = scalar_lea.vmem %s6, 8
  %394 = vst.msk [vmem:[%s393] sm:$0xff] %vm59, %v391
  // Predicated region
  $region26: #{forward.11} parent=0 // pred_check
    _
  $region27: #{forward.11} parent=0 // pred_check_branch
    %396 = sbr.rel (0) target = $region29
  $region28: #{forward.11} parent=0 // pred_region
    _
  $region29: #{forward.11} parent=0 // pred_fallthru
    _
  // Predicated region
  $region30: #{forward.11} parent=0 // pred_check
    _
  $region31: #{forward.11} parent=0 // pred_check_branch
    %398 = sbr.rel (0) target = $region33
  $region32: #{forward.11} parent=0 // pred_region
    _
  $region33: #{forward.11} parent=0 // pred_fallthru
    _

// kernel: forward.10
$region0: #{forward.10}
  #allocation0 [shape = 'u32[]', space=smem, size = 0x4, offset = 0x4, fixed_abs, tag = 'smem constant byte address 0x4 - core index']
  #allocation1 [shape = 'u32[72,128]{1,0:T(1,128)}', space=vmem, size = 0x9000, scoped, tag = 'internal scratch']
  %s0 = inlined_call_operand.vmem [shape: f32[2,16,32], index: 0, kind: input, shape index: {}]
  %s1 = inlined_call_operand.vmem [shape: f32[64,64], index: 1, kind: input, shape index: {}]
  %s2 = inlined_call_operand.vmem [shape: f32[32,96], index: 2, kind: input, shape index: {}]
  %s3 = inlined_call_operand.vmem [shape: f32[1,96], index: 3, kind: input, shape index: {}]
  %s4 = inlined_call_operand.vmem [shape: f32[32,32], index: 4, kind: input, shape index: {}]
  %s5 = inlined_call_operand.vmem [shape: f32[1,32], index: 5, kind: input, shape index: {}]
  %s6 = inlined_call_operand.vmem [shape: f32[1,32], index: 6, kind: input, shape index: {}]
  %s7 = inlined_call_operand.vmem [shape: f32[1,32], index: 7, kind: input, shape index: {}]
  %s8 = inlined_call_operand.vmem [shape: f32[32,64], index: 8, kind: input, shape index: {}]
  %s9 = inlined_call_operand.vmem [shape: f32[1,64], index: 9, kind: input, shape index: {}]
  %s10 = inlined_call_operand.vmem [shape: f32[64,32], index: 10, kind: input, shape index: {}]
  %s11 = inlined_call_operand.vmem [shape: f32[1,32], index: 11, kind: input, shape index: {}]
  %s12 = inlined_call_operand.vmem [shape: f32[1,32], index: 12, kind: input, shape index: {}]
  %s13 = inlined_call_operand.vmem [shape: f32[1,32], index: 13, kind: input, shape index: {}]
  %s14 = inlined_call_operand.vmem [shape: f32[2,16,32], index: 14, kind: output, shape index: {}]
  %s15 = sld [smem:[#allocation0]]
  $region89: #{forward.10} parent=0
    _
  %s17 = ssub.s32 1, %s15
  %s18 = scalar_select 0, %s17, %s15
  loop: start=0, step=1, limit=4
  $region2: #{forward.10} parent=0 // loop_pre_header
    _
  $region3: #{forward.10} parent=0 // loop_header
    %s20 = sphi 0, %s24
    %p21 = scmp.ge.s32.totalorder %s20, 4
    %s30 = sphi 0, %s32
    %s33 = sphi 0, %s30
    %s34 = sphi 0, %s33
    %s50 = sphi 0, %s34
    %s54 = sphi 0, %s54
    %s56 = sphi 0, %s54
    %s57 = sphi 0, %s56
    %s71 = sphi 0, %s57
    %s75 = sphi 0, %s75
    %s77 = sphi 0, %s75
    %s78 = sphi 0, %s77
    %s92 = sphi 0, %s78
    %s96 = sphi 0, %s96
    %s98 = sphi 0, %s96
    %s99 = sphi 0, %s98
    %s113 = sphi 0, %s99
    %s117 = sphi 0, %s117
    %s119 = sphi 0, %s117
    %s120 = sphi 0, %s119
    %s134 = sphi 0, %s120
    %s138 = sphi 0, %s138
    %s140 = sphi 0, %s138
    %s141 = sphi 0, %s140
    %s155 = sphi 0, %s141
    %s159 = sphi 0, %s159
    %s161 = sphi 0, %s159
    %s162 = sphi 0, %s161
    %s176 = sphi 0, %s162
    %s180 = sphi 0, %s180
    %s182 = sphi 0, %s180
    %s183 = sphi 0, %s182
    %s197 = sphi 0, %s183
    %s201 = sphi 0, %s201
    %s203 = sphi 0, %s201
    %s204 = sphi 0, %s203
    %s218 = sphi 0, %s204
    %s222 = sphi 0, %s222
    %s224 = sphi 0, %s222
    %s225 = sphi 0, %s224
    %s239 = sphi 0, %s225
    %s243 = sphi 0, %s243
    %s245 = sphi 0, %s243
    %s246 = sphi 0, %s245
    %s260 = sphi 0, %s246
    %s264 = sphi 0, %s264
    %s266 = sphi 0, %s264
    %s267 = sphi 0, %s266
    %s281 = sphi 0, %s267
    %s285 = sphi 0, %s285
    %s287 = sphi 0, %s285
    %s288 = sphi 0, %s287
    %s302 = sphi 0, %s288
    %s306 = sphi 0, %s306
    %s308 = sphi 0, %s306
    %s309 = sphi 0, %s308
    %s323 = sphi 0, %s309
    %s329 = sphi 0, %s331
    %s332 = sphi 0, %s329
    %s333 = sphi 0, %s332
    %s349 = sphi 0, %s333
  $region4: #{forward.10} parent=0 // loop_header_branch
    %23 = sbr.rel (%p21) target = $region8
  $region5: #{forward.10} parent=0 // loop_body
    %s25 = ssub.s32 %s20, 1
    %s26 = ssub.s32 %s20, 2
    %s27 = sadd.s32 %s20, 1
    %s28 = ssub.s32 %s20, %s27
    %p29 = scmp.eq.s32.totalorder %s28, 0
    %s31 = sadd.s32 %s30, 1
    %s32 = scalar_select %p29, %s30, %s31
    %p35 = pneg %p29
    %p36 = scmp.eq.s32.totalorder %s20, 1
    %p37 = por %p35, %p36
    %p38 = scmp.ne.s32.totalorder %s30, %s33
    %p39 = scmp.eq.s32.totalorder %s20, 0
    %p40 = por %p38, %p39
    %p41 = scmp.ne.s32.totalorder %s30, %s33
    %p42 = scmp.eq.s32.totalorder %s25, 1
    %p43 = por %p41, %p42
    %p44 = scmp.ne.s32.totalorder %s33, %s34
    %p45 = scmp.eq.s32.totalorder %s25, 0
    %p46 = por %p44, %p45
    %p47 = scmp.ne.s32.totalorder %s33, %s34
    %p48 = scmp.eq.s32.totalorder %s26, 1
    %p49 = por %p47, %p48
    %p51 = scmp.ne.s32.totalorder %s34, %s50
    %p52 = scmp.eq.s32.totalorder %s26, 0
    %p53 = por %p51, %p52
    %s55 = sadd.s32 %s54, 1
    %p58 = scmp.eq.s32.totalorder %s20, 1
    %p59 = scmp.ne.s32.totalorder %s54, %s56
    %p60 = scmp.eq.s32.totalorder %s20, 0
    %p61 = por %p59, %p60
    %p62 = scmp.ne.s32.totalorder %s54, %s56
    %p63 = scmp.eq.s32.totalorder %s25, 1
    %p64 = por %p62, %p63
    %p65 = scmp.ne.s32.totalorder %s56, %s57
    %p66 = scmp.eq.s32.totalorder %s25, 0
    %p67 = por %p65, %p66
    %p68 = scmp.ne.s32.totalorder %s56, %s57
    %p69 = scmp.eq.s32.totalorder %s26, 1
    %p70 = por %p68, %p69
    %p72 = scmp.ne.s32.totalorder %s57, %s71
    %p73 = scmp.eq.s32.totalorder %s26, 0
    %p74 = por %p72, %p73
    %s76 = sadd.s32 %s75, 1
    %p79 = scmp.eq.s32.totalorder %s20, 1
    %p80 = scmp.ne.s32.totalorder %s75, %s77
    %p81 = scmp.eq.s32.totalorder %s20, 0
    %p82 = por %p80, %p81
    %p83 = scmp.ne.s32.totalorder %s75, %s77
    %p84 = scmp.eq.s32.totalorder %s25, 1
    %p85 = por %p83, %p84
    %p86 = scmp.ne.s32.totalorder %s77, %s78
    %p87 = scmp.eq.s32.totalorder %s25, 0
    %p88 = por %p86, %p87
    %p89 = scmp.ne.s32.totalorder %s77, %s78
    %p90 = scmp.eq.s32.totalorder %s26, 1
    %p91 = por %p89, %p90
    %p93 = scmp.ne.s32.totalorder %s78, %s92
    %p94 = scmp.eq.s32.totalorder %s26, 0
    %p95 = por %p93, %p94
    %s97 = sadd.s32 %s96, 1
    %p100 = scmp.eq.s32.totalorder %s20, 1
    %p101 = scmp.ne.s32.totalorder %s96, %s98
    %p102 = scmp.eq.s32.totalorder %s20, 0
    %p103 = por %p101, %p102
    %p104 = scmp.ne.s32.totalorder %s96, %s98
    %p105 = scmp.eq.s32.totalorder %s25, 1
    %p106 = por %p104, %p105
    %p107 = scmp.ne.s32.totalorder %s98, %s99
    %p108 = scmp.eq.s32.totalorder %s25, 0
    %p109 = por %p107, %p108
    %p110 = scmp.ne.s32.totalorder %s98, %s99
    %p111 = scmp.eq.s32.totalorder %s26, 1
    %p112 = por %p110, %p111
    %p114 = scmp.ne.s32.totalorder %s99, %s113
    %p115 = scmp.eq.s32.totalorder %s26, 0
    %p116 = por %p114, %p115
    %s118 = sadd.s32 %s117, 1
    %p121 = scmp.eq.s32.totalorder %s20, 1
    %p122 = scmp.ne.s32.totalorder %s117, %s119
    %p123 = scmp.eq.s32.totalorder %s20, 0
    %p124 = por %p122, %p123
    %p125 = scmp.ne.s32.totalorder %s117, %s119
    %p126 = scmp.eq.s32.totalorder %s25, 1
    %p127 = por %p125, %p126
    %p128 = scmp.ne.s32.totalorder %s119, %s120
    %p129 = scmp.eq.s32.totalorder %s25, 0
    %p130 = por %p128, %p129
    %p131 = scmp.ne.s32.totalorder %s119, %s120
    %p132 = scmp.eq.s32.totalorder %s26, 1
    %p133 = por %p131, %p132
    %p135 = scmp.ne.s32.totalorder %s120, %s134
    %p136 = scmp.eq.s32.totalorder %s26, 0
    %p137 = por %p135, %p136
    %s139 = sadd.s32 %s138, 1
    %p142 = scmp.eq.s32.totalorder %s20, 1
    %p143 = scmp.ne.s32.totalorder %s138, %s140
    %p144 = scmp.eq.s32.totalorder %s20, 0
    %p145 = por %p143, %p144
    %p146 = scmp.ne.s32.totalorder %s138, %s140
    %p147 = scmp.eq.s32.totalorder %s25, 1
    %p148 = por %p146, %p147
    %p149 = scmp.ne.s32.totalorder %s140, %s141
    %p150 = scmp.eq.s32.totalorder %s25, 0
    %p151 = por %p149, %p150
    %p152 = scmp.ne.s32.totalorder %s140, %s141
    %p153 = scmp.eq.s32.totalorder %s26, 1
    %p154 = por %p152, %p153
    %p156 = scmp.ne.s32.totalorder %s141, %s155
    %p157 = scmp.eq.s32.totalorder %s26, 0
    %p158 = por %p156, %p157
    %s160 = sadd.s32 %s159, 1
    %p163 = scmp.eq.s32.totalorder %s20, 1
    %p164 = scmp.ne.s32.totalorder %s159, %s161
    %p165 = scmp.eq.s32.totalorder %s20, 0
    %p166 = por %p164, %p165
    %p167 = scmp.ne.s32.totalorder %s159, %s161
    %p168 = scmp.eq.s32.totalorder %s25, 1
    %p169 = por %p167, %p168
    %p170 = scmp.ne.s32.totalorder %s161, %s162
    %p171 = scmp.eq.s32.totalorder %s25, 0
    %p172 = por %p170, %p171
    %p173 = scmp.ne.s32.totalorder %s161, %s162
    %p174 = scmp.eq.s32.totalorder %s26, 1
    %p175 = por %p173, %p174
    %p177 = scmp.ne.s32.totalorder %s162, %s176
    %p178 = scmp.eq.s32.totalorder %s26, 0
    %p179 = por %p177, %p178
    %s181 = sadd.s32 %s180, 1
    %p184 = scmp.eq.s32.totalorder %s20, 1
    %p185 = scmp.ne.s32.totalorder %s180, %s182
    %p186 = scmp.eq.s32.totalorder %s20, 0
    %p187 = por %p185, %p186
    %p188 = scmp.ne.s32.totalorder %s180, %s182
    %p189 = scmp.eq.s32.totalorder %s25, 1
    %p190 = por %p188, %p189
    %p191 = scmp.ne.s32.totalorder %s182, %s183
    %p192 = scmp.eq.s32.totalorder %s25, 0
    %p193 = por %p191, %p192
    %p194 = scmp.ne.s32.totalorder %s182, %s183
    %p195 = scmp.eq.s32.totalorder %s26, 1
    %p196 = por %p194, %p195
    %p198 = scmp.ne.s32.totalorder %s183, %s197
    %p199 = scmp.eq.s32.totalorder %s26, 0
    %p200 = por %p198, %p199
    %s202 = sadd.s32 %s201, 1
    %p205 = scmp.eq.s32.totalorder %s20, 1
    %p206 = scmp.ne.s32.totalorder %s201, %s203
    %p207 = scmp.eq.s32.totalorder %s20, 0
    %p208 = por %p206, %p207
    %p209 = scmp.ne.s32.totalorder %s201, %s203
    %p210 = scmp.eq.s32.totalorder %s25, 1
    %p211 = por %p209, %p210
    %p212 = scmp.ne.s32.totalorder %s203, %s204
    %p213 = scmp.eq.s32.totalorder %s25, 0
    %p214 = por %p212, %p213
    %p215 = scmp.ne.s32.totalorder %s203, %s204
    %p216 = scmp.eq.s32.totalorder %s26, 1
    %p217 = por %p215, %p216
    %p219 = scmp.ne.s32.totalorder %s204, %s218
    %p220 = scmp.eq.s32.totalorder %s26, 0
    %p221 = por %p219, %p220
    %s223 = sadd.s32 %s222, 1
    %p226 = scmp.eq.s32.totalorder %s20, 1
    %p227 = scmp.ne.s32.totalorder %s222, %s224
    %p228 = scmp.eq.s32.totalorder %s20, 0
    %p229 = por %p227, %p228
    %p230 = scmp.ne.s32.totalorder %s222, %s224
    %p231 = scmp.eq.s32.totalorder %s25, 1
    %p232 = por %p230, %p231
    %p233 = scmp.ne.s32.totalorder %s224, %s225
    %p234 = scmp.eq.s32.totalorder %s25, 0
    %p235 = por %p233, %p234
    %p236 = scmp.ne.s32.totalorder %s224, %s225
    %p237 = scmp.eq.s32.totalorder %s26, 1
    %p238 = por %p236, %p237
    %p240 = scmp.ne.s32.totalorder %s225, %s239
    %p241 = scmp.eq.s32.totalorder %s26, 0
    %p242 = por %p240, %p241
    %s244 = sadd.s32 %s243, 1
    %p247 = scmp.eq.s32.totalorder %s20, 1
    %p248 = scmp.ne.s32.totalorder %s243, %s245
    %p249 = scmp.eq.s32.totalorder %s20, 0
    %p250 = por %p248, %p249
    %p251 = scmp.ne.s32.totalorder %s243, %s245
    %p252 = scmp.eq.s32.totalorder %s25, 1
    %p253 = por %p251, %p252
    %p254 = scmp.ne.s32.totalorder %s245, %s246
    %p255 = scmp.eq.s32.totalorder %s25, 0
    %p256 = por %p254, %p255
    %p257 = scmp.ne.s32.totalorder %s245, %s246
    %p258 = scmp.eq.s32.totalorder %s26, 1
    %p259 = por %p257, %p258
    %p261 = scmp.ne.s32.totalorder %s246, %s260
    %p262 = scmp.eq.s32.totalorder %s26, 0
    %p263 = por %p261, %p262
    %s265 = sadd.s32 %s264, 1
    %p268 = scmp.eq.s32.totalorder %s20, 1
    %p269 = scmp.ne.s32.totalorder %s264, %s266
    %p270 = scmp.eq.s32.totalorder %s20, 0
    %p271 = por %p269, %p270
    %p272 = scmp.ne.s32.totalorder %s264, %s266
    %p273 = scmp.eq.s32.totalorder %s25, 1
    %p274 = por %p272, %p273
    %p275 = scmp.ne.s32.totalorder %s266, %s267
    %p276 = scmp.eq.s32.totalorder %s25, 0
    %p277 = por %p275, %p276
    %p278 = scmp.ne.s32.totalorder %s266, %s267
    %p279 = scmp.eq.s32.totalorder %s26, 1
    %p280 = por %p278, %p279
    %p282 = scmp.ne.s32.totalorder %s267, %s281
    %p283 = scmp.eq.s32.totalorder %s26, 0
    %p284 = por %p282, %p283
    %s286 = sadd.s32 %s285, 1
    %p289 = scmp.eq.s32.totalorder %s20, 1
    %p290 = scmp.ne.s32.totalorder %s285, %s287
    %p291 = scmp.eq.s32.totalorder %s20, 0
    %p292 = por %p290, %p291
    %p293 = scmp.ne.s32.totalorder %s285, %s287
    %p294 = scmp.eq.s32.totalorder %s25, 1
    %p295 = por %p293, %p294
    %p296 = scmp.ne.s32.totalorder %s287, %s288
    %p297 = scmp.eq.s32.totalorder %s25, 0
    %p298 = por %p296, %p297
    %p299 = scmp.ne.s32.totalorder %s287, %s288
    %p300 = scmp.eq.s32.totalorder %s26, 1
    %p301 = por %p299, %p300
    %p303 = scmp.ne.s32.totalorder %s288, %s302
    %p304 = scmp.eq.s32.totalorder %s26, 0
    %p305 = por %p303, %p304
    %s307 = sadd.s32 %s306, 1
    %p310 = scmp.eq.s32.totalorder %s20, 1
    %p311 = scmp.ne.s32.totalorder %s306, %s308
    %p312 = scmp.eq.s32.totalorder %s20, 0
    %p313 = por %p311, %p312
    %p314 = scmp.ne.s32.totalorder %s306, %s308
    %p315 = scmp.eq.s32.totalorder %s25, 1
    %p316 = por %p314, %p315
    %p317 = scmp.ne.s32.totalorder %s308, %s309
    %p318 = scmp.eq.s32.totalorder %s25, 0
    %p319 = por %p317, %p318
    %p320 = scmp.ne.s32.totalorder %s308, %s309
    %p321 = scmp.eq.s32.totalorder %s26, 1
    %p322 = por %p320, %p321
    %p324 = scmp.ne.s32.totalorder %s309, %s323
    %p325 = scmp.eq.s32.totalorder %s26, 0
    %p326 = por %p324, %p325
    %s327 = ssub.s32 %s20, %s27
    %p328 = scmp.eq.s32.totalorder %s327, 0
    %s330 = sadd.s32 %s329, 1
    %s331 = scalar_select %p328, %s329, %s330
    %p334 = pneg %p328
    %p335 = scmp.eq.s32.totalorder %s20, 1
    %p336 = por %p334, %p335
    %p337 = scmp.ne.s32.totalorder %s329, %s332
    %p338 = scmp.eq.s32.totalorder %s20, 0
    %p339 = por %p337, %p338
    %p340 = scmp.ne.s32.totalorder %s329, %s332
    %p341 = scmp.eq.s32.totalorder %s25, 1
    %p342 = por %p340, %p341
    %p343 = scmp.ne.s32.totalorder %s332, %s333
    %p344 = scmp.eq.s32.totalorder %s25, 0
    %p345 = por %p343, %p344
    %p346 = scmp.ne.s32.totalorder %s332, %s333
    %p347 = scmp.eq.s32.totalorder %s26, 1
    %p348 = por %p346, %p347
    %p350 = scmp.ne.s32.totalorder %s333, %s349
    %p351 = scmp.eq.s32.totalorder %s26, 0
    %p352 = por %p350, %p351
    %p353 = scmp.le.s32.totalorder 1, %s20
    %p354 = scmp.lt.s32.totalorder %s20, 3
    %p355 = pnand %p353, %p354
    %p356 = pneg %p355
    // Predicated region
    $region9: #{forward.10} parent=5 // pred_check
      _
    $region10: #{forward.10} parent=5 // pred_check_branch
      %358 = sbr.rel (%p355) target = $region12
    $region11: #{forward.10} parent=5 // pred_region
      %s359 = ssub.s32 %s20, 1
      // Predicated region
      $region13: #{forward.10} parent=11 // pred_check
        %p360 = pneg %p67
      $region14: #{forward.10} parent=11 // pred_check_branch
        %362 = sbr.rel (%p360) target = $region16
      $region15: #{forward.10} parent=11 // pred_region
        _
      $region16: #{forward.10} parent=11 // pred_fallthru
        _
      // Predicated region
      $region17: #{forward.10} parent=11 // pred_check
        %p363 = pneg %p88
      $region18: #{forward.10} parent=11 // pred_check_branch
        %365 = sbr.rel (%p363) target = $region20
      $region19: #{forward.10} parent=11 // pred_region
        _
      $region20: #{forward.10} parent=11 // pred_fallthru
        _
      // Predicated region
      $region21: #{forward.10} parent=11 // pred_check
        %p366 = pneg %p109
      $region22: #{forward.10} parent=11 // pred_check_branch
        %368 = sbr.rel (%p366) target = $region24
      $region23: #{forward.10} parent=11 // pred_region
        _
      $region24: #{forward.10} parent=11 // pred_fallthru
        _
      // Predicated region
      $region25: #{forward.10} parent=11 // pred_check
        %p369 = pneg %p130
      $region26: #{forward.10} parent=11 // pred_check_branch
        %371 = sbr.rel (%p369) target = $region28
      $region27: #{forward.10} parent=11 // pred_region
        _
      $region28: #{forward.10} parent=11 // pred_fallthru
        _
      // Predicated region
      $region29: #{forward.10} parent=11 // pred_check
        %p372 = pneg %p151
      $region30: #{forward.10} parent=11 // pred_check_branch
        %374 = sbr.rel (%p372) target = $region32
      $region31: #{forward.10} parent=11 // pred_region
        _
      $region32: #{forward.10} parent=11 // pred_fallthru
        _
      // Predicated region
      $region33: #{forward.10} parent=11 // pred_check
        %p375 = pneg %p172
      $region34: #{forward.10} parent=11 // pred_check_branch
        %377 = sbr.rel (%p375) target = $region36
      $region35: #{forward.10} parent=11 // pred_region
        _
      $region36: #{forward.10} parent=11 // pred_fallthru
        _
      // Predicated region
      $region37: #{forward.10} parent=11 // pred_check
        %p378 = pneg %p193
      $region38: #{forward.10} parent=11 // pred_check_branch
        %380 = sbr.rel (%p378) target = $region40
      $region39: #{forward.10} parent=11 // pred_region
        _
      $region40: #{forward.10} parent=11 // pred_fallthru
        _
      // Predicated region
      $region41: #{forward.10} parent=11 // pred_check
        %p381 = pneg %p214
      $region42: #{forward.10} parent=11 // pred_check_branch
        %383 = sbr.rel (%p381) target = $region44
      $region43: #{forward.10} parent=11 // pred_region
        _
      $region44: #{forward.10} parent=11 // pred_fallthru
        _
      // Predicated region
      $region45: #{forward.10} parent=11 // pred_check
        %p384 = pneg %p235
      $region46: #{forward.10} parent=11 // pred_check_branch
        %386 = sbr.rel (%p384) target = $region48
      $region47: #{forward.10} parent=11 // pred_region
        _
      $region48: #{forward.10} parent=11 // pred_fallthru
        _
      // Predicated region
      $region49: #{forward.10} parent=11 // pred_check
        %p387 = pneg %p256
      $region50: #{forward.10} parent=11 // pred_check_branch
        %389 = sbr.rel (%p387) target = $region52
      $region51: #{forward.10} parent=11 // pred_region
        _
      $region52: #{forward.10} parent=11 // pred_fallthru
        _
      // Predicated region
      $region53: #{forward.10} parent=11 // pred_check
        %p390 = pneg %p277
      $region54: #{forward.10} parent=11 // pred_check_branch
        %392 = sbr.rel (%p390) target = $region56
      $region55: #{forward.10} parent=11 // pred_region
        _
      $region56: #{forward.10} parent=11 // pred_fallthru
        _
      // Predicated region
      $region57: #{forward.10} parent=11 // pred_check
        %p393 = pneg %p298
      $region58: #{forward.10} parent=11 // pred_check_branch
        %395 = sbr.rel (%p393) target = $region60
      $region59: #{forward.10} parent=11 // pred_region
        _
      $region60: #{forward.10} parent=11 // pred_fallthru
        _
      // Predicated region
      $region61: #{forward.10} parent=11 // pred_check
        %p396 = pneg %p319
      $region62: #{forward.10} parent=11 // pred_check_branch
        %398 = sbr.rel (%p396) target = $region64
      $region63: #{forward.10} parent=11 // pred_region
        _
      $region64: #{forward.10} parent=11 // pred_fallthru
        _
    $region12: #{forward.10} parent=5 // pred_fallthru
      _
    %p399 = scmp.lt.s32.totalorder %s20, 2
    // Predicated region
    $region65: #{forward.10} parent=5 // pred_check
      %p400 = pneg %p399
    $region66: #{forward.10} parent=5 // pred_check_branch
      %402 = sbr.rel (%p400) target = $region68
    $region67: #{forward.10} parent=5 // pred_region
      // Predicated region
      $region69: #{forward.10} parent=67 // pred_check
        %p403 = pneg %p40
      $region70: #{forward.10} parent=67 // pred_check_branch
        %405 = sbr.rel (%p403) target = $region72
      $region71: #{forward.10} parent=67 // pred_region
        %p406 = scmp.lt.s32.totalorder %s20, 1
        %s407 = scalar_select %p406, %s20, 1
        %s408 = smul.addr %s407, 2
        %s409 = smul.addr %s408, 8
        %s410 = scalar_lea.vmem %s0, %s409
      $region72: #{forward.10} parent=67 // pred_fallthru
        _
    $region68: #{forward.10} parent=5 // pred_fallthru
      _
    %p411 = scmp.le.s32.totalorder 1, %s20
    %p412 = scmp.lt.s32.totalorder %s20, 3
    %p413 = pnand %p411, %p412
    %p414 = pneg %p413
    // Predicated region
    $region73: #{forward.10} parent=5 // pred_check
      _
    $region74: #{forward.10} parent=5 // pred_check_branch
      %416 = sbr.rel (%p413) target = $region76
    $region75: #{forward.10} parent=5 // pred_region
      %s417 = ssub.s32 %s20, 1
      %p418 = scmp.lt.s32.totalorder %s25, 1
      %s419 = scalar_select %p418, %s25, 1
      %s420 = smul.addr %s419, 2
      %s421 = smul.addr %s420, 8
      %s422 = scalar_lea.vmem %s0, %s421
      %p423 = pneg %p46
      %p424 = pneg %p43
      %p425 = pneg %p67
      %p426 = pneg %p64
      %p427 = pneg %p88
      %p428 = pneg %p85
      %p429 = pneg %p109
      %p430 = pneg %p106
      %p431 = pneg %p130
      %p432 = pneg %p127
      %p433 = pneg %p151
      %p434 = pneg %p148
      %p435 = pneg %p172
      %p436 = pneg %p169
      %p437 = pneg %p193
      %p438 = pneg %p190
      %p439 = pneg %p214
      %p440 = pneg %p211
      %p441 = pneg %p235
      %p442 = pneg %p232
      %p443 = pneg %p256
      %p444 = pneg %p253
      %p445 = pneg %p277
      %p446 = pneg %p274
      %p447 = pneg %p298
      %p448 = pneg %p295
      %p449 = pneg %p319
      %p450 = pneg %p316
      %p451 = pneg %p345
      %p452 = pneg %p342
      %p453 = scmp.lt.s32.totalorder %s25, 1
      %s454 = scalar_select %p453, %s25, 1
      %s455 = smul.addr %s454, 2
      %s456 = smul.addr %s455, 8
      %s457 = scalar_lea.vmem %s14, %s456
      %p458 = scmp.lt.s32.totalorder %s25, 1
      %s459 = scalar_select %p458, %s25, 1
      %s460 = smul.addr %s459, 2
      %s461 = smul.addr %s460, 8
      %s462 = scalar_lea.vmem %s0, %s461
      %p463 = scmp.lt.s32.totalorder %s25, 1
      %s464 = scalar_select %p463, %s25, 1
      %s465 = smul.addr %s464, 2
      %s466 = smul.addr %s465, 8
      %s467 = scalar_lea.vmem %s14, %s466
      %v469 = vld [vmem:[%s462] sm:$0xff]
      %v470 = vld [vmem:[%s462 + $0x8] sm:$0xff]
      %v471 = vld [vmem:[%s2] sm:$0xff]
      %v472 = vld [vmem:[%s2 + $0x8] sm:$0xff]
      %v473 = vld [vmem:[%s2 + $0x10] sm:$0xff]
      %v474 = vld [vmem:[%s2 + $0x18] sm:$0xff]
      %v475 = vpack.c.bf16 %v470, %v469
      %v476 = vpack.c.bf16 %v472, %v471
      %v477 = vpack.c.bf16 %v474, %v473
      %v478 = vld [vmem:[%s3] sm:$0x1]
      %v480 = vperm.slane %v478, 0
      %vm482 = vcmask 261120
      %v484 = vsel %vm482, %v475, 0
      %486 = vmatpush.bf16.msra.mxu0 0
      %487 = vmatpush.bf16.msra.mxu0 0
      %488 = vmatpush.bf16.msra.mxu0 0
      %489 = vmatpush.bf16.msra.mxu0 0
      %490 = vmatpush.bf16.msra.mxu0 0
      %491 = vmatpush.bf16.msra.mxu0 0
      %492 = vmatpush.bf16.msra.mxu0 %v477
      %493 = vmatpush.bf16.msra.mxu0 %v476
      %494 = vmatmul.bf16.gmra.mxu0 %v484
      %v495 = vpop.f32.mrf.mxu0
      %v496 = vadd.f32 %v480, %v495
      %v497 = vpop.f32.mrf.mxu0
      %v498 = vadd.f32 %v480, %v497
      %499 = vdwg.mxu0
      %v500 = vld [vmem:[%s1] sm:$0xff]
      %v501 = vld [vmem:[%s1 + $0x8] sm:$0xff]
      %v502 = vld [vmem:[%s1 + $0x10] sm:$0xff]
      %v503 = vld [vmem:[%s1 + $0x18] sm:$0xff]
      %v504 = vld [vmem:[%s1 + $0x20] sm:$0xff]
      %v505 = vld [vmem:[%s1 + $0x28] sm:$0xff]
      %v506 = vld [vmem:[%s1 + $0x30] sm:$0xff]
      %v507 = vld [vmem:[%s1 + $0x38] sm:$0xff]
      %510 = vrot.lane.b32.xlu0 %v496, 120
      %v511 = vpop.permute.xlu0 %510
      %512 = vrot.lane.b32.xlu0 %v498, 120
      %v513 = vpop.permute.xlu0 %512
      %516 = vrot.lane.b32.xlu0 %v496, 112
      %v517 = vpop.permute.xlu0 %516
      %518 = vrot.lane.b32.xlu0 %v498, 112
      %v519 = vpop.permute.xlu0 %518
      %522 = vrot.lane.b32.xlu0 %v496, 104
      %v523 = vpop.permute.xlu0 %522
      %524 = vrot.lane.b32.xlu0 %v498, 104
      %v525 = vpop.permute.xlu0 %524
      %v528 = vpack.c.bf16 %v498, %v496
      %v529 = vpack.c.bf16 %v513, %v511
      %v530 = vpack.c.bf16 %v519, %v517
      %v531 = vpack.c.bf16 %v525, %v523
      %536 = vrot.lane.b32.xlu0 %v528, 96
      %v537 = vpop.permute.xlu0 %536
      %538 = vrot.lane.b32.xlu0 %v529, 96
      %v539 = vpop.permute.xlu0 %538
      %540 = vrot.lane.b32.xlu0 %v530, 96
      %v541 = vpop.permute.xlu0 %540
      %542 = vrot.lane.b32.xlu0 %v531, 96
      %v543 = vpop.permute.xlu0 %542
      %vm544 = vcmask 64512
      %v546 = vsel %vm544, %v528, 0
      %v549 = vsel %vm544, %v529, 0
      %v552 = vsel %vm544, %v530, 0
      %v555 = vsel %vm544, %v531, 0
      %v558 = vsel %vm544, %v537, 0
      %v561 = vsel %vm544, %v539, 0
      %v564 = vsel %vm544, %v541, 0
      %v567 = vsel %vm544, %v543, 0
      %569 = vmatpush.bf16.xpose.msra.mxu0 0
      %570 = vmatpush.bf16.xpose.msra.mxu0 0
      %571 = vmatpush.bf16.xpose.msra.mxu0 0
      %572 = vmatpush.bf16.xpose.msra.mxu0 0
      %573 = vmatpush.bf16.xpose.msra.mxu0 %v567
      %574 = vmatpush.bf16.xpose.msra.mxu0 %v564
      %575 = vmatpush.bf16.xpose.msra.mxu0 %v561
      %576 = vmatpush.bf16.xpose.msra.mxu0 %v558
      %577 = vmatmul.bf16.gmra.mxu0 %v546
      %v578 = vpop.f32.mrf.mxu0
      %v579 = vadd.f32 0.0, %v578
      %v580 = vpop.f32.mrf.mxu0
      %v581 = vadd.f32 0.0, %v580
      %582 = vmatmul.bf16.gmra.mxu0 %v549
      %v583 = vpop.f32.mrf.mxu0
      %v584 = vadd.f32 0.0, %v583
      %v585 = vpop.f32.mrf.mxu0
      %v586 = vadd.f32 0.0, %v585
      %587 = vmatmul.bf16.gmra.mxu0 %v552
      %v588 = vpop.f32.mrf.mxu0
      %v589 = vadd.f32 0.0, %v588
      %v590 = vpop.f32.mrf.mxu0
      %v591 = vadd.f32 0.0, %v590
      %592 = vmatmul.bf16.gmra.mxu0 %v555
      %v593 = vpop.f32.mrf.mxu0
      %v594 = vadd.f32 0.0, %v593
      %v595 = vpop.f32.mrf.mxu0
      %v596 = vadd.f32 0.0, %v595
      %597 = vdwg.mxu0
      %v598 = vmul.f32 %v579, 0.35355338
      %v599 = vmul.f32 %v581, 0.35355338
      %v600 = vmul.f32 %v584, 0.35355338
      %v601 = vmul.f32 %v586, 0.35355338
      %v602 = vmul.f32 %v589, 0.35355338
      %v603 = vmul.f32 %v591, 0.35355338
      %v604 = vmul.f32 %v594, 0.35355338
      %v605 = vmul.f32 %v596, 0.35355338
      %v606 = vadd.f32 %v598, %v500
      %v607 = vadd.f32 %v599, %v501
      %v608 = vadd.f32 %v600, %v502
      %v609 = vadd.f32 %v601, %v503
      %v610 = vadd.f32 %v602, %v504
      %v611 = vadd.f32 %v603, %v505
      %v612 = vadd.f32 %v604, %v506
      %v613 = vadd.f32 %v605, %v507
      %vm614 = vcmask 523264
      %v615 = vsel %vm614, %v606, -inf
      %616 = vmax.xlane.f32.xlu0 %v615
      %v617 = vpop.xlane.xlu0 %616
      %v618 = vsel %vm614, %v607, -inf
      %619 = vmax.xlane.f32.xlu0 %v618
      %v620 = vpop.xlane.xlu0 %619
      %v621 = vsel %vm614, %v608, -inf
      %622 = vmax.xlane.f32.xlu0 %v621
      %v623 = vpop.xlane.xlu0 %622
      %v624 = vsel %vm614, %v609, -inf
      %625 = vmax.xlane.f32.xlu0 %v624
      %v626 = vpop.xlane.xlu0 %625
      %v627 = vsel %vm614, %v610, -inf
      %628 = vmax.xlane.f32.xlu0 %v627
      %v629 = vpop.xlane.xlu0 %628
      %v630 = vsel %vm614, %v611, -inf
      %631 = vmax.xlane.f32.xlu0 %v630
      %v632 = vpop.xlane.xlu0 %631
      %v633 = vsel %vm614, %v612, -inf
      %634 = vmax.xlane.f32.xlu0 %v633
      %v635 = vpop.xlane.xlu0 %634
      %v636 = vsel %vm614, %v613, -inf
      %637 = vmax.xlane.f32.xlu0 %v636
      %v638 = vpop.xlane.xlu0 %637
      %v639 = vsub.f32 %v606, %v617
      %v640 = vsub.f32 %v607, %v620
      %v641 = vsub.f32 %v608, %v623
      %v642 = vsub.f32 %v609, %v626
      %v643 = vsub.f32 %v610, %v629
      %v644 = vsub.f32 %v611, %v632
      %v645 = vsub.f32 %v612, %v635
      %v646 = vsub.f32 %v613, %v638
      %v647 = vmul.f32 %v639, 1.442695
      %v648 = vpow.pop %v647
      %v649 = vmul.f32 %v640, 1.442695
      %v650 = vpow.pop %v649
      %v651 = vmul.f32 %v641, 1.442695
      %v652 = vpow.pop %v651
      %v653 = vmul.f32 %v642, 1.442695
      %v654 = vpow.pop %v653
      %v655 = vmul.f32 %v643, 1.442695
      %v656 = vpow.pop %v655
      %v657 = vmul.f32 %v644, 1.442695
      %v658 = vpow.pop %v657
      %v659 = vmul.f32 %v645, 1.442695
      %v660 = vpow.pop %v659
      %v661 = vmul.f32 %v646, 1.442695
      %v662 = vpow.pop %v661
      %v663 = vsel %vm614, %v648, 0.0
      %664 = vadd.xlane.f32.xlu0 %v663
      %v665 = vpop.xlane.xlu0 %664
      %v666 = vsel %vm614, %v650, 0.0
      %667 = vadd.xlane.f32.xlu0 %v666
      %v668 = vpop.xlane.xlu0 %667
      %v669 = vsel %vm614, %v652, 0.0
      %670 = vadd.xlane.f32.xlu0 %v669
      %v671 = vpop.xlane.xlu0 %670
      %v672 = vsel %vm614, %v654, 0.0
      %673 = vadd.xlane.f32.xlu0 %v672
      %v674 = vpop.xlane.xlu0 %673
      %v675 = vsel %vm614, %v656, 0.0
      %676 = vadd.xlane.f32.xlu0 %v675
      %v677 = vpop.xlane.xlu0 %676
      %v678 = vsel %vm614, %v658, 0.0
      %679 = vadd.xlane.f32.xlu0 %v678
      %v680 = vpop.xlane.xlu0 %679
      %v681 = vsel %vm614, %v660, 0.0
      %682 = vadd.xlane.f32.xlu0 %v681
      %v683 = vpop.xlane.xlu0 %682
      %v684 = vsel %vm614, %v662, 0.0
      %685 = vadd.xlane.f32.xlu0 %v684
      %v686 = vpop.xlane.xlu0 %685
      %v687 = vrcp.pop %v665
      %v688 = vrcp.pop %v668
      %v689 = vrcp.pop %v671
      %v690 = vrcp.pop %v674
      %v691 = vrcp.pop %v677
      %v692 = vrcp.pop %v680
      %v693 = vrcp.pop %v683
      %v694 = vrcp.pop %v686
      %v695 = vmul.f32 %v648, %v687
      %v696 = vmul.f32 %v650, %v688
      %v697 = vmul.f32 %v652, %v689
      %v698 = vmul.f32 %v654, %v690
      %v699 = vmul.f32 %v656, %v691
      %v700 = vmul.f32 %v658, %v692
      %v701 = vmul.f32 %v660, %v693
      %v702 = vmul.f32 %v662, %v694
      %v703 = vpack.c.bf16 %v696, %v695
      %v704 = vpack.c.bf16 %v698, %v697
      %v705 = vpack.c.bf16 %v700, %v699
      %v706 = vpack.c.bf16 %v702, %v701
      %707 = vrot.lane.b32.xlu0 %v528, 64
      %v708 = vpop.permute.xlu0 %707
      %709 = vrot.lane.b32.xlu0 %v529, 64
      %v710 = vpop.permute.xlu0 %709
      %711 = vrot.lane.b32.xlu0 %v530, 64
      %v712 = vpop.permute.xlu0 %711
      %713 = vrot.lane.b32.xlu0 %v531, 64
      %v714 = vpop.permute.xlu0 %713
      %v720 = vsel %vm614, %v703, 0
      %v723 = vsel %vm614, %v704, 0
      %v726 = vsel %vm614, %v705, 0
      %v729 = vsel %vm614, %v706, 0
      %731 = vmatpush.bf16.msra.mxu0 0
      %732 = vmatpush.bf16.msra.mxu0 0
      %733 = vmatpush.bf16.msra.mxu0 0
      %734 = vmatpush.bf16.msra.mxu0 0
      %735 = vmatpush.bf16.msra.mxu0 %v714
      %736 = vmatpush.bf16.msra.mxu0 %v712
      %737 = vmatpush.bf16.msra.mxu0 %v710
      %738 = vmatpush.bf16.msra.mxu0 %v708
      %739 = vmatmul.bf16.gmra.mxu0 %v720
      %v740 = vpop.f32.mrf.mxu0
      %v741 = vadd.f32 0.0, %v740
      %v742 = vpop.f32.mrf.mxu0
      %v743 = vadd.f32 0.0, %v742
      %744 = vmatmul.bf16.gmra.mxu0 %v723
      %v745 = vpop.f32.mrf.mxu0
      %v746 = vadd.f32 0.0, %v745
      %v747 = vpop.f32.mrf.mxu0
      %v748 = vadd.f32 0.0, %v747
      %749 = vmatmul.bf16.gmra.mxu0 %v726
      %v750 = vpop.f32.mrf.mxu0
      %v751 = vadd.f32 0.0, %v750
      %v752 = vpop.f32.mrf.mxu0
      %v753 = vadd.f32 0.0, %v752
      %754 = vmatmul.bf16.gmra.mxu0 %v729
      %v755 = vpop.f32.mrf.mxu0
      %v756 = vadd.f32 0.0, %v755
      %v757 = vpop.f32.mrf.mxu0
      %v758 = vadd.f32 0.0, %v757
      %759 = vdwg.mxu0
      %762 = vrot.lane.b32.xlu0 %v746, 8
      %v763 = vpop.permute.xlu0 %762
      %764 = vrot.lane.b32.xlu0 %v748, 8
      %v765 = vpop.permute.xlu0 %764
      %770 = vrot.lane.b32.xlu0 %v751, 16
      %v771 = vpop.permute.xlu0 %770
      %772 = vrot.lane.b32.xlu0 %v753, 16
      %v773 = vpop.permute.xlu0 %772
      %778 = vrot.lane.b32.xlu0 %v756, 24
      %v779 = vpop.permute.xlu0 %778
      %780 = vrot.lane.b32.xlu0 %v758, 24
      %v781 = vpop.permute.xlu0 %780
      %v784 = vsel %vm544, %v741, %v763
      %v785 = vsel %vm544, %v743, %v765
      %vm786 = vcmask 130048
      %v787 = vsel %vm786, %v784, %v771
      %v788 = vsel %vm786, %v785, %v773
      %vm789 = vcmask 195584
      %v790 = vsel %vm789, %v787, %v779
      %v791 = vsel %vm789, %v788, %v781
      %v792 = vld [vmem:[%s4] sm:$0xff]
      %v793 = vld [vmem:[%s4 + $0x8] sm:$0xff]
      %v794 = vld [vmem:[%s4 + $0x10] sm:$0xff]
      %v795 = vld [vmem:[%s4 + $0x18] sm:$0xff]
      %v796 = vpack.c.bf16 %v791, %v790
      %v797 = vpack.c.bf16 %v793, %v792
      %v798 = vpack.c.bf16 %v795, %v794
      %v800 = vsel %vm482, %v796, 0
      %802 = vmatpush.bf16.msra.mxu0 0
      %803 = vmatpush.bf16.msra.mxu0 0
      %804 = vmatpush.bf16.msra.mxu0 0
      %805 = vmatpush.bf16.msra.mxu0 0
      %806 = vmatpush.bf16.msra.mxu0 0
      %807 = vmatpush.bf16.msra.mxu0 0
      %808 = vmatpush.bf16.msra.mxu0 %v798
      %809 = vmatpush.bf16.msra.mxu0 %v797
      %810 = vmatmul.bf16.gmra.mxu0 %v800
      %v811 = vpop.f32.mrf.mxu0
      %v812 = vadd.f32 0.0, %v811
      %v813 = vpop.f32.mrf.mxu0
      %v814 = vadd.f32 0.0, %v813
      %815 = vdwg.mxu0
      %v816 = vadd.f32 %v469, %v812
      %v817 = vadd.f32 %v470, %v814
      %v818 = vld [vmem:[%s5] sm:$0x1]
      %v820 = vperm.slane %v818, 0
      %v822 = vadd.f32 %v816, %v820
      %v823 = vadd.f32 %v817, %v820
      %v824 = vld [vmem:[%s6] sm:$0x1]
      %v825 = vld [vmem:[%s7] sm:$0x1]
      %v826 = vsel %vm482, %v822, 0.0
      %827 = vadd.xlane.f32.xlu0 %v826
      %v828 = vpop.xlane.xlu0 %827
      %v829 = vsel %vm482, %v823, 0.0
      %830 = vadd.xlane.f32.xlu0 %v829
      %v831 = vpop.xlane.xlu0 %830
      %v832 = vrcp.pop 32.0
      %v833 = vmul.f32 32.0, %v832
      %v834 = vsub.f32 1.0, %v833
      %v835 = vmul.f32 %v832, %v834
      %v836 = vadd.f32 %v832, %v835
      %vm837 = vweird.f32 %v832
      %v838 = vsel %vm837, %v832, %v836
      %v839 = vmul.f32 %v828, %v838
      %v840 = vmul.f32 %v831, %v838
      %v841 = vsub.f32 %v822, %v839
      %v842 = vsub.f32 %v823, %v840
      %v843 = vmul.f32 %v841, %v841
      %v844 = vmul.f32 %v842, %v842
      %v845 = vsel %vm482, %v843, 0.0
      %846 = vadd.xlane.f32.xlu0 %v845
      %v847 = vpop.xlane.xlu0 %846
      %v848 = vsel %vm482, %v844, 0.0
      %849 = vadd.xlane.f32.xlu0 %v848
      %v850 = vpop.xlane.xlu0 %849
      %v851 = vmul.f32 %v847, %v838
      %v852 = vmul.f32 %v850, %v838
      %v853 = vadd.f32 %v851, 1e-05
      %v854 = vadd.f32 %v852, 1e-05
      %v855 = vrsqrt.pop %v853
      %v856 = vmul.f32 %v855, %v853
      %v857 = vmul.f32 %v856, %v855
      %v858 = vmul.f32 0.5, %v857
      %v859 = vsub.f32 1.5, %v858
      %v860 = vmul.f32 %v855, %v859
      %vm861 = vweird.f32 %v853
      %vm862 = vweird.f32 %v855
      %vm863 = vmor %vm861, %vm862
      %v864 = vsel %vm863, %v855, %v860
      %v865 = vrsqrt.pop %v854
      %v866 = vmul.f32 %v865, %v854
      %v867 = vmul.f32 %v866, %v865
      %v868 = vmul.f32 0.5, %v867
      %v869 = vsub.f32 1.5, %v868
      %v870 = vmul.f32 %v865, %v869
      %vm871 = vweird.f32 %v854
      %vm872 = vweird.f32 %v865
      %vm873 = vmor %vm871, %vm872
      %v874 = vsel %vm873, %v865, %v870
      %v875 = vmul.f32 %v841, %v864
      %v876 = vmul.f32 %v842, %v874
      %v878 = vperm.slane %v824, 0
      %v880 = vmul.f32 %v875, %v878
      %v881 = vmul.f32 %v876, %v878
      %v883 = vperm.slane %v825, 0
      %v885 = vadd.f32 %v880, %v883
      %v886 = vadd.f32 %v881, %v883
      %v887 = vld [vmem:[%s8] sm:$0xff]
      %v888 = vld [vmem:[%s8 + $0x8] sm:$0xff]
      %v889 = vld [vmem:[%s8 + $0x10] sm:$0xff]
      %v890 = vld [vmem:[%s8 + $0x18] sm:$0xff]
      %v891 = vpack.c.bf16 %v886, %v885
      %v892 = vpack.c.bf16 %v888, %v887
      %v893 = vpack.c.bf16 %v890, %v889
      %v894 = vld [vmem:[%s9] sm:$0x1]
      %v896 = vperm.slane %v894, 0
      %v899 = vsel %vm482, %v891, 0
      %901 = vmatpush.bf16.msra.mxu0 0
      %902 = vmatpush.bf16.msra.mxu0 0
      %903 = vmatpush.bf16.msra.mxu0 0
      %904 = vmatpush.bf16.msra.mxu0 0
      %905 = vmatpush.bf16.msra.mxu0 0
      %906 = vmatpush.bf16.msra.mxu0 0
      %907 = vmatpush.bf16.msra.mxu0 %v893
      %908 = vmatpush.bf16.msra.mxu0 %v892
      %909 = vmatmul.bf16.gmra.mxu0 %v899
      %v910 = vpop.f32.mrf.mxu0
      %v911 = vadd.f32 %v896, %v910
      %v912 = vpop.f32.mrf.mxu0
      %v913 = vadd.f32 %v896, %v912
      %914 = vdwg.mxu0
      %v915 = vmul.f32 %v911, 0.5
      %v916 = vmul.f32 %v913, 0.5
      %v917 = vmul.f32 %v911, 0.044715
      %v918 = vmul.f32 %v913, 0.044715
      %v919 = vmul.f32 %v917, %v911
      %v920 = vmul.f32 %v918, %v913
      %v921 = vmul.f32 %v919, %v911
      %v922 = vmul.f32 %v920, %v913
      %v923 = vadd.f32 %v911, %v921
      %v924 = vadd.f32 %v913, %v922
      %v925 = vmul.f32 %v923, 0.7978846
      %v926 = vmul.f32 %v924, 0.7978846
      %v927 = vtanh.pop %v925
      %v928 = vtanh.pop %v926
      %v929 = vadd.f32 %v927, 1.0
      %v930 = vadd.f32 %v928, 1.0
      %v931 = vmul.f32 %v915, %v929
      %v932 = vmul.f32 %v916, %v930
      %v933 = vld [vmem:[%s10] sm:$0xff]
      %v934 = vld [vmem:[%s10 + $0x8] sm:$0xff]
      %v935 = vld [vmem:[%s10 + $0x10] sm:$0xff]
      %v936 = vld [vmem:[%s10 + $0x18] sm:$0xff]
      %v937 = vld [vmem:[%s10 + $0x20] sm:$0xff]
      %v938 = vld [vmem:[%s10 + $0x28] sm:$0xff]
      %v939 = vld [vmem:[%s10 + $0x30] sm:$0xff]
      %v940 = vld [vmem:[%s10 + $0x38] sm:$0xff]
      %v941 = vpack.c.bf16 %v932, %v931
      %v942 = vpack.c.bf16 %v934, %v933
      %v943 = vpack.c.bf16 %v936, %v935
      %v944 = vpack.c.bf16 %v938, %v937
      %v945 = vpack.c.bf16 %v940, %v939
      %v947 = vsel %vm614, %v941, 0
      %949 = vmatpush.bf16.msra.mxu0 0
      %950 = vmatpush.bf16.msra.mxu0 0
      %951 = vmatpush.bf16.msra.mxu0 0
      %952 = vmatpush.bf16.msra.mxu0 0
      %953 = vmatpush.bf16.msra.mxu0 %v945
      %954 = vmatpush.bf16.msra.mxu0 %v944
      %955 = vmatpush.bf16.msra.mxu0 %v943
      %956 = vmatpush.bf16.msra.mxu0 %v942
      %957 = vmatmul.bf16.gmra.mxu0 %v947
      %v958 = vpop.f32.mrf.mxu0
      %v959 = vadd.f32 0.0, %v958
      %v960 = vpop.f32.mrf.mxu0
      %v961 = vadd.f32 0.0, %v960
      %962 = vdwg.mxu0
      %v963 = vadd.f32 %v885, %v959
      %v964 = vadd.f32 %v886, %v961
      %v965 = vld [vmem:[%s11] sm:$0x1]
      %v967 = vperm.slane %v965, 0
      %v969 = vadd.f32 %v963, %v967
      %v970 = vadd.f32 %v964, %v967
      %v971 = vld [vmem:[%s12] sm:$0x1]
      %v972 = vld [vmem:[%s13] sm:$0x1]
      %v973 = vsel %vm482, %v969, 0.0
      %974 = vadd.xlane.f32.xlu0 %v973
      %v975 = vpop.xlane.xlu0 %974
      %v976 = vsel %vm482, %v970, 0.0
      %977 = vadd.xlane.f32.xlu0 %v976
      %v978 = vpop.xlane.xlu0 %977
      %v979 = vmul.f32 %v975, %v838
      %v980 = vmul.f32 %v978, %v838
      %v981 = vsub.f32 %v969, %v979
      %v982 = vsub.f32 %v970, %v980
      %v983 = vmul.f32 %v981, %v981
      %v984 = vmul.f32 %v982, %v982
      %v985 = vsel %vm482, %v983, 0.0
      %986 = vadd.xlane.f32.xlu0 %v985
      %v987 = vpop.xlane.xlu0 %986
      %v988 = vsel %vm482, %v984, 0.0
      %989 = vadd.xlane.f32.xlu0 %v988
      %v990 = vpop.xlane.xlu0 %989
      %v991 = vmul.f32 %v987, %v838
      %v992 = vmul.f32 %v990, %v838
      %v993 = vadd.f32 %v991, 1e-05
      %v994 = vadd.f32 %v992, 1e-05
      %v995 = vrsqrt.pop %v993
      %v996 = vmul.f32 %v995, %v993
      %v997 = vmul.f32 %v996, %v995
      %v998 = vmul.f32 0.5, %v997
      %v999 = vsub.f32 1.5, %v998
      %v1000 = vmul.f32 %v995, %v999
      %vm1001 = vweird.f32 %v993
      %vm1002 = vweird.f32 %v995
      %vm1003 = vmor %vm1001, %vm1002
      %v1004 = vsel %vm1003, %v995, %v1000
      %v1005 = vrsqrt.pop %v994
      %v1006 = vmul.f32 %v1005, %v994
      %v1007 = vmul.f32 %v1006, %v1005
      %v1008 = vmul.f32 0.5, %v1007
      %v1009 = vsub.f32 1.5, %v1008
      %v1010 = vmul.f32 %v1005, %v1009
      %vm1011 = vweird.f32 %v994
      %vm1012 = vweird.f32 %v1005
      %vm1013 = vmor %vm1011, %vm1012
      %v1014 = vsel %vm1013, %v1005, %v1010
      %v1015 = vmul.f32 %v981, %v1004
      %v1016 = vmul.f32 %v982, %v1014
      %v1018 = vperm.slane %v971, 0
      %v1020 = vmul.f32 %v1015, %v1018
      %v1021 = vmul.f32 %v1016, %v1018
      %v1023 = vperm.slane %v972, 0
      %v1025 = vadd.f32 %v1020, %v1023
      %v1026 = vadd.f32 %v1021, %v1023
      %1027 = vst.msk [vmem:[%s467] sm:$0xff] %vm482, %v1025
      %1028 = vst.msk [vmem:[%s467 + $0x8] sm:$0xff] %vm482, %v1026
      %p1029 = scmp.lt.s32.totalorder %s25, 1
      %s1030 = scalar_select %p1029, %s25, 1
      %s1031 = smul.addr %s1030, 2
      %s1032 = smul.addr %s1031, 8
      %s1033 = scalar_lea.vmem %s14, %s1032
      // Predicated region
      $region77: #{forward.10} parent=75 // pred_check
        %p1034 = pneg %p342
      $region78: #{forward.10} parent=75 // pred_check_branch
        %1036 = sbr.rel (%p1034) target = $region80
      $region79: #{forward.10} parent=75 // pred_region
        _
      $region80: #{forward.10} parent=75 // pred_fallthru
        _
    $region76: #{forward.10} parent=5 // pred_fallthru
      _
    %p1037 = scmp.le.s32.totalorder 2, %s20
    // Predicated region
    $region81: #{forward.10} parent=5 // pred_check
      %p1038 = pneg %p1037
    $region82: #{forward.10} parent=5 // pred_check_branch
      %1040 = sbr.rel (%p1038) target = $region84
    $region83: #{forward.10} parent=5 // pred_region
      %s1041 = ssub.s32 %s20, 2
      // Predicated region
      $region85: #{forward.10} parent=83 // pred_check
        %p1042 = pneg %p348
      $region86: #{forward.10} parent=83 // pred_check_branch
        %1044 = sbr.rel (%p1042) target = $region88
      $region87: #{forward.10} parent=83 // pred_region
        %p1045 = scmp.lt.s32.totalorder %s26, 1
        %s1046 = scalar_select %p1045, %s26, 1
        %s1047 = smul.addr %s1046, 2
        %s1048 = smul.addr %s1047, 8
        %s1049 = scalar_lea.vmem %s14, %s1048
      $region88: #{forward.10} parent=83 // pred_fallthru
        _
    $region84: #{forward.10} parent=5 // pred_fallthru
      _
  $region6: #{forward.10} parent=0 // loop_footer
    %s24 = sadd.s32 1, %s20
  $region7: #{forward.10} parent=0 // loop_footer_branch
    %19 = sbr.rel target = $region3
  $region8: #{forward.10} parent=0 // loop_exit
    _

// kernel: forward.17
$region0: #{forward.17}
  #allocation0 [shape = 'u32[]', space=smem, size = 0x4, offset = 0x4, fixed_abs, tag = 'smem constant byte address 0x4 - core index']
  #allocation1 [shape = 'u32[72,128]{1,0:T(1,128)}', space=vmem, size = 0x9000, scoped, tag = 'internal scratch']
  %s0 = inlined_call_operand.vmem [shape: f32[2,16,32], index: 0, kind: input, shape index: {}]
  %s1 = inlined_call_operand.vmem [shape: f32[1,32], index: 1, kind: input, shape index: {}]
  %s2 = inlined_call_operand.hbm [shape: f32[1,32], index: 2, kind: input, shape index: {}]
  %s3 = inlined_call_operand.vmem [shape: f32[32,4], index: 3, kind: input, shape index: {}]
  %s4 = inlined_call_operand.hbm [shape: f32[1,4], index: 4, kind: input, shape index: {}]
  %s5 = inlined_call_operand.vmem [shape: f32[2,16,4], index: 5, kind: output, shape index: {}]
  %s6 = sld [smem:[#allocation0]]
  $region61: #{forward.17} parent=0
    _
  %s8 = ssub.s32 1, %s6
  %s9 = scalar_select 0, %s8, %s6
  $region1: #{forward.17} parent=0
    #allocation2 [shape = 'u8[512]{0}', space=vmem, size = 0x400, scoped, tag = 'input window, operand 2, single buffered']
    #allocation3 [shape = 's32[2]{0}', space=sflag, size = 0x8, scoped, tag = 'scoped memory for forward.17']
    #allocation4 [shape = 'u8[512]{0}', space=vmem, size = 0x400, scoped, tag = 'input window, operand 4, single buffered']
    #allocation5 [shape = 's32[1]{0}', space=sflag, size = 0x4, scoped, tag = 'scoped memory for forward.17']
    %10 = vsyncpa [#allocation3], 0
    %11 = vsyncpa [#allocation5], 0
    loop: start=0, step=1, limit=4
    $region2: #{forward.17} parent=1 // loop_pre_header
      _
    $region3: #{forward.17} parent=1 // loop_header
      %s13 = sphi 0, %s17
      %p14 = scmp.ge.s32.totalorder %s13, 4
      %s23 = sphi 0, %s25
      %s26 = sphi 0, %s23
      %s27 = sphi 0, %s26
      %s43 = sphi 0, %s27
      %s47 = sphi 0, %s47
      %s49 = sphi 0, %s47
      %s50 = sphi 0, %s49
      %s64 = sphi 0, %s50
      %s68 = sphi 0, %s68
      %s70 = sphi 0, %s68
      %s71 = sphi 0, %s70
      %s85 = sphi 0, %s71
      %s89 = sphi 0, %s89
      %s91 = sphi 0, %s89
      %s92 = sphi 0, %s91
      %s106 = sphi 0, %s92
      %s110 = sphi 0, %s110
      %s112 = sphi 0, %s110
      %s113 = sphi 0, %s112
      %s127 = sphi 0, %s113
      %s133 = sphi 0, %s135
      %s136 = sphi 0, %s133
      %s137 = sphi 0, %s136
      %s153 = sphi 0, %s137
    $region4: #{forward.17} parent=1 // loop_header_branch
      %16 = sbr.rel (%p14) target = $region8
    $region5: #{forward.17} parent=1 // loop_body
      %s18 = ssub.s32 %s13, 1
      %s19 = ssub.s32 %s13, 2
      %s20 = sadd.s32 %s13, 1
      %s21 = ssub.s32 %s13, %s20
      %p22 = scmp.eq.s32.totalorder %s21, 0
      %s24 = sadd.s32 %s23, 1
      %s25 = scalar_select %p22, %s23, %s24
      %p28 = pneg %p22
      %p29 = scmp.eq.s32.totalorder %s13, 1
      %p30 = por %p28, %p29
      %p31 = scmp.ne.s32.totalorder %s23, %s26
      %p32 = scmp.eq.s32.totalorder %s13, 0
      %p33 = por %p31, %p32
      %p34 = scmp.ne.s32.totalorder %s23, %s26
      %p35 = scmp.eq.s32.totalorder %s18, 1
      %p36 = por %p34, %p35
      %p37 = scmp.ne.s32.totalorder %s26, %s27
      %p38 = scmp.eq.s32.totalorder %s18, 0
      %p39 = por %p37, %p38
      %p40 = scmp.ne.s32.totalorder %s26, %s27
      %p41 = scmp.eq.s32.totalorder %s19, 1
      %p42 = por %p40, %p41
      %p44 = scmp.ne.s32.totalorder %s27, %s43
      %p45 = scmp.eq.s32.totalorder %s19, 0
      %p46 = por %p44, %p45
      %s48 = sadd.s32 %s47, 1
      %p51 = scmp.eq.s32.totalorder %s13, 1
      %p52 = scmp.ne.s32.totalorder %s47, %s49
      %p53 = scmp.eq.s32.totalorder %s13, 0
      %p54 = por %p52, %p53
      %p55 = scmp.ne.s32.totalorder %s47, %s49
      %p56 = scmp.eq.s32.totalorder %s18, 1
      %p57 = por %p55, %p56
      %p58 = scmp.ne.s32.totalorder %s49, %s50
      %p59 = scmp.eq.s32.totalorder %s18, 0
      %p60 = por %p58, %p59
      %p61 = scmp.ne.s32.totalorder %s49, %s50
      %p62 = scmp.eq.s32.totalorder %s19, 1
      %p63 = por %p61, %p62
      %p65 = scmp.ne.s32.totalorder %s50, %s64
      %p66 = scmp.eq.s32.totalorder %s19, 0
      %p67 = por %p65, %p66
      %s69 = sadd.s32 %s68, 1
      %p72 = scmp.eq.s32.totalorder %s13, 1
      %p73 = scmp.ne.s32.totalorder %s68, %s70
      %p74 = scmp.eq.s32.totalorder %s13, 0
      %p75 = por %p73, %p74
      %p76 = scmp.ne.s32.totalorder %s68, %s70
      %p77 = scmp.eq.s32.totalorder %s18, 1
      %p78 = por %p76, %p77
      %p79 = scmp.ne.s32.totalorder %s70, %s71
      %p80 = scmp.eq.s32.totalorder %s18, 0
      %p81 = por %p79, %p80
      %p82 = scmp.ne.s32.totalorder %s70, %s71
      %p83 = scmp.eq.s32.totalorder %s19, 1
      %p84 = por %p82, %p83
      %p86 = scmp.ne.s32.totalorder %s71, %s85
      %p87 = scmp.eq.s32.totalorder %s19, 0
      %p88 = por %p86, %p87
      %s90 = sadd.s32 %s89, 1
      %p93 = scmp.eq.s32.totalorder %s13, 1
      %p94 = scmp.ne.s32.totalorder %s89, %s91
      %p95 = scmp.eq.s32.totalorder %s13, 0
      %p96 = por %p94, %p95
      %p97 = scmp.ne.s32.totalorder %s89, %s91
      %p98 = scmp.eq.s32.totalorder %s18, 1
      %p99 = por %p97, %p98
      %p100 = scmp.ne.s32.totalorder %s91, %s92
      %p101 = scmp.eq.s32.totalorder %s18, 0
      %p102 = por %p100, %p101
      %p103 = scmp.ne.s32.totalorder %s91, %s92
      %p104 = scmp.eq.s32.totalorder %s19, 1
      %p105 = por %p103, %p104
      %p107 = scmp.ne.s32.totalorder %s92, %s106
      %p108 = scmp.eq.s32.totalorder %s19, 0
      %p109 = por %p107, %p108
      %s111 = sadd.s32 %s110, 1
      %p114 = scmp.eq.s32.totalorder %s13, 1
      %p115 = scmp.ne.s32.totalorder %s110, %s112
      %p116 = scmp.eq.s32.totalorder %s13, 0
      %p117 = por %p115, %p116
      %p118 = scmp.ne.s32.totalorder %s110, %s112
      %p119 = scmp.eq.s32.totalorder %s18, 1
      %p120 = por %p118, %p119
      %p121 = scmp.ne.s32.totalorder %s112, %s113
      %p122 = scmp.eq.s32.totalorder %s18, 0
      %p123 = por %p121, %p122
      %p124 = scmp.ne.s32.totalorder %s112, %s113
      %p125 = scmp.eq.s32.totalorder %s19, 1
      %p126 = por %p124, %p125
      %p128 = scmp.ne.s32.totalorder %s113, %s127
      %p129 = scmp.eq.s32.totalorder %s19, 0
      %p130 = por %p128, %p129
      %s131 = ssub.s32 %s13, %s20
      %p132 = scmp.eq.s32.totalorder %s131, 0
      %s134 = sadd.s32 %s133, 1
      %s135 = scalar_select %p132, %s133, %s134
      %p138 = pneg %p132
      %p139 = scmp.eq.s32.totalorder %s13, 1
      %p140 = por %p138, %p139
      %p141 = scmp.ne.s32.totalorder %s133, %s136
      %p142 = scmp.eq.s32.totalorder %s13, 0
      %p143 = por %p141, %p142
      %p144 = scmp.ne.s32.totalorder %s133, %s136
      %p145 = scmp.eq.s32.totalorder %s18, 1
      %p146 = por %p144, %p145
      %p147 = scmp.ne.s32.totalorder %s136, %s137
      %p148 = scmp.eq.s32.totalorder %s18, 0
      %p149 = por %p147, %p148
      %p150 = scmp.ne.s32.totalorder %s136, %s137
      %p151 = scmp.eq.s32.totalorder %s19, 1
      %p152 = por %p150, %p151
      %p154 = scmp.ne.s32.totalorder %s137, %s153
      %p155 = scmp.eq.s32.totalorder %s19, 0
      %p156 = por %p154, %p155
      %p157 = scmp.le.s32.totalorder 1, %s13
      %p158 = scmp.lt.s32.totalorder %s13, 3
      %p159 = pnand %p157, %p158
      %p160 = pneg %p159
      // Predicated region
      $region9: #{forward.17} parent=5 // pred_check
        _
      $region10: #{forward.17} parent=5 // pred_check_branch
        %162 = sbr.rel (%p159) target = $region12
      $region11: #{forward.17} parent=5 // pred_region
        %s163 = ssub.s32 %s13, 1
        // Predicated region
        $region13: #{forward.17} parent=11 // pred_check
          %p164 = pneg %p60
        $region14: #{forward.17} parent=11 // pred_check_branch
          %166 = sbr.rel (%p164) target = $region16
        $region15: #{forward.17} parent=11 // pred_region
          _
        $region16: #{forward.17} parent=11 // pred_fallthru
          _
        // Predicated region
        $region17: #{forward.17} parent=11 // pred_check
          %p167 = pneg %p81
        $region18: #{forward.17} parent=11 // pred_check_branch
          %169 = sbr.rel (%p167) target = $region20
        $region19: #{forward.17} parent=11 // pred_region
          %171 = vsyncadd [#allocation3], 0
          %s173 = sshll.u32 %s2, 4
          %s174 = int_to_ptr.hbm [resolvable:$true] %s173
          %s175 = sshll.u32 [#allocation2], 4
          %s176 = int_to_ptr.vmem [resolvable:$true] %s175
          %178 = dma.hbm_to_vmem [thread:$0]  %s174, 16, %s176, [#allocation3]
        $region20: #{forward.17} parent=11 // pred_fallthru
          _
        // Predicated region
        $region21: #{forward.17} parent=11 // pred_check
          %p179 = pneg %p102
        $region22: #{forward.17} parent=11 // pred_check_branch
          %181 = sbr.rel (%p179) target = $region24
        $region23: #{forward.17} parent=11 // pred_region
          _
        $region24: #{forward.17} parent=11 // pred_fallthru
          _
        // Predicated region
        $region25: #{forward.17} parent=11 // pred_check
          %p182 = pneg %p123
        $region26: #{forward.17} parent=11 // pred_check_branch
          %184 = sbr.rel (%p182) target = $region28
        $region27: #{forward.17} parent=11 // pred_region
          %186 = vsyncadd [#allocation5], 0
          %s188 = sshll.u32 %s4, 4
          %s189 = int_to_ptr.hbm [resolvable:$true] %s188
          %s190 = sshll.u32 [#allocation4], 4
          %s191 = int_to_ptr.vmem [resolvable:$true] %s190
          %193 = dma.hbm_to_vmem [thread:$0]  %s189, 16, %s191, [#allocation5]
        $region28: #{forward.17} parent=11 // pred_fallthru
          _
      $region12: #{forward.17} parent=5 // pred_fallthru
        _
      %p194 = scmp.lt.s32.totalorder %s13, 2
      // Predicated region
      $region29: #{forward.17} parent=5 // pred_check
        %p195 = pneg %p194
      $region30: #{forward.17} parent=5 // pred_check_branch
        %197 = sbr.rel (%p195) target = $region32
      $region31: #{forward.17} parent=5 // pred_region
        // Predicated region
        $region33: #{forward.17} parent=31 // pred_check
          %p198 = pneg %p33
        $region34: #{forward.17} parent=31 // pred_check_branch
          %200 = sbr.rel (%p198) target = $region36
        $region35: #{forward.17} parent=31 // pred_region
          %p201 = scmp.lt.s32.totalorder %s13, 1
          %s202 = scalar_select %p201, %s13, 1
          %s203 = smul.addr %s202, 2
          %s204 = smul.addr %s203, 8
          %s205 = scalar_lea.vmem %s0, %s204
        $region36: #{forward.17} parent=31 // pred_fallthru
          _
      $region32: #{forward.17} parent=5 // pred_fallthru
        _
      %p206 = scmp.le.s32.totalorder 1, %s13
      %p207 = scmp.lt.s32.totalorder %s13, 3
      %p208 = pnand %p206, %p207
      %p209 = pneg %p208
      // Predicated region
      $region37: #{forward.17} parent=5 // pred_check
        _
      $region38: #{forward.17} parent=5 // pred_check_branch
        %211 = sbr.rel (%p208) target = $region40
      $region39: #{forward.17} parent=5 // pred_region
        %s212 = ssub.s32 %s13, 1
        // Predicated region
        $region41: #{forward.17} parent=39 // pred_check
          %p213 = pneg %p81
        $region42: #{forward.17} parent=39 // pred_check_branch
          %215 = sbr.rel (%p213) target = $region44
        $region43: #{forward.17} parent=39 // pred_region
          %217 = dma.done [#allocation3], 16
        $region44: #{forward.17} parent=39 // pred_fallthru
          _
        // Predicated region
        $region45: #{forward.17} parent=39 // pred_check
          %p218 = pneg %p123
        $region46: #{forward.17} parent=39 // pred_check_branch
          %220 = sbr.rel (%p218) target = $region48
        $region47: #{forward.17} parent=39 // pred_region
          %222 = dma.done [#allocation5], 16
        $region48: #{forward.17} parent=39 // pred_fallthru
          _
        %p223 = scmp.lt.s32.totalorder %s18, 1
        %s224 = scalar_select %p223, %s18, 1
        %s225 = smul.addr %s224, 2
        %s226 = smul.addr %s225, 8
        %s227 = scalar_lea.vmem %s0, %s226
        %p228 = pneg %p39
        %p229 = pneg %p36
        %p230 = pneg %p60
        %p231 = pneg %p57
        %p232 = pneg %p81
        %p233 = pneg %p78
        %p234 = pneg %p102
        %p235 = pneg %p99
        %p236 = pneg %p123
        %p237 = pneg %p120
        %p238 = pneg %p149
        %p239 = pneg %p146
        %p240 = scmp.lt.s32.totalorder %s18, 1
        %s241 = scalar_select %p240, %s18, 1
        %s242 = smul.addr %s241, 2
        %s243 = smul.addr %s242, 8
        %s244 = scalar_lea.vmem %s5, %s243
        %p245 = scmp.lt.s32.totalorder %s18, 1
        %s246 = scalar_select %p245, %s18, 1
        %s247 = smul.addr %s246, 2
        %s248 = smul.addr %s247, 8
        %s249 = scalar_lea.vmem %s0, %s248
        %p250 = scmp.lt.s32.totalorder %s18, 1
        %s251 = scalar_select %p250, %s18, 1
        %s252 = smul.addr %s251, 2
        %s253 = smul.addr %s252, 8
        %s254 = scalar_lea.vmem %s5, %s253
        %v256 = vld [vmem:[%s249] sm:$0xff]
        %v257 = vld [vmem:[%s249 + $0x8] sm:$0xff]
        %v258 = vld [vmem:[%s1] sm:$0x1]
        %v259 = vld [vmem:[#allocation2] sm:$0x1]
        %vm260 = vcmask 261120
        %v261 = vsel %vm260, %v256, 0.0
        %262 = vadd.xlane.f32.xlu0 %v261
        %v263 = vpop.xlane.xlu0 %262
        %v264 = vsel %vm260, %v257, 0.0
        %265 = vadd.xlane.f32.xlu0 %v264
        %v266 = vpop.xlane.xlu0 %265
        %v267 = vrcp.pop 32.0
        %v268 = vmul.f32 32.0, %v267
        %v269 = vsub.f32 1.0, %v268
        %v270 = vmul.f32 %v267, %v269
        %v271 = vadd.f32 %v267, %v270
        %vm272 = vweird.f32 %v267
        %v273 = vsel %vm272, %v267, %v271
        %v274 = vmul.f32 %v263, %v273
        %v275 = vmul.f32 %v266, %v273
        %v276 = vsub.f32 %v256, %v274
        %v277 = vsub.f32 %v257, %v275
        %v278 = vmul.f32 %v276, %v276
        %v279 = vmul.f32 %v277, %v277
        %v280 = vsel %vm260, %v278, 0.0
        %281 = vadd.xlane.f32.xlu0 %v280
        %v282 = vpop.xlane.xlu0 %281
        %v283 = vsel %vm260, %v279, 0.0
        %284 = vadd.xlane.f32.xlu0 %v283
        %v285 = vpop.xlane.xlu0 %284
        %v286 = vmul.f32 %v282, %v273
        %v287 = vmul.f32 %v285, %v273
        %v288 = vadd.f32 %v286, 1e-05
        %v289 = vadd.f32 %v287, 1e-05
        %v290 = vrsqrt.pop %v288
        %v291 = vmul.f32 %v290, %v288
        %v292 = vmul.f32 %v291, %v290
        %v293 = vmul.f32 0.5, %v292
        %v294 = vsub.f32 1.5, %v293
        %v295 = vmul.f32 %v290, %v294
        %vm296 = vweird.f32 %v288
        %vm297 = vweird.f32 %v290
        %vm298 = vmor %vm296, %vm297
        %v299 = vsel %vm298, %v290, %v295
        %v300 = vrsqrt.pop %v289
        %v301 = vmul.f32 %v300, %v289
        %v302 = vmul.f32 %v301, %v300
        %v303 = vmul.f32 0.5, %v302
        %v304 = vsub.f32 1.5, %v303
        %v305 = vmul.f32 %v300, %v304
        %vm306 = vweird.f32 %v289
        %vm307 = vweird.f32 %v300
        %vm308 = vmor %vm306, %vm307
        %v309 = vsel %vm308, %v300, %v305
        %v310 = vmul.f32 %v276, %v299
        %v311 = vmul.f32 %v277, %v309
        %v313 = vperm.slane %v258, 0
        %v315 = vmul.f32 %v310, %v313
        %v316 = vmul.f32 %v311, %v313
        %v318 = vperm.slane %v259, 0
        %v320 = vadd.f32 %v315, %v318
        %v321 = vadd.f32 %v316, %v318
        %v322 = vld [vmem:[%s3] sm:$0xff]
        %v323 = vld [vmem:[%s3 + $0x8] sm:$0xff]
        %v324 = vld [vmem:[%s3 + $0x10] sm:$0xff]
        %v325 = vld [vmem:[%s3 + $0x18] sm:$0xff]
        %v326 = vpack.c.bf16 %v321, %v320
        %v327 = vpack.c.bf16 %v323, %v322
        %v328 = vpack.c.bf16 %v325, %v324
        %v329 = vld [vmem:[#allocation4] sm:$0x1]
        %v331 = vperm.slane %v329, 0
        %v334 = vsel %vm260, %v326, 0
        %336 = vmatpush.bf16.msra.mxu0 0
        %337 = vmatpush.bf16.msra.mxu0 0
        %338 = vmatpush.bf16.msra.mxu0 0
        %339 = vmatpush.bf16.msra.mxu0 0
        %340 = vmatpush.bf16.msra.mxu0 0
        %341 = vmatpush.bf16.msra.mxu0 0
        %342 = vmatpush.bf16.msra.mxu0 %v328
        %343 = vmatpush.bf16.msra.mxu0 %v327
        %344 = vmatmul.bf16.gmra.mxu0 %v334
        %v345 = vpop.f32.mrf.mxu0
        %v346 = vadd.f32 %v331, %v345
        %v347 = vpop.f32.mrf.mxu0
        %v348 = vadd.f32 %v331, %v347
        %349 = vdwg.mxu0
        %vm350 = vcmask 31744
        %351 = vst.msk [vmem:[%s254] sm:$0xff] %vm350, %v346
        %352 = vst.msk [vmem:[%s254 + $0x8] sm:$0xff] %vm350, %v348
        %p353 = scmp.lt.s32.totalorder %s18, 1
        %s354 = scalar_select %p353, %s18, 1
        %s355 = smul.addr %s354, 2
        %s356 = smul.addr %s355, 8
        %s357 = scalar_lea.vmem %s5, %s356
        // Predicated region
        $region49: #{forward.17} parent=39 // pred_check
          %p358 = pneg %p146
        $region50: #{forward.17} parent=39 // pred_check_branch
          %360 = sbr.rel (%p358) target = $region52
        $region51: #{forward.17} parent=39 // pred_region
          _
        $region52: #{forward.17} parent=39 // pred_fallthru
          _
      $region40: #{forward.17} parent=5 // pred_fallthru
        _
      %p361 = scmp.le.s32.totalorder 2, %s13
      // Predicated region
      $region53: #{forward.17} parent=5 // pred_check
        %p362 = pneg %p361
      $region54: #{forward.17} parent=5 // pred_check_branch
        %364 = sbr.rel (%p362) target = $region56
      $region55: #{forward.17} parent=5 // pred_region
        %s365 = ssub.s32 %s13, 2
        // Predicated region
        $region57: #{forward.17} parent=55 // pred_check
          %p366 = pneg %p152
        $region58: #{forward.17} parent=55 // pred_check_branch
          %368 = sbr.rel (%p366) target = $region60
        $region59: #{forward.17} parent=55 // pred_region
          %p369 = scmp.lt.s32.totalorder %s19, 1
          %s370 = scalar_select %p369, %s19, 1
          %s371 = smul.addr %s370, 2
          %s372 = smul.addr %s371, 8
          %s373 = scalar_lea.vmem %s5, %s372
        $region60: #{forward.17} parent=55 // pred_fallthru
          _
      $region56: #{forward.17} parent=5 // pred_fallthru
        _
    $region6: #{forward.17} parent=1 // loop_footer
      %s17 = sadd.s32 1, %s13
    $region7: #{forward.17} parent=1 // loop_footer_branch
      %12 = sbr.rel target = $region3
    $region8: #{forward.17} parent=1 // loop_exit
      _
    %374 = vsyncpa [#allocation3], 1
    %s375 = scalar_lea.sflag [#allocation3], 1
    %376 = vsyncpa %s375, 1
    %377 = vsyncpa [#allocation5], 1

// kernel: forward.15
$region0: #{forward.15}
  #allocation0 [shape = 'u32[]', space=smem, size = 0x4, offset = 0x4, fixed_abs, tag = 'smem constant byte address 0x4 - core index']
  #allocation1 [shape = 'u32[72,128]{1,0:T(1,128)}', space=vmem, size = 0x9000, scoped, tag = 'internal scratch']
  %s0 = inlined_call_operand.vmem [shape: f32[2,16,32], index: 0, kind: input, shape index: {}]
  %s1 = inlined_call_operand.vmem [shape: f32[2,16,32], index: 1, kind: input, shape index: {}]
  %s2 = inlined_call_operand.vmem [shape: f32[64,64], index: 2, kind: input, shape index: {}]
  %s3 = inlined_call_operand.vmem [shape: f32[64,64], index: 3, kind: input, shape index: {}]
  %s4 = inlined_call_operand.vmem [shape: f32[32,96], index: 4, kind: input, shape index: {}]
  %s5 = inlined_call_operand.vmem [shape: f32[1,96], index: 5, kind: input, shape index: {}]
  %s6 = inlined_call_operand.vmem [shape: f32[32,32], index: 6, kind: input, shape index: {}]
  %s7 = inlined_call_operand.vmem [shape: f32[1,32], index: 7, kind: input, shape index: {}]
  %s8 = inlined_call_operand.vmem [shape: f32[1,32], index: 8, kind: input, shape index: {}]
  %s9 = inlined_call_operand.vmem [shape: f32[1,32], index: 9, kind: input, shape index: {}]
  %s10 = inlined_call_operand.vmem [shape: f32[32,32], index: 10, kind: input, shape index: {}]
  %s11 = inlined_call_operand.vmem [shape: f32[1,32], index: 11, kind: input, shape index: {}]
  %s12 = inlined_call_operand.vmem [shape: f32[32,64], index: 12, kind: input, shape index: {}]
  %s13 = inlined_call_operand.vmem [shape: f32[1,64], index: 13, kind: input, shape index: {}]
  %s14 = inlined_call_operand.vmem [shape: f32[32,32], index: 14, kind: input, shape index: {}]
  %s15 = inlined_call_operand.vmem [shape: f32[1,32], index: 15, kind: input, shape index: {}]
  %s16 = inlined_call_operand.vmem [shape: f32[1,32], index: 16, kind: input, shape index: {}]
  %s17 = inlined_call_operand.vmem [shape: f32[1,32], index: 17, kind: input, shape index: {}]
  %s18 = inlined_call_operand.vmem [shape: f32[32,64], index: 18, kind: input, shape index: {}]
  %s19 = inlined_call_operand.vmem [shape: f32[1,64], index: 19, kind: input, shape index: {}]
  %s20 = inlined_call_operand.vmem [shape: f32[64,32], index: 20, kind: input, shape index: {}]
  %s21 = inlined_call_operand.vmem [shape: f32[1,32], index: 21, kind: input, shape index: {}]
  %s22 = inlined_call_operand.vmem [shape: f32[1,32], index: 22, kind: input, shape index: {}]
  %s23 = inlined_call_operand.vmem [shape: f32[1,32], index: 23, kind: input, shape index: {}]
  %s24 = inlined_call_operand.vmem [shape: f32[2,16,32], index: 24, kind: output, shape index: {}]
  %s25 = sld [smem:[#allocation0]]
  $region129: #{forward.15} parent=0
    _
  %s27 = ssub.s32 1, %s25
  %s28 = scalar_select 0, %s27, %s25
  loop: start=0, step=1, limit=4
  $region2: #{forward.15} parent=0 // loop_pre_header
    _
  $region3: #{forward.15} parent=0 // loop_header
    %s30 = sphi 0, %s34
    %p31 = scmp.ge.s32.totalorder %s30, 4
    %s40 = sphi 0, %s42
    %s43 = sphi 0, %s40
    %s44 = sphi 0, %s43
    %s60 = sphi 0, %s44
    %s66 = sphi 0, %s68
    %s69 = sphi 0, %s66
    %s70 = sphi 0, %s69
    %s86 = sphi 0, %s70
    %s90 = sphi 0, %s90
    %s92 = sphi 0, %s90
    %s93 = sphi 0, %s92
    %s107 = sphi 0, %s93
    %s111 = sphi 0, %s111
    %s113 = sphi 0, %s111
    %s114 = sphi 0, %s113
    %s128 = sphi 0, %s114
    %s132 = sphi 0, %s132
    %s134 = sphi 0, %s132
    %s135 = sphi 0, %s134
    %s149 = sphi 0, %s135
    %s153 = sphi 0, %s153
    %s155 = sphi 0, %s153
    %s156 = sphi 0, %s155
    %s170 = sphi 0, %s156
    %s174 = sphi 0, %s174
    %s176 = sphi 0, %s174
    %s177 = sphi 0, %s176
    %s191 = sphi 0, %s177
    %s195 = sphi 0, %s195
    %s197 = sphi 0, %s195
    %s198 = sphi 0, %s197
    %s212 = sphi 0, %s198
    %s216 = sphi 0, %s216
    %s218 = sphi 0, %s216
    %s219 = sphi 0, %s218
    %s233 = sphi 0, %s219
    %s237 = sphi 0, %s237
    %s239 = sphi 0, %s237
    %s240 = sphi 0, %s239
    %s254 = sphi 0, %s240
    %s258 = sphi 0, %s258
    %s260 = sphi 0, %s258
    %s261 = sphi 0, %s260
    %s275 = sphi 0, %s261
    %s279 = sphi 0, %s279
    %s281 = sphi 0, %s279
    %s282 = sphi 0, %s281
    %s296 = sphi 0, %s282
    %s300 = sphi 0, %s300
    %s302 = sphi 0, %s300
    %s303 = sphi 0, %s302
    %s317 = sphi 0, %s303
    %s321 = sphi 0, %s321
    %s323 = sphi 0, %s321
    %s324 = sphi 0, %s323
    %s338 = sphi 0, %s324
    %s342 = sphi 0, %s342
    %s344 = sphi 0, %s342
    %s345 = sphi 0, %s344
    %s359 = sphi 0, %s345
    %s363 = sphi 0, %s363
    %s365 = sphi 0, %s363
    %s366 = sphi 0, %s365
    %s380 = sphi 0, %s366
    %s384 = sphi 0, %s384
    %s386 = sphi 0, %s384
    %s387 = sphi 0, %s386
    %s401 = sphi 0, %s387
    %s405 = sphi 0, %s405
    %s407 = sphi 0, %s405
    %s408 = sphi 0, %s407
    %s422 = sphi 0, %s408
    %s426 = sphi 0, %s426
    %s428 = sphi 0, %s426
    %s429 = sphi 0, %s428
    %s443 = sphi 0, %s429
    %s447 = sphi 0, %s447
    %s449 = sphi 0, %s447
    %s450 = sphi 0, %s449
    %s464 = sphi 0, %s450
    %s468 = sphi 0, %s468
    %s470 = sphi 0, %s468
    %s471 = sphi 0, %s470
    %s485 = sphi 0, %s471
    %s489 = sphi 0, %s489
    %s491 = sphi 0, %s489
    %s492 = sphi 0, %s491
    %s506 = sphi 0, %s492
    %s510 = sphi 0, %s510
    %s512 = sphi 0, %s510
    %s513 = sphi 0, %s512
    %s527 = sphi 0, %s513
    %s531 = sphi 0, %s531
    %s533 = sphi 0, %s531
    %s534 = sphi 0, %s533
    %s548 = sphi 0, %s534
    %s554 = sphi 0, %s556
    %s557 = sphi 0, %s554
    %s558 = sphi 0, %s557
    %s574 = sphi 0, %s558
  $region4: #{forward.15} parent=0 // loop_header_branch
    %33 = sbr.rel (%p31) target = $region8
  $region5: #{forward.15} parent=0 // loop_body
    %s35 = ssub.s32 %s30, 1
    %s36 = ssub.s32 %s30, 2
    %s37 = sadd.s32 %s30, 1
    %s38 = ssub.s32 %s30, %s37
    %p39 = scmp.eq.s32.totalorder %s38, 0
    %s41 = sadd.s32 %s40, 1
    %s42 = scalar_select %p39, %s40, %s41
    %p45 = pneg %p39
    %p46 = scmp.eq.s32.totalorder %s30, 1
    %p47 = por %p45, %p46
    %p48 = scmp.ne.s32.totalorder %s40, %s43
    %p49 = scmp.eq.s32.totalorder %s30, 0
    %p50 = por %p48, %p49
    %p51 = scmp.ne.s32.totalorder %s40, %s43
    %p52 = scmp.eq.s32.totalorder %s35, 1
    %p53 = por %p51, %p52
    %p54 = scmp.ne.s32.totalorder %s43, %s44
    %p55 = scmp.eq.s32.totalorder %s35, 0
    %p56 = por %p54, %p55
    %p57 = scmp.ne.s32.totalorder %s43, %s44
    %p58 = scmp.eq.s32.totalorder %s36, 1
    %p59 = por %p57, %p58
    %p61 = scmp.ne.s32.totalorder %s44, %s60
    %p62 = scmp.eq.s32.totalorder %s36, 0
    %p63 = por %p61, %p62
    %s64 = ssub.s32 %s30, %s37
    %p65 = scmp.eq.s32.totalorder %s64, 0
    %s67 = sadd.s32 %s66, 1
    %s68 = scalar_select %p65, %s66, %s67
    %p71 = pneg %p65
    %p72 = scmp.eq.s32.totalorder %s30, 1
    %p73 = por %p71, %p72
    %p74 = scmp.ne.s32.totalorder %s66, %s69
    %p75 = scmp.eq.s32.totalorder %s30, 0
    %p76 = por %p74, %p75
    %p77 = scmp.ne.s32.totalorder %s66, %s69
    %p78 = scmp.eq.s32.totalorder %s35, 1
    %p79 = por %p77, %p78
    %p80 = scmp.ne.s32.totalorder %s69, %s70
    %p81 = scmp.eq.s32.totalorder %s35, 0
    %p82 = por %p80, %p81
    %p83 = scmp.ne.s32.totalorder %s69, %s70
    %p84 = scmp.eq.s32.totalorder %s36, 1
    %p85 = por %p83, %p84
    %p87 = scmp.ne.s32.totalorder %s70, %s86
    %p88 = scmp.eq.s32.totalorder %s36, 0
    %p89 = por %p87, %p88
    %s91 = sadd.s32 %s90, 1
    %p94 = scmp.eq.s32.totalorder %s30, 1
    %p95 = scmp.ne.s32.totalorder %s90, %s92
    %p96 = scmp.eq.s32.totalorder %s30, 0
    %p97 = por %p95, %p96
    %p98 = scmp.ne.s32.totalorder %s90, %s92
    %p99 = scmp.eq.s32.totalorder %s35, 1
    %p100 = por %p98, %p99
    %p101 = scmp.ne.s32.totalorder %s92, %s93
    %p102 = scmp.eq.s32.totalorder %s35, 0
    %p103 = por %p101, %p102
    %p104 = scmp.ne.s32.totalorder %s92, %s93
    %p105 = scmp.eq.s32.totalorder %s36, 1
    %p106 = por %p104, %p105
    %p108 = scmp.ne.s32.totalorder %s93, %s107
    %p109 = scmp.eq.s32.totalorder %s36, 0
    %p110 = por %p108, %p109
    %s112 = sadd.s32 %s111, 1
    %p115 = scmp.eq.s32.totalorder %s30, 1
    %p116 = scmp.ne.s32.totalorder %s111, %s113
    %p117 = scmp.eq.s32.totalorder %s30, 0
    %p118 = por %p116, %p117
    %p119 = scmp.ne.s32.totalorder %s111, %s113
    %p120 = scmp.eq.s32.totalorder %s35, 1
    %p121 = por %p119, %p120
    %p122 = scmp.ne.s32.totalorder %s113, %s114
    %p123 = scmp.eq.s32.totalorder %s35, 0
    %p124 = por %p122, %p123
    %p125 = scmp.ne.s32.totalorder %s113, %s114
    %p126 = scmp.eq.s32.totalorder %s36, 1
    %p127 = por %p125, %p126
    %p129 = scmp.ne.s32.totalorder %s114, %s128
    %p130 = scmp.eq.s32.totalorder %s36, 0
    %p131 = por %p129, %p130
    %s133 = sadd.s32 %s132, 1
    %p136 = scmp.eq.s32.totalorder %s30, 1
    %p137 = scmp.ne.s32.totalorder %s132, %s134
    %p138 = scmp.eq.s32.totalorder %s30, 0
    %p139 = por %p137, %p138
    %p140 = scmp.ne.s32.totalorder %s132, %s134
    %p141 = scmp.eq.s32.totalorder %s35, 1
    %p142 = por %p140, %p141
    %p143 = scmp.ne.s32.totalorder %s134, %s135
    %p144 = scmp.eq.s32.totalorder %s35, 0
    %p145 = por %p143, %p144
    %p146 = scmp.ne.s32.totalorder %s134, %s135
    %p147 = scmp.eq.s32.totalorder %s36, 1
    %p148 = por %p146, %p147
    %p150 = scmp.ne.s32.totalorder %s135, %s149
    %p151 = scmp.eq.s32.totalorder %s36, 0
    %p152 = por %p150, %p151
    %s154 = sadd.s32 %s153, 1
    %p157 = scmp.eq.s32.totalorder %s30, 1
    %p158 = scmp.ne.s32.totalorder %s153, %s155
    %p159 = scmp.eq.s32.totalorder %s30, 0
    %p160 = por %p158, %p159
    %p161 = scmp.ne.s32.totalorder %s153, %s155
    %p162 = scmp.eq.s32.totalorder %s35, 1
    %p163 = por %p161, %p162
    %p164 = scmp.ne.s32.totalorder %s155, %s156
    %p165 = scmp.eq.s32.totalorder %s35, 0
    %p166 = por %p164, %p165
    %p167 = scmp.ne.s32.totalorder %s155, %s156
    %p168 = scmp.eq.s32.totalorder %s36, 1
    %p169 = por %p167, %p168
    %p171 = scmp.ne.s32.totalorder %s156, %s170
    %p172 = scmp.eq.s32.totalorder %s36, 0
    %p173 = por %p171, %p172
    %s175 = sadd.s32 %s174, 1
    %p178 = scmp.eq.s32.totalorder %s30, 1
    %p179 = scmp.ne.s32.totalorder %s174, %s176
    %p180 = scmp.eq.s32.totalorder %s30, 0
    %p181 = por %p179, %p180
    %p182 = scmp.ne.s32.totalorder %s174, %s176
    %p183 = scmp.eq.s32.totalorder %s35, 1
    %p184 = por %p182, %p183
    %p185 = scmp.ne.s32.totalorder %s176, %s177
    %p186 = scmp.eq.s32.totalorder %s35, 0
    %p187 = por %p185, %p186
    %p188 = scmp.ne.s32.totalorder %s176, %s177
    %p189 = scmp.eq.s32.totalorder %s36, 1
    %p190 = por %p188, %p189
    %p192 = scmp.ne.s32.totalorder %s177, %s191
    %p193 = scmp.eq.s32.totalorder %s36, 0
    %p194 = por %p192, %p193
    %s196 = sadd.s32 %s195, 1
    %p199 = scmp.eq.s32.totalorder %s30, 1
    %p200 = scmp.ne.s32.totalorder %s195, %s197
    %p201 = scmp.eq.s32.totalorder %s30, 0
    %p202 = por %p200, %p201
    %p203 = scmp.ne.s32.totalorder %s195, %s197
    %p204 = scmp.eq.s32.totalorder %s35, 1
    %p205 = por %p203, %p204
    %p206 = scmp.ne.s32.totalorder %s197, %s198
    %p207 = scmp.eq.s32.totalorder %s35, 0
    %p208 = por %p206, %p207
    %p209 = scmp.ne.s32.totalorder %s197, %s198
    %p210 = scmp.eq.s32.totalorder %s36, 1
    %p211 = por %p209, %p210
    %p213 = scmp.ne.s32.totalorder %s198, %s212
    %p214 = scmp.eq.s32.totalorder %s36, 0
    %p215 = por %p213, %p214
    %s217 = sadd.s32 %s216, 1
    %p220 = scmp.eq.s32.totalorder %s30, 1
    %p221 = scmp.ne.s32.totalorder %s216, %s218
    %p222 = scmp.eq.s32.totalorder %s30, 0
    %p223 = por %p221, %p222
    %p224 = scmp.ne.s32.totalorder %s216, %s218
    %p225 = scmp.eq.s32.totalorder %s35, 1
    %p226 = por %p224, %p225
    %p227 = scmp.ne.s32.totalorder %s218, %s219
    %p228 = scmp.eq.s32.totalorder %s35, 0
    %p229 = por %p227, %p228
    %p230 = scmp.ne.s32.totalorder %s218, %s219
    %p231 = scmp.eq.s32.totalorder %s36, 1
    %p232 = por %p230, %p231
    %p234 = scmp.ne.s32.totalorder %s219, %s233
    %p235 = scmp.eq.s32.totalorder %s36, 0
    %p236 = por %p234, %p235
    %s238 = sadd.s32 %s237, 1
    %p241 = scmp.eq.s32.totalorder %s30, 1
    %p242 = scmp.ne.s32.totalorder %s237, %s239
    %p243 = scmp.eq.s32.totalorder %s30, 0
    %p244 = por %p242, %p243
    %p245 = scmp.ne.s32.totalorder %s237, %s239
    %p246 = scmp.eq.s32.totalorder %s35, 1
    %p247 = por %p245, %p246
    %p248 = scmp.ne.s32.totalorder %s239, %s240
    %p249 = scmp.eq.s32.totalorder %s35, 0
    %p250 = por %p248, %p249
    %p251 = scmp.ne.s32.totalorder %s239, %s240
    %p252 = scmp.eq.s32.totalorder %s36, 1
    %p253 = por %p251, %p252
    %p255 = scmp.ne.s32.totalorder %s240, %s254
    %p256 = scmp.eq.s32.totalorder %s36, 0
    %p257 = por %p255, %p256
    %s259 = sadd.s32 %s258, 1
    %p262 = scmp.eq.s32.totalorder %s30, 1
    %p263 = scmp.ne.s32.totalorder %s258, %s260
    %p264 = scmp.eq.s32.totalorder %s30, 0
    %p265 = por %p263, %p264
    %p266 = scmp.ne.s32.totalorder %s258, %s260
    %p267 = scmp.eq.s32.totalorder %s35, 1
    %p268 = por %p266, %p267
    %p269 = scmp.ne.s32.totalorder %s260, %s261
    %p270 = scmp.eq.s32.totalorder %s35, 0
    %p271 = por %p269, %p270
    %p272 = scmp.ne.s32.totalorder %s260, %s261
    %p273 = scmp.eq.s32.totalorder %s36, 1
    %p274 = por %p272, %p273
    %p276 = scmp.ne.s32.totalorder %s261, %s275
    %p277 = scmp.eq.s32.totalorder %s36, 0
    %p278 = por %p276, %p277
    %s280 = sadd.s32 %s279, 1
    %p283 = scmp.eq.s32.totalorder %s30, 1
    %p284 = scmp.ne.s32.totalorder %s279, %s281
    %p285 = scmp.eq.s32.totalorder %s30, 0
    %p286 = por %p284, %p285
    %p287 = scmp.ne.s32.totalorder %s279, %s281
    %p288 = scmp.eq.s32.totalorder %s35, 1
    %p289 = por %p287, %p288
    %p290 = scmp.ne.s32.totalorder %s281, %s282
    %p291 = scmp.eq.s32.totalorder %s35, 0
    %p292 = por %p290, %p291
    %p293 = scmp.ne.s32.totalorder %s281, %s282
    %p294 = scmp.eq.s32.totalorder %s36, 1
    %p295 = por %p293, %p294
    %p297 = scmp.ne.s32.totalorder %s282, %s296
    %p298 = scmp.eq.s32.totalorder %s36, 0
    %p299 = por %p297, %p298
    %s301 = sadd.s32 %s300, 1
    %p304 = scmp.eq.s32.totalorder %s30, 1
    %p305 = scmp.ne.s32.totalorder %s300, %s302
    %p306 = scmp.eq.s32.totalorder %s30, 0
    %p307 = por %p305, %p306
    %p308 = scmp.ne.s32.totalorder %s300, %s302
    %p309 = scmp.eq.s32.totalorder %s35, 1
    %p310 = por %p308, %p309
    %p311 = scmp.ne.s32.totalorder %s302, %s303
    %p312 = scmp.eq.s32.totalorder %s35, 0
    %p313 = por %p311, %p312
    %p314 = scmp.ne.s32.totalorder %s302, %s303
    %p315 = scmp.eq.s32.totalorder %s36, 1
    %p316 = por %p314, %p315
    %p318 = scmp.ne.s32.totalorder %s303, %s317
    %p319 = scmp.eq.s32.totalorder %s36, 0
    %p320 = por %p318, %p319
    %s322 = sadd.s32 %s321, 1
    %p325 = scmp.eq.s32.totalorder %s30, 1
    %p326 = scmp.ne.s32.totalorder %s321, %s323
    %p327 = scmp.eq.s32.totalorder %s30, 0
    %p328 = por %p326, %p327
    %p329 = scmp.ne.s32.totalorder %s321, %s323
    %p330 = scmp.eq.s32.totalorder %s35, 1
    %p331 = por %p329, %p330
    %p332 = scmp.ne.s32.totalorder %s323, %s324
    %p333 = scmp.eq.s32.totalorder %s35, 0
    %p334 = por %p332, %p333
    %p335 = scmp.ne.s32.totalorder %s323, %s324
    %p336 = scmp.eq.s32.totalorder %s36, 1
    %p337 = por %p335, %p336
    %p339 = scmp.ne.s32.totalorder %s324, %s338
    %p340 = scmp.eq.s32.totalorder %s36, 0
    %p341 = por %p339, %p340
    %s343 = sadd.s32 %s342, 1
    %p346 = scmp.eq.s32.totalorder %s30, 1
    %p347 = scmp.ne.s32.totalorder %s342, %s344
    %p348 = scmp.eq.s32.totalorder %s30, 0
    %p349 = por %p347, %p348
    %p350 = scmp.ne.s32.totalorder %s342, %s344
    %p351 = scmp.eq.s32.totalorder %s35, 1
    %p352 = por %p350, %p351
    %p353 = scmp.ne.s32.totalorder %s344, %s345
    %p354 = scmp.eq.s32.totalorder %s35, 0
    %p355 = por %p353, %p354
    %p356 = scmp.ne.s32.totalorder %s344, %s345
    %p357 = scmp.eq.s32.totalorder %s36, 1
    %p358 = por %p356, %p357
    %p360 = scmp.ne.s32.totalorder %s345, %s359
    %p361 = scmp.eq.s32.totalorder %s36, 0
    %p362 = por %p360, %p361
    %s364 = sadd.s32 %s363, 1
    %p367 = scmp.eq.s32.totalorder %s30, 1
    %p368 = scmp.ne.s32.totalorder %s363, %s365
    %p369 = scmp.eq.s32.totalorder %s30, 0
    %p370 = por %p368, %p369
    %p371 = scmp.ne.s32.totalorder %s363, %s365
    %p372 = scmp.eq.s32.totalorder %s35, 1
    %p373 = por %p371, %p372
    %p374 = scmp.ne.s32.totalorder %s365, %s366
    %p375 = scmp.eq.s32.totalorder %s35, 0
    %p376 = por %p374, %p375
    %p377 = scmp.ne.s32.totalorder %s365, %s366
    %p378 = scmp.eq.s32.totalorder %s36, 1
    %p379 = por %p377, %p378
    %p381 = scmp.ne.s32.totalorder %s366, %s380
    %p382 = scmp.eq.s32.totalorder %s36, 0
    %p383 = por %p381, %p382
    %s385 = sadd.s32 %s384, 1
    %p388 = scmp.eq.s32.totalorder %s30, 1
    %p389 = scmp.ne.s32.totalorder %s384, %s386
    %p390 = scmp.eq.s32.totalorder %s30, 0
    %p391 = por %p389, %p390
    %p392 = scmp.ne.s32.totalorder %s384, %s386
    %p393 = scmp.eq.s32.totalorder %s35, 1
    %p394 = por %p392, %p393
    %p395 = scmp.ne.s32.totalorder %s386, %s387
    %p396 = scmp.eq.s32.totalorder %s35, 0
    %p397 = por %p395, %p396
    %p398 = scmp.ne.s32.totalorder %s386, %s387
    %p399 = scmp.eq.s32.totalorder %s36, 1
    %p400 = por %p398, %p399
    %p402 = scmp.ne.s32.totalorder %s387, %s401
    %p403 = scmp.eq.s32.totalorder %s36, 0
    %p404 = por %p402, %p403
    %s406 = sadd.s32 %s405, 1
    %p409 = scmp.eq.s32.totalorder %s30, 1
    %p410 = scmp.ne.s32.totalorder %s405, %s407
    %p411 = scmp.eq.s32.totalorder %s30, 0
    %p412 = por %p410, %p411
    %p413 = scmp.ne.s32.totalorder %s405, %s407
    %p414 = scmp.eq.s32.totalorder %s35, 1
    %p415 = por %p413, %p414
    %p416 = scmp.ne.s32.totalorder %s407, %s408
    %p417 = scmp.eq.s32.totalorder %s35, 0
    %p418 = por %p416, %p417
    %p419 = scmp.ne.s32.totalorder %s407, %s408
    %p420 = scmp.eq.s32.totalorder %s36, 1
    %p421 = por %p419, %p420
    %p423 = scmp.ne.s32.totalorder %s408, %s422
    %p424 = scmp.eq.s32.totalorder %s36, 0
    %p425 = por %p423, %p424
    %s427 = sadd.s32 %s426, 1
    %p430 = scmp.eq.s32.totalorder %s30, 1
    %p431 = scmp.ne.s32.totalorder %s426, %s428
    %p432 = scmp.eq.s32.totalorder %s30, 0
    %p433 = por %p431, %p432
    %p434 = scmp.ne.s32.totalorder %s426, %s428
    %p435 = scmp.eq.s32.totalorder %s35, 1
    %p436 = por %p434, %p435
    %p437 = scmp.ne.s32.totalorder %s428, %s429
    %p438 = scmp.eq.s32.totalorder %s35, 0
    %p439 = por %p437, %p438
    %p440 = scmp.ne.s32.totalorder %s428, %s429
    %p441 = scmp.eq.s32.totalorder %s36, 1
    %p442 = por %p440, %p441
    %p444 = scmp.ne.s32.totalorder %s429, %s443
    %p445 = scmp.eq.s32.totalorder %s36, 0
    %p446 = por %p444, %p445
    %s448 = sadd.s32 %s447, 1
    %p451 = scmp.eq.s32.totalorder %s30, 1
    %p452 = scmp.ne.s32.totalorder %s447, %s449
    %p453 = scmp.eq.s32.totalorder %s30, 0
    %p454 = por %p452, %p453
    %p455 = scmp.ne.s32.totalorder %s447, %s449
    %p456 = scmp.eq.s32.totalorder %s35, 1
    %p457 = por %p455, %p456
    %p458 = scmp.ne.s32.totalorder %s449, %s450
    %p459 = scmp.eq.s32.totalorder %s35, 0
    %p460 = por %p458, %p459
    %p461 = scmp.ne.s32.totalorder %s449, %s450
    %p462 = scmp.eq.s32.totalorder %s36, 1
    %p463 = por %p461, %p462
    %p465 = scmp.ne.s32.totalorder %s450, %s464
    %p466 = scmp.eq.s32.totalorder %s36, 0
    %p467 = por %p465, %p466
    %s469 = sadd.s32 %s468, 1
    %p472 = scmp.eq.s32.totalorder %s30, 1
    %p473 = scmp.ne.s32.totalorder %s468, %s470
    %p474 = scmp.eq.s32.totalorder %s30, 0
    %p475 = por %p473, %p474
    %p476 = scmp.ne.s32.totalorder %s468, %s470
    %p477 = scmp.eq.s32.totalorder %s35, 1
    %p478 = por %p476, %p477
    %p479 = scmp.ne.s32.totalorder %s470, %s471
    %p480 = scmp.eq.s32.totalorder %s35, 0
    %p481 = por %p479, %p480
    %p482 = scmp.ne.s32.totalorder %s470, %s471
    %p483 = scmp.eq.s32.totalorder %s36, 1
    %p484 = por %p482, %p483
    %p486 = scmp.ne.s32.totalorder %s471, %s485
    %p487 = scmp.eq.s32.totalorder %s36, 0
    %p488 = por %p486, %p487
    %s490 = sadd.s32 %s489, 1
    %p493 = scmp.eq.s32.totalorder %s30, 1
    %p494 = scmp.ne.s32.totalorder %s489, %s491
    %p495 = scmp.eq.s32.totalorder %s30, 0
    %p496 = por %p494, %p495
    %p497 = scmp.ne.s32.totalorder %s489, %s491
    %p498 = scmp.eq.s32.totalorder %s35, 1
    %p499 = por %p497, %p498
    %p500 = scmp.ne.s32.totalorder %s491, %s492
    %p501 = scmp.eq.s32.totalorder %s35, 0
    %p502 = por %p500, %p501
    %p503 = scmp.ne.s32.totalorder %s491, %s492
    %p504 = scmp.eq.s32.totalorder %s36, 1
    %p505 = por %p503, %p504
    %p507 = scmp.ne.s32.totalorder %s492, %s506
    %p508 = scmp.eq.s32.totalorder %s36, 0
    %p509 = por %p507, %p508
    %s511 = sadd.s32 %s510, 1
    %p514 = scmp.eq.s32.totalorder %s30, 1
    %p515 = scmp.ne.s32.totalorder %s510, %s512
    %p516 = scmp.eq.s32.totalorder %s30, 0
    %p517 = por %p515, %p516
    %p518 = scmp.ne.s32.totalorder %s510, %s512
    %p519 = scmp.eq.s32.totalorder %s35, 1
    %p520 = por %p518, %p519
    %p521 = scmp.ne.s32.totalorder %s512, %s513
    %p522 = scmp.eq.s32.totalorder %s35, 0
    %p523 = por %p521, %p522
    %p524 = scmp.ne.s32.totalorder %s512, %s513
    %p525 = scmp.eq.s32.totalorder %s36, 1
    %p526 = por %p524, %p525
    %p528 = scmp.ne.s32.totalorder %s513, %s527
    %p529 = scmp.eq.s32.totalorder %s36, 0
    %p530 = por %p528, %p529
    %s532 = sadd.s32 %s531, 1
    %p535 = scmp.eq.s32.totalorder %s30, 1
    %p536 = scmp.ne.s32.totalorder %s531, %s533
    %p537 = scmp.eq.s32.totalorder %s30, 0
    %p538 = por %p536, %p537
    %p539 = scmp.ne.s32.totalorder %s531, %s533
    %p540 = scmp.eq.s32.totalorder %s35, 1
    %p541 = por %p539, %p540
    %p542 = scmp.ne.s32.totalorder %s533, %s534
    %p543 = scmp.eq.s32.totalorder %s35, 0
    %p544 = por %p542, %p543
    %p545 = scmp.ne.s32.totalorder %s533, %s534
    %p546 = scmp.eq.s32.totalorder %s36, 1
    %p547 = por %p545, %p546
    %p549 = scmp.ne.s32.totalorder %s534, %s548
    %p550 = scmp.eq.s32.totalorder %s36, 0
    %p551 = por %p549, %p550
    %s552 = ssub.s32 %s30, %s37
    %p553 = scmp.eq.s32.totalorder %s552, 0
    %s555 = sadd.s32 %s554, 1
    %s556 = scalar_select %p553, %s554, %s555
    %p559 = pneg %p553
    %p560 = scmp.eq.s32.totalorder %s30, 1
    %p561 = por %p559, %p560
    %p562 = scmp.ne.s32.totalorder %s554, %s557
    %p563 = scmp.eq.s32.totalorder %s30, 0
    %p564 = por %p562, %p563
    %p565 = scmp.ne.s32.totalorder %s554, %s557
    %p566 = scmp.eq.s32.totalorder %s35, 1
    %p567 = por %p565, %p566
    %p568 = scmp.ne.s32.totalorder %s557, %s558
    %p569 = scmp.eq.s32.totalorder %s35, 0
    %p570 = por %p568, %p569
    %p571 = scmp.ne.s32.totalorder %s557, %s558
    %p572 = scmp.eq.s32.totalorder %s36, 1
    %p573 = por %p571, %p572
    %p575 = scmp.ne.s32.totalorder %s558, %s574
    %p576 = scmp.eq.s32.totalorder %s36, 0
    %p577 = por %p575, %p576
    %p578 = scmp.le.s32.totalorder 1, %s30
    %p579 = scmp.lt.s32.totalorder %s30, 3
    %p580 = pnand %p578, %p579
    %p581 = pneg %p580
    // Predicated region
    $region9: #{forward.15} parent=5 // pred_check
      _
    $region10: #{forward.15} parent=5 // pred_check_branch
      %583 = sbr.rel (%p580) target = $region12
    $region11: #{forward.15} parent=5 // pred_region
      %s584 = ssub.s32 %s30, 1
      // Predicated region
      $region13: #{forward.15} parent=11 // pred_check
        %p585 = pneg %p103
      $region14: #{forward.15} parent=11 // pred_check_branch
        %587 = sbr.rel (%p585) target = $region16
      $region15: #{forward.15} parent=11 // pred_region
        _
      $region16: #{forward.15} parent=11 // pred_fallthru
        _
      // Predicated region
      $region17: #{forward.15} parent=11 // pred_check
        %p588 = pneg %p124
      $region18: #{forward.15} parent=11 // pred_check_branch
        %590 = sbr.rel (%p588) target = $region20
      $region19: #{forward.15} parent=11 // pred_region
        _
      $region20: #{forward.15} parent=11 // pred_fallthru
        _
      // Predicated region
      $region21: #{forward.15} parent=11 // pred_check
        %p591 = pneg %p145
      $region22: #{forward.15} parent=11 // pred_check_branch
        %593 = sbr.rel (%p591) target = $region24
      $region23: #{forward.15} parent=11 // pred_region
        _
      $region24: #{forward.15} parent=11 // pred_fallthru
        _
      // Predicated region
      $region25: #{forward.15} parent=11 // pred_check
        %p594 = pneg %p166
      $region26: #{forward.15} parent=11 // pred_check_branch
        %596 = sbr.rel (%p594) target = $region28
      $region27: #{forward.15} parent=11 // pred_region
        _
      $region28: #{forward.15} parent=11 // pred_fallthru
        _
      // Predicated region
      $region29: #{forward.15} parent=11 // pred_check
        %p597 = pneg %p187
      $region30: #{forward.15} parent=11 // pred_check_branch
        %599 = sbr.rel (%p597) target = $region32
      $region31: #{forward.15} parent=11 // pred_region
        _
      $region32: #{forward.15} parent=11 // pred_fallthru
        _
      // Predicated region
      $region33: #{forward.15} parent=11 // pred_check
        %p600 = pneg %p208
      $region34: #{forward.15} parent=11 // pred_check_branch
        %602 = sbr.rel (%p600) target = $region36
      $region35: #{forward.15} parent=11 // pred_region
        _
      $region36: #{forward.15} parent=11 // pred_fallthru
        _
      // Predicated region
      $region37: #{forward.15} parent=11 // pred_check
        %p603 = pneg %p229
      $region38: #{forward.15} parent=11 // pred_check_branch
        %605 = sbr.rel (%p603) target = $region40
      $region39: #{forward.15} parent=11 // pred_region
        _
      $region40: #{forward.15} parent=11 // pred_fallthru
        _
      // Predicated region
      $region41: #{forward.15} parent=11 // pred_check
        %p606 = pneg %p250
      $region42: #{forward.15} parent=11 // pred_check_branch
        %608 = sbr.rel (%p606) target = $region44
      $region43: #{forward.15} parent=11 // pred_region
        _
      $region44: #{forward.15} parent=11 // pred_fallthru
        _
      // Predicated region
      $region45: #{forward.15} parent=11 // pred_check
        %p609 = pneg %p271
      $region46: #{forward.15} parent=11 // pred_check_branch
        %611 = sbr.rel (%p609) target = $region48
      $region47: #{forward.15} parent=11 // pred_region
        _
      $region48: #{forward.15} parent=11 // pred_fallthru
        _
      // Predicated region
      $region49: #{forward.15} parent=11 // pred_check
        %p612 = pneg %p292
      $region50: #{forward.15} parent=11 // pred_check_branch
        %614 = sbr.rel (%p612) target = $region52
      $region51: #{forward.15} parent=11 // pred_region
        _
      $region52: #{forward.15} parent=11 // pred_fallthru
        _
      // Predicated region
      $region53: #{forward.15} parent=11 // pred_check
        %p615 = pneg %p313
      $region54: #{forward.15} parent=11 // pred_check_branch
        %617 = sbr.rel (%p615) target = $region56
      $region55: #{forward.15} parent=11 // pred_region
        _
      $region56: #{forward.15} parent=11 // pred_fallthru
        _
      // Predicated region
      $region57: #{forward.15} parent=11 // pred_check
        %p618 = pneg %p334
      $region58: #{forward.15} parent=11 // pred_check_branch
        %620 = sbr.rel (%p618) target = $region60
      $region59: #{forward.15} parent=11 // pred_region
        _
      $region60: #{forward.15} parent=11 // pred_fallthru
        _
      // Predicated region
      $region61: #{forward.15} parent=11 // pred_check
        %p621 = pneg %p355
      $region62: #{forward.15} parent=11 // pred_check_branch
        %623 = sbr.rel (%p621) target = $region64
      $region63: #{forward.15} parent=11 // pred_region
        _
      $region64: #{forward.15} parent=11 // pred_fallthru
        _
      // Predicated region
      $region65: #{forward.15} parent=11 // pred_check
        %p624 = pneg %p376
      $region66: #{forward.15} parent=11 // pred_check_branch
        %626 = sbr.rel (%p624) target = $region68
      $region67: #{forward.15} parent=11 // pred_region
        _
      $region68: #{forward.15} parent=11 // pred_fallthru
        _
      // Predicated region
      $region69: #{forward.15} parent=11 // pred_check
        %p627 = pneg %p397
      $region70: #{forward.15} parent=11 // pred_check_branch
        %629 = sbr.rel (%p627) target = $region72
      $region71: #{forward.15} parent=11 // pred_region
        _
      $region72: #{forward.15} parent=11 // pred_fallthru
        _
      // Predicated region
      $region73: #{forward.15} parent=11 // pred_check
        %p630 = pneg %p418
      $region74: #{forward.15} parent=11 // pred_check_branch
        %632 = sbr.rel (%p630) target = $region76
      $region75: #{forward.15} parent=11 // pred_region
        _
      $region76: #{forward.15} parent=11 // pred_fallthru
        _
      // Predicated region
      $region77: #{forward.15} parent=11 // pred_check
        %p633 = pneg %p439
      $region78: #{forward.15} parent=11 // pred_check_branch
        %635 = sbr.rel (%p633) target = $region80
      $region79: #{forward.15} parent=11 // pred_region
        _
      $region80: #{forward.15} parent=11 // pred_fallthru
        _
      // Predicated region
      $region81: #{forward.15} parent=11 // pred_check
        %p636 = pneg %p460
      $region82: #{forward.15} parent=11 // pred_check_branch
        %638 = sbr.rel (%p636) target = $region84
      $region83: #{forward.15} parent=11 // pred_region
        _
      $region84: #{forward.15} parent=11 // pred_fallthru
        _
      // Predicated region
      $region85: #{forward.15} parent=11 // pred_check
        %p639 = pneg %p481
      $region86: #{forward.15} parent=11 // pred_check_branch
        %641 = sbr.rel (%p639) target = $region88
      $region87: #{forward.15} parent=11 // pred_region
        _
      $region88: #{forward.15} parent=11 // pred_fallthru
        _
      // Predicated region
      $region89: #{forward.15} parent=11 // pred_check
        %p642 = pneg %p502
      $region90: #{forward.15} parent=11 // pred_check_branch
        %644 = sbr.rel (%p642) target = $region92
      $region91: #{forward.15} parent=11 // pred_region
        _
      $region92: #{forward.15} parent=11 // pred_fallthru
        _
      // Predicated region
      $region93: #{forward.15} parent=11 // pred_check
        %p645 = pneg %p523
      $region94: #{forward.15} parent=11 // pred_check_branch
        %647 = sbr.rel (%p645) target = $region96
      $region95: #{forward.15} parent=11 // pred_region
        _
      $region96: #{forward.15} parent=11 // pred_fallthru
        _
      // Predicated region
      $region97: #{forward.15} parent=11 // pred_check
        %p648 = pneg %p544
      $region98: #{forward.15} parent=11 // pred_check_branch
        %650 = sbr.rel (%p648) target = $region100
      $region99: #{forward.15} parent=11 // pred_region
        _
      $region100: #{forward.15} parent=11 // pred_fallthru
        _
    $region12: #{forward.15} parent=5 // pred_fallthru
      _
    %p651 = scmp.lt.s32.totalorder %s30, 2
    // Predicated region
    $region101: #{forward.15} parent=5 // pred_check
      %p652 = pneg %p651
    $region102: #{forward.15} parent=5 // pred_check_branch
      %654 = sbr.rel (%p652) target = $region104
    $region103: #{forward.15} parent=5 // pred_region
      // Predicated region
      $region105: #{forward.15} parent=103 // pred_check
        %p655 = pneg %p50
      $region106: #{forward.15} parent=103 // pred_check_branch
        %657 = sbr.rel (%p655) target = $region108
      $region107: #{forward.15} parent=103 // pred_region
        %p658 = scmp.lt.s32.totalorder %s30, 1
        %s659 = scalar_select %p658, %s30, 1
        %s660 = smul.addr %s659, 2
        %s661 = smul.addr %s660, 8
        %s662 = scalar_lea.vmem %s0, %s661
      $region108: #{forward.15} parent=103 // pred_fallthru
        _
      // Predicated region
      $region109: #{forward.15} parent=103 // pred_check
        %p663 = pneg %p76
      $region110: #{forward.15} parent=103 // pred_check_branch
        %665 = sbr.rel (%p663) target = $region112
      $region111: #{forward.15} parent=103 // pred_region
        %p666 = scmp.lt.s32.totalorder %s30, 1
        %s667 = scalar_select %p666, %s30, 1
        %s668 = smul.addr %s667, 2
        %s669 = smul.addr %s668, 8
        %s670 = scalar_lea.vmem %s1, %s669
      $region112: #{forward.15} parent=103 // pred_fallthru
        _
    $region104: #{forward.15} parent=5 // pred_fallthru
      _
    %p671 = scmp.le.s32.totalorder 1, %s30
    %p672 = scmp.lt.s32.totalorder %s30, 3
    %p673 = pnand %p671, %p672
    %p674 = pneg %p673
    // Predicated region
    $region113: #{forward.15} parent=5 // pred_check
      _
    $region114: #{forward.15} parent=5 // pred_check_branch
      %676 = sbr.rel (%p673) target = $region116
    $region115: #{forward.15} parent=5 // pred_region
      %s677 = ssub.s32 %s30, 1
      %p678 = scmp.lt.s32.totalorder %s35, 1
      %s679 = scalar_select %p678, %s35, 1
      %s680 = smul.addr %s679, 2
      %s681 = smul.addr %s680, 8
      %s682 = scalar_lea.vmem %s0, %s681
      %p683 = pneg %p56
      %p684 = pneg %p53
      %p685 = scmp.lt.s32.totalorder %s35, 1
      %s686 = scalar_select %p685, %s35, 1
      %s687 = smul.addr %s686, 2
      %s688 = smul.addr %s687, 8
      %s689 = scalar_lea.vmem %s1, %s688
      %p690 = pneg %p82
      %p691 = pneg %p79
      %p692 = pneg %p103
      %p693 = pneg %p100
      %p694 = pneg %p124
      %p695 = pneg %p121
      %p696 = pneg %p145
      %p697 = pneg %p142
      %p698 = pneg %p166
      %p699 = pneg %p163
      %p700 = pneg %p187
      %p701 = pneg %p184
      %p702 = pneg %p208
      %p703 = pneg %p205
      %p704 = pneg %p229
      %p705 = pneg %p226
      %p706 = pneg %p250
      %p707 = pneg %p247
      %p708 = pneg %p271
      %p709 = pneg %p268
      %p710 = pneg %p292
      %p711 = pneg %p289
      %p712 = pneg %p313
      %p713 = pneg %p310
      %p714 = pneg %p334
      %p715 = pneg %p331
      %p716 = pneg %p355
      %p717 = pneg %p352
      %p718 = pneg %p376
      %p719 = pneg %p373
      %p720 = pneg %p397
      %p721 = pneg %p394
      %p722 = pneg %p418
      %p723 = pneg %p415
      %p724 = pneg %p439
      %p725 = pneg %p436
      %p726 = pneg %p460
      %p727 = pneg %p457
      %p728 = pneg %p481
      %p729 = pneg %p478
      %p730 = pneg %p502
      %p731 = pneg %p499
      %p732 = pneg %p523
      %p733 = pneg %p520
      %p734 = pneg %p544
      %p735 = pneg %p541
      %p736 = pneg %p570
      %p737 = pneg %p567
      %p738 = scmp.lt.s32.totalorder %s35, 1
      %s739 = scalar_select %p738, %s35, 1
      %s740 = smul.addr %s739, 2
      %s741 = smul.addr %s740, 8
      %s742 = scalar_lea.vmem %s24, %s741
      %p743 = scmp.lt.s32.totalorder %s35, 1
      %s744 = scalar_select %p743, %s35, 1
      %s745 = smul.addr %s744, 2
      %s746 = smul.addr %s745, 8
      %s747 = scalar_lea.vmem %s0, %s746
      %p748 = scmp.lt.s32.totalorder %s35, 1
      %s749 = scalar_select %p748, %s35, 1
      %s750 = smul.addr %s749, 2
      %s751 = smul.addr %s750, 8
      %s752 = scalar_lea.vmem %s1, %s751
      %p753 = scmp.lt.s32.totalorder %s35, 1
      %s754 = scalar_select %p753, %s35, 1
      %s755 = smul.addr %s754, 2
      %s756 = smul.addr %s755, 8
      %s757 = scalar_lea.vmem %s24, %s756
      %v759 = vld [vmem:[%s747] sm:$0xff]
      %v760 = vld [vmem:[%s747 + $0x8] sm:$0xff]
      %v761 = vld [vmem:[%s752] sm:$0xff]
      %v762 = vld [vmem:[%s752 + $0x8] sm:$0xff]
      %v763 = vld [vmem:[%s4] sm:$0xff]
      %v764 = vld [vmem:[%s4 + $0x8] sm:$0xff]
      %v765 = vld [vmem:[%s4 + $0x10] sm:$0xff]
      %v766 = vld [vmem:[%s4 + $0x18] sm:$0xff]
      %v767 = vpack.c.bf16 %v760, %v759
      %v768 = vpack.c.bf16 %v764, %v763
      %v769 = vpack.c.bf16 %v766, %v765
      %v770 = vld [vmem:[%s5] sm:$0x1]
      %v772 = vperm.slane %v770, 0
      %vm774 = vcmask 261120
      %v776 = vsel %vm774, %v767, 0
      %778 = vmatpush.bf16.msra.mxu0 0
      %779 = vmatpush.bf16.msra.mxu0 0
      %780 = vmatpush.bf16.msra.mxu0 0
      %781 = vmatpush.bf16.msra.mxu0 0
      %782 = vmatpush.bf16.msra.mxu0 0
      %783 = vmatpush.bf16.msra.mxu0 0
      %784 = vmatpush.bf16.msra.mxu0 %v769
      %785 = vmatpush.bf16.msra.mxu0 %v768
      %786 = vmatmul.bf16.gmra.mxu0 %v776
      %v787 = vpop.f32.mrf.mxu0
      %v788 = vadd.f32 %v772, %v787
      %v789 = vpop.f32.mrf.mxu0
      %v790 = vadd.f32 %v772, %v789
      %791 = vdwg.mxu0
      %v792 = vld [vmem:[%s2] sm:$0xff]
      %v793 = vld [vmem:[%s2 + $0x8] sm:$0xff]
      %v794 = vld [vmem:[%s2 + $0x10] sm:$0xff]
      %v795 = vld [vmem:[%s2 + $0x18] sm:$0xff]
      %v796 = vld [vmem:[%s2 + $0x20] sm:$0xff]
      %v797 = vld [vmem:[%s2 + $0x28] sm:$0xff]
      %v798 = vld [vmem:[%s2 + $0x30] sm:$0xff]
      %v799 = vld [vmem:[%s2 + $0x38] sm:$0xff]
      %802 = vrot.lane.b32.xlu0 %v788, 120
      %v803 = vpop.permute.xlu0 %802
      %804 = vrot.lane.b32.xlu0 %v790, 120
      %v805 = vpop.permute.xlu0 %804
      %808 = vrot.lane.b32.xlu0 %v788, 112
      %v809 = vpop.permute.xlu0 %808
      %810 = vrot.lane.b32.xlu0 %v790, 112
      %v811 = vpop.permute.xlu0 %810
      %814 = vrot.lane.b32.xlu0 %v788, 104
      %v815 = vpop.permute.xlu0 %814
      %816 = vrot.lane.b32.xlu0 %v790, 104
      %v817 = vpop.permute.xlu0 %816
      %v820 = vpack.c.bf16 %v790, %v788
      %v821 = vpack.c.bf16 %v805, %v803
      %v822 = vpack.c.bf16 %v811, %v809
      %v823 = vpack.c.bf16 %v817, %v815
      %828 = vrot.lane.b32.xlu0 %v820, 96
      %v829 = vpop.permute.xlu0 %828
      %830 = vrot.lane.b32.xlu0 %v821, 96
      %v831 = vpop.permute.xlu0 %830
      %832 = vrot.lane.b32.xlu0 %v822, 96
      %v833 = vpop.permute.xlu0 %832
      %834 = vrot.lane.b32.xlu0 %v823, 96
      %v835 = vpop.permute.xlu0 %834
      %vm836 = vcmask 64512
      %v838 = vsel %vm836, %v820, 0
      %v841 = vsel %vm836, %v821, 0
      %v844 = vsel %vm836, %v822, 0
      %v847 = vsel %vm836, %v823, 0
      %v850 = vsel %vm836, %v829, 0
      %v853 = vsel %vm836, %v831, 0
      %v856 = vsel %vm836, %v833, 0
      %v859 = vsel %vm836, %v835, 0
      %861 = vmatpush.bf16.xpose.msra.mxu0 0
      %862 = vmatpush.bf16.xpose.msra.mxu0 0
      %863 = vmatpush.bf16.xpose.msra.mxu0 0
      %864 = vmatpush.bf16.xpose.msra.mxu0 0
      %865 = vmatpush.bf16.xpose.msra.mxu0 %v859
      %866 = vmatpush.bf16.xpose.msra.mxu0 %v856
      %867 = vmatpush.bf16.xpose.msra.mxu0 %v853
      %868 = vmatpush.bf16.xpose.msra.mxu0 %v850
      %869 = vmatmul.bf16.gmra.mxu0 %v838
      %v870 = vpop.f32.mrf.mxu0
      %v871 = vadd.f32 0.0, %v870
      %v872 = vpop.f32.mrf.mxu0
      %v873 = vadd.f32 0.0, %v872
      %874 = vmatmul.bf16.gmra.mxu0 %v841
      %v875 = vpop.f32.mrf.mxu0
      %v876 = vadd.f32 0.0, %v875
      %v877 = vpop.f32.mrf.mxu0
      %v878 = vadd.f32 0.0, %v877
      %879 = vmatmul.bf16.gmra.mxu0 %v844
      %v880 = vpop.f32.mrf.mxu0
      %v881 = vadd.f32 0.0, %v880
      %v882 = vpop.f32.mrf.mxu0
      %v883 = vadd.f32 0.0, %v882
      %884 = vmatmul.bf16.gmra.mxu0 %v847
      %v885 = vpop.f32.mrf.mxu0
      %v886 = vadd.f32 0.0, %v885
      %v887 = vpop.f32.mrf.mxu0
      %v888 = vadd.f32 0.0, %v887
      %889 = vdwg.mxu0
      %v890 = vmul.f32 %v871, 0.35355338
      %v891 = vmul.f32 %v873, 0.35355338
      %v892 = vmul.f32 %v876, 0.35355338
      %v893 = vmul.f32 %v878, 0.35355338
      %v894 = vmul.f32 %v881, 0.35355338
      %v895 = vmul.f32 %v883, 0.35355338
      %v896 = vmul.f32 %v886, 0.35355338
      %v897 = vmul.f32 %v888, 0.35355338
      %v898 = vadd.f32 %v890, %v792
      %v899 = vadd.f32 %v891, %v793
      %v900 = vadd.f32 %v892, %v794
      %v901 = vadd.f32 %v893, %v795
      %v902 = vadd.f32 %v894, %v796
      %v903 = vadd.f32 %v895, %v797
      %v904 = vadd.f32 %v896, %v798
      %v905 = vadd.f32 %v897, %v799
      %vm906 = vcmask 523264
      %v907 = vsel %vm906, %v898, -inf
      %908 = vmax.xlane.f32.xlu0 %v907
      %v909 = vpop.xlane.xlu0 %908
      %v910 = vsel %vm906, %v899, -inf
      %911 = vmax.xlane.f32.xlu0 %v910
      %v912 = vpop.xlane.xlu0 %911
      %v913 = vsel %vm906, %v900, -inf
      %914 = vmax.xlane.f32.xlu0 %v913
      %v915 = vpop.xlane.xlu0 %914
      %v916 = vsel %vm906, %v901, -inf
      %917 = vmax.xlane.f32.xlu0 %v916
      %v918 = vpop.xlane.xlu0 %917
      %v919 = vsel %vm906, %v902, -inf
      %920 = vmax.xlane.f32.xlu0 %v919
      %v921 = vpop.xlane.xlu0 %920
      %v922 = vsel %vm906, %v903, -inf
      %923 = vmax.xlane.f32.xlu0 %v922
      %v924 = vpop.xlane.xlu0 %923
      %v925 = vsel %vm906, %v904, -inf
      %926 = vmax.xlane.f32.xlu0 %v925
      %v927 = vpop.xlane.xlu0 %926
      %v928 = vsel %vm906, %v905, -inf
      %929 = vmax.xlane.f32.xlu0 %v928
      %v930 = vpop.xlane.xlu0 %929
      %v931 = vsub.f32 %v898, %v909
      %v932 = vsub.f32 %v899, %v912
      %v933 = vsub.f32 %v900, %v915
      %v934 = vsub.f32 %v901, %v918
      %v935 = vsub.f32 %v902, %v921
      %v936 = vsub.f32 %v903, %v924
      %v937 = vsub.f32 %v904, %v927
      %v938 = vsub.f32 %v905, %v930
      %v939 = vmul.f32 %v931, 1.442695
      %v940 = vpow.pop %v939
      %v941 = vmul.f32 %v932, 1.442695
      %v942 = vpow.pop %v941
      %v943 = vmul.f32 %v933, 1.442695
      %v944 = vpow.pop %v943
      %v945 = vmul.f32 %v934, 1.442695
      %v946 = vpow.pop %v945
      %v947 = vmul.f32 %v935, 1.442695
      %v948 = vpow.pop %v947
      %v949 = vmul.f32 %v936, 1.442695
      %v950 = vpow.pop %v949
      %v951 = vmul.f32 %v937, 1.442695
      %v952 = vpow.pop %v951
      %v953 = vmul.f32 %v938, 1.442695
      %v954 = vpow.pop %v953
      %v955 = vsel %vm906, %v940, 0.0
      %956 = vadd.xlane.f32.xlu0 %v955
      %v957 = vpop.xlane.xlu0 %956
      %v958 = vsel %vm906, %v942, 0.0
      %959 = vadd.xlane.f32.xlu0 %v958
      %v960 = vpop.xlane.xlu0 %959
      %v961 = vsel %vm906, %v944, 0.0
      %962 = vadd.xlane.f32.xlu0 %v961
      %v963 = vpop.xlane.xlu0 %962
      %v964 = vsel %vm906, %v946, 0.0
      %965 = vadd.xlane.f32.xlu0 %v964
      %v966 = vpop.xlane.xlu0 %965
      %v967 = vsel %vm906, %v948, 0.0
      %968 = vadd.xlane.f32.xlu0 %v967
      %v969 = vpop.xlane.xlu0 %968
      %v970 = vsel %vm906, %v950, 0.0
      %971 = vadd.xlane.f32.xlu0 %v970
      %v972 = vpop.xlane.xlu0 %971
      %v973 = vsel %vm906, %v952, 0.0
      %974 = vadd.xlane.f32.xlu0 %v973
      %v975 = vpop.xlane.xlu0 %974
      %v976 = vsel %vm906, %v954, 0.0
      %977 = vadd.xlane.f32.xlu0 %v976
      %v978 = vpop.xlane.xlu0 %977
      %v979 = vrcp.pop %v957
      %v980 = vrcp.pop %v960
      %v981 = vrcp.pop %v963
      %v982 = vrcp.pop %v966
      %v983 = vrcp.pop %v969
      %v984 = vrcp.pop %v972
      %v985 = vrcp.pop %v975
      %v986 = vrcp.pop %v978
      %v987 = vmul.f32 %v940, %v979
      %v988 = vmul.f32 %v942, %v980
      %v989 = vmul.f32 %v944, %v981
      %v990 = vmul.f32 %v946, %v982
      %v991 = vmul.f32 %v948, %v983
      %v992 = vmul.f32 %v950, %v984
      %v993 = vmul.f32 %v952, %v985
      %v994 = vmul.f32 %v954, %v986
      %v995 = vpack.c.bf16 %v988, %v987
      %v996 = vpack.c.bf16 %v990, %v989
      %v997 = vpack.c.bf16 %v992, %v991
      %v998 = vpack.c.bf16 %v994, %v993
      %999 = vrot.lane.b32.xlu0 %v820, 64
      %v1000 = vpop.permute.xlu0 %999
      %1001 = vrot.lane.b32.xlu0 %v821, 64
      %v1002 = vpop.permute.xlu0 %1001
      %1003 = vrot.lane.b32.xlu0 %v822, 64
      %v1004 = vpop.permute.xlu0 %1003
      %1005 = vrot.lane.b32.xlu0 %v823, 64
      %v1006 = vpop.permute.xlu0 %1005
      %v1012 = vsel %vm906, %v995, 0
      %v1015 = vsel %vm906, %v996, 0
      %v1018 = vsel %vm906, %v997, 0
      %v1021 = vsel %vm906, %v998, 0
      %1023 = vmatpush.bf16.msra.mxu0 0
      %1024 = vmatpush.bf16.msra.mxu0 0
      %1025 = vmatpush.bf16.msra.mxu0 0
      %1026 = vmatpush.bf16.msra.mxu0 0
      %1027 = vmatpush.bf16.msra.mxu0 %v1006
      %1028 = vmatpush.bf16.msra.mxu0 %v1004
      %1029 = vmatpush.bf16.msra.mxu0 %v1002
      %1030 = vmatpush.bf16.msra.mxu0 %v1000
      %1031 = vmatmul.bf16.gmra.mxu0 %v1012
      %v1032 = vpop.f32.mrf.mxu0
      %v1033 = vadd.f32 0.0, %v1032
      %v1034 = vpop.f32.mrf.mxu0
      %v1035 = vadd.f32 0.0, %v1034
      %1036 = vmatmul.bf16.gmra.mxu0 %v1015
      %v1037 = vpop.f32.mrf.mxu0
      %v1038 = vadd.f32 0.0, %v1037
      %v1039 = vpop.f32.mrf.mxu0
      %v1040 = vadd.f32 0.0, %v1039
      %1041 = vmatmul.bf16.gmra.mxu0 %v1018
      %v1042 = vpop.f32.mrf.mxu0
      %v1043 = vadd.f32 0.0, %v1042
      %v1044 = vpop.f32.mrf.mxu0
      %v1045 = vadd.f32 0.0, %v1044
      %1046 = vmatmul.bf16.gmra.mxu0 %v1021
      %v1047 = vpop.f32.mrf.mxu0
      %v1048 = vadd.f32 0.0, %v1047
      %v1049 = vpop.f32.mrf.mxu0
      %v1050 = vadd.f32 0.0, %v1049
      %1051 = vdwg.mxu0
      %v1052 = vlaneseq
      %v1053 = vshrl.u32 %v1052, 7
      %v1054 = vadd.s32 %v1053, 8
      %v1055 = vlaneseq
      %v1056 = vand.u32 %v1055, 127
      %v1057 = vmul.u32 %v1053, 4
      %v1058 = vmul.u32 %v1054, 4
      %vm1059 = vcmp.eq.s32.totalorder %v1056, %v1057
      %vm1060 = vcmp.eq.s32.totalorder %v1056, %v1058
      %v1061 = vsel %vm1059, 1.0, 0.0
      %v1062 = vsel %vm1060, 1.0, 0.0
      %v1064 = vsel %vm906, %v1061, 0
      %v1067 = vsel %vm906, %v1062, 0
      %1069 = vmatpush.msra.mxu0 0.0
      %1070 = vmatpush.msra.mxu0 0.0
      %1071 = vmatpush.msra.mxu0 0.0
      %1072 = vmatpush.msra.mxu0 0.0
      %1073 = vmatpush.msra.mxu0 0.0
      %1074 = vmatpush.msra.mxu0 0.0
      %1075 = vmatpush.msra.mxu0 0.0
      %1076 = vmatpush.msra.mxu0 0.0
      %1077 = vmatpush.msra.mxu0 %v1050
      %1078 = vmatpush.msra.mxu0 %v1048
      %1079 = vmatpush.msra.mxu0 %v1045
      %1080 = vmatpush.msra.mxu0 %v1043
      %1081 = vmatpush.msra.mxu0 %v1040
      %1082 = vmatpush.msra.mxu0 %v1038
      %1083 = vmatpush.msra.mxu0 %v1035
      %1084 = vmatpush.msra.mxu0 %v1033
      %1085 = vmatmul.f32.gmra.mxu0 %v1064
      %v1086 = vpop.f32.mrf.mxu0
      %v1087 = vadd.f32 0.0, %v1086
      %1088 = vmatmul.f32.gmra.mxu0 %v1067
      %v1089 = vpop.f32.mrf.mxu0
      %v1090 = vadd.f32 0.0, %v1089
      %1091 = vdwg.mxu0
      %v1092 = vadd.s32 %v1057, 1
      %v1093 = vadd.s32 %v1058, 1
      %vm1094 = vcmp.eq.s32.totalorder %v1056, %v1092
      %vm1095 = vcmp.eq.s32.totalorder %v1056, %v1093
      %v1096 = vsel %vm1094, 1.0, 0.0
      %v1097 = vsel %vm1095, 1.0, 0.0
      %v1099 = vsel %vm906, %v1096, 0
      %v1102 = vsel %vm906, %v1097, 0
      %1104 = vmatpush.msra.mxu0 0.0
      %1105 = vmatpush.msra.mxu0 0.0
      %1106 = vmatpush.msra.mxu0 0.0
      %1107 = vmatpush.msra.mxu0 0.0
      %1108 = vmatpush.msra.mxu0 0.0
      %1109 = vmatpush.msra.mxu0 0.0
      %1110 = vmatpush.msra.mxu0 0.0
      %1111 = vmatpush.msra.mxu0 0.0
      %1112 = vmatpush.msra.mxu0 %v1050
      %1113 = vmatpush.msra.mxu0 %v1048
      %1114 = vmatpush.msra.mxu0 %v1045
      %1115 = vmatpush.msra.mxu0 %v1043
      %1116 = vmatpush.msra.mxu0 %v1040
      %1117 = vmatpush.msra.mxu0 %v1038
      %1118 = vmatpush.msra.mxu0 %v1035
      %1119 = vmatpush.msra.mxu0 %v1033
      %1120 = vmatmul.f32.gmra.mxu0 %v1099
      %v1121 = vpop.f32.mrf.mxu0
      %v1122 = vadd.f32 0.0, %v1121
      %1123 = vmatmul.f32.gmra.mxu0 %v1102
      %v1124 = vpop.f32.mrf.mxu0
      %v1125 = vadd.f32 0.0, %v1124
      %1126 = vdwg.mxu0
      %v1127 = vadd.s32 %v1057, 2
      %v1128 = vadd.s32 %v1058, 2
      %vm1129 = vcmp.eq.s32.totalorder %v1056, %v1127
      %vm1130 = vcmp.eq.s32.totalorder %v1056, %v1128
      %v1131 = vsel %vm1129, 1.0, 0.0
      %v1132 = vsel %vm1130, 1.0, 0.0
      %v1134 = vsel %vm906, %v1131, 0
      %v1137 = vsel %vm906, %v1132, 0
      %1139 = vmatpush.msra.mxu0 0.0
      %1140 = vmatpush.msra.mxu0 0.0
      %1141 = vmatpush.msra.mxu0 0.0
      %1142 = vmatpush.msra.mxu0 0.0
      %1143 = vmatpush.msra.mxu0 0.0
      %1144 = vmatpush.msra.mxu0 0.0
      %1145 = vmatpush.msra.mxu0 0.0
      %1146 = vmatpush.msra.mxu0 0.0
      %1147 = vmatpush.msra.mxu0 %v1050
      %1148 = vmatpush.msra.mxu0 %v1048
      %1149 = vmatpush.msra.mxu0 %v1045
      %1150 = vmatpush.msra.mxu0 %v1043
      %1151 = vmatpush.msra.mxu0 %v1040
      %1152 = vmatpush.msra.mxu0 %v1038
      %1153 = vmatpush.msra.mxu0 %v1035
      %1154 = vmatpush.msra.mxu0 %v1033
      %1155 = vmatmul.f32.gmra.mxu0 %v1134
      %v1156 = vpop.f32.mrf.mxu0
      %v1157 = vadd.f32 0.0, %v1156
      %1158 = vmatmul.f32.gmra.mxu0 %v1137
      %v1159 = vpop.f32.mrf.mxu0
      %v1160 = vadd.f32 0.0, %v1159
      %1161 = vdwg.mxu0
      %v1162 = vadd.s32 %v1057, 3
      %v1163 = vadd.s32 %v1058, 3
      %vm1164 = vcmp.eq.s32.totalorder %v1056, %v1162
      %vm1165 = vcmp.eq.s32.totalorder %v1056, %v1163
      %v1166 = vsel %vm1164, 1.0, 0.0
      %v1167 = vsel %vm1165, 1.0, 0.0
      %v1169 = vsel %vm906, %v1166, 0
      %v1172 = vsel %vm906, %v1167, 0
      %1174 = vmatpush.msra.mxu0 0.0
      %1175 = vmatpush.msra.mxu0 0.0
      %1176 = vmatpush.msra.mxu0 0.0
      %1177 = vmatpush.msra.mxu0 0.0
      %1178 = vmatpush.msra.mxu0 0.0
      %1179 = vmatpush.msra.mxu0 0.0
      %1180 = vmatpush.msra.mxu0 0.0
      %1181 = vmatpush.msra.mxu0 0.0
      %1182 = vmatpush.msra.mxu0 %v1050
      %1183 = vmatpush.msra.mxu0 %v1048
      %1184 = vmatpush.msra.mxu0 %v1045
      %1185 = vmatpush.msra.mxu0 %v1043
      %1186 = vmatpush.msra.mxu0 %v1040
      %1187 = vmatpush.msra.mxu0 %v1038
      %1188 = vmatpush.msra.mxu0 %v1035
      %1189 = vmatpush.msra.mxu0 %v1033
      %1190 = vmatmul.f32.gmra.mxu0 %v1169
      %v1191 = vpop.f32.mrf.mxu0
      %v1192 = vadd.f32 0.0, %v1191
      %1193 = vmatmul.f32.gmra.mxu0 %v1172
      %v1194 = vpop.f32.mrf.mxu0
      %v1195 = vadd.f32 0.0, %v1194
      %1196 = vdwg.mxu0
      %1199 = vrot.lane.b32.xlu0 %v1122, 8
      %v1200 = vpop.permute.xlu0 %1199
      %1201 = vrot.lane.b32.xlu0 %v1125, 8
      %v1202 = vpop.permute.xlu0 %1201
      %1207 = vrot.lane.b32.xlu0 %v1157, 16
      %v1208 = vpop.permute.xlu0 %1207
      %1209 = vrot.lane.b32.xlu0 %v1160, 16
      %v1210 = vpop.permute.xlu0 %1209
      %1215 = vrot.lane.b32.xlu0 %v1192, 24
      %v1216 = vpop.permute.xlu0 %1215
      %1217 = vrot.lane.b32.xlu0 %v1195, 24
      %v1218 = vpop.permute.xlu0 %1217
      %v1221 = vsel %vm836, %v1087, %v1200
      %v1222 = vsel %vm836, %v1090, %v1202
      %vm1223 = vcmask 130048
      %v1224 = vsel %vm1223, %v1221, %v1208
      %v1225 = vsel %vm1223, %v1222, %v1210
      %vm1226 = vcmask 195584
      %v1227 = vsel %vm1226, %v1224, %v1216
      %v1228 = vsel %vm1226, %v1225, %v1218
      %v1229 = vld [vmem:[%s6] sm:$0xff]
      %v1230 = vld [vmem:[%s6 + $0x8] sm:$0xff]
      %v1231 = vld [vmem:[%s6 + $0x10] sm:$0xff]
      %v1232 = vld [vmem:[%s6 + $0x18] sm:$0xff]
      %v1233 = vpack.c.bf16 %v1228, %v1227
      %v1234 = vpack.c.bf16 %v1230, %v1229
      %v1235 = vpack.c.bf16 %v1232, %v1231
      %v1237 = vsel %vm774, %v1233, 0
      %1239 = vmatpush.bf16.msra.mxu0 0
      %1240 = vmatpush.bf16.msra.mxu0 0
      %1241 = vmatpush.bf16.msra.mxu0 0
      %1242 = vmatpush.bf16.msra.mxu0 0
      %1243 = vmatpush.bf16.msra.mxu0 0
      %1244 = vmatpush.bf16.msra.mxu0 0
      %1245 = vmatpush.bf16.msra.mxu0 %v1235
      %1246 = vmatpush.bf16.msra.mxu0 %v1234
      %1247 = vmatmul.bf16.gmra.mxu0 %v1237
      %v1248 = vpop.f32.mrf.mxu0
      %v1249 = vadd.f32 0.0, %v1248
      %v1250 = vpop.f32.mrf.mxu0
      %v1251 = vadd.f32 0.0, %v1250
      %1252 = vdwg.mxu0
      %v1253 = vadd.f32 %v759, %v1249
      %v1254 = vadd.f32 %v760, %v1251
      %v1255 = vld [vmem:[%s7] sm:$0x1]
      %v1257 = vperm.slane %v1255, 0
      %v1259 = vadd.f32 %v1253, %v1257
      %v1260 = vadd.f32 %v1254, %v1257
      %v1261 = vld [vmem:[%s8] sm:$0x1]
      %v1262 = vld [vmem:[%s9] sm:$0x1]
      %v1263 = vsel %vm774, %v1259, 0.0
      %1264 = vadd.xlane.f32.xlu0 %v1263
      %v1265 = vpop.xlane.xlu0 %1264
      %v1266 = vsel %vm774, %v1260, 0.0
      %1267 = vadd.xlane.f32.xlu0 %v1266
      %v1268 = vpop.xlane.xlu0 %1267
      %v1269 = vrcp.pop 32.0
      %v1270 = vmul.f32 32.0, %v1269
      %v1271 = vsub.f32 1.0, %v1270
      %v1272 = vmul.f32 %v1269, %v1271
      %v1273 = vadd.f32 %v1269, %v1272
      %vm1274 = vweird.f32 %v1269
      %v1275 = vsel %vm1274, %v1269, %v1273
      %v1276 = vmul.f32 %v1265, %v1275
      %v1277 = vmul.f32 %v1268, %v1275
      %v1278 = vsub.f32 %v1259, %v1276
      %v1279 = vsub.f32 %v1260, %v1277
      %v1280 = vmul.f32 %v1278, %v1278
      %v1281 = vmul.f32 %v1279, %v1279
      %v1282 = vsel %vm774, %v1280, 0.0
      %1283 = vadd.xlane.f32.xlu0 %v1282
      %v1284 = vpop.xlane.xlu0 %1283
      %v1285 = vsel %vm774, %v1281, 0.0
      %1286 = vadd.xlane.f32.xlu0 %v1285
      %v1287 = vpop.xlane.xlu0 %1286
      %v1288 = vmul.f32 %v1284, %v1275
      %v1289 = vmul.f32 %v1287, %v1275
      %v1290 = vadd.f32 %v1288, 1e-05
      %v1291 = vadd.f32 %v1289, 1e-05
      %v1292 = vrsqrt.pop %v1290
      %v1293 = vmul.f32 %v1292, %v1290
      %v1294 = vmul.f32 %v1293, %v1292
      %v1295 = vmul.f32 0.5, %v1294
      %v1296 = vsub.f32 1.5, %v1295
      %v1297 = vmul.f32 %v1292, %v1296
      %vm1298 = vweird.f32 %v1290
      %vm1299 = vweird.f32 %v1292
      %vm1300 = vmor %vm1298, %vm1299
      %v1301 = vsel %vm1300, %v1292, %v1297
      %v1302 = vrsqrt.pop %v1291
      %v1303 = vmul.f32 %v1302, %v1291
      %v1304 = vmul.f32 %v1303, %v1302
      %v1305 = vmul.f32 0.5, %v1304
      %v1306 = vsub.f32 1.5, %v1305
      %v1307 = vmul.f32 %v1302, %v1306
      %vm1308 = vweird.f32 %v1291
      %vm1309 = vweird.f32 %v1302
      %vm1310 = vmor %vm1308, %vm1309
      %v1311 = vsel %vm1310, %v1302, %v1307
      %v1312 = vmul.f32 %v1278, %v1301
      %v1313 = vmul.f32 %v1279, %v1311
      %v1315 = vperm.slane %v1261, 0
      %v1317 = vmul.f32 %v1312, %v1315
      %v1318 = vmul.f32 %v1313, %v1315
      %v1320 = vperm.slane %v1262, 0
      %v1322 = vadd.f32 %v1317, %v1320
      %v1323 = vadd.f32 %v1318, %v1320
      %v1324 = vld [vmem:[%s10] sm:$0xff]
      %v1325 = vld [vmem:[%s10 + $0x8] sm:$0xff]
      %v1326 = vld [vmem:[%s10 + $0x10] sm:$0xff]
      %v1327 = vld [vmem:[%s10 + $0x18] sm:$0xff]
      %v1328 = vpack.c.bf16 %v1323, %v1322
      %v1329 = vpack.c.bf16 %v1325, %v1324
      %v1330 = vpack.c.bf16 %v1327, %v1326
      %v1331 = vld [vmem:[%s11] sm:$0x1]
      %v1333 = vperm.slane %v1331, 0
      %v1336 = vsel %vm774, %v1328, 0
      %1338 = vmatpush.bf16.msra.mxu0 0
      %1339 = vmatpush.bf16.msra.mxu0 0
      %1340 = vmatpush.bf16.msra.mxu0 0
      %1341 = vmatpush.bf16.msra.mxu0 0
      %1342 = vmatpush.bf16.msra.mxu0 0
      %1343 = vmatpush.bf16.msra.mxu0 0
      %1344 = vmatpush.bf16.msra.mxu0 %v1330
      %1345 = vmatpush.bf16.msra.mxu0 %v1329
      %1346 = vmatmul.bf16.gmra.mxu0 %v1336
      %v1347 = vpop.f32.mrf.mxu0
      %v1348 = vadd.f32 %v1333, %v1347
      %v1349 = vpop.f32.mrf.mxu0
      %v1350 = vadd.f32 %v1333, %v1349
      %1351 = vdwg.mxu0
      %v1352 = vld [vmem:[%s12] sm:$0xff]
      %v1353 = vld [vmem:[%s12 + $0x8] sm:$0xff]
      %v1354 = vld [vmem:[%s12 + $0x10] sm:$0xff]
      %v1355 = vld [vmem:[%s12 + $0x18] sm:$0xff]
      %v1356 = vpack.c.bf16 %v762, %v761
      %v1357 = vpack.c.bf16 %v1353, %v1352
      %v1358 = vpack.c.bf16 %v1355, %v1354
      %v1359 = vld [vmem:[%s13] sm:$0x1]
      %v1361 = vperm.slane %v1359, 0
      %v1364 = vsel %vm774, %v1356, 0
      %1366 = vmatpush.bf16.msra.mxu0 0
      %1367 = vmatpush.bf16.msra.mxu0 0
      %1368 = vmatpush.bf16.msra.mxu0 0
      %1369 = vmatpush.bf16.msra.mxu0 0
      %1370 = vmatpush.bf16.msra.mxu0 0
      %1371 = vmatpush.bf16.msra.mxu0 0
      %1372 = vmatpush.bf16.msra.mxu0 %v1358
      %1373 = vmatpush.bf16.msra.mxu0 %v1357
      %1374 = vmatmul.bf16.gmra.mxu0 %v1364
      %v1375 = vpop.f32.mrf.mxu0
      %v1376 = vadd.f32 %v1361, %v1375
      %v1377 = vpop.f32.mrf.mxu0
      %v1378 = vadd.f32 %v1361, %v1377
      %1379 = vdwg.mxu0
      %v1380 = vld [vmem:[%s3] sm:$0xff]
      %v1381 = vld [vmem:[%s3 + $0x8] sm:$0xff]
      %v1382 = vld [vmem:[%s3 + $0x10] sm:$0xff]
      %v1383 = vld [vmem:[%s3 + $0x18] sm:$0xff]
      %v1384 = vld [vmem:[%s3 + $0x20] sm:$0xff]
      %v1385 = vld [vmem:[%s3 + $0x28] sm:$0xff]
      %v1386 = vld [vmem:[%s3 + $0x30] sm:$0xff]
      %v1387 = vld [vmem:[%s3 + $0x38] sm:$0xff]
      %1390 = vrot.lane.b32.xlu0 %v1348, 120
      %v1391 = vpop.permute.xlu0 %1390
      %1392 = vrot.lane.b32.xlu0 %v1350, 120
      %v1393 = vpop.permute.xlu0 %1392
      %1396 = vrot.lane.b32.xlu0 %v1348, 112
      %v1397 = vpop.permute.xlu0 %1396
      %1398 = vrot.lane.b32.xlu0 %v1350, 112
      %v1399 = vpop.permute.xlu0 %1398
      %1402 = vrot.lane.b32.xlu0 %v1348, 104
      %v1403 = vpop.permute.xlu0 %1402
      %1404 = vrot.lane.b32.xlu0 %v1350, 104
      %v1405 = vpop.permute.xlu0 %1404
      %1410 = vrot.lane.b32.xlu0 %v1376, 120
      %v1411 = vpop.permute.xlu0 %1410
      %1412 = vrot.lane.b32.xlu0 %v1378, 120
      %v1413 = vpop.permute.xlu0 %1412
      %1416 = vrot.lane.b32.xlu0 %v1376, 112
      %v1417 = vpop.permute.xlu0 %1416
      %1418 = vrot.lane.b32.xlu0 %v1378, 112
      %v1419 = vpop.permute.xlu0 %1418
      %1422 = vrot.lane.b32.xlu0 %v1376, 104
      %v1423 = vpop.permute.xlu0 %1422
      %1424 = vrot.lane.b32.xlu0 %v1378, 104
      %v1425 = vpop.permute.xlu0 %1424
      %v1428 = vpack.c.bf16 %v1350, %v1348
      %v1429 = vpack.c.bf16 %v1393, %v1391
      %v1430 = vpack.c.bf16 %v1399, %v1397
      %v1431 = vpack.c.bf16 %v1405, %v1403
      %v1432 = vpack.c.bf16 %v1378, %v1376
      %v1433 = vpack.c.bf16 %v1413, %v1411
      %v1434 = vpack.c.bf16 %v1419, %v1417
      %v1435 = vpack.c.bf16 %v1425, %v1423
      %v1437 = vsel %vm836, %v1428, 0
      %v1440 = vsel %vm836, %v1429, 0
      %v1443 = vsel %vm836, %v1430, 0
      %v1446 = vsel %vm836, %v1431, 0
      %v1449 = vsel %vm836, %v1432, 0
      %v1452 = vsel %vm836, %v1433, 0
      %v1455 = vsel %vm836, %v1434, 0
      %v1458 = vsel %vm836, %v1435, 0
      %1460 = vmatpush.bf16.xpose.msra.mxu0 0
      %1461 = vmatpush.bf16.xpose.msra.mxu0 0
      %1462 = vmatpush.bf16.xpose.msra.mxu0 0
      %1463 = vmatpush.bf16.xpose.msra.mxu0 0
      %1464 = vmatpush.bf16.xpose.msra.mxu0 %v1458
      %1465 = vmatpush.bf16.xpose.msra.mxu0 %v1455
      %1466 = vmatpush.bf16.xpose.msra.mxu0 %v1452
      %1467 = vmatpush.bf16.xpose.msra.mxu0 %v1449
      %1468 = vmatmul.bf16.gmra.mxu0 %v1437
      %v1469 = vpop.f32.mrf.mxu0
      %v1470 = vadd.f32 0.0, %v1469
      %v1471 = vpop.f32.mrf.mxu0
      %v1472 = vadd.f32 0.0, %v1471
      %1473 = vmatmul.bf16.gmra.mxu0 %v1440
      %v1474 = vpop.f32.mrf.mxu0
      %v1475 = vadd.f32 0.0, %v1474
      %v1476 = vpop.f32.mrf.mxu0
      %v1477 = vadd.f32 0.0, %v1476
      %1478 = vmatmul.bf16.gmra.mxu0 %v1443
      %v1479 = vpop.f32.mrf.mxu0
      %v1480 = vadd.f32 0.0, %v1479
      %v1481 = vpop.f32.mrf.mxu0
      %v1482 = vadd.f32 0.0, %v1481
      %1483 = vmatmul.bf16.gmra.mxu0 %v1446
      %v1484 = vpop.f32.mrf.mxu0
      %v1485 = vadd.f32 0.0, %v1484
      %v1486 = vpop.f32.mrf.mxu0
      %v1487 = vadd.f32 0.0, %v1486
      %1488 = vdwg.mxu0
      %v1489 = vmul.f32 %v1470, 0.35355338
      %v1490 = vmul.f32 %v1472, 0.35355338
      %v1491 = vmul.f32 %v1475, 0.35355338
      %v1492 = vmul.f32 %v1477, 0.35355338
      %v1493 = vmul.f32 %v1480, 0.35355338
      %v1494 = vmul.f32 %v1482, 0.35355338
      %v1495 = vmul.f32 %v1485, 0.35355338
      %v1496 = vmul.f32 %v1487, 0.35355338
      %v1497 = vadd.f32 %v1489, %v1380
      %v1498 = vadd.f32 %v1490, %v1381
      %v1499 = vadd.f32 %v1491, %v1382
      %v1500 = vadd.f32 %v1492, %v1383
      %v1501 = vadd.f32 %v1493, %v1384
      %v1502 = vadd.f32 %v1494, %v1385
      %v1503 = vadd.f32 %v1495, %v1386
      %v1504 = vadd.f32 %v1496, %v1387
      %v1505 = vsel %vm906, %v1497, -inf
      %1506 = vmax.xlane.f32.xlu0 %v1505
      %v1507 = vpop.xlane.xlu0 %1506
      %v1508 = vsel %vm906, %v1498, -inf
      %1509 = vmax.xlane.f32.xlu0 %v1508
      %v1510 = vpop.xlane.xlu0 %1509
      %v1511 = vsel %vm906, %v1499, -inf
      %1512 = vmax.xlane.f32.xlu0 %v1511
      %v1513 = vpop.xlane.xlu0 %1512
      %v1514 = vsel %vm906, %v1500, -inf
      %1515 = vmax.xlane.f32.xlu0 %v1514
      %v1516 = vpop.xlane.xlu0 %1515
      %v1517 = vsel %vm906, %v1501, -inf
      %1518 = vmax.xlane.f32.xlu0 %v1517
      %v1519 = vpop.xlane.xlu0 %1518
      %v1520 = vsel %vm906, %v1502, -inf
      %1521 = vmax.xlane.f32.xlu0 %v1520
      %v1522 = vpop.xlane.xlu0 %1521
      %v1523 = vsel %vm906, %v1503, -inf
      %1524 = vmax.xlane.f32.xlu0 %v1523
      %v1525 = vpop.xlane.xlu0 %1524
      %v1526 = vsel %vm906, %v1504, -inf
      %1527 = vmax.xlane.f32.xlu0 %v1526
      %v1528 = vpop.xlane.xlu0 %1527
      %v1529 = vsub.f32 %v1497, %v1507
      %v1530 = vsub.f32 %v1498, %v1510
      %v1531 = vsub.f32 %v1499, %v1513
      %v1532 = vsub.f32 %v1500, %v1516
      %v1533 = vsub.f32 %v1501, %v1519
      %v1534 = vsub.f32 %v1502, %v1522
      %v1535 = vsub.f32 %v1503, %v1525
      %v1536 = vsub.f32 %v1504, %v1528
      %v1537 = vmul.f32 %v1529, 1.442695
      %v1538 = vpow.pop %v1537
      %v1539 = vmul.f32 %v1530, 1.442695
      %v1540 = vpow.pop %v1539
      %v1541 = vmul.f32 %v1531, 1.442695
      %v1542 = vpow.pop %v1541
      %v1543 = vmul.f32 %v1532, 1.442695
      %v1544 = vpow.pop %v1543
      %v1545 = vmul.f32 %v1533, 1.442695
      %v1546 = vpow.pop %v1545
      %v1547 = vmul.f32 %v1534, 1.442695
      %v1548 = vpow.pop %v1547
      %v1549 = vmul.f32 %v1535, 1.442695
      %v1550 = vpow.pop %v1549
      %v1551 = vmul.f32 %v1536, 1.442695
      %v1552 = vpow.pop %v1551
      %v1553 = vsel %vm906, %v1538, 0.0
      %1554 = vadd.xlane.f32.xlu0 %v1553
      %v1555 = vpop.xlane.xlu0 %1554
      %v1556 = vsel %vm906, %v1540, 0.0
      %1557 = vadd.xlane.f32.xlu0 %v1556
      %v1558 = vpop.xlane.xlu0 %1557
      %v1559 = vsel %vm906, %v1542, 0.0
      %1560 = vadd.xlane.f32.xlu0 %v1559
      %v1561 = vpop.xlane.xlu0 %1560
      %v1562 = vsel %vm906, %v1544, 0.0
      %1563 = vadd.xlane.f32.xlu0 %v1562
      %v1564 = vpop.xlane.xlu0 %1563
      %v1565 = vsel %vm906, %v1546, 0.0
      %1566 = vadd.xlane.f32.xlu0 %v1565
      %v1567 = vpop.xlane.xlu0 %1566
      %v1568 = vsel %vm906, %v1548, 0.0
      %1569 = vadd.xlane.f32.xlu0 %v1568
      %v1570 = vpop.xlane.xlu0 %1569
      %v1571 = vsel %vm906, %v1550, 0.0
      %1572 = vadd.xlane.f32.xlu0 %v1571
      %v1573 = vpop.xlane.xlu0 %1572
      %v1574 = vsel %vm906, %v1552, 0.0
      %1575 = vadd.xlane.f32.xlu0 %v1574
      %v1576 = vpop.xlane.xlu0 %1575
      %v1577 = vrcp.pop %v1555
      %v1578 = vrcp.pop %v1558
      %v1579 = vrcp.pop %v1561
      %v1580 = vrcp.pop %v1564
      %v1581 = vrcp.pop %v1567
      %v1582 = vrcp.pop %v1570
      %v1583 = vrcp.pop %v1573
      %v1584 = vrcp.pop %v1576
      %v1585 = vmul.f32 %v1538, %v1577
      %v1586 = vmul.f32 %v1540, %v1578
      %v1587 = vmul.f32 %v1542, %v1579
      %v1588 = vmul.f32 %v1544, %v1580
      %v1589 = vmul.f32 %v1546, %v1581
      %v1590 = vmul.f32 %v1548, %v1582
      %v1591 = vmul.f32 %v1550, %v1583
      %v1592 = vmul.f32 %v1552, %v1584
      %v1593 = vpack.c.bf16 %v1586, %v1585
      %v1594 = vpack.c.bf16 %v1588, %v1587
      %v1595 = vpack.c.bf16 %v1590, %v1589
      %v1596 = vpack.c.bf16 %v1592, %v1591
      %1601 = vrot.lane.b32.xlu0 %v1432, 96
      %v1602 = vpop.permute.xlu0 %1601
      %1603 = vrot.lane.b32.xlu0 %v1433, 96
      %v1604 = vpop.permute.xlu0 %1603
      %1605 = vrot.lane.b32.xlu0 %v1434, 96
      %v1606 = vpop.permute.xlu0 %1605
      %1607 = vrot.lane.b32.xlu0 %v1435, 96
      %v1608 = vpop.permute.xlu0 %1607
      %v1614 = vsel %vm906, %v1593, 0
      %v1617 = vsel %vm906, %v1594, 0
      %v1620 = vsel %vm906, %v1595, 0
      %v1623 = vsel %vm906, %v1596, 0
      %1625 = vmatpush.bf16.msra.mxu0 0
      %1626 = vmatpush.bf16.msra.mxu0 0
      %1627 = vmatpush.bf16.msra.mxu0 0
      %1628 = vmatpush.bf16.msra.mxu0 0
      %1629 = vmatpush.bf16.msra.mxu0 %v1608
      %1630 = vmatpush.bf16.msra.mxu0 %v1606
      %1631 = vmatpush.bf16.msra.mxu0 %v1604
      %1632 = vmatpush.bf16.msra.mxu0 %v1602
      %1633 = vmatmul.bf16.gmra.mxu0 %v1614
      %v1634 = vpop.f32.mrf.mxu0
      %v1635 = vadd.f32 0.0, %v1634
      %v1636 = vpop.f32.mrf.mxu0
      %v1637 = vadd.f32 0.0, %v1636
      %1638 = vmatmul.bf16.gmra.mxu0 %v1617
      %v1639 = vpop.f32.mrf.mxu0
      %v1640 = vadd.f32 0.0, %v1639
      %v1641 = vpop.f32.mrf.mxu0
      %v1642 = vadd.f32 0.0, %v1641
      %1643 = vmatmul.bf16.gmra.mxu0 %v1620
      %v1644 = vpop.f32.mrf.mxu0
      %v1645 = vadd.f32 0.0, %v1644
      %v1646 = vpop.f32.mrf.mxu0
      %v1647 = vadd.f32 0.0, %v1646
      %1648 = vmatmul.bf16.gmra.mxu0 %v1623
      %v1649 = vpop.f32.mrf.mxu0
      %v1650 = vadd.f32 0.0, %v1649
      %v1651 = vpop.f32.mrf.mxu0
      %v1652 = vadd.f32 0.0, %v1651
      %1653 = vdwg.mxu0
      %1656 = vrot.lane.b32.xlu0 %v1640, 8
      %v1657 = vpop.permute.xlu0 %1656
      %1658 = vrot.lane.b32.xlu0 %v1642, 8
      %v1659 = vpop.permute.xlu0 %1658
      %1664 = vrot.lane.b32.xlu0 %v1645, 16
      %v1665 = vpop.permute.xlu0 %1664
      %1666 = vrot.lane.b32.xlu0 %v1647, 16
      %v1667 = vpop.permute.xlu0 %1666
      %1672 = vrot.lane.b32.xlu0 %v1650, 24
      %v1673 = vpop.permute.xlu0 %1672
      %1674 = vrot.lane.b32.xlu0 %v1652, 24
      %v1675 = vpop.permute.xlu0 %1674
      %v1678 = vsel %vm836, %v1635, %v1657
      %v1679 = vsel %vm836, %v1637, %v1659
      %v1680 = vsel %vm1223, %v1678, %v1665
      %v1681 = vsel %vm1223, %v1679, %v1667
      %v1682 = vsel %vm1226, %v1680, %v1673
      %v1683 = vsel %vm1226, %v1681, %v1675
      %v1684 = vld [vmem:[%s14] sm:$0xff]
      %v1685 = vld [vmem:[%s14 + $0x8] sm:$0xff]
      %v1686 = vld [vmem:[%s14 + $0x10] sm:$0xff]
      %v1687 = vld [vmem:[%s14 + $0x18] sm:$0xff]
      %v1688 = vpack.c.bf16 %v1683, %v1682
      %v1689 = vpack.c.bf16 %v1685, %v1684
      %v1690 = vpack.c.bf16 %v1687, %v1686
      %v1692 = vsel %vm774, %v1688, 0
      %1694 = vmatpush.bf16.msra.mxu0 0
      %1695 = vmatpush.bf16.msra.mxu0 0
      %1696 = vmatpush.bf16.msra.mxu0 0
      %1697 = vmatpush.bf16.msra.mxu0 0
      %1698 = vmatpush.bf16.msra.mxu0 0
      %1699 = vmatpush.bf16.msra.mxu0 0
      %1700 = vmatpush.bf16.msra.mxu0 %v1690
      %1701 = vmatpush.bf16.msra.mxu0 %v1689
      %1702 = vmatmul.bf16.gmra.mxu0 %v1692
      %v1703 = vpop.f32.mrf.mxu0
      %v1704 = vadd.f32 0.0, %v1703
      %v1705 = vpop.f32.mrf.mxu0
      %v1706 = vadd.f32 0.0, %v1705
      %1707 = vdwg.mxu0
      %v1708 = vadd.f32 %v1322, %v1704
      %v1709 = vadd.f32 %v1323, %v1706
      %v1710 = vld [vmem:[%s15] sm:$0x1]
      %v1712 = vperm.slane %v1710, 0
      %v1714 = vadd.f32 %v1708, %v1712
      %v1715 = vadd.f32 %v1709, %v1712
      %v1716 = vld [vmem:[%s16] sm:$0x1]
      %v1717 = vld [vmem:[%s17] sm:$0x1]
      %v1718 = vsel %vm774, %v1714, 0.0
      %1719 = vadd.xlane.f32.xlu0 %v1718
      %v1720 = vpop.xlane.xlu0 %1719
      %v1721 = vsel %vm774, %v1715, 0.0
      %1722 = vadd.xlane.f32.xlu0 %v1721
      %v1723 = vpop.xlane.xlu0 %1722
      %v1724 = vmul.f32 %v1720, %v1275
      %v1725 = vmul.f32 %v1723, %v1275
      %v1726 = vsub.f32 %v1714, %v1724
      %v1727 = vsub.f32 %v1715, %v1725
      %v1728 = vmul.f32 %v1726, %v1726
      %v1729 = vmul.f32 %v1727, %v1727
      %v1730 = vsel %vm774, %v1728, 0.0
      %1731 = vadd.xlane.f32.xlu0 %v1730
      %v1732 = vpop.xlane.xlu0 %1731
      %v1733 = vsel %vm774, %v1729, 0.0
      %1734 = vadd.xlane.f32.xlu0 %v1733
      %v1735 = vpop.xlane.xlu0 %1734
      %v1736 = vmul.f32 %v1732, %v1275
      %v1737 = vmul.f32 %v1735, %v1275
      %v1738 = vadd.f32 %v1736, 1e-05
      %v1739 = vadd.f32 %v1737, 1e-05
      %v1740 = vrsqrt.pop %v1738
      %v1741 = vmul.f32 %v1740, %v1738
      %v1742 = vmul.f32 %v1741, %v1740
      %v1743 = vmul.f32 0.5, %v1742
      %v1744 = vsub.f32 1.5, %v1743
      %v1745 = vmul.f32 %v1740, %v1744
      %vm1746 = vweird.f32 %v1738
      %vm1747 = vweird.f32 %v1740
      %vm1748 = vmor %vm1746, %vm1747
      %v1749 = vsel %vm1748, %v1740, %v1745
      %v1750 = vrsqrt.pop %v1739
      %v1751 = vmul.f32 %v1750, %v1739
      %v1752 = vmul.f32 %v1751, %v1750
      %v1753 = vmul.f32 0.5, %v1752
      %v1754 = vsub.f32 1.5, %v1753
      %v1755 = vmul.f32 %v1750, %v1754
      %vm1756 = vweird.f32 %v1739
      %vm1757 = vweird.f32 %v1750
      %vm1758 = vmor %vm1756, %vm1757
      %v1759 = vsel %vm1758, %v1750, %v1755
      %v1760 = vmul.f32 %v1726, %v1749
      %v1761 = vmul.f32 %v1727, %v1759
      %v1763 = vperm.slane %v1716, 0
      %v1765 = vmul.f32 %v1760, %v1763
      %v1766 = vmul.f32 %v1761, %v1763
      %v1768 = vperm.slane %v1717, 0
      %v1770 = vadd.f32 %v1765, %v1768
      %v1771 = vadd.f32 %v1766, %v1768
      %v1772 = vld [vmem:[%s18] sm:$0xff]
      %v1773 = vld [vmem:[%s18 + $0x8] sm:$0xff]
      %v1774 = vld [vmem:[%s18 + $0x10] sm:$0xff]
      %v1775 = vld [vmem:[%s18 + $0x18] sm:$0xff]
      %v1776 = vpack.c.bf16 %v1771, %v1770
      %v1777 = vpack.c.bf16 %v1773, %v1772
      %v1778 = vpack.c.bf16 %v1775, %v1774
      %v1779 = vld [vmem:[%s19] sm:$0x1]
      %v1781 = vperm.slane %v1779, 0
      %v1784 = vsel %vm774, %v1776, 0
      %1786 = vmatpush.bf16.msra.mxu0 0
      %1787 = vmatpush.bf16.msra.mxu0 0
      %1788 = vmatpush.bf16.msra.mxu0 0
      %1789 = vmatpush.bf16.msra.mxu0 0
      %1790 = vmatpush.bf16.msra.mxu0 0
      %1791 = vmatpush.bf16.msra.mxu0 0
      %1792 = vmatpush.bf16.msra.mxu0 %v1778
      %1793 = vmatpush.bf16.msra.mxu0 %v1777
      %1794 = vmatmul.bf16.gmra.mxu0 %v1784
      %v1795 = vpop.f32.mrf.mxu0
      %v1796 = vadd.f32 %v1781, %v1795
      %v1797 = vpop.f32.mrf.mxu0
      %v1798 = vadd.f32 %v1781, %v1797
      %1799 = vdwg.mxu0
      %v1800 = vmul.f32 %v1796, 0.5
      %v1801 = vmul.f32 %v1798, 0.5
      %v1802 = vmul.f32 %v1796, 0.044715
      %v1803 = vmul.f32 %v1798, 0.044715
      %v1804 = vmul.f32 %v1802, %v1796
      %v1805 = vmul.f32 %v1803, %v1798
      %v1806 = vmul.f32 %v1804, %v1796
      %v1807 = vmul.f32 %v1805, %v1798
      %v1808 = vadd.f32 %v1796, %v1806
      %v1809 = vadd.f32 %v1798, %v1807
      %v1810 = vmul.f32 %v1808, 0.7978846
      %v1811 = vmul.f32 %v1809, 0.7978846
      %v1812 = vtanh.pop %v1810
      %v1813 = vtanh.pop %v1811
      %v1814 = vadd.f32 %v1812, 1.0
      %v1815 = vadd.f32 %v1813, 1.0
      %v1816 = vmul.f32 %v1800, %v1814
      %v1817 = vmul.f32 %v1801, %v1815
      %v1818 = vld [vmem:[%s20] sm:$0xff]
      %v1819 = vld [vmem:[%s20 + $0x8] sm:$0xff]
      %v1820 = vld [vmem:[%s20 + $0x10] sm:$0xff]
      %v1821 = vld [vmem:[%s20 + $0x18] sm:$0xff]
      %v1822 = vld [vmem:[%s20 + $0x20] sm:$0xff]
      %v1823 = vld [vmem:[%s20 + $0x28] sm:$0xff]
      %v1824 = vld [vmem:[%s20 + $0x30] sm:$0xff]
      %v1825 = vld [vmem:[%s20 + $0x38] sm:$0xff]
      %v1826 = vpack.c.bf16 %v1817, %v1816
      %v1827 = vpack.c.bf16 %v1819, %v1818
      %v1828 = vpack.c.bf16 %v1821, %v1820
      %v1829 = vpack.c.bf16 %v1823, %v1822
      %v1830 = vpack.c.bf16 %v1825, %v1824
      %v1832 = vsel %vm906, %v1826, 0
      %1834 = vmatpush.bf16.msra.mxu0 0
      %1835 = vmatpush.bf16.msra.mxu0 0
      %1836 = vmatpush.bf16.msra.mxu0 0
      %1837 = vmatpush.bf16.msra.mxu0 0
      %1838 = vmatpush.bf16.msra.mxu0 %v1830
      %1839 = vmatpush.bf16.msra.mxu0 %v1829
      %1840 = vmatpush.bf16.msra.mxu0 %v1828
      %1841 = vmatpush.bf16.msra.mxu0 %v1827
      %1842 = vmatmul.bf16.gmra.mxu0 %v1832
      %v1843 = vpop.f32.mrf.mxu0
      %v1844 = vadd.f32 0.0, %v1843
      %v1845 = vpop.f32.mrf.mxu0
      %v1846 = vadd.f32 0.0, %v1845
      %1847 = vdwg.mxu0
      %v1848 = vadd.f32 %v1770, %v1844
      %v1849 = vadd.f32 %v1771, %v1846
      %v1850 = vld [vmem:[%s21] sm:$0x1]
      %v1852 = vperm.slane %v1850, 0
      %v1854 = vadd.f32 %v1848, %v1852
      %v1855 = vadd.f32 %v1849, %v1852
      %v1856 = vld [vmem:[%s22] sm:$0x1]
      %v1857 = vld [vmem:[%s23] sm:$0x1]
      %v1858 = vsel %vm774, %v1854, 0.0
      %1859 = vadd.xlane.f32.xlu0 %v1858
      %v1860 = vpop.xlane.xlu0 %1859
      %v1861 = vsel %vm774, %v1855, 0.0
      %1862 = vadd.xlane.f32.xlu0 %v1861
      %v1863 = vpop.xlane.xlu0 %1862
      %v1864 = vmul.f32 %v1860, %v1275
      %v1865 = vmul.f32 %v1863, %v1275
      %v1866 = vsub.f32 %v1854, %v1864
      %v1867 = vsub.f32 %v1855, %v1865
      %v1868 = vmul.f32 %v1866, %v1866
      %v1869 = vmul.f32 %v1867, %v1867
      %v1870 = vsel %vm774, %v1868, 0.0
      %1871 = vadd.xlane.f32.xlu0 %v1870
      %v1872 = vpop.xlane.xlu0 %1871
      %v1873 = vsel %vm774, %v1869, 0.0
      %1874 = vadd.xlane.f32.xlu0 %v1873
      %v1875 = vpop.xlane.xlu0 %1874
      %v1876 = vmul.f32 %v1872, %v1275
      %v1877 = vmul.f32 %v1875, %v1275
      %v1878 = vadd.f32 %v1876, 1e-05
      %v1879 = vadd.f32 %v1877, 1e-05
      %v1880 = vrsqrt.pop %v1878
      %v1881 = vmul.f32 %v1880, %v1878
      %v1882 = vmul.f32 %v1881, %v1880
      %v1883 = vmul.f32 0.5, %v1882
      %v1884 = vsub.f32 1.5, %v1883
      %v1885 = vmul.f32 %v1880, %v1884
      %vm1886 = vweird.f32 %v1878
      %vm1887 = vweird.f32 %v1880
      %vm1888 = vmor %vm1886, %vm1887
      %v1889 = vsel %vm1888, %v1880, %v1885
      %v1890 = vrsqrt.pop %v1879
      %v1891 = vmul.f32 %v1890, %v1879
      %v1892 = vmul.f32 %v1891, %v1890
      %v1893 = vmul.f32 0.5, %v1892
      %v1894 = vsub.f32 1.5, %v1893
      %v1895 = vmul.f32 %v1890, %v1894
      %vm1896 = vweird.f32 %v1879
      %vm1897 = vweird.f32 %v1890
      %vm1898 = vmor %vm1896, %vm1897
      %v1899 = vsel %vm1898, %v1890, %v1895
      %v1900 = vmul.f32 %v1866, %v1889
      %v1901 = vmul.f32 %v1867, %v1899
      %v1903 = vperm.slane %v1856, 0
      %v1905 = vmul.f32 %v1900, %v1903
      %v1906 = vmul.f32 %v1901, %v1903
      %v1908 = vperm.slane %v1857, 0
      %v1910 = vadd.f32 %v1905, %v1908
      %v1911 = vadd.f32 %v1906, %v1908
      %1912 = vst.msk [vmem:[%s757] sm:$0xff] %vm774, %v1910
      %1913 = vst.msk [vmem:[%s757 + $0x8] sm:$0xff] %vm774, %v1911
      %p1914 = scmp.lt.s32.totalorder %s35, 1
      %s1915 = scalar_select %p1914, %s35, 1
      %s1916 = smul.addr %s1915, 2
      %s1917 = smul.addr %s1916, 8
      %s1918 = scalar_lea.vmem %s24, %s1917
      // Predicated region
      $region117: #{forward.15} parent=115 // pred_check
        %p1919 = pneg %p567
      $region118: #{forward.15} parent=115 // pred_check_branch
        %1921 = sbr.rel (%p1919) target = $region120
      $region119: #{forward.15} parent=115 // pred_region
        _
      $region120: #{forward.15} parent=115 // pred_fallthru
        _
    $region116: #{forward.15} parent=5 // pred_fallthru
      _
    %p1922 = scmp.le.s32.totalorder 2, %s30
    // Predicated region
    $region121: #{forward.15} parent=5 // pred_check
      %p1923 = pneg %p1922
    $region122: #{forward.15} parent=5 // pred_check_branch
      %1925 = sbr.rel (%p1923) target = $region124
    $region123: #{forward.15} parent=5 // pred_region
      %s1926 = ssub.s32 %s30, 2
      // Predicated region
      $region125: #{forward.15} parent=123 // pred_check
        %p1927 = pneg %p573
      $region126: #{forward.15} parent=123 // pred_check_branch
        %1929 = sbr.rel (%p1927) target = $region128
      $region127: #{forward.15} parent=123 // pred_region
        %p1930 = scmp.lt.s32.totalorder %s36, 1
        %s1931 = scalar_select %p1930, %s36, 1
        %s1932 = smul.addr %s1931, 2
        %s1933 = smul.addr %s1932, 8
        %s1934 = scalar_lea.vmem %s24, %s1933
      $region128: #{forward.15} parent=123 // pred_fallthru
        _
    $region124: #{forward.15} parent=5 // pred_fallthru
      _
  $region6: #{forward.15} parent=0 // loop_footer
    %s34 = sadd.s32 1, %s30
  $region7: #{forward.15} parent=0 // loop_footer_branch
    %29 = sbr.rel target = $region3
  $region8: #{forward.15} parent=0 // loop_exit
    _

// kernel: forward.16
$region0: #{forward.16}
  #allocation0 [shape = 'u32[]', space=smem, size = 0x4, offset = 0x4, fixed_abs, tag = 'smem constant byte address 0x4 - core index']
  #allocation1 [shape = 'u32[72,128]{1,0:T(1,128)}', space=vmem, size = 0x9000, scoped, tag = 'internal scratch']
  %s0 = inlined_call_operand.vmem [shape: f32[2,16,32], index: 0, kind: input, shape index: {}]
  %s1 = inlined_call_operand.vmem [shape: f32[2,16,32], index: 1, kind: input, shape index: {}]
  %s2 = inlined_call_operand.vmem [shape: f32[64,64], index: 2, kind: input, shape index: {}]
  %s3 = inlined_call_operand.vmem [shape: f32[64,64], index: 3, kind: input, shape index: {}]
  %s4 = inlined_call_operand.vmem [shape: f32[32,96], index: 4, kind: input, shape index: {}]
  %s5 = inlined_call_operand.vmem [shape: f32[1,96], index: 5, kind: input, shape index: {}]
  %s6 = inlined_call_operand.vmem [shape: f32[32,32], index: 6, kind: input, shape index: {}]
  %s7 = inlined_call_operand.vmem [shape: f32[1,32], index: 7, kind: input, shape index: {}]
  %s8 = inlined_call_operand.vmem [shape: f32[1,32], index: 8, kind: input, shape index: {}]
  %s9 = inlined_call_operand.vmem [shape: f32[1,32], index: 9, kind: input, shape index: {}]
  %s10 = inlined_call_operand.vmem [shape: f32[32,32], index: 10, kind: input, shape index: {}]
  %s11 = inlined_call_operand.vmem [shape: f32[1,32], index: 11, kind: input, shape index: {}]
  %s12 = inlined_call_operand.vmem [shape: f32[32,64], index: 12, kind: input, shape index: {}]
  %s13 = inlined_call_operand.vmem [shape: f32[1,64], index: 13, kind: input, shape index: {}]
  %s14 = inlined_call_operand.vmem [shape: f32[32,32], index: 14, kind: input, shape index: {}]
  %s15 = inlined_call_operand.vmem [shape: f32[1,32], index: 15, kind: input, shape index: {}]
  %s16 = inlined_call_operand.vmem [shape: f32[1,32], index: 16, kind: input, shape index: {}]
  %s17 = inlined_call_operand.hbm [shape: f32[1,32], index: 17, kind: input, shape index: {}]
  %s18 = inlined_call_operand.vmem [shape: f32[32,64], index: 18, kind: input, shape index: {}]
  %s19 = inlined_call_operand.hbm [shape: f32[1,64], index: 19, kind: input, shape index: {}]
  %s20 = inlined_call_operand.vmem [shape: f32[64,32], index: 20, kind: input, shape index: {}]
  %s21 = inlined_call_operand.hbm [shape: f32[1,32], index: 21, kind: input, shape index: {}]
  %s22 = inlined_call_operand.hbm [shape: f32[1,32], index: 22, kind: input, shape index: {}]
  %s23 = inlined_call_operand.hbm [shape: f32[1,32], index: 23, kind: input, shape index: {}]
  %s24 = inlined_call_operand.vmem [shape: f32[2,16,32], index: 24, kind: output, shape index: {}]
  %s25 = sld [smem:[#allocation0]]
  $region149: #{forward.16} parent=0
    _
  %s27 = ssub.s32 1, %s25
  %s28 = scalar_select 0, %s27, %s25
  $region1: #{forward.16} parent=0
    #allocation2 [shape = 'u8[512]{0}', space=vmem, size = 0x400, scoped, tag = 'input window, operand 17, single buffered']
    #allocation3 [shape = 's32[2]{0}', space=sflag, size = 0x8, scoped, tag = 'scoped memory for forward.16']
    #allocation4 [shape = 'u8[512]{0}', space=vmem, size = 0x400, scoped, tag = 'input window, operand 19, single buffered']
    #allocation5 [shape = 's32[1]{0}', space=sflag, size = 0x4, scoped, tag = 'scoped memory for forward.16']
    #allocation6 [shape = 'u8[512]{0}', space=vmem, size = 0x400, scoped, tag = 'input window, operand 21, single buffered']
    #allocation7 [shape = 'u8[512]{0}', space=vmem, size = 0x400, scoped, tag = 'input window, operand 22, single buffered']
    #allocation8 [shape = 's32[1]{0}', space=sflag, size = 0x4, scoped, tag = 'scoped memory for forward.16']
    #allocation9 [shape = 'u8[512]{0}', space=vmem, size = 0x400, scoped, tag = 'input window, operand 23, single buffered']
    %29 = vsyncpa [#allocation3], 0
    %30 = vsyncpa [#allocation5], 0
    %31 = vsyncpa [#allocation8], 0
    loop: start=0, step=1, limit=4
    $region2: #{forward.16} parent=1 // loop_pre_header
      _
    $region3: #{forward.16} parent=1 // loop_header
      %s33 = sphi 0, %s37
      %p34 = scmp.ge.s32.totalorder %s33, 4
      %s43 = sphi 0, %s45
      %s46 = sphi 0, %s43
      %s47 = sphi 0, %s46
      %s63 = sphi 0, %s47
      %s69 = sphi 0, %s71
      %s72 = sphi 0, %s69
      %s73 = sphi 0, %s72
      %s89 = sphi 0, %s73
      %s93 = sphi 0, %s93
      %s95 = sphi 0, %s93
      %s96 = sphi 0, %s95
      %s110 = sphi 0, %s96
      %s114 = sphi 0, %s114
      %s116 = sphi 0, %s114
      %s117 = sphi 0, %s116
      %s131 = sphi 0, %s117
      %s135 = sphi 0, %s135
      %s137 = sphi 0, %s135
      %s138 = sphi 0, %s137
      %s152 = sphi 0, %s138
      %s156 = sphi 0, %s156
      %s158 = sphi 0, %s156
      %s159 = sphi 0, %s158
      %s173 = sphi 0, %s159
      %s177 = sphi 0, %s177
      %s179 = sphi 0, %s177
      %s180 = sphi 0, %s179
      %s194 = sphi 0, %s180
      %s198 = sphi 0, %s198
      %s200 = sphi 0, %s198
      %s201 = sphi 0, %s200
      %s215 = sphi 0, %s201
      %s219 = sphi 0, %s219
      %s221 = sphi 0, %s219
      %s222 = sphi 0, %s221
      %s236 = sphi 0, %s222
      %s240 = sphi 0, %s240
      %s242 = sphi 0, %s240
      %s243 = sphi 0, %s242
      %s257 = sphi 0, %s243
      %s261 = sphi 0, %s261
      %s263 = sphi 0, %s261
      %s264 = sphi 0, %s263
      %s278 = sphi 0, %s264
      %s282 = sphi 0, %s282
      %s284 = sphi 0, %s282
      %s285 = sphi 0, %s284
      %s299 = sphi 0, %s285
      %s303 = sphi 0, %s303
      %s305 = sphi 0, %s303
      %s306 = sphi 0, %s305
      %s320 = sphi 0, %s306
      %s324 = sphi 0, %s324
      %s326 = sphi 0, %s324
      %s327 = sphi 0, %s326
      %s341 = sphi 0, %s327
      %s345 = sphi 0, %s345
      %s347 = sphi 0, %s345
      %s348 = sphi 0, %s347
      %s362 = sphi 0, %s348
      %s366 = sphi 0, %s366
      %s368 = sphi 0, %s366
      %s369 = sphi 0, %s368
      %s383 = sphi 0, %s369
      %s387 = sphi 0, %s387
      %s389 = sphi 0, %s387
      %s390 = sphi 0, %s389
      %s404 = sphi 0, %s390
      %s408 = sphi 0, %s408
      %s410 = sphi 0, %s408
      %s411 = sphi 0, %s410
      %s425 = sphi 0, %s411
      %s429 = sphi 0, %s429
      %s431 = sphi 0, %s429
      %s432 = sphi 0, %s431
      %s446 = sphi 0, %s432
      %s450 = sphi 0, %s450
      %s452 = sphi 0, %s450
      %s453 = sphi 0, %s452
      %s467 = sphi 0, %s453
      %s471 = sphi 0, %s471
      %s473 = sphi 0, %s471
      %s474 = sphi 0, %s473
      %s488 = sphi 0, %s474
      %s492 = sphi 0, %s492
      %s494 = sphi 0, %s492
      %s495 = sphi 0, %s494
      %s509 = sphi 0, %s495
      %s513 = sphi 0, %s513
      %s515 = sphi 0, %s513
      %s516 = sphi 0, %s515
      %s530 = sphi 0, %s516
      %s534 = sphi 0, %s534
      %s536 = sphi 0, %s534
      %s537 = sphi 0, %s536
      %s551 = sphi 0, %s537
      %s557 = sphi 0, %s559
      %s560 = sphi 0, %s557
      %s561 = sphi 0, %s560
      %s577 = sphi 0, %s561
    $region4: #{forward.16} parent=1 // loop_header_branch
      %36 = sbr.rel (%p34) target = $region8
    $region5: #{forward.16} parent=1 // loop_body
      %s38 = ssub.s32 %s33, 1
      %s39 = ssub.s32 %s33, 2
      %s40 = sadd.s32 %s33, 1
      %s41 = ssub.s32 %s33, %s40
      %p42 = scmp.eq.s32.totalorder %s41, 0
      %s44 = sadd.s32 %s43, 1
      %s45 = scalar_select %p42, %s43, %s44
      %p48 = pneg %p42
      %p49 = scmp.eq.s32.totalorder %s33, 1
      %p50 = por %p48, %p49
      %p51 = scmp.ne.s32.totalorder %s43, %s46
      %p52 = scmp.eq.s32.totalorder %s33, 0
      %p53 = por %p51, %p52
      %p54 = scmp.ne.s32.totalorder %s43, %s46
      %p55 = scmp.eq.s32.totalorder %s38, 1
      %p56 = por %p54, %p55
      %p57 = scmp.ne.s32.totalorder %s46, %s47
      %p58 = scmp.eq.s32.totalorder %s38, 0
      %p59 = por %p57, %p58
      %p60 = scmp.ne.s32.totalorder %s46, %s47
      %p61 = scmp.eq.s32.totalorder %s39, 1
      %p62 = por %p60, %p61
      %p64 = scmp.ne.s32.totalorder %s47, %s63
      %p65 = scmp.eq.s32.totalorder %s39, 0
      %p66 = por %p64, %p65
      %s67 = ssub.s32 %s33, %s40
      %p68 = scmp.eq.s32.totalorder %s67, 0
      %s70 = sadd.s32 %s69, 1
      %s71 = scalar_select %p68, %s69, %s70
      %p74 = pneg %p68
      %p75 = scmp.eq.s32.totalorder %s33, 1
      %p76 = por %p74, %p75
      %p77 = scmp.ne.s32.totalorder %s69, %s72
      %p78 = scmp.eq.s32.totalorder %s33, 0
      %p79 = por %p77, %p78
      %p80 = scmp.ne.s32.totalorder %s69, %s72
      %p81 = scmp.eq.s32.totalorder %s38, 1
      %p82 = por %p80, %p81
      %p83 = scmp.ne.s32.totalorder %s72, %s73
      %p84 = scmp.eq.s32.totalorder %s38, 0
      %p85 = por %p83, %p84
      %p86 = scmp.ne.s32.totalorder %s72, %s73
      %p87 = scmp.eq.s32.totalorder %s39, 1
      %p88 = por %p86, %p87
      %p90 = scmp.ne.s32.totalorder %s73, %s89
      %p91 = scmp.eq.s32.totalorder %s39, 0
      %p92 = por %p90, %p91
      %s94 = sadd.s32 %s93, 1
      %p97 = scmp.eq.s32.totalorder %s33, 1
      %p98 = scmp.ne.s32.totalorder %s93, %s95
      %p99 = scmp.eq.s32.totalorder %s33, 0
      %p100 = por %p98, %p99
      %p101 = scmp.ne.s32.totalorder %s93, %s95
      %p102 = scmp.eq.s32.totalorder %s38, 1
      %p103 = por %p101, %p102
      %p104 = scmp.ne.s32.totalorder %s95, %s96
      %p105 = scmp.eq.s32.totalorder %s38, 0
      %p106 = por %p104, %p105
      %p107 = scmp.ne.s32.totalorder %s95, %s96
      %p108 = scmp.eq.s32.totalorder %s39, 1
      %p109 = por %p107, %p108
      %p111 = scmp.ne.s32.totalorder %s96, %s110
      %p112 = scmp.eq.s32.totalorder %s39, 0
      %p113 = por %p111, %p112
      %s115 = sadd.s32 %s114, 1
      %p118 = scmp.eq.s32.totalorder %s33, 1
      %p119 = scmp.ne.s32.totalorder %s114, %s116
      %p120 = scmp.eq.s32.totalorder %s33, 0
      %p121 = por %p119, %p120
      %p122 = scmp.ne.s32.totalorder %s114, %s116
      %p123 = scmp.eq.s32.totalorder %s38, 1
      %p124 = por %p122, %p123
      %p125 = scmp.ne.s32.totalorder %s116, %s117
      %p126 = scmp.eq.s32.totalorder %s38, 0
      %p127 = por %p125, %p126
      %p128 = scmp.ne.s32.totalorder %s116, %s117
      %p129 = scmp.eq.s32.totalorder %s39, 1
      %p130 = por %p128, %p129
      %p132 = scmp.ne.s32.totalorder %s117, %s131
      %p133 = scmp.eq.s32.totalorder %s39, 0
      %p134 = por %p132, %p133
      %s136 = sadd.s32 %s135, 1
      %p139 = scmp.eq.s32.totalorder %s33, 1
      %p140 = scmp.ne.s32.totalorder %s135, %s137
      %p141 = scmp.eq.s32.totalorder %s33, 0
      %p142 = por %p140, %p141
      %p143 = scmp.ne.s32.totalorder %s135, %s137
      %p144 = scmp.eq.s32.totalorder %s38, 1
      %p145 = por %p143, %p144
      %p146 = scmp.ne.s32.totalorder %s137, %s138
      %p147 = scmp.eq.s32.totalorder %s38, 0
      %p148 = por %p146, %p147
      %p149 = scmp.ne.s32.totalorder %s137, %s138
      %p150 = scmp.eq.s32.totalorder %s39, 1
      %p151 = por %p149, %p150
      %p153 = scmp.ne.s32.totalorder %s138, %s152
      %p154 = scmp.eq.s32.totalorder %s39, 0
      %p155 = por %p153, %p154
      %s157 = sadd.s32 %s156, 1
      %p160 = scmp.eq.s32.totalorder %s33, 1
      %p161 = scmp.ne.s32.totalorder %s156, %s158
      %p162 = scmp.eq.s32.totalorder %s33, 0
      %p163 = por %p161, %p162
      %p164 = scmp.ne.s32.totalorder %s156, %s158
      %p165 = scmp.eq.s32.totalorder %s38, 1
      %p166 = por %p164, %p165
      %p167 = scmp.ne.s32.totalorder %s158, %s159
      %p168 = scmp.eq.s32.totalorder %s38, 0
      %p169 = por %p167, %p168
      %p170 = scmp.ne.s32.totalorder %s158, %s159
      %p171 = scmp.eq.s32.totalorder %s39, 1
      %p172 = por %p170, %p171
      %p174 = scmp.ne.s32.totalorder %s159, %s173
      %p175 = scmp.eq.s32.totalorder %s39, 0
      %p176 = por %p174, %p175
      %s178 = sadd.s32 %s177, 1
      %p181 = scmp.eq.s32.totalorder %s33, 1
      %p182 = scmp.ne.s32.totalorder %s177, %s179
      %p183 = scmp.eq.s32.totalorder %s33, 0
      %p184 = por %p182, %p183
      %p185 = scmp.ne.s32.totalorder %s177, %s179
      %p186 = scmp.eq.s32.totalorder %s38, 1
      %p187 = por %p185, %p186
      %p188 = scmp.ne.s32.totalorder %s179, %s180
      %p189 = scmp.eq.s32.totalorder %s38, 0
      %p190 = por %p188, %p189
      %p191 = scmp.ne.s32.totalorder %s179, %s180
      %p192 = scmp.eq.s32.totalorder %s39, 1
      %p193 = por %p191, %p192
      %p195 = scmp.ne.s32.totalorder %s180, %s194
      %p196 = scmp.eq.s32.totalorder %s39, 0
      %p197 = por %p195, %p196
      %s199 = sadd.s32 %s198, 1
      %p202 = scmp.eq.s32.totalorder %s33, 1
      %p203 = scmp.ne.s32.totalorder %s198, %s200
      %p204 = scmp.eq.s32.totalorder %s33, 0
      %p205 = por %p203, %p204
      %p206 = scmp.ne.s32.totalorder %s198, %s200
      %p207 = scmp.eq.s32.totalorder %s38, 1
      %p208 = por %p206, %p207
      %p209 = scmp.ne.s32.totalorder %s200, %s201
      %p210 = scmp.eq.s32.totalorder %s38, 0
      %p211 = por %p209, %p210
      %p212 = scmp.ne.s32.totalorder %s200, %s201
      %p213 = scmp.eq.s32.totalorder %s39, 1
      %p214 = por %p212, %p213
      %p216 = scmp.ne.s32.totalorder %s201, %s215
      %p217 = scmp.eq.s32.totalorder %s39, 0
      %p218 = por %p216, %p217
      %s220 = sadd.s32 %s219, 1
      %p223 = scmp.eq.s32.totalorder %s33, 1
      %p224 = scmp.ne.s32.totalorder %s219, %s221
      %p225 = scmp.eq.s32.totalorder %s33, 0
      %p226 = por %p224, %p225
      %p227 = scmp.ne.s32.totalorder %s219, %s221
      %p228 = scmp.eq.s32.totalorder %s38, 1
      %p229 = por %p227, %p228
      %p230 = scmp.ne.s32.totalorder %s221, %s222
      %p231 = scmp.eq.s32.totalorder %s38, 0
      %p232 = por %p230, %p231
      %p233 = scmp.ne.s32.totalorder %s221, %s222
      %p234 = scmp.eq.s32.totalorder %s39, 1
      %p235 = por %p233, %p234
      %p237 = scmp.ne.s32.totalorder %s222, %s236
      %p238 = scmp.eq.s32.totalorder %s39, 0
      %p239 = por %p237, %p238
      %s241 = sadd.s32 %s240, 1
      %p244 = scmp.eq.s32.totalorder %s33, 1
      %p245 = scmp.ne.s32.totalorder %s240, %s242
      %p246 = scmp.eq.s32.totalorder %s33, 0
      %p247 = por %p245, %p246
      %p248 = scmp.ne.s32.totalorder %s240, %s242
      %p249 = scmp.eq.s32.totalorder %s38, 1
      %p250 = por %p248, %p249
      %p251 = scmp.ne.s32.totalorder %s242, %s243
      %p252 = scmp.eq.s32.totalorder %s38, 0
      %p253 = por %p251, %p252
      %p254 = scmp.ne.s32.totalorder %s242, %s243
      %p255 = scmp.eq.s32.totalorder %s39, 1
      %p256 = por %p254, %p255
      %p258 = scmp.ne.s32.totalorder %s243, %s257
      %p259 = scmp.eq.s32.totalorder %s39, 0
      %p260 = por %p258, %p259
      %s262 = sadd.s32 %s261, 1
      %p265 = scmp.eq.s32.totalorder %s33, 1
      %p266 = scmp.ne.s32.totalorder %s261, %s263
      %p267 = scmp.eq.s32.totalorder %s33, 0
      %p268 = por %p266, %p267
      %p269 = scmp.ne.s32.totalorder %s261, %s263
      %p270 = scmp.eq.s32.totalorder %s38, 1
      %p271 = por %p269, %p270
      %p272 = scmp.ne.s32.totalorder %s263, %s264
      %p273 = scmp.eq.s32.totalorder %s38, 0
      %p274 = por %p272, %p273
      %p275 = scmp.ne.s32.totalorder %s263, %s264
      %p276 = scmp.eq.s32.totalorder %s39, 1
      %p277 = por %p275, %p276
      %p279 = scmp.ne.s32.totalorder %s264, %s278
      %p280 = scmp.eq.s32.totalorder %s39, 0
      %p281 = por %p279, %p280
      %s283 = sadd.s32 %s282, 1
      %p286 = scmp.eq.s32.totalorder %s33, 1
      %p287 = scmp.ne.s32.totalorder %s282, %s284
      %p288 = scmp.eq.s32.totalorder %s33, 0
      %p289 = por %p287, %p288
      %p290 = scmp.ne.s32.totalorder %s282, %s284
      %p291 = scmp.eq.s32.totalorder %s38, 1
      %p292 = por %p290, %p291
      %p293 = scmp.ne.s32.totalorder %s284, %s285
      %p294 = scmp.eq.s32.totalorder %s38, 0
      %p295 = por %p293, %p294
      %p296 = scmp.ne.s32.totalorder %s284, %s285
      %p297 = scmp.eq.s32.totalorder %s39, 1
      %p298 = por %p296, %p297
      %p300 = scmp.ne.s32.totalorder %s285, %s299
      %p301 = scmp.eq.s32.totalorder %s39, 0
      %p302 = por %p300, %p301
      %s304 = sadd.s32 %s303, 1
      %p307 = scmp.eq.s32.totalorder %s33, 1
      %p308 = scmp.ne.s32.totalorder %s303, %s305
      %p309 = scmp.eq.s32.totalorder %s33, 0
      %p310 = por %p308, %p309
      %p311 = scmp.ne.s32.totalorder %s303, %s305
      %p312 = scmp.eq.s32.totalorder %s38, 1
      %p313 = por %p311, %p312
      %p314 = scmp.ne.s32.totalorder %s305, %s306
      %p315 = scmp.eq.s32.totalorder %s38, 0
      %p316 = por %p314, %p315
      %p317 = scmp.ne.s32.totalorder %s305, %s306
      %p318 = scmp.eq.s32.totalorder %s39, 1
      %p319 = por %p317, %p318
      %p321 = scmp.ne.s32.totalorder %s306, %s320
      %p322 = scmp.eq.s32.totalorder %s39, 0
      %p323 = por %p321, %p322
      %s325 = sadd.s32 %s324, 1
      %p328 = scmp.eq.s32.totalorder %s33, 1
      %p329 = scmp.ne.s32.totalorder %s324, %s326
      %p330 = scmp.eq.s32.totalorder %s33, 0
      %p331 = por %p329, %p330
      %p332 = scmp.ne.s32.totalorder %s324, %s326
      %p333 = scmp.eq.s32.totalorder %s38, 1
      %p334 = por %p332, %p333
      %p335 = scmp.ne.s32.totalorder %s326, %s327
      %p336 = scmp.eq.s32.totalorder %s38, 0
      %p337 = por %p335, %p336
      %p338 = scmp.ne.s32.totalorder %s326, %s327
      %p339 = scmp.eq.s32.totalorder %s39, 1
      %p340 = por %p338, %p339
      %p342 = scmp.ne.s32.totalorder %s327, %s341
      %p343 = scmp.eq.s32.totalorder %s39, 0
      %p344 = por %p342, %p343
      %s346 = sadd.s32 %s345, 1
      %p349 = scmp.eq.s32.totalorder %s33, 1
      %p350 = scmp.ne.s32.totalorder %s345, %s347
      %p351 = scmp.eq.s32.totalorder %s33, 0
      %p352 = por %p350, %p351
      %p353 = scmp.ne.s32.totalorder %s345, %s347
      %p354 = scmp.eq.s32.totalorder %s38, 1
      %p355 = por %p353, %p354
      %p356 = scmp.ne.s32.totalorder %s347, %s348
      %p357 = scmp.eq.s32.totalorder %s38, 0
      %p358 = por %p356, %p357
      %p359 = scmp.ne.s32.totalorder %s347, %s348
      %p360 = scmp.eq.s32.totalorder %s39, 1
      %p361 = por %p359, %p360
      %p363 = scmp.ne.s32.totalorder %s348, %s362
      %p364 = scmp.eq.s32.totalorder %s39, 0
      %p365 = por %p363, %p364
      %s367 = sadd.s32 %s366, 1
      %p370 = scmp.eq.s32.totalorder %s33, 1
      %p371 = scmp.ne.s32.totalorder %s366, %s368
      %p372 = scmp.eq.s32.totalorder %s33, 0
      %p373 = por %p371, %p372
      %p374 = scmp.ne.s32.totalorder %s366, %s368
      %p375 = scmp.eq.s32.totalorder %s38, 1
      %p376 = por %p374, %p375
      %p377 = scmp.ne.s32.totalorder %s368, %s369
      %p378 = scmp.eq.s32.totalorder %s38, 0
      %p379 = por %p377, %p378
      %p380 = scmp.ne.s32.totalorder %s368, %s369
      %p381 = scmp.eq.s32.totalorder %s39, 1
      %p382 = por %p380, %p381
      %p384 = scmp.ne.s32.totalorder %s369, %s383
      %p385 = scmp.eq.s32.totalorder %s39, 0
      %p386 = por %p384, %p385
      %s388 = sadd.s32 %s387, 1
      %p391 = scmp.eq.s32.totalorder %s33, 1
      %p392 = scmp.ne.s32.totalorder %s387, %s389
      %p393 = scmp.eq.s32.totalorder %s33, 0
      %p394 = por %p392, %p393
      %p395 = scmp.ne.s32.totalorder %s387, %s389
      %p396 = scmp.eq.s32.totalorder %s38, 1
      %p397 = por %p395, %p396
      %p398 = scmp.ne.s32.totalorder %s389, %s390
      %p399 = scmp.eq.s32.totalorder %s38, 0
      %p400 = por %p398, %p399
      %p401 = scmp.ne.s32.totalorder %s389, %s390
      %p402 = scmp.eq.s32.totalorder %s39, 1
      %p403 = por %p401, %p402
      %p405 = scmp.ne.s32.totalorder %s390, %s404
      %p406 = scmp.eq.s32.totalorder %s39, 0
      %p407 = por %p405, %p406
      %s409 = sadd.s32 %s408, 1
      %p412 = scmp.eq.s32.totalorder %s33, 1
      %p413 = scmp.ne.s32.totalorder %s408, %s410
      %p414 = scmp.eq.s32.totalorder %s33, 0
      %p415 = por %p413, %p414
      %p416 = scmp.ne.s32.totalorder %s408, %s410
      %p417 = scmp.eq.s32.totalorder %s38, 1
      %p418 = por %p416, %p417
      %p419 = scmp.ne.s32.totalorder %s410, %s411
      %p420 = scmp.eq.s32.totalorder %s38, 0
      %p421 = por %p419, %p420
      %p422 = scmp.ne.s32.totalorder %s410, %s411
      %p423 = scmp.eq.s32.totalorder %s39, 1
      %p424 = por %p422, %p423
      %p426 = scmp.ne.s32.totalorder %s411, %s425
      %p427 = scmp.eq.s32.totalorder %s39, 0
      %p428 = por %p426, %p427
      %s430 = sadd.s32 %s429, 1
      %p433 = scmp.eq.s32.totalorder %s33, 1
      %p434 = scmp.ne.s32.totalorder %s429, %s431
      %p435 = scmp.eq.s32.totalorder %s33, 0
      %p436 = por %p434, %p435
      %p437 = scmp.ne.s32.totalorder %s429, %s431
      %p438 = scmp.eq.s32.totalorder %s38, 1
      %p439 = por %p437, %p438
      %p440 = scmp.ne.s32.totalorder %s431, %s432
      %p441 = scmp.eq.s32.totalorder %s38, 0
      %p442 = por %p440, %p441
      %p443 = scmp.ne.s32.totalorder %s431, %s432
      %p444 = scmp.eq.s32.totalorder %s39, 1
      %p445 = por %p443, %p444
      %p447 = scmp.ne.s32.totalorder %s432, %s446
      %p448 = scmp.eq.s32.totalorder %s39, 0
      %p449 = por %p447, %p448
      %s451 = sadd.s32 %s450, 1
      %p454 = scmp.eq.s32.totalorder %s33, 1
      %p455 = scmp.ne.s32.totalorder %s450, %s452
      %p456 = scmp.eq.s32.totalorder %s33, 0
      %p457 = por %p455, %p456
      %p458 = scmp.ne.s32.totalorder %s450, %s452
      %p459 = scmp.eq.s32.totalorder %s38, 1
      %p460 = por %p458, %p459
      %p461 = scmp.ne.s32.totalorder %s452, %s453
      %p462 = scmp.eq.s32.totalorder %s38, 0
      %p463 = por %p461, %p462
      %p464 = scmp.ne.s32.totalorder %s452, %s453
      %p465 = scmp.eq.s32.totalorder %s39, 1
      %p466 = por %p464, %p465
      %p468 = scmp.ne.s32.totalorder %s453, %s467
      %p469 = scmp.eq.s32.totalorder %s39, 0
      %p470 = por %p468, %p469
      %s472 = sadd.s32 %s471, 1
      %p475 = scmp.eq.s32.totalorder %s33, 1
      %p476 = scmp.ne.s32.totalorder %s471, %s473
      %p477 = scmp.eq.s32.totalorder %s33, 0
      %p478 = por %p476, %p477
      %p479 = scmp.ne.s32.totalorder %s471, %s473
      %p480 = scmp.eq.s32.totalorder %s38, 1
      %p481 = por %p479, %p480
      %p482 = scmp.ne.s32.totalorder %s473, %s474
      %p483 = scmp.eq.s32.totalorder %s38, 0
      %p484 = por %p482, %p483
      %p485 = scmp.ne.s32.totalorder %s473, %s474
      %p486 = scmp.eq.s32.totalorder %s39, 1
      %p487 = por %p485, %p486
      %p489 = scmp.ne.s32.totalorder %s474, %s488
      %p490 = scmp.eq.s32.totalorder %s39, 0
      %p491 = por %p489, %p490
      %s493 = sadd.s32 %s492, 1
      %p496 = scmp.eq.s32.totalorder %s33, 1
      %p497 = scmp.ne.s32.totalorder %s492, %s494
      %p498 = scmp.eq.s32.totalorder %s33, 0
      %p499 = por %p497, %p498
      %p500 = scmp.ne.s32.totalorder %s492, %s494
      %p501 = scmp.eq.s32.totalorder %s38, 1
      %p502 = por %p500, %p501
      %p503 = scmp.ne.s32.totalorder %s494, %s495
      %p504 = scmp.eq.s32.totalorder %s38, 0
      %p505 = por %p503, %p504
      %p506 = scmp.ne.s32.totalorder %s494, %s495
      %p507 = scmp.eq.s32.totalorder %s39, 1
      %p508 = por %p506, %p507
      %p510 = scmp.ne.s32.totalorder %s495, %s509
      %p511 = scmp.eq.s32.totalorder %s39, 0
      %p512 = por %p510, %p511
      %s514 = sadd.s32 %s513, 1
      %p517 = scmp.eq.s32.totalorder %s33, 1
      %p518 = scmp.ne.s32.totalorder %s513, %s515
      %p519 = scmp.eq.s32.totalorder %s33, 0
      %p520 = por %p518, %p519
      %p521 = scmp.ne.s32.totalorder %s513, %s515
      %p522 = scmp.eq.s32.totalorder %s38, 1
      %p523 = por %p521, %p522
      %p524 = scmp.ne.s32.totalorder %s515, %s516
      %p525 = scmp.eq.s32.totalorder %s38, 0
      %p526 = por %p524, %p525
      %p527 = scmp.ne.s32.totalorder %s515, %s516
      %p528 = scmp.eq.s32.totalorder %s39, 1
      %p529 = por %p527, %p528
      %p531 = scmp.ne.s32.totalorder %s516, %s530
      %p532 = scmp.eq.s32.totalorder %s39, 0
      %p533 = por %p531, %p532
      %s535 = sadd.s32 %s534, 1
      %p538 = scmp.eq.s32.totalorder %s33, 1
      %p539 = scmp.ne.s32.totalorder %s534, %s536
      %p540 = scmp.eq.s32.totalorder %s33, 0
      %p541 = por %p539, %p540
      %p542 = scmp.ne.s32.totalorder %s534, %s536
      %p543 = scmp.eq.s32.totalorder %s38, 1
      %p544 = por %p542, %p543
      %p545 = scmp.ne.s32.totalorder %s536, %s537
      %p546 = scmp.eq.s32.totalorder %s38, 0
      %p547 = por %p545, %p546
      %p548 = scmp.ne.s32.totalorder %s536, %s537
      %p549 = scmp.eq.s32.totalorder %s39, 1
      %p550 = por %p548, %p549
      %p552 = scmp.ne.s32.totalorder %s537, %s551
      %p553 = scmp.eq.s32.totalorder %s39, 0
      %p554 = por %p552, %p553
      %s555 = ssub.s32 %s33, %s40
      %p556 = scmp.eq.s32.totalorder %s555, 0
      %s558 = sadd.s32 %s557, 1
      %s559 = scalar_select %p556, %s557, %s558
      %p562 = pneg %p556
      %p563 = scmp.eq.s32.totalorder %s33, 1
      %p564 = por %p562, %p563
      %p565 = scmp.ne.s32.totalorder %s557, %s560
      %p566 = scmp.eq.s32.totalorder %s33, 0
      %p567 = por %p565, %p566
      %p568 = scmp.ne.s32.totalorder %s557, %s560
      %p569 = scmp.eq.s32.totalorder %s38, 1
      %p570 = por %p568, %p569
      %p571 = scmp.ne.s32.totalorder %s560, %s561
      %p572 = scmp.eq.s32.totalorder %s38, 0
      %p573 = por %p571, %p572
      %p574 = scmp.ne.s32.totalorder %s560, %s561
      %p575 = scmp.eq.s32.totalorder %s39, 1
      %p576 = por %p574, %p575
      %p578 = scmp.ne.s32.totalorder %s561, %s577
      %p579 = scmp.eq.s32.totalorder %s39, 0
      %p580 = por %p578, %p579
      %p581 = scmp.le.s32.totalorder 1, %s33
      %p582 = scmp.lt.s32.totalorder %s33, 3
      %p583 = pnand %p581, %p582
      %p584 = pneg %p583
      // Predicated region
      $region9: #{forward.16} parent=5 // pred_check
        _
      $region10: #{forward.16} parent=5 // pred_check_branch
        %586 = sbr.rel (%p583) target = $region12
      $region11: #{forward.16} parent=5 // pred_region
        %s587 = ssub.s32 %s33, 1
        // Predicated region
        $region13: #{forward.16} parent=11 // pred_check
          %p588 = pneg %p106
        $region14: #{forward.16} parent=11 // pred_check_branch
          %590 = sbr.rel (%p588) target = $region16
        $region15: #{forward.16} parent=11 // pred_region
          _
        $region16: #{forward.16} parent=11 // pred_fallthru
          _
        // Predicated region
        $region17: #{forward.16} parent=11 // pred_check
          %p591 = pneg %p127
        $region18: #{forward.16} parent=11 // pred_check_branch
          %593 = sbr.rel (%p591) target = $region20
        $region19: #{forward.16} parent=11 // pred_region
          _
        $region20: #{forward.16} parent=11 // pred_fallthru
          _
        // Predicated region
        $region21: #{forward.16} parent=11 // pred_check
          %p594 = pneg %p148
        $region22: #{forward.16} parent=11 // pred_check_branch
          %596 = sbr.rel (%p594) target = $region24
        $region23: #{forward.16} parent=11 // pred_region
          _
        $region24: #{forward.16} parent=11 // pred_fallthru
          _
        // Predicated region
        $region25: #{forward.16} parent=11 // pred_check
          %p597 = pneg %p169
        $region26: #{forward.16} parent=11 // pred_check_branch
          %599 = sbr.rel (%p597) target = $region28
        $region27: #{forward.16} parent=11 // pred_region
          _
        $region28: #{forward.16} parent=11 // pred_fallthru
          _
        // Predicated region
        $region29: #{forward.16} parent=11 // pred_check
          %p600 = pneg %p190
        $region30: #{forward.16} parent=11 // pred_check_branch
          %602 = sbr.rel (%p600) target = $region32
        $region31: #{forward.16} parent=11 // pred_region
          _
        $region32: #{forward.16} parent=11 // pred_fallthru
          _
        // Predicated region
        $region33: #{forward.16} parent=11 // pred_check
          %p603 = pneg %p211
        $region34: #{forward.16} parent=11 // pred_check_branch
          %605 = sbr.rel (%p603) target = $region36
        $region35: #{forward.16} parent=11 // pred_region
          _
        $region36: #{forward.16} parent=11 // pred_fallthru
          _
        // Predicated region
        $region37: #{forward.16} parent=11 // pred_check
          %p606 = pneg %p232
        $region38: #{forward.16} parent=11 // pred_check_branch
          %608 = sbr.rel (%p606) target = $region40
        $region39: #{forward.16} parent=11 // pred_region
          _
        $region40: #{forward.16} parent=11 // pred_fallthru
          _
        // Predicated region
        $region41: #{forward.16} parent=11 // pred_check
          %p609 = pneg %p253
        $region42: #{forward.16} parent=11 // pred_check_branch
          %611 = sbr.rel (%p609) target = $region44
        $region43: #{forward.16} parent=11 // pred_region
          _
        $region44: #{forward.16} parent=11 // pred_fallthru
          _
        // Predicated region
        $region45: #{forward.16} parent=11 // pred_check
          %p612 = pneg %p274
        $region46: #{forward.16} parent=11 // pred_check_branch
          %614 = sbr.rel (%p612) target = $region48
        $region47: #{forward.16} parent=11 // pred_region
          _
        $region48: #{forward.16} parent=11 // pred_fallthru
          _
        // Predicated region
        $region49: #{forward.16} parent=11 // pred_check
          %p615 = pneg %p295
        $region50: #{forward.16} parent=11 // pred_check_branch
          %617 = sbr.rel (%p615) target = $region52
        $region51: #{forward.16} parent=11 // pred_region
          _
        $region52: #{forward.16} parent=11 // pred_fallthru
          _
        // Predicated region
        $region53: #{forward.16} parent=11 // pred_check
          %p618 = pneg %p316
        $region54: #{forward.16} parent=11 // pred_check_branch
          %620 = sbr.rel (%p618) target = $region56
        $region55: #{forward.16} parent=11 // pred_region
          _
        $region56: #{forward.16} parent=11 // pred_fallthru
          _
        // Predicated region
        $region57: #{forward.16} parent=11 // pred_check
          %p621 = pneg %p337
        $region58: #{forward.16} parent=11 // pred_check_branch
          %623 = sbr.rel (%p621) target = $region60
        $region59: #{forward.16} parent=11 // pred_region
          _
        $region60: #{forward.16} parent=11 // pred_fallthru
          _
        // Predicated region
        $region61: #{forward.16} parent=11 // pred_check
          %p624 = pneg %p358
        $region62: #{forward.16} parent=11 // pred_check_branch
          %626 = sbr.rel (%p624) target = $region64
        $region63: #{forward.16} parent=11 // pred_region
          _
        $region64: #{forward.16} parent=11 // pred_fallthru
          _
        // Predicated region
        $region65: #{forward.16} parent=11 // pred_check
          %p627 = pneg %p379
        $region66: #{forward.16} parent=11 // pred_check_branch
          %629 = sbr.rel (%p627) target = $region68
        $region67: #{forward.16} parent=11 // pred_region
          _
        $region68: #{forward.16} parent=11 // pred_fallthru
          _
        // Predicated region
        $region69: #{forward.16} parent=11 // pred_check
          %p630 = pneg %p400
        $region70: #{forward.16} parent=11 // pred_check_branch
          %632 = sbr.rel (%p630) target = $region72
        $region71: #{forward.16} parent=11 // pred_region
          _
        $region72: #{forward.16} parent=11 // pred_fallthru
          _
        // Predicated region
        $region73: #{forward.16} parent=11 // pred_check
          %p633 = pneg %p421
        $region74: #{forward.16} parent=11 // pred_check_branch
          %635 = sbr.rel (%p633) target = $region76
        $region75: #{forward.16} parent=11 // pred_region
          %637 = vsyncadd [#allocation3], 0
          %s639 = sshll.u32 %s17, 4
          %s640 = int_to_ptr.hbm [resolvable:$true] %s639
          %s641 = sshll.u32 [#allocation2], 4
          %s642 = int_to_ptr.vmem [resolvable:$true] %s641
          %644 = dma.hbm_to_vmem [thread:$0]  %s640, 16, %s642, [#allocation3]
        $region76: #{forward.16} parent=11 // pred_fallthru
          _
        // Predicated region
        $region77: #{forward.16} parent=11 // pred_check
          %p645 = pneg %p442
        $region78: #{forward.16} parent=11 // pred_check_branch
          %647 = sbr.rel (%p645) target = $region80
        $region79: #{forward.16} parent=11 // pred_region
          _
        $region80: #{forward.16} parent=11 // pred_fallthru
          _
        // Predicated region
        $region81: #{forward.16} parent=11 // pred_check
          %p648 = pneg %p463
        $region82: #{forward.16} parent=11 // pred_check_branch
          %650 = sbr.rel (%p648) target = $region84
        $region83: #{forward.16} parent=11 // pred_region
          %652 = vsyncadd [#allocation5], 0
          %s654 = sshll.u32 %s19, 4
          %s655 = int_to_ptr.hbm [resolvable:$true] %s654
          %s656 = sshll.u32 [#allocation4], 4
          %s657 = int_to_ptr.vmem [resolvable:$true] %s656
          %659 = dma.hbm_to_vmem [thread:$0]  %s655, 16, %s657, [#allocation5]
        $region84: #{forward.16} parent=11 // pred_fallthru
          _
        // Predicated region
        $region85: #{forward.16} parent=11 // pred_check
          %p660 = pneg %p484
        $region86: #{forward.16} parent=11 // pred_check_branch
          %662 = sbr.rel (%p660) target = $region88
        $region87: #{forward.16} parent=11 // pred_region
          _
        $region88: #{forward.16} parent=11 // pred_fallthru
          _
        // Predicated region
        $region89: #{forward.16} parent=11 // pred_check
          %p663 = pneg %p505
        $region90: #{forward.16} parent=11 // pred_check_branch
          %665 = sbr.rel (%p663) target = $region92
        $region91: #{forward.16} parent=11 // pred_region
          %667 = vsyncadd [#allocation5], 0
          %s669 = sshll.u32 %s21, 4
          %s670 = int_to_ptr.hbm [resolvable:$true] %s669
          %s671 = sshll.u32 [#allocation6], 4
          %s672 = int_to_ptr.vmem [resolvable:$true] %s671
          %674 = dma.hbm_to_vmem [thread:$0]  %s670, 16, %s672, [#allocation5]
        $region92: #{forward.16} parent=11 // pred_fallthru
          _
        // Predicated region
        $region93: #{forward.16} parent=11 // pred_check
          %p675 = pneg %p526
        $region94: #{forward.16} parent=11 // pred_check_branch
          %677 = sbr.rel (%p675) target = $region96
        $region95: #{forward.16} parent=11 // pred_region
          %679 = vsyncadd [#allocation8], 0
          %s681 = sshll.u32 %s22, 4
          %s682 = int_to_ptr.hbm [resolvable:$true] %s681
          %s683 = sshll.u32 [#allocation7], 4
          %s684 = int_to_ptr.vmem [resolvable:$true] %s683
          %686 = dma.hbm_to_vmem [thread:$0]  %s682, 16, %s684, [#allocation8]
        $region96: #{forward.16} parent=11 // pred_fallthru
          _
        // Predicated region
        $region97: #{forward.16} parent=11 // pred_check
          %p687 = pneg %p547
        $region98: #{forward.16} parent=11 // pred_check_branch
          %689 = sbr.rel (%p687) target = $region100
        $region99: #{forward.16} parent=11 // pred_region
          %691 = vsyncadd [#allocation8], 0
          %s693 = sshll.u32 %s23, 4
          %s694 = int_to_ptr.hbm [resolvable:$true] %s693
          %s695 = sshll.u32 [#allocation9], 4
          %s696 = int_to_ptr.vmem [resolvable:$true] %s695
          %698 = dma.hbm_to_vmem [thread:$0]  %s694, 16, %s696, [#allocation8]
        $region100: #{forward.16} parent=11 // pred_fallthru
          _
      $region12: #{forward.16} parent=5 // pred_fallthru
        _
      %p699 = scmp.lt.s32.totalorder %s33, 2
      // Predicated region
      $region101: #{forward.16} parent=5 // pred_check
        %p700 = pneg %p699
      $region102: #{forward.16} parent=5 // pred_check_branch
        %702 = sbr.rel (%p700) target = $region104
      $region103: #{forward.16} parent=5 // pred_region
        // Predicated region
        $region105: #{forward.16} parent=103 // pred_check
          %p703 = pneg %p53
        $region106: #{forward.16} parent=103 // pred_check_branch
          %705 = sbr.rel (%p703) target = $region108
        $region107: #{forward.16} parent=103 // pred_region
          %p706 = scmp.lt.s32.totalorder %s33, 1
          %s707 = scalar_select %p706, %s33, 1
          %s708 = smul.addr %s707, 2
          %s709 = smul.addr %s708, 8
          %s710 = scalar_lea.vmem %s0, %s709
        $region108: #{forward.16} parent=103 // pred_fallthru
          _
        // Predicated region
        $region109: #{forward.16} parent=103 // pred_check
          %p711 = pneg %p79
        $region110: #{forward.16} parent=103 // pred_check_branch
          %713 = sbr.rel (%p711) target = $region112
        $region111: #{forward.16} parent=103 // pred_region
          %p714 = scmp.lt.s32.totalorder %s33, 1
          %s715 = scalar_select %p714, %s33, 1
          %s716 = smul.addr %s715, 2
          %s717 = smul.addr %s716, 8
          %s718 = scalar_lea.vmem %s1, %s717
        $region112: #{forward.16} parent=103 // pred_fallthru
          _
      $region104: #{forward.16} parent=5 // pred_fallthru
        _
      %p719 = scmp.le.s32.totalorder 1, %s33
      %p720 = scmp.lt.s32.totalorder %s33, 3
      %p721 = pnand %p719, %p720
      %p722 = pneg %p721
      // Predicated region
      $region113: #{forward.16} parent=5 // pred_check
        _
      $region114: #{forward.16} parent=5 // pred_check_branch
        %724 = sbr.rel (%p721) target = $region116
      $region115: #{forward.16} parent=5 // pred_region
        %s725 = ssub.s32 %s33, 1
        // Predicated region
        $region117: #{forward.16} parent=115 // pred_check
          %p726 = pneg %p421
        $region118: #{forward.16} parent=115 // pred_check_branch
          %728 = sbr.rel (%p726) target = $region120
        $region119: #{forward.16} parent=115 // pred_region
          %730 = dma.done [#allocation3], 16
        $region120: #{forward.16} parent=115 // pred_fallthru
          _
        // Predicated region
        $region121: #{forward.16} parent=115 // pred_check
          %p731 = pneg %p463
        $region122: #{forward.16} parent=115 // pred_check_branch
          %733 = sbr.rel (%p731) target = $region124
        $region123: #{forward.16} parent=115 // pred_region
          %735 = dma.done [#allocation5], 16
        $region124: #{forward.16} parent=115 // pred_fallthru
          _
        // Predicated region
        $region125: #{forward.16} parent=115 // pred_check
          %p736 = pneg %p505
        $region126: #{forward.16} parent=115 // pred_check_branch
          %738 = sbr.rel (%p736) target = $region128
        $region127: #{forward.16} parent=115 // pred_region
          %740 = dma.done [#allocation5], 16
        $region128: #{forward.16} parent=115 // pred_fallthru
          _
        // Predicated region
        $region129: #{forward.16} parent=115 // pred_check
          %p741 = pneg %p526
        $region130: #{forward.16} parent=115 // pred_check_branch
          %743 = sbr.rel (%p741) target = $region132
        $region131: #{forward.16} parent=115 // pred_region
          %745 = dma.done [#allocation8], 16
        $region132: #{forward.16} parent=115 // pred_fallthru
          _
        // Predicated region
        $region133: #{forward.16} parent=115 // pred_check
          %p746 = pneg %p547
        $region134: #{forward.16} parent=115 // pred_check_branch
          %748 = sbr.rel (%p746) target = $region136
        $region135: #{forward.16} parent=115 // pred_region
          %750 = dma.done [#allocation8], 16
        $region136: #{forward.16} parent=115 // pred_fallthru
          _
        %p751 = scmp.lt.s32.totalorder %s38, 1
        %s752 = scalar_select %p751, %s38, 1
        %s753 = smul.addr %s752, 2
        %s754 = smul.addr %s753, 8
        %s755 = scalar_lea.vmem %s0, %s754
        %p756 = pneg %p59
        %p757 = pneg %p56
        %p758 = scmp.lt.s32.totalorder %s38, 1
        %s759 = scalar_select %p758, %s38, 1
        %s760 = smul.addr %s759, 2
        %s761 = smul.addr %s760, 8
        %s762 = scalar_lea.vmem %s1, %s761
        %p763 = pneg %p85
        %p764 = pneg %p82
        %p765 = pneg %p106
        %p766 = pneg %p103
        %p767 = pneg %p127
        %p768 = pneg %p124
        %p769 = pneg %p148
        %p770 = pneg %p145
        %p771 = pneg %p169
        %p772 = pneg %p166
        %p773 = pneg %p190
        %p774 = pneg %p187
        %p775 = pneg %p211
        %p776 = pneg %p208
        %p777 = pneg %p232
        %p778 = pneg %p229
        %p779 = pneg %p253
        %p780 = pneg %p250
        %p781 = pneg %p274
        %p782 = pneg %p271
        %p783 = pneg %p295
        %p784 = pneg %p292
        %p785 = pneg %p316
        %p786 = pneg %p313
        %p787 = pneg %p337
        %p788 = pneg %p334
        %p789 = pneg %p358
        %p790 = pneg %p355
        %p791 = pneg %p379
        %p792 = pneg %p376
        %p793 = pneg %p400
        %p794 = pneg %p397
        %p795 = pneg %p421
        %p796 = pneg %p418
        %p797 = pneg %p442
        %p798 = pneg %p439
        %p799 = pneg %p463
        %p800 = pneg %p460
        %p801 = pneg %p484
        %p802 = pneg %p481
        %p803 = pneg %p505
        %p804 = pneg %p502
        %p805 = pneg %p526
        %p806 = pneg %p523
        %p807 = pneg %p547
        %p808 = pneg %p544
        %p809 = pneg %p573
        %p810 = pneg %p570
        %p811 = scmp.lt.s32.totalorder %s38, 1
        %s812 = scalar_select %p811, %s38, 1
        %s813 = smul.addr %s812, 2
        %s814 = smul.addr %s813, 8
        %s815 = scalar_lea.vmem %s24, %s814
        %p816 = scmp.lt.s32.totalorder %s38, 1
        %s817 = scalar_select %p816, %s38, 1
        %s818 = smul.addr %s817, 2
        %s819 = smul.addr %s818, 8
        %s820 = scalar_lea.vmem %s0, %s819
        %p821 = scmp.lt.s32.totalorder %s38, 1
        %s822 = scalar_select %p821, %s38, 1
        %s823 = smul.addr %s822, 2
        %s824 = smul.addr %s823, 8
        %s825 = scalar_lea.vmem %s1, %s824
        %p826 = scmp.lt.s32.totalorder %s38, 1
        %s827 = scalar_select %p826, %s38, 1
        %s828 = smul.addr %s827, 2
        %s829 = smul.addr %s828, 8
        %s830 = scalar_lea.vmem %s24, %s829
        %v832 = vld [vmem:[%s820] sm:$0xff]
        %v833 = vld [vmem:[%s820 + $0x8] sm:$0xff]
        %v834 = vld [vmem:[%s825] sm:$0xff]
        %v835 = vld [vmem:[%s825 + $0x8] sm:$0xff]
        %v836 = vld [vmem:[%s4] sm:$0xff]
        %v837 = vld [vmem:[%s4 + $0x8] sm:$0xff]
        %v838 = vld [vmem:[%s4 + $0x10] sm:$0xff]
        %v839 = vld [vmem:[%s4 + $0x18] sm:$0xff]
        %v840 = vpack.c.bf16 %v833, %v832
        %v841 = vpack.c.bf16 %v837, %v836
        %v842 = vpack.c.bf16 %v839, %v838
        %v843 = vld [vmem:[%s5] sm:$0x1]
        %v845 = vperm.slane %v843, 0
        %vm847 = vcmask 261120
        %v849 = vsel %vm847, %v840, 0
        %851 = vmatpush.bf16.msra.mxu0 0
        %852 = vmatpush.bf16.msra.mxu0 0
        %853 = vmatpush.bf16.msra.mxu0 0
        %854 = vmatpush.bf16.msra.mxu0 0
        %855 = vmatpush.bf16.msra.mxu0 0
        %856 = vmatpush.bf16.msra.mxu0 0
        %857 = vmatpush.bf16.msra.mxu0 %v842
        %858 = vmatpush.bf16.msra.mxu0 %v841
        %859 = vmatmul.bf16.gmra.mxu0 %v849
        %v860 = vpop.f32.mrf.mxu0
        %v861 = vadd.f32 %v845, %v860
        %v862 = vpop.f32.mrf.mxu0
        %v863 = vadd.f32 %v845, %v862
        %864 = vdwg.mxu0
        %v865 = vld [vmem:[%s2] sm:$0xff]
        %v866 = vld [vmem:[%s2 + $0x8] sm:$0xff]
        %v867 = vld [vmem:[%s2 + $0x10] sm:$0xff]
        %v868 = vld [vmem:[%s2 + $0x18] sm:$0xff]
        %v869 = vld [vmem:[%s2 + $0x20] sm:$0xff]
        %v870 = vld [vmem:[%s2 + $0x28] sm:$0xff]
        %v871 = vld [vmem:[%s2 + $0x30] sm:$0xff]
        %v872 = vld [vmem:[%s2 + $0x38] sm:$0xff]
        %875 = vrot.lane.b32.xlu0 %v861, 120
        %v876 = vpop.permute.xlu0 %875
        %877 = vrot.lane.b32.xlu0 %v863, 120
        %v878 = vpop.permute.xlu0 %877
        %881 = vrot.lane.b32.xlu0 %v861, 112
        %v882 = vpop.permute.xlu0 %881
        %883 = vrot.lane.b32.xlu0 %v863, 112
        %v884 = vpop.permute.xlu0 %883
        %887 = vrot.lane.b32.xlu0 %v861, 104
        %v888 = vpop.permute.xlu0 %887
        %889 = vrot.lane.b32.xlu0 %v863, 104
        %v890 = vpop.permute.xlu0 %889
        %v893 = vpack.c.bf16 %v863, %v861
        %v894 = vpack.c.bf16 %v878, %v876
        %v895 = vpack.c.bf16 %v884, %v882
        %v896 = vpack.c.bf16 %v890, %v888
        %901 = vrot.lane.b32.xlu0 %v893, 96
        %v902 = vpop.permute.xlu0 %901
        %903 = vrot.lane.b32.xlu0 %v894, 96
        %v904 = vpop.permute.xlu0 %903
        %905 = vrot.lane.b32.xlu0 %v895, 96
        %v906 = vpop.permute.xlu0 %905
        %907 = vrot.lane.b32.xlu0 %v896, 96
        %v908 = vpop.permute.xlu0 %907
        %vm909 = vcmask 64512
        %v911 = vsel %vm909, %v893, 0
        %v914 = vsel %vm909, %v894, 0
        %v917 = vsel %vm909, %v895, 0
        %v920 = vsel %vm909, %v896, 0
        %v923 = vsel %vm909, %v902, 0
        %v926 = vsel %vm909, %v904, 0
        %v929 = vsel %vm909, %v906, 0
        %v932 = vsel %vm909, %v908, 0
        %934 = vmatpush.bf16.xpose.msra.mxu0 0
        %935 = vmatpush.bf16.xpose.msra.mxu0 0
        %936 = vmatpush.bf16.xpose.msra.mxu0 0
        %937 = vmatpush.bf16.xpose.msra.mxu0 0
        %938 = vmatpush.bf16.xpose.msra.mxu0 %v932
        %939 = vmatpush.bf16.xpose.msra.mxu0 %v929
        %940 = vmatpush.bf16.xpose.msra.mxu0 %v926
        %941 = vmatpush.bf16.xpose.msra.mxu0 %v923
        %942 = vmatmul.bf16.gmra.mxu0 %v911
        %v943 = vpop.f32.mrf.mxu0
        %v944 = vadd.f32 0.0, %v943
        %v945 = vpop.f32.mrf.mxu0
        %v946 = vadd.f32 0.0, %v945
        %947 = vmatmul.bf16.gmra.mxu0 %v914
        %v948 = vpop.f32.mrf.mxu0
        %v949 = vadd.f32 0.0, %v948
        %v950 = vpop.f32.mrf.mxu0
        %v951 = vadd.f32 0.0, %v950
        %952 = vmatmul.bf16.gmra.mxu0 %v917
        %v953 = vpop.f32.mrf.mxu0
        %v954 = vadd.f32 0.0, %v953
        %v955 = vpop.f32.mrf.mxu0
        %v956 = vadd.f32 0.0, %v955
        %957 = vmatmul.bf16.gmra.mxu0 %v920
        %v958 = vpop.f32.mrf.mxu0
        %v959 = vadd.f32 0.0, %v958
        %v960 = vpop.f32.mrf.mxu0
        %v961 = vadd.f32 0.0, %v960
        %962 = vdwg.mxu0
        %v963 = vmul.f32 %v944, 0.35355338
        %v964 = vmul.f32 %v946, 0.35355338
        %v965 = vmul.f32 %v949, 0.35355338
        %v966 = vmul.f32 %v951, 0.35355338
        %v967 = vmul.f32 %v954, 0.35355338
        %v968 = vmul.f32 %v956, 0.35355338
        %v969 = vmul.f32 %v959, 0.35355338
        %v970 = vmul.f32 %v961, 0.35355338
        %v971 = vadd.f32 %v963, %v865
        %v972 = vadd.f32 %v964, %v866
        %v973 = vadd.f32 %v965, %v867
        %v974 = vadd.f32 %v966, %v868
        %v975 = vadd.f32 %v967, %v869
        %v976 = vadd.f32 %v968, %v870
        %v977 = vadd.f32 %v969, %v871
        %v978 = vadd.f32 %v970, %v872
        %vm979 = vcmask 523264
        %v980 = vsel %vm979, %v971, -inf
        %981 = vmax.xlane.f32.xlu0 %v980
        %v982 = vpop.xlane.xlu0 %981
        %v983 = vsel %vm979, %v972, -inf
        %984 = vmax.xlane.f32.xlu0 %v983
        %v985 = vpop.xlane.xlu0 %984
        %v986 = vsel %vm979, %v973, -inf
        %987 = vmax.xlane.f32.xlu0 %v986
        %v988 = vpop.xlane.xlu0 %987
        %v989 = vsel %vm979, %v974, -inf
        %990 = vmax.xlane.f32.xlu0 %v989
        %v991 = vpop.xlane.xlu0 %990
        %v992 = vsel %vm979, %v975, -inf
        %993 = vmax.xlane.f32.xlu0 %v992
        %v994 = vpop.xlane.xlu0 %993
        %v995 = vsel %vm979, %v976, -inf
        %996 = vmax.xlane.f32.xlu0 %v995
        %v997 = vpop.xlane.xlu0 %996
        %v998 = vsel %vm979, %v977, -inf
        %999 = vmax.xlane.f32.xlu0 %v998
        %v1000 = vpop.xlane.xlu0 %999
        %v1001 = vsel %vm979, %v978, -inf
        %1002 = vmax.xlane.f32.xlu0 %v1001
        %v1003 = vpop.xlane.xlu0 %1002
        %v1004 = vsub.f32 %v971, %v982
        %v1005 = vsub.f32 %v972, %v985
        %v1006 = vsub.f32 %v973, %v988
        %v1007 = vsub.f32 %v974, %v991
        %v1008 = vsub.f32 %v975, %v994
        %v1009 = vsub.f32 %v976, %v997
        %v1010 = vsub.f32 %v977, %v1000
        %v1011 = vsub.f32 %v978, %v1003
        %v1012 = vmul.f32 %v1004, 1.442695
        %v1013 = vpow.pop %v1012
        %v1014 = vmul.f32 %v1005, 1.442695
        %v1015 = vpow.pop %v1014
        %v1016 = vmul.f32 %v1006, 1.442695
        %v1017 = vpow.pop %v1016
        %v1018 = vmul.f32 %v1007, 1.442695
        %v1019 = vpow.pop %v1018
        %v1020 = vmul.f32 %v1008, 1.442695
        %v1021 = vpow.pop %v1020
        %v1022 = vmul.f32 %v1009, 1.442695
        %v1023 = vpow.pop %v1022
        %v1024 = vmul.f32 %v1010, 1.442695
        %v1025 = vpow.pop %v1024
        %v1026 = vmul.f32 %v1011, 1.442695
        %v1027 = vpow.pop %v1026
        %v1028 = vsel %vm979, %v1013, 0.0
        %1029 = vadd.xlane.f32.xlu0 %v1028
        %v1030 = vpop.xlane.xlu0 %1029
        %v1031 = vsel %vm979, %v1015, 0.0
        %1032 = vadd.xlane.f32.xlu0 %v1031
        %v1033 = vpop.xlane.xlu0 %1032
        %v1034 = vsel %vm979, %v1017, 0.0
        %1035 = vadd.xlane.f32.xlu0 %v1034
        %v1036 = vpop.xlane.xlu0 %1035
        %v1037 = vsel %vm979, %v1019, 0.0
        %1038 = vadd.xlane.f32.xlu0 %v1037
        %v1039 = vpop.xlane.xlu0 %1038
        %v1040 = vsel %vm979, %v1021, 0.0
        %1041 = vadd.xlane.f32.xlu0 %v1040
        %v1042 = vpop.xlane.xlu0 %1041
        %v1043 = vsel %vm979, %v1023, 0.0
        %1044 = vadd.xlane.f32.xlu0 %v1043
        %v1045 = vpop.xlane.xlu0 %1044
        %v1046 = vsel %vm979, %v1025, 0.0
        %1047 = vadd.xlane.f32.xlu0 %v1046
        %v1048 = vpop.xlane.xlu0 %1047
        %v1049 = vsel %vm979, %v1027, 0.0
        %1050 = vadd.xlane.f32.xlu0 %v1049
        %v1051 = vpop.xlane.xlu0 %1050
        %v1052 = vrcp.pop %v1030
        %v1053 = vrcp.pop %v1033
        %v1054 = vrcp.pop %v1036
        %v1055 = vrcp.pop %v1039
        %v1056 = vrcp.pop %v1042
        %v1057 = vrcp.pop %v1045
        %v1058 = vrcp.pop %v1048
        %v1059 = vrcp.pop %v1051
        %v1060 = vmul.f32 %v1013, %v1052
        %v1061 = vmul.f32 %v1015, %v1053
        %v1062 = vmul.f32 %v1017, %v1054
        %v1063 = vmul.f32 %v1019, %v1055
        %v1064 = vmul.f32 %v1021, %v1056
        %v1065 = vmul.f32 %v1023, %v1057
        %v1066 = vmul.f32 %v1025, %v1058
        %v1067 = vmul.f32 %v1027, %v1059
        %v1068 = vpack.c.bf16 %v1061, %v1060
        %v1069 = vpack.c.bf16 %v1063, %v1062
        %v1070 = vpack.c.bf16 %v1065, %v1064
        %v1071 = vpack.c.bf16 %v1067, %v1066
        %1072 = vrot.lane.b32.xlu0 %v893, 64
        %v1073 = vpop.permute.xlu0 %1072
        %1074 = vrot.lane.b32.xlu0 %v894, 64
        %v1075 = vpop.permute.xlu0 %1074
        %1076 = vrot.lane.b32.xlu0 %v895, 64
        %v1077 = vpop.permute.xlu0 %1076
        %1078 = vrot.lane.b32.xlu0 %v896, 64
        %v1079 = vpop.permute.xlu0 %1078
        %v1085 = vsel %vm979, %v1068, 0
        %v1088 = vsel %vm979, %v1069, 0
        %v1091 = vsel %vm979, %v1070, 0
        %v1094 = vsel %vm979, %v1071, 0
        %1096 = vmatpush.bf16.msra.mxu0 0
        %1097 = vmatpush.bf16.msra.mxu0 0
        %1098 = vmatpush.bf16.msra.mxu0 0
        %1099 = vmatpush.bf16.msra.mxu0 0
        %1100 = vmatpush.bf16.msra.mxu0 %v1079
        %1101 = vmatpush.bf16.msra.mxu0 %v1077
        %1102 = vmatpush.bf16.msra.mxu0 %v1075
        %1103 = vmatpush.bf16.msra.mxu0 %v1073
        %1104 = vmatmul.bf16.gmra.mxu0 %v1085
        %v1105 = vpop.f32.mrf.mxu0
        %v1106 = vadd.f32 0.0, %v1105
        %v1107 = vpop.f32.mrf.mxu0
        %v1108 = vadd.f32 0.0, %v1107
        %1109 = vmatmul.bf16.gmra.mxu0 %v1088
        %v1110 = vpop.f32.mrf.mxu0
        %v1111 = vadd.f32 0.0, %v1110
        %v1112 = vpop.f32.mrf.mxu0
        %v1113 = vadd.f32 0.0, %v1112
        %1114 = vmatmul.bf16.gmra.mxu0 %v1091
        %v1115 = vpop.f32.mrf.mxu0
        %v1116 = vadd.f32 0.0, %v1115
        %v1117 = vpop.f32.mrf.mxu0
        %v1118 = vadd.f32 0.0, %v1117
        %1119 = vmatmul.bf16.gmra.mxu0 %v1094
        %v1120 = vpop.f32.mrf.mxu0
        %v1121 = vadd.f32 0.0, %v1120
        %v1122 = vpop.f32.mrf.mxu0
        %v1123 = vadd.f32 0.0, %v1122
        %1124 = vdwg.mxu0
        %v1125 = vlaneseq
        %v1126 = vshrl.u32 %v1125, 7
        %v1127 = vadd.s32 %v1126, 8
        %v1128 = vlaneseq
        %v1129 = vand.u32 %v1128, 127
        %v1130 = vmul.u32 %v1126, 4
        %v1131 = vmul.u32 %v1127, 4
        %vm1132 = vcmp.eq.s32.totalorder %v1129, %v1130
        %vm1133 = vcmp.eq.s32.totalorder %v1129, %v1131
        %v1134 = vsel %vm1132, 1.0, 0.0
        %v1135 = vsel %vm1133, 1.0, 0.0
        %v1137 = vsel %vm979, %v1134, 0
        %v1140 = vsel %vm979, %v1135, 0
        %1142 = vmatpush.msra.mxu0 0.0
        %1143 = vmatpush.msra.mxu0 0.0
        %1144 = vmatpush.msra.mxu0 0.0
        %1145 = vmatpush.msra.mxu0 0.0
        %1146 = vmatpush.msra.mxu0 0.0
        %1147 = vmatpush.msra.mxu0 0.0
        %1148 = vmatpush.msra.mxu0 0.0
        %1149 = vmatpush.msra.mxu0 0.0
        %1150 = vmatpush.msra.mxu0 %v1123
        %1151 = vmatpush.msra.mxu0 %v1121
        %1152 = vmatpush.msra.mxu0 %v1118
        %1153 = vmatpush.msra.mxu0 %v1116
        %1154 = vmatpush.msra.mxu0 %v1113
        %1155 = vmatpush.msra.mxu0 %v1111
        %1156 = vmatpush.msra.mxu0 %v1108
        %1157 = vmatpush.msra.mxu0 %v1106
        %1158 = vmatmul.f32.gmra.mxu0 %v1137
        %v1159 = vpop.f32.mrf.mxu0
        %v1160 = vadd.f32 0.0, %v1159
        %1161 = vmatmul.f32.gmra.mxu0 %v1140
        %v1162 = vpop.f32.mrf.mxu0
        %v1163 = vadd.f32 0.0, %v1162
        %1164 = vdwg.mxu0
        %v1165 = vadd.s32 %v1130, 1
        %v1166 = vadd.s32 %v1131, 1
        %vm1167 = vcmp.eq.s32.totalorder %v1129, %v1165
        %vm1168 = vcmp.eq.s32.totalorder %v1129, %v1166
        %v1169 = vsel %vm1167, 1.0, 0.0
        %v1170 = vsel %vm1168, 1.0, 0.0
        %v1172 = vsel %vm979, %v1169, 0
        %v1175 = vsel %vm979, %v1170, 0
        %1177 = vmatpush.msra.mxu0 0.0
        %1178 = vmatpush.msra.mxu0 0.0
        %1179 = vmatpush.msra.mxu0 0.0
        %1180 = vmatpush.msra.mxu0 0.0
        %1181 = vmatpush.msra.mxu0 0.0
        %1182 = vmatpush.msra.mxu0 0.0
        %1183 = vmatpush.msra.mxu0 0.0
        %1184 = vmatpush.msra.mxu0 0.0
        %1185 = vmatpush.msra.mxu0 %v1123
        %1186 = vmatpush.msra.mxu0 %v1121
        %1187 = vmatpush.msra.mxu0 %v1118
        %1188 = vmatpush.msra.mxu0 %v1116
        %1189 = vmatpush.msra.mxu0 %v1113
        %1190 = vmatpush.msra.mxu0 %v1111
        %1191 = vmatpush.msra.mxu0 %v1108
        %1192 = vmatpush.msra.mxu0 %v1106
        %1193 = vmatmul.f32.gmra.mxu0 %v1172
        %v1194 = vpop.f32.mrf.mxu0
        %v1195 = vadd.f32 0.0, %v1194
        %1196 = vmatmul.f32.gmra.mxu0 %v1175
        %v1197 = vpop.f32.mrf.mxu0
        %v1198 = vadd.f32 0.0, %v1197
        %1199 = vdwg.mxu0
        %v1200 = vadd.s32 %v1130, 2
        %v1201 = vadd.s32 %v1131, 2
        %vm1202 = vcmp.eq.s32.totalorder %v1129, %v1200
        %vm1203 = vcmp.eq.s32.totalorder %v1129, %v1201
        %v1204 = vsel %vm1202, 1.0, 0.0
        %v1205 = vsel %vm1203, 1.0, 0.0
        %v1207 = vsel %vm979, %v1204, 0
        %v1210 = vsel %vm979, %v1205, 0
        %1212 = vmatpush.msra.mxu0 0.0
        %1213 = vmatpush.msra.mxu0 0.0
        %1214 = vmatpush.msra.mxu0 0.0
        %1215 = vmatpush.msra.mxu0 0.0
        %1216 = vmatpush.msra.mxu0 0.0
        %1217 = vmatpush.msra.mxu0 0.0
        %1218 = vmatpush.msra.mxu0 0.0
        %1219 = vmatpush.msra.mxu0 0.0
        %1220 = vmatpush.msra.mxu0 %v1123
        %1221 = vmatpush.msra.mxu0 %v1121
        %1222 = vmatpush.msra.mxu0 %v1118
        %1223 = vmatpush.msra.mxu0 %v1116
        %1224 = vmatpush.msra.mxu0 %v1113
        %1225 = vmatpush.msra.mxu0 %v1111
        %1226 = vmatpush.msra.mxu0 %v1108
        %1227 = vmatpush.msra.mxu0 %v1106
        %1228 = vmatmul.f32.gmra.mxu0 %v1207
        %v1229 = vpop.f32.mrf.mxu0
        %v1230 = vadd.f32 0.0, %v1229
        %1231 = vmatmul.f32.gmra.mxu0 %v1210
        %v1232 = vpop.f32.mrf.mxu0
        %v1233 = vadd.f32 0.0, %v1232
        %1234 = vdwg.mxu0
        %v1235 = vadd.s32 %v1130, 3
        %v1236 = vadd.s32 %v1131, 3
        %vm1237 = vcmp.eq.s32.totalorder %v1129, %v1235
        %vm1238 = vcmp.eq.s32.totalorder %v1129, %v1236
        %v1239 = vsel %vm1237, 1.0, 0.0
        %v1240 = vsel %vm1238, 1.0, 0.0
        %v1242 = vsel %vm979, %v1239, 0
        %v1245 = vsel %vm979, %v1240, 0
        %1247 = vmatpush.msra.mxu0 0.0
        %1248 = vmatpush.msra.mxu0 0.0
        %1249 = vmatpush.msra.mxu0 0.0
        %1250 = vmatpush.msra.mxu0 0.0
        %1251 = vmatpush.msra.mxu0 0.0
        %1252 = vmatpush.msra.mxu0 0.0
        %1253 = vmatpush.msra.mxu0 0.0
        %1254 = vmatpush.msra.mxu0 0.0
        %1255 = vmatpush.msra.mxu0 %v1123
        %1256 = vmatpush.msra.mxu0 %v1121
        %1257 = vmatpush.msra.mxu0 %v1118
        %1258 = vmatpush.msra.mxu0 %v1116
        %1259 = vmatpush.msra.mxu0 %v1113
        %1260 = vmatpush.msra.mxu0 %v1111
        %1261 = vmatpush.msra.mxu0 %v1108
        %1262 = vmatpush.msra.mxu0 %v1106
        %1263 = vmatmul.f32.gmra.mxu0 %v1242
        %v1264 = vpop.f32.mrf.mxu0
        %v1265 = vadd.f32 0.0, %v1264
        %1266 = vmatmul.f32.gmra.mxu0 %v1245
        %v1267 = vpop.f32.mrf.mxu0
        %v1268 = vadd.f32 0.0, %v1267
        %1269 = vdwg.mxu0
        %1272 = vrot.lane.b32.xlu0 %v1195, 8
        %v1273 = vpop.permute.xlu0 %1272
        %1274 = vrot.lane.b32.xlu0 %v1198, 8
        %v1275 = vpop.permute.xlu0 %1274
        %1280 = vrot.lane.b32.xlu0 %v1230, 16
        %v1281 = vpop.permute.xlu0 %1280
        %1282 = vrot.lane.b32.xlu0 %v1233, 16
        %v1283 = vpop.permute.xlu0 %1282
        %1288 = vrot.lane.b32.xlu0 %v1265, 24
        %v1289 = vpop.permute.xlu0 %1288
        %1290 = vrot.lane.b32.xlu0 %v1268, 24
        %v1291 = vpop.permute.xlu0 %1290
        %v1294 = vsel %vm909, %v1160, %v1273
        %v1295 = vsel %vm909, %v1163, %v1275
        %vm1296 = vcmask 130048
        %v1297 = vsel %vm1296, %v1294, %v1281
        %v1298 = vsel %vm1296, %v1295, %v1283
        %vm1299 = vcmask 195584
        %v1300 = vsel %vm1299, %v1297, %v1289
        %v1301 = vsel %vm1299, %v1298, %v1291
        %v1302 = vld [vmem:[%s6] sm:$0xff]
        %v1303 = vld [vmem:[%s6 + $0x8] sm:$0xff]
        %v1304 = vld [vmem:[%s6 + $0x10] sm:$0xff]
        %v1305 = vld [vmem:[%s6 + $0x18] sm:$0xff]
        %v1306 = vpack.c.bf16 %v1301, %v1300
        %v1307 = vpack.c.bf16 %v1303, %v1302
        %v1308 = vpack.c.bf16 %v1305, %v1304
        %v1310 = vsel %vm847, %v1306, 0
        %1312 = vmatpush.bf16.msra.mxu0 0
        %1313 = vmatpush.bf16.msra.mxu0 0
        %1314 = vmatpush.bf16.msra.mxu0 0
        %1315 = vmatpush.bf16.msra.mxu0 0
        %1316 = vmatpush.bf16.msra.mxu0 0
        %1317 = vmatpush.bf16.msra.mxu0 0
        %1318 = vmatpush.bf16.msra.mxu0 %v1308
        %1319 = vmatpush.bf16.msra.mxu0 %v1307
        %1320 = vmatmul.bf16.gmra.mxu0 %v1310
        %v1321 = vpop.f32.mrf.mxu0
        %v1322 = vadd.f32 0.0, %v1321
        %v1323 = vpop.f32.mrf.mxu0
        %v1324 = vadd.f32 0.0, %v1323
        %1325 = vdwg.mxu0
        %v1326 = vadd.f32 %v832, %v1322
        %v1327 = vadd.f32 %v833, %v1324
        %v1328 = vld [vmem:[%s7] sm:$0x1]
        %v1330 = vperm.slane %v1328, 0
        %v1332 = vadd.f32 %v1326, %v1330
        %v1333 = vadd.f32 %v1327, %v1330
        %v1334 = vld [vmem:[%s8] sm:$0x1]
        %v1335 = vld [vmem:[%s9] sm:$0x1]
        %v1336 = vsel %vm847, %v1332, 0.0
        %1337 = vadd.xlane.f32.xlu0 %v1336
        %v1338 = vpop.xlane.xlu0 %1337
        %v1339 = vsel %vm847, %v1333, 0.0
        %1340 = vadd.xlane.f32.xlu0 %v1339
        %v1341 = vpop.xlane.xlu0 %1340
        %v1342 = vrcp.pop 32.0
        %v1343 = vmul.f32 32.0, %v1342
        %v1344 = vsub.f32 1.0, %v1343
        %v1345 = vmul.f32 %v1342, %v1344
        %v1346 = vadd.f32 %v1342, %v1345
        %vm1347 = vweird.f32 %v1342
        %v1348 = vsel %vm1347, %v1342, %v1346
        %v1349 = vmul.f32 %v1338, %v1348
        %v1350 = vmul.f32 %v1341, %v1348
        %v1351 = vsub.f32 %v1332, %v1349
        %v1352 = vsub.f32 %v1333, %v1350
        %v1353 = vmul.f32 %v1351, %v1351
        %v1354 = vmul.f32 %v1352, %v1352
        %v1355 = vsel %vm847, %v1353, 0.0
        %1356 = vadd.xlane.f32.xlu0 %v1355
        %v1357 = vpop.xlane.xlu0 %1356
        %v1358 = vsel %vm847, %v1354, 0.0
        %1359 = vadd.xlane.f32.xlu0 %v1358
        %v1360 = vpop.xlane.xlu0 %1359
        %v1361 = vmul.f32 %v1357, %v1348
        %v1362 = vmul.f32 %v1360, %v1348
        %v1363 = vadd.f32 %v1361, 1e-05
        %v1364 = vadd.f32 %v1362, 1e-05
        %v1365 = vrsqrt.pop %v1363
        %v1366 = vmul.f32 %v1365, %v1363
        %v1367 = vmul.f32 %v1366, %v1365
        %v1368 = vmul.f32 0.5, %v1367
        %v1369 = vsub.f32 1.5, %v1368
        %v1370 = vmul.f32 %v1365, %v1369
        %vm1371 = vweird.f32 %v1363
        %vm1372 = vweird.f32 %v1365
        %vm1373 = vmor %vm1371, %vm1372
        %v1374 = vsel %vm1373, %v1365, %v1370
        %v1375 = vrsqrt.pop %v1364
        %v1376 = vmul.f32 %v1375, %v1364
        %v1377 = vmul.f32 %v1376, %v1375
        %v1378 = vmul.f32 0.5, %v1377
        %v1379 = vsub.f32 1.5, %v1378
        %v1380 = vmul.f32 %v1375, %v1379
        %vm1381 = vweird.f32 %v1364
        %vm1382 = vweird.f32 %v1375
        %vm1383 = vmor %vm1381, %vm1382
        %v1384 = vsel %vm1383, %v1375, %v1380
        %v1385 = vmul.f32 %v1351, %v1374
        %v1386 = vmul.f32 %v1352, %v1384
        %v1388 = vperm.slane %v1334, 0
        %v1390 = vmul.f32 %v1385, %v1388
        %v1391 = vmul.f32 %v1386, %v1388
        %v1393 = vperm.slane %v1335, 0
        %v1395 = vadd.f32 %v1390, %v1393
        %v1396 = vadd.f32 %v1391, %v1393
        %v1397 = vld [vmem:[%s10] sm:$0xff]
        %v1398 = vld [vmem:[%s10 + $0x8] sm:$0xff]
        %v1399 = vld [vmem:[%s10 + $0x10] sm:$0xff]
        %v1400 = vld [vmem:[%s10 + $0x18] sm:$0xff]
        %v1401 = vpack.c.bf16 %v1396, %v1395
        %v1402 = vpack.c.bf16 %v1398, %v1397
        %v1403 = vpack.c.bf16 %v1400, %v1399
        %v1404 = vld [vmem:[%s11] sm:$0x1]
        %v1406 = vperm.slane %v1404, 0
        %v1409 = vsel %vm847, %v1401, 0
        %1411 = vmatpush.bf16.msra.mxu0 0
        %1412 = vmatpush.bf16.msra.mxu0 0
        %1413 = vmatpush.bf16.msra.mxu0 0
        %1414 = vmatpush.bf16.msra.mxu0 0
        %1415 = vmatpush.bf16.msra.mxu0 0
        %1416 = vmatpush.bf16.msra.mxu0 0
        %1417 = vmatpush.bf16.msra.mxu0 %v1403
        %1418 = vmatpush.bf16.msra.mxu0 %v1402
        %1419 = vmatmul.bf16.gmra.mxu0 %v1409
        %v1420 = vpop.f32.mrf.mxu0
        %v1421 = vadd.f32 %v1406, %v1420
        %v1422 = vpop.f32.mrf.mxu0
        %v1423 = vadd.f32 %v1406, %v1422
        %1424 = vdwg.mxu0
        %v1425 = vld [vmem:[%s12] sm:$0xff]
        %v1426 = vld [vmem:[%s12 + $0x8] sm:$0xff]
        %v1427 = vld [vmem:[%s12 + $0x10] sm:$0xff]
        %v1428 = vld [vmem:[%s12 + $0x18] sm:$0xff]
        %v1429 = vpack.c.bf16 %v835, %v834
        %v1430 = vpack.c.bf16 %v1426, %v1425
        %v1431 = vpack.c.bf16 %v1428, %v1427
        %v1432 = vld [vmem:[%s13] sm:$0x1]
        %v1434 = vperm.slane %v1432, 0
        %v1437 = vsel %vm847, %v1429, 0
        %1439 = vmatpush.bf16.msra.mxu0 0
        %1440 = vmatpush.bf16.msra.mxu0 0
        %1441 = vmatpush.bf16.msra.mxu0 0
        %1442 = vmatpush.bf16.msra.mxu0 0
        %1443 = vmatpush.bf16.msra.mxu0 0
        %1444 = vmatpush.bf16.msra.mxu0 0
        %1445 = vmatpush.bf16.msra.mxu0 %v1431
        %1446 = vmatpush.bf16.msra.mxu0 %v1430
        %1447 = vmatmul.bf16.gmra.mxu0 %v1437
        %v1448 = vpop.f32.mrf.mxu0
        %v1449 = vadd.f32 %v1434, %v1448
        %v1450 = vpop.f32.mrf.mxu0
        %v1451 = vadd.f32 %v1434, %v1450
        %1452 = vdwg.mxu0
        %v1453 = vld [vmem:[%s3] sm:$0xff]
        %v1454 = vld [vmem:[%s3 + $0x8] sm:$0xff]
        %v1455 = vld [vmem:[%s3 + $0x10] sm:$0xff]
        %v1456 = vld [vmem:[%s3 + $0x18] sm:$0xff]
        %v1457 = vld [vmem:[%s3 + $0x20] sm:$0xff]
        %v1458 = vld [vmem:[%s3 + $0x28] sm:$0xff]
        %v1459 = vld [vmem:[%s3 + $0x30] sm:$0xff]
        %v1460 = vld [vmem:[%s3 + $0x38] sm:$0xff]
        %1463 = vrot.lane.b32.xlu0 %v1421, 120
        %v1464 = vpop.permute.xlu0 %1463
        %1465 = vrot.lane.b32.xlu0 %v1423, 120
        %v1466 = vpop.permute.xlu0 %1465
        %1469 = vrot.lane.b32.xlu0 %v1421, 112
        %v1470 = vpop.permute.xlu0 %1469
        %1471 = vrot.lane.b32.xlu0 %v1423, 112
        %v1472 = vpop.permute.xlu0 %1471
        %1475 = vrot.lane.b32.xlu0 %v1421, 104
        %v1476 = vpop.permute.xlu0 %1475
        %1477 = vrot.lane.b32.xlu0 %v1423, 104
        %v1478 = vpop.permute.xlu0 %1477
        %1483 = vrot.lane.b32.xlu0 %v1449, 120
        %v1484 = vpop.permute.xlu0 %1483
        %1485 = vrot.lane.b32.xlu0 %v1451, 120
        %v1486 = vpop.permute.xlu0 %1485
        %1489 = vrot.lane.b32.xlu0 %v1449, 112
        %v1490 = vpop.permute.xlu0 %1489
        %1491 = vrot.lane.b32.xlu0 %v1451, 112
        %v1492 = vpop.permute.xlu0 %1491
        %1495 = vrot.lane.b32.xlu0 %v1449, 104
        %v1496 = vpop.permute.xlu0 %1495
        %1497 = vrot.lane.b32.xlu0 %v1451, 104
        %v1498 = vpop.permute.xlu0 %1497
        %v1501 = vpack.c.bf16 %v1423, %v1421
        %v1502 = vpack.c.bf16 %v1466, %v1464
        %v1503 = vpack.c.bf16 %v1472, %v1470
        %v1504 = vpack.c.bf16 %v1478, %v1476
        %v1505 = vpack.c.bf16 %v1451, %v1449
        %v1506 = vpack.c.bf16 %v1486, %v1484
        %v1507 = vpack.c.bf16 %v1492, %v1490
        %v1508 = vpack.c.bf16 %v1498, %v1496
        %v1510 = vsel %vm909, %v1501, 0
        %v1513 = vsel %vm909, %v1502, 0
        %v1516 = vsel %vm909, %v1503, 0
        %v1519 = vsel %vm909, %v1504, 0
        %v1522 = vsel %vm909, %v1505, 0
        %v1525 = vsel %vm909, %v1506, 0
        %v1528 = vsel %vm909, %v1507, 0
        %v1531 = vsel %vm909, %v1508, 0
        %1533 = vmatpush.bf16.xpose.msra.mxu0 0
        %1534 = vmatpush.bf16.xpose.msra.mxu0 0
        %1535 = vmatpush.bf16.xpose.msra.mxu0 0
        %1536 = vmatpush.bf16.xpose.msra.mxu0 0
        %1537 = vmatpush.bf16.xpose.msra.mxu0 %v1531
        %1538 = vmatpush.bf16.xpose.msra.mxu0 %v1528
        %1539 = vmatpush.bf16.xpose.msra.mxu0 %v1525
        %1540 = vmatpush.bf16.xpose.msra.mxu0 %v1522
        %1541 = vmatmul.bf16.gmra.mxu0 %v1510
        %v1542 = vpop.f32.mrf.mxu0
        %v1543 = vadd.f32 0.0, %v1542
        %v1544 = vpop.f32.mrf.mxu0
        %v1545 = vadd.f32 0.0, %v1544
        %1546 = vmatmul.bf16.gmra.mxu0 %v1513
        %v1547 = vpop.f32.mrf.mxu0
        %v1548 = vadd.f32 0.0, %v1547
        %v1549 = vpop.f32.mrf.mxu0
        %v1550 = vadd.f32 0.0, %v1549
        %1551 = vmatmul.bf16.gmra.mxu0 %v1516
        %v1552 = vpop.f32.mrf.mxu0
        %v1553 = vadd.f32 0.0, %v1552
        %v1554 = vpop.f32.mrf.mxu0
        %v1555 = vadd.f32 0.0, %v1554
        %1556 = vmatmul.bf16.gmra.mxu0 %v1519
        %v1557 = vpop.f32.mrf.mxu0
        %v1558 = vadd.f32 0.0, %v1557
        %v1559 = vpop.f32.mrf.mxu0
        %v1560 = vadd.f32 0.0, %v1559
        %1561 = vdwg.mxu0
        %v1562 = vmul.f32 %v1543, 0.35355338
        %v1563 = vmul.f32 %v1545, 0.35355338
        %v1564 = vmul.f32 %v1548, 0.35355338
        %v1565 = vmul.f32 %v1550, 0.35355338
        %v1566 = vmul.f32 %v1553, 0.35355338
        %v1567 = vmul.f32 %v1555, 0.35355338
        %v1568 = vmul.f32 %v1558, 0.35355338
        %v1569 = vmul.f32 %v1560, 0.35355338
        %v1570 = vadd.f32 %v1562, %v1453
        %v1571 = vadd.f32 %v1563, %v1454
        %v1572 = vadd.f32 %v1564, %v1455
        %v1573 = vadd.f32 %v1565, %v1456
        %v1574 = vadd.f32 %v1566, %v1457
        %v1575 = vadd.f32 %v1567, %v1458
        %v1576 = vadd.f32 %v1568, %v1459
        %v1577 = vadd.f32 %v1569, %v1460
        %v1578 = vsel %vm979, %v1570, -inf
        %1579 = vmax.xlane.f32.xlu0 %v1578
        %v1580 = vpop.xlane.xlu0 %1579
        %v1581 = vsel %vm979, %v1571, -inf
        %1582 = vmax.xlane.f32.xlu0 %v1581
        %v1583 = vpop.xlane.xlu0 %1582
        %v1584 = vsel %vm979, %v1572, -inf
        %1585 = vmax.xlane.f32.xlu0 %v1584
        %v1586 = vpop.xlane.xlu0 %1585
        %v1587 = vsel %vm979, %v1573, -inf
        %1588 = vmax.xlane.f32.xlu0 %v1587
        %v1589 = vpop.xlane.xlu0 %1588
        %v1590 = vsel %vm979, %v1574, -inf
        %1591 = vmax.xlane.f32.xlu0 %v1590
        %v1592 = vpop.xlane.xlu0 %1591
        %v1593 = vsel %vm979, %v1575, -inf
        %1594 = vmax.xlane.f32.xlu0 %v1593
        %v1595 = vpop.xlane.xlu0 %1594
        %v1596 = vsel %vm979, %v1576, -inf
        %1597 = vmax.xlane.f32.xlu0 %v1596
        %v1598 = vpop.xlane.xlu0 %1597
        %v1599 = vsel %vm979, %v1577, -inf
        %1600 = vmax.xlane.f32.xlu0 %v1599
        %v1601 = vpop.xlane.xlu0 %1600
        %v1602 = vsub.f32 %v1570, %v1580
        %v1603 = vsub.f32 %v1571, %v1583
        %v1604 = vsub.f32 %v1572, %v1586
        %v1605 = vsub.f32 %v1573, %v1589
        %v1606 = vsub.f32 %v1574, %v1592
        %v1607 = vsub.f32 %v1575, %v1595
        %v1608 = vsub.f32 %v1576, %v1598
        %v1609 = vsub.f32 %v1577, %v1601
        %v1610 = vmul.f32 %v1602, 1.442695
        %v1611 = vpow.pop %v1610
        %v1612 = vmul.f32 %v1603, 1.442695
        %v1613 = vpow.pop %v1612
        %v1614 = vmul.f32 %v1604, 1.442695
        %v1615 = vpow.pop %v1614
        %v1616 = vmul.f32 %v1605, 1.442695
        %v1617 = vpow.pop %v1616
        %v1618 = vmul.f32 %v1606, 1.442695
        %v1619 = vpow.pop %v1618
        %v1620 = vmul.f32 %v1607, 1.442695
        %v1621 = vpow.pop %v1620
        %v1622 = vmul.f32 %v1608, 1.442695
        %v1623 = vpow.pop %v1622
        %v1624 = vmul.f32 %v1609, 1.442695
        %v1625 = vpow.pop %v1624
        %v1626 = vsel %vm979, %v1611, 0.0
        %1627 = vadd.xlane.f32.xlu0 %v1626
        %v1628 = vpop.xlane.xlu0 %1627
        %v1629 = vsel %vm979, %v1613, 0.0
        %1630 = vadd.xlane.f32.xlu0 %v1629
        %v1631 = vpop.xlane.xlu0 %1630
        %v1632 = vsel %vm979, %v1615, 0.0
        %1633 = vadd.xlane.f32.xlu0 %v1632
        %v1634 = vpop.xlane.xlu0 %1633
        %v1635 = vsel %vm979, %v1617, 0.0
        %1636 = vadd.xlane.f32.xlu0 %v1635
        %v1637 = vpop.xlane.xlu0 %1636
        %v1638 = vsel %vm979, %v1619, 0.0
        %1639 = vadd.xlane.f32.xlu0 %v1638
        %v1640 = vpop.xlane.xlu0 %1639
        %v1641 = vsel %vm979, %v1621, 0.0
        %1642 = vadd.xlane.f32.xlu0 %v1641
        %v1643 = vpop.xlane.xlu0 %1642
        %v1644 = vsel %vm979, %v1623, 0.0
        %1645 = vadd.xlane.f32.xlu0 %v1644
        %v1646 = vpop.xlane.xlu0 %1645
        %v1647 = vsel %vm979, %v1625, 0.0
        %1648 = vadd.xlane.f32.xlu0 %v1647
        %v1649 = vpop.xlane.xlu0 %1648
        %v1650 = vrcp.pop %v1628
        %v1651 = vrcp.pop %v1631
        %v1652 = vrcp.pop %v1634
        %v1653 = vrcp.pop %v1637
        %v1654 = vrcp.pop %v1640
        %v1655 = vrcp.pop %v1643
        %v1656 = vrcp.pop %v1646
        %v1657 = vrcp.pop %v1649
        %v1658 = vmul.f32 %v1611, %v1650
        %v1659 = vmul.f32 %v1613, %v1651
        %v1660 = vmul.f32 %v1615, %v1652
        %v1661 = vmul.f32 %v1617, %v1653
        %v1662 = vmul.f32 %v1619, %v1654
        %v1663 = vmul.f32 %v1621, %v1655
        %v1664 = vmul.f32 %v1623, %v1656
        %v1665 = vmul.f32 %v1625, %v1657
        %v1666 = vpack.c.bf16 %v1659, %v1658
        %v1667 = vpack.c.bf16 %v1661, %v1660
        %v1668 = vpack.c.bf16 %v1663, %v1662
        %v1669 = vpack.c.bf16 %v1665, %v1664
        %1674 = vrot.lane.b32.xlu0 %v1505, 96
        %v1675 = vpop.permute.xlu0 %1674
        %1676 = vrot.lane.b32.xlu0 %v1506, 96
        %v1677 = vpop.permute.xlu0 %1676
        %1678 = vrot.lane.b32.xlu0 %v1507, 96
        %v1679 = vpop.permute.xlu0 %1678
        %1680 = vrot.lane.b32.xlu0 %v1508, 96
        %v1681 = vpop.permute.xlu0 %1680
        %v1687 = vsel %vm979, %v1666, 0
        %v1690 = vsel %vm979, %v1667, 0
        %v1693 = vsel %vm979, %v1668, 0
        %v1696 = vsel %vm979, %v1669, 0
        %1698 = vmatpush.bf16.msra.mxu0 0
        %1699 = vmatpush.bf16.msra.mxu0 0
        %1700 = vmatpush.bf16.msra.mxu0 0
        %1701 = vmatpush.bf16.msra.mxu0 0
        %1702 = vmatpush.bf16.msra.mxu0 %v1681
        %1703 = vmatpush.bf16.msra.mxu0 %v1679
        %1704 = vmatpush.bf16.msra.mxu0 %v1677
        %1705 = vmatpush.bf16.msra.mxu0 %v1675
        %1706 = vmatmul.bf16.gmra.mxu0 %v1687
        %v1707 = vpop.f32.mrf.mxu0
        %v1708 = vadd.f32 0.0, %v1707
        %v1709 = vpop.f32.mrf.mxu0
        %v1710 = vadd.f32 0.0, %v1709
        %1711 = vmatmul.bf16.gmra.mxu0 %v1690
        %v1712 = vpop.f32.mrf.mxu0
        %v1713 = vadd.f32 0.0, %v1712
        %v1714 = vpop.f32.mrf.mxu0
        %v1715 = vadd.f32 0.0, %v1714
        %1716 = vmatmul.bf16.gmra.mxu0 %v1693
        %v1717 = vpop.f32.mrf.mxu0
        %v1718 = vadd.f32 0.0, %v1717
        %v1719 = vpop.f32.mrf.mxu0
        %v1720 = vadd.f32 0.0, %v1719
        %1721 = vmatmul.bf16.gmra.mxu0 %v1696
        %v1722 = vpop.f32.mrf.mxu0
        %v1723 = vadd.f32 0.0, %v1722
        %v1724 = vpop.f32.mrf.mxu0
        %v1725 = vadd.f32 0.0, %v1724
        %1726 = vdwg.mxu0
        %1729 = vrot.lane.b32.xlu0 %v1713, 8
        %v1730 = vpop.permute.xlu0 %1729
        %1731 = vrot.lane.b32.xlu0 %v1715, 8
        %v1732 = vpop.permute.xlu0 %1731
        %1737 = vrot.lane.b32.xlu0 %v1718, 16
        %v1738 = vpop.permute.xlu0 %1737
        %1739 = vrot.lane.b32.xlu0 %v1720, 16
        %v1740 = vpop.permute.xlu0 %1739
        %1745 = vrot.lane.b32.xlu0 %v1723, 24
        %v1746 = vpop.permute.xlu0 %1745
        %1747 = vrot.lane.b32.xlu0 %v1725, 24
        %v1748 = vpop.permute.xlu0 %1747
        %v1751 = vsel %vm909, %v1708, %v1730
        %v1752 = vsel %vm909, %v1710, %v1732
        %v1753 = vsel %vm1296, %v1751, %v1738
        %v1754 = vsel %vm1296, %v1752, %v1740
        %v1755 = vsel %vm1299, %v1753, %v1746
        %v1756 = vsel %vm1299, %v1754, %v1748
        %v1757 = vld [vmem:[%s14] sm:$0xff]
        %v1758 = vld [vmem:[%s14 + $0x8] sm:$0xff]
        %v1759 = vld [vmem:[%s14 + $0x10] sm:$0xff]
        %v1760 = vld [vmem:[%s14 + $0x18] sm:$0xff]
        %v1761 = vpack.c.bf16 %v1756, %v1755
        %v1762 = vpack.c.bf16 %v1758, %v1757
        %v1763 = vpack.c.bf16 %v1760, %v1759
        %v1765 = vsel %vm847, %v1761, 0
        %1767 = vmatpush.bf16.msra.mxu0 0
        %1768 = vmatpush.bf16.msra.mxu0 0
        %1769 = vmatpush.bf16.msra.mxu0 0
        %1770 = vmatpush.bf16.msra.mxu0 0
        %1771 = vmatpush.bf16.msra.mxu0 0
        %1772 = vmatpush.bf16.msra.mxu0 0
        %1773 = vmatpush.bf16.msra.mxu0 %v1763
        %1774 = vmatpush.bf16.msra.mxu0 %v1762
        %1775 = vmatmul.bf16.gmra.mxu0 %v1765
        %v1776 = vpop.f32.mrf.mxu0
        %v1777 = vadd.f32 0.0, %v1776
        %v1778 = vpop.f32.mrf.mxu0
        %v1779 = vadd.f32 0.0, %v1778
        %1780 = vdwg.mxu0
        %v1781 = vadd.f32 %v1395, %v1777
        %v1782 = vadd.f32 %v1396, %v1779
        %v1783 = vld [vmem:[%s15] sm:$0x1]
        %v1785 = vperm.slane %v1783, 0
        %v1787 = vadd.f32 %v1781, %v1785
        %v1788 = vadd.f32 %v1782, %v1785
        %v1789 = vld [vmem:[%s16] sm:$0x1]
        %v1790 = vld [vmem:[#allocation2] sm:$0x1]
        %v1791 = vsel %vm847, %v1787, 0.0
        %1792 = vadd.xlane.f32.xlu0 %v1791
        %v1793 = vpop.xlane.xlu0 %1792
        %v1794 = vsel %vm847, %v1788, 0.0
        %1795 = vadd.xlane.f32.xlu0 %v1794
        %v1796 = vpop.xlane.xlu0 %1795
        %v1797 = vmul.f32 %v1793, %v1348
        %v1798 = vmul.f32 %v1796, %v1348
        %v1799 = vsub.f32 %v1787, %v1797
        %v1800 = vsub.f32 %v1788, %v1798
        %v1801 = vmul.f32 %v1799, %v1799
        %v1802 = vmul.f32 %v1800, %v1800
        %v1803 = vsel %vm847, %v1801, 0.0
        %1804 = vadd.xlane.f32.xlu0 %v1803
        %v1805 = vpop.xlane.xlu0 %1804
        %v1806 = vsel %vm847, %v1802, 0.0
        %1807 = vadd.xlane.f32.xlu0 %v1806
        %v1808 = vpop.xlane.xlu0 %1807
        %v1809 = vmul.f32 %v1805, %v1348
        %v1810 = vmul.f32 %v1808, %v1348
        %v1811 = vadd.f32 %v1809, 1e-05
        %v1812 = vadd.f32 %v1810, 1e-05
        %v1813 = vrsqrt.pop %v1811
        %v1814 = vmul.f32 %v1813, %v1811
        %v1815 = vmul.f32 %v1814, %v1813
        %v1816 = vmul.f32 0.5, %v1815
        %v1817 = vsub.f32 1.5, %v1816
        %v1818 = vmul.f32 %v1813, %v1817
        %vm1819 = vweird.f32 %v1811
        %vm1820 = vweird.f32 %v1813
        %vm1821 = vmor %vm1819, %vm1820
        %v1822 = vsel %vm1821, %v1813, %v1818
        %v1823 = vrsqrt.pop %v1812
        %v1824 = vmul.f32 %v1823, %v1812
        %v1825 = vmul.f32 %v1824, %v1823
        %v1826 = vmul.f32 0.5, %v1825
        %v1827 = vsub.f32 1.5, %v1826
        %v1828 = vmul.f32 %v1823, %v1827
        %vm1829 = vweird.f32 %v1812
        %vm1830 = vweird.f32 %v1823
        %vm1831 = vmor %vm1829, %vm1830
        %v1832 = vsel %vm1831, %v1823, %v1828
        %v1833 = vmul.f32 %v1799, %v1822
        %v1834 = vmul.f32 %v1800, %v1832
        %v1836 = vperm.slane %v1789, 0
        %v1838 = vmul.f32 %v1833, %v1836
        %v1839 = vmul.f32 %v1834, %v1836
        %v1841 = vperm.slane %v1790, 0
        %v1843 = vadd.f32 %v1838, %v1841
        %v1844 = vadd.f32 %v1839, %v1841
        %v1845 = vld [vmem:[%s18] sm:$0xff]
        %v1846 = vld [vmem:[%s18 + $0x8] sm:$0xff]
        %v1847 = vld [vmem:[%s18 + $0x10] sm:$0xff]
        %v1848 = vld [vmem:[%s18 + $0x18] sm:$0xff]
        %v1849 = vpack.c.bf16 %v1844, %v1843
        %v1850 = vpack.c.bf16 %v1846, %v1845
        %v1851 = vpack.c.bf16 %v1848, %v1847
        %v1852 = vld [vmem:[#allocation4] sm:$0x1]
        %v1854 = vperm.slane %v1852, 0
        %v1857 = vsel %vm847, %v1849, 0
        %1859 = vmatpush.bf16.msra.mxu0 0
        %1860 = vmatpush.bf16.msra.mxu0 0
        %1861 = vmatpush.bf16.msra.mxu0 0
        %1862 = vmatpush.bf16.msra.mxu0 0
        %1863 = vmatpush.bf16.msra.mxu0 0
        %1864 = vmatpush.bf16.msra.mxu0 0
        %1865 = vmatpush.bf16.msra.mxu0 %v1851
        %1866 = vmatpush.bf16.msra.mxu0 %v1850
        %1867 = vmatmul.bf16.gmra.mxu0 %v1857
        %v1868 = vpop.f32.mrf.mxu0
        %v1869 = vadd.f32 %v1854, %v1868
        %v1870 = vpop.f32.mrf.mxu0
        %v1871 = vadd.f32 %v1854, %v1870
        %1872 = vdwg.mxu0
        %v1873 = vmul.f32 %v1869, 0.5
        %v1874 = vmul.f32 %v1871, 0.5
        %v1875 = vmul.f32 %v1869, 0.044715
        %v1876 = vmul.f32 %v1871, 0.044715
        %v1877 = vmul.f32 %v1875, %v1869
        %v1878 = vmul.f32 %v1876, %v1871
        %v1879 = vmul.f32 %v1877, %v1869
        %v1880 = vmul.f32 %v1878, %v1871
        %v1881 = vadd.f32 %v1869, %v1879
        %v1882 = vadd.f32 %v1871, %v1880
        %v1883 = vmul.f32 %v1881, 0.7978846
        %v1884 = vmul.f32 %v1882, 0.7978846
        %v1885 = vtanh.pop %v1883
        %v1886 = vtanh.pop %v1884
        %v1887 = vadd.f32 %v1885, 1.0
        %v1888 = vadd.f32 %v1886, 1.0
        %v1889 = vmul.f32 %v1873, %v1887
        %v1890 = vmul.f32 %v1874, %v1888
        %v1891 = vld [vmem:[%s20] sm:$0xff]
        %v1892 = vld [vmem:[%s20 + $0x8] sm:$0xff]
        %v1893 = vld [vmem:[%s20 + $0x10] sm:$0xff]
        %v1894 = vld [vmem:[%s20 + $0x18] sm:$0xff]
        %v1895 = vld [vmem:[%s20 + $0x20] sm:$0xff]
        %v1896 = vld [vmem:[%s20 + $0x28] sm:$0xff]
        %v1897 = vld [vmem:[%s20 + $0x30] sm:$0xff]
        %v1898 = vld [vmem:[%s20 + $0x38] sm:$0xff]
        %v1899 = vpack.c.bf16 %v1890, %v1889
        %v1900 = vpack.c.bf16 %v1892, %v1891
        %v1901 = vpack.c.bf16 %v1894, %v1893
        %v1902 = vpack.c.bf16 %v1896, %v1895
        %v1903 = vpack.c.bf16 %v1898, %v1897
        %v1905 = vsel %vm979, %v1899, 0
        %1907 = vmatpush.bf16.msra.mxu0 0
        %1908 = vmatpush.bf16.msra.mxu0 0
        %1909 = vmatpush.bf16.msra.mxu0 0
        %1910 = vmatpush.bf16.msra.mxu0 0
        %1911 = vmatpush.bf16.msra.mxu0 %v1903
        %1912 = vmatpush.bf16.msra.mxu0 %v1902
        %1913 = vmatpush.bf16.msra.mxu0 %v1901
        %1914 = vmatpush.bf16.msra.mxu0 %v1900
        %1915 = vmatmul.bf16.gmra.mxu0 %v1905
        %v1916 = vpop.f32.mrf.mxu0
        %v1917 = vadd.f32 0.0, %v1916
        %v1918 = vpop.f32.mrf.mxu0
        %v1919 = vadd.f32 0.0, %v1918
        %1920 = vdwg.mxu0
        %v1921 = vadd.f32 %v1843, %v1917
        %v1922 = vadd.f32 %v1844, %v1919
        %v1923 = vld [vmem:[#allocation6] sm:$0x1]
        %v1925 = vperm.slane %v1923, 0
        %v1927 = vadd.f32 %v1921, %v1925
        %v1928 = vadd.f32 %v1922, %v1925
        %v1929 = vld [vmem:[#allocation7] sm:$0x1]
        %v1930 = vld [vmem:[#allocation9] sm:$0x1]
        %v1931 = vsel %vm847, %v1927, 0.0
        %1932 = vadd.xlane.f32.xlu0 %v1931
        %v1933 = vpop.xlane.xlu0 %1932
        %v1934 = vsel %vm847, %v1928, 0.0
        %1935 = vadd.xlane.f32.xlu0 %v1934
        %v1936 = vpop.xlane.xlu0 %1935
        %v1937 = vmul.f32 %v1933, %v1348
        %v1938 = vmul.f32 %v1936, %v1348
        %v1939 = vsub.f32 %v1927, %v1937
        %v1940 = vsub.f32 %v1928, %v1938
        %v1941 = vmul.f32 %v1939, %v1939
        %v1942 = vmul.f32 %v1940, %v1940
        %v1943 = vsel %vm847, %v1941, 0.0
        %1944 = vadd.xlane.f32.xlu0 %v1943
        %v1945 = vpop.xlane.xlu0 %1944
        %v1946 = vsel %vm847, %v1942, 0.0
        %1947 = vadd.xlane.f32.xlu0 %v1946
        %v1948 = vpop.xlane.xlu0 %1947
        %v1949 = vmul.f32 %v1945, %v1348
        %v1950 = vmul.f32 %v1948, %v1348
        %v1951 = vadd.f32 %v1949, 1e-05
        %v1952 = vadd.f32 %v1950, 1e-05
        %v1953 = vrsqrt.pop %v1951
        %v1954 = vmul.f32 %v1953, %v1951
        %v1955 = vmul.f32 %v1954, %v1953
        %v1956 = vmul.f32 0.5, %v1955
        %v1957 = vsub.f32 1.5, %v1956
        %v1958 = vmul.f32 %v1953, %v1957
        %vm1959 = vweird.f32 %v1951
        %vm1960 = vweird.f32 %v1953
        %vm1961 = vmor %vm1959, %vm1960
        %v1962 = vsel %vm1961, %v1953, %v1958
        %v1963 = vrsqrt.pop %v1952
        %v1964 = vmul.f32 %v1963, %v1952
        %v1965 = vmul.f32 %v1964, %v1963
        %v1966 = vmul.f32 0.5, %v1965
        %v1967 = vsub.f32 1.5, %v1966
        %v1968 = vmul.f32 %v1963, %v1967
        %vm1969 = vweird.f32 %v1952
        %vm1970 = vweird.f32 %v1963
        %vm1971 = vmor %vm1969, %vm1970
        %v1972 = vsel %vm1971, %v1963, %v1968
        %v1973 = vmul.f32 %v1939, %v1962
        %v1974 = vmul.f32 %v1940, %v1972
        %v1976 = vperm.slane %v1929, 0
        %v1978 = vmul.f32 %v1973, %v1976
        %v1979 = vmul.f32 %v1974, %v1976
        %v1981 = vperm.slane %v1930, 0
        %v1983 = vadd.f32 %v1978, %v1981
        %v1984 = vadd.f32 %v1979, %v1981
        %1985 = vst.msk [vmem:[%s830] sm:$0xff] %vm847, %v1983
        %1986 = vst.msk [vmem:[%s830 + $0x8] sm:$0xff] %vm847, %v1984
        %p1987 = scmp.lt.s32.totalorder %s38, 1
        %s1988 = scalar_select %p1987, %s38, 1
        %s1989 = smul.addr %s1988, 2
        %s1990 = smul.addr %s1989, 8
        %s1991 = scalar_lea.vmem %s24, %s1990
        // Predicated region
        $region137: #{forward.16} parent=115 // pred_check
          %p1992 = pneg %p570
        $region138: #{forward.16} parent=115 // pred_check_branch
          %1994 = sbr.rel (%p1992) target = $region140
        $region139: #{forward.16} parent=115 // pred_region
          _
        $region140: #{forward.16} parent=115 // pred_fallthru
          _
      $region116: #{forward.16} parent=5 // pred_fallthru
        _
      %p1995 = scmp.le.s32.totalorder 2, %s33
      // Predicated region
      $region141: #{forward.16} parent=5 // pred_check
        %p1996 = pneg %p1995
      $region142: #{forward.16} parent=5 // pred_check_branch
        %1998 = sbr.rel (%p1996) target = $region144
      $region143: #{forward.16} parent=5 // pred_region
        %s1999 = ssub.s32 %s33, 2
        // Predicated region
        $region145: #{forward.16} parent=143 // pred_check
          %p2000 = pneg %p576
        $region146: #{forward.16} parent=143 // pred_check_branch
          %2002 = sbr.rel (%p2000) target = $region148
        $region147: #{forward.16} parent=143 // pred_region
          %p2003 = scmp.lt.s32.totalorder %s39, 1
          %s2004 = scalar_select %p2003, %s39, 1
          %s2005 = smul.addr %s2004, 2
          %s2006 = smul.addr %s2005, 8
          %s2007 = scalar_lea.vmem %s24, %s2006
        $region148: #{forward.16} parent=143 // pred_fallthru
          _
      $region144: #{forward.16} parent=5 // pred_fallthru
        _
    $region6: #{forward.16} parent=1 // loop_footer
      %s37 = sadd.s32 1, %s33
    $region7: #{forward.16} parent=1 // loop_footer_branch
      %32 = sbr.rel target = $region3
    $region8: #{forward.16} parent=1 // loop_exit
      _
    %2008 = vsyncpa [#allocation3], 1
    %s2009 = scalar_lea.sflag [#allocation3], 1
    %2010 = vsyncpa %s2009, 1
    %2011 = vsyncpa [#allocation5], 1
    %2012 = vsyncpa [#allocation8], 1

</llo_original>
